<compile_context>
chip_gen: v5e
topology: v5e:2x2
jax: 0.10.0
libtpu: 0.0.40
codegen_flags: <defaults>
</compile_context>

<pallas_src>
import functools

import jax
import jax.numpy as jnp
from jax import lax
from jax.experimental import pallas as pl
from jax.experimental.pallas import tpu as pltpu

H0 = 2 ** 9          # conv feature width
H2 = 2 ** 9          # critic hidden width
SENS_SIZE = 75
SA_RAW = SENS_SIZE + 3          # 78 = sens + action columns
SA_PAD = 128                    # zero-padded (lane-friendly) sens+action width
FLAT_K = 64 * 7 * 7             # 3136
OUT_PAD = 128                   # padded width of the 1-wide critic output
VMEM_LIMIT = 48 * 1024 * 1024


def _round_up(x, m):
    return (x + m - 1) // m * m


# ---------------------------------------------------------------------------
# Pallas kernel 1: fused  out = tanh(x @ w + b)   (bf16 MXU inputs, f32 epilogue)
# Used for the three conv layers (after im2col).
# ---------------------------------------------------------------------------
def _mm_bias_tanh_kernel(x_ref, w_ref, b_ref, o_ref):
    acc = jnp.dot(x_ref[...], w_ref[...], preferred_element_type=jnp.float32)
    o_ref[...] = jnp.tanh(acc + b_ref[...])


def matmul_bias_tanh(x, w_bf, b, *, tm_max=256):
    """x: (M, K) f32/bf16, w_bf: (K, N) bf16, b: (N,) -> tanh(x @ w + b) : (M, N) f32.

    Gridded over M ("parallel"); K un-tiled; N zero-padded to a multiple of 128
    so output stores are lane-dense.  MXU runs bf16 x bf16 -> f32.
    """
    M, K = x.shape
    K2, N = w_bf.shape
    assert K == K2, (K, K2)

    n_pad = max(_round_up(N, 128), 128)
    if n_pad != N:
        w_bf = jnp.pad(w_bf, ((0, 0), (0, n_pad - N)))
        b = jnp.pad(b, ((0, n_pad - N),))
    b2 = b.reshape(1, n_pad).astype(jnp.float32)

    x_bf = x.astype(jnp.bfloat16)
    if M <= tm_max:
        tm, m_pad = M, M                        # single block == full array dim
    else:
        tm = tm_max
        m_pad = _round_up(M, tm)
        if m_pad != M:
            x_bf = jnp.pad(x_bf, ((0, m_pad - M), (0, 0)))

    cost = pl.CostEstimate(
        flops=2 * m_pad * K * n_pad,
        transcendentals=m_pad * n_pad,
        bytes_accessed=m_pad * K * 2 + K * n_pad * 2 + m_pad * n_pad * 4 + n_pad * 4,
    )

    out = pl.pallas_call(
        _mm_bias_tanh_kernel,
        out_shape=jax.ShapeDtypeStruct((m_pad, n_pad), jnp.float32),
        grid=(m_pad // tm,),
        in_specs=[
            pl.BlockSpec((tm, K), lambda i: (i, 0)),      # patch tile
            pl.BlockSpec((K, n_pad), lambda i: (0, 0)),   # weights (same block every step)
            pl.BlockSpec((1, n_pad), lambda i: (0, 0)),   # bias row
        ],
        out_specs=pl.BlockSpec((tm, n_pad), lambda i: (i, 0)),
        compiler_params=pltpu.CompilerParams(
            dimension_semantics=("parallel",),
            vmem_limit_bytes=VMEM_LIMIT,
        ),
        cost_estimate=cost,
    )(x_bf, w_bf, b2)

    if m_pad != M or n_pad != N:
        out = out[:M, :N]
    return out


# ---------------------------------------------------------------------------
# Pallas kernel 2: fused critic head
#   feat = tanh(flat @ Wc + bc)                          (conv_forward.fc_1)
#   h    = tanh(feat @ W1_feat + sa @ W1_sa + b1)        (critic.fc_1 with concat folded in)
#   out  = h @ W3 + b3                                   (critic.fc_3, N padded to 128)
# ---------------------------------------------------------------------------
def _head_kernel(flat_ref, sa_ref, cfc_w_ref, cfc_b_ref,
                 w1f_ref, w1s_ref, b1_ref, w3_ref, b3_ref, o_ref):
    feat = jnp.tanh(
        jnp.dot(flat_ref[...], cfc_w_ref[...], preferred_element_type=jnp.float32)
        + cfc_b_ref[...])
    h = jnp.dot(feat.astype(jnp.bfloat16), w1f_ref[...],
                preferred_element_type=jnp.float32)
    h = h + jnp.dot(sa_ref[...], w1s_ref[...], preferred_element_type=jnp.float32)
    h = jnp.tanh(h + b1_ref[...])
    o_ref[...] = (jnp.dot(h.astype(jnp.bfloat16), w3_ref[...],
                          preferred_element_type=jnp.float32) + b3_ref[...])


def critic_head(flat, sens, action, p, *, tm_max=256):
    """flat: (B, 3136) NHWC-flattened conv features; sens: (B,75); action: (B,3) -> (B,1)."""
    B, K = flat.shape
    assert K == FLAT_K, K

    sa = jnp.concatenate([sens, action], axis=1)                    # (B, 78)
    sa = jnp.pad(sa, ((0, 0), (0, SA_PAD - SA_RAW))).astype(jnp.bfloat16)
    flat_bf = flat.astype(jnp.bfloat16)

    if B <= tm_max:
        tm, m_pad = B, B
    else:
        tm = tm_max
        m_pad = _round_up(B, tm)
        flat_bf = jnp.pad(flat_bf, ((0, m_pad - B), (0, 0)))
        sa = jnp.pad(sa, ((0, m_pad - B), (0, 0)))

    matmul_flops = 2 * m_pad * (K * H0 + H0 * H2 + SA_PAD * H2 + H2 * OUT_PAD)
    cost = pl.CostEstimate(
        flops=matmul_flops,
        transcendentals=m_pad * (H0 + H2),
        bytes_accessed=(m_pad * K * 2 + m_pad * SA_PAD * 2
                        + K * H0 * 2 + H0 * H2 * 2 + SA_PAD * H2 * 2 + H2 * OUT_PAD * 2
                        + (H0 + H2 + OUT_PAD) * 4 + m_pad * OUT_PAD * 4),
    )

    out = pl.pallas_call(
        _head_kernel,
        out_shape=jax.ShapeDtypeStruct((m_pad, OUT_PAD), jnp.float32),
        grid=(m_pad // tm,),
        in_specs=[
            pl.BlockSpec((tm, K), lambda i: (i, 0)),            # flat conv features
            pl.BlockSpec((tm, SA_PAD), lambda i: (i, 0)),       # [sens, action] (padded)
            pl.BlockSpec((K, H0), lambda i: (0, 0)),            # conv fc_1 weight
            pl.BlockSpec((1, H0), lambda i: (0, 0)),            # conv fc_1 bias
            pl.BlockSpec((H0, H2), lambda i: (0, 0)),           # critic fc_1 weight (feat rows)
            pl.BlockSpec((SA_PAD, H2), lambda i: (0, 0)),       # critic fc_1 weight (sens/act rows)
            pl.BlockSpec((1, H2), lambda i: (0, 0)),            # critic fc_1 bias
            pl.BlockSpec((H2, OUT_PAD), lambda i: (0, 0)),      # critic fc_3 weight (padded)
            pl.BlockSpec((1, OUT_PAD), lambda i: (0, 0)),       # critic fc_3 bias (padded)
        ],
        out_specs=pl.BlockSpec((tm, OUT_PAD), lambda i: (i, 0)),
        compiler_params=pltpu.CompilerParams(
            dimension_semantics=("parallel",),
            vmem_limit_bytes=VMEM_LIMIT,
        ),
        cost_estimate=cost,
    )(flat_bf, sa, p["cfc_w"], p["cfc_b"], p["w1_feat"], p["w1_sa"], p["fc1_b"],
      p["fc3_w"], p["fc3_b"])

    return out[:B, :1]


# ---------------------------------------------------------------------------
# im2col glue (NHWC, K ordered (KH, KW, C)) -- compute stays in the Pallas kernels
# ---------------------------------------------------------------------------
def _im2col_nhwc(x, kh, kw, stride):
    """x: (B, H, W, C) NHWC -> patches (B*OH*OW, KH*KW*C)."""
    # TODO(synk): build conv patches in-kernel from raw NHWC HBM (pl.ANY + manual DMA)
    #             to avoid materializing the im2col matrix in HBM.
    B, H, W, C = x.shape
    oh = (H - kh) // stride + 1
    ow = (W - kw) // stride + 1
    cols = []
    for i in range(kh):
        for j in range(kw):
            cols.append(x[:, i:i + stride * oh:stride, j:j + stride * ow:stride, :])
    cols = jnp.stack(cols, axis=3)                 # (B, OH, OW, KH*KW, C)
    return cols.reshape(B * oh * ow, kh * kw * C), oh, ow


def conv2d_tanh_nhwc(x, wmat, b, *, kh, kw, stride):
    """x: (B,H,W,C) NHWC; wmat: (KH*KW*C, OC) bf16; b: (OC,). Returns NHWC tanh(conv(x))."""
    B = x.shape[0]
    oc = wmat.shape[1]
    patches, oh, ow = _im2col_nhwc(x, kh, kw, stride)
    y = matmul_bias_tanh(patches, wmat, b)         # (M, OC)
    return y.reshape(B, oh, ow, oc)


# ---------------------------------------------------------------------------
# Parameters (PyTorch layout) + one-time prep into matmul layout
# ---------------------------------------------------------------------------
def init_params(key):
    """PyTorch-layout parameters (conv: OIHW, linear: (out, in))."""
    ks = jax.random.split(key, 12)

    def _w(k, shape, fan_in):
        return jax.random.normal(k, shape, jnp.float32) / jnp.sqrt(fan_in)

    return {
        "c1_w": _w(ks[0], (32, 3, 8, 8), 3 * 8 * 8),
        "c1_b": _w(ks[1], (32,), 3 * 8 * 8),
        "c2_w": _w(ks[2], (64, 32, 4, 4), 32 * 4 * 4),
        "c2_b": _w(ks[3], (64,), 32 * 4 * 4),
        "c3_w": _w(ks[4], (64, 64, 3, 3), 64 * 3 * 3),
        "c3_b": _w(ks[5], (64,), 64 * 3 * 3),
        "cfc_w": _w(ks[6], (H0, FLAT_K), FLAT_K),                  # conv_forward.fc_1
        "cfc_b": _w(ks[7], (H0,), FLAT_K),
        "fc1_w": _w(ks[8], (H2, H0 + SA_RAW), H0 + SA_RAW),
        "fc1_b": _w(ks[9], (H2,), H0 + SA_RAW),
        "fc3_w": _w(ks[10], (1, H2), H2),
        "fc3_b": _w(ks[11], (1,), H2),
    }


def prepare_params(params):
    """One-time reshape/transpose/pad of PyTorch weights into (K, N) matmul layout (bf16)."""
    def conv_wmat(w):                              # OIHW -> (KH*KW*IC, OC), K order (KH,KW,C)
        oc, ic, kh, kw = w.shape
        return jnp.transpose(w, (2, 3, 1, 0)).reshape(kh * kw * ic, oc).astype(jnp.bfloat16)

    # PyTorch flattens NCHW (C,H,W) before conv fc_1; our activations are NHWC (H,W,C), so
    # permute the weight's input axis once instead of transposing activations every call.
    cfc = params["cfc_w"].reshape(H0, 64, 7, 7)                     # (out, C, H, W)
    cfc = jnp.transpose(cfc, (2, 3, 1, 0)).reshape(7 * 7 * 64, H0).astype(jnp.bfloat16)

    # critic fc_1: split into feature rows and (sens,action) rows so the concat folds away.
    fc1_t = params["fc1_w"].T                                       # (590, 512)
    w1_feat = fc1_t[:H0].astype(jnp.bfloat16)                       # (512, 512)
    w1_sa = jnp.pad(fc1_t[H0:], ((0, SA_PAD - SA_RAW), (0, 0))).astype(jnp.bfloat16)

    # critic fc_3: pad N=1 -> 128 for lane-dense stores; slice after the kernel.
    fc3_t = jnp.pad(params["fc3_w"].T, ((0, 0), (0, OUT_PAD - 1))).astype(jnp.bfloat16)
    fc3_b = jnp.pad(params["fc3_b"], ((0, OUT_PAD - 1),)).reshape(1, OUT_PAD)

    return {
        "c1_w": conv_wmat(params["c1_w"]), "c1_b": params["c1_b"],
        "c2_w": conv_wmat(params["c2_w"]), "c2_b": params["c2_b"],
        "c3_w": conv_wmat(params["c3_w"]), "c3_b": params["c3_b"],
        "cfc_w": cfc, "cfc_b": params["cfc_b"].reshape(1, H0).astype(jnp.float32),
        "w1_feat": w1_feat, "w1_sa": w1_sa,
        "fc1_b": params["fc1_b"].reshape(1, H2).astype(jnp.float32),
        "fc3_w": fc3_t, "fc3_b": fc3_b.astype(jnp.float32),
    }


# ---------------------------------------------------------------------------
# critic_nn forward
# ---------------------------------------------------------------------------
@jax.jit
def critic_forward(prepped, image, sens, action):
    """image: (B,3,84,84) NCHW f32; sens: (B,75); action: (B,3)  ->  (B,1) f32."""
    x = jnp.transpose(image, (0, 2, 3, 1))                          # NCHW -> NHWC (once)
    x = conv2d_tanh_nhwc(x, prepped["c1_w"], prepped["c1_b"], kh=8, kw=8, stride=4)  # (B,20,20,32)
    x = conv2d_tanh_nhwc(x, prepped["c2_w"], prepped["c2_b"], kh=4, kw=4, stride=2)  # (B, 9, 9,64)
    x = conv2d_tanh_nhwc(x, prepped["c3_w"], prepped["c3_b"], kh=3, kw=3, stride=1)  # (B, 7, 7,64)
    B = x.shape[0]
    flat = x.reshape(B, -1)                                         # (B, 3136), (H,W,C) order
    return critic_head(flat, sens, action, prepped)                 # fused fc stack -> (B, 1)


# ---------------------------------------------------------------------------
# Pure-JAX f32 reference (uses the original PyTorch-layout params)
# ---------------------------------------------------------------------------
def _reference_forward(params, image, sens, action):
    def conv(x, w, b, s):
        y = lax.conv_general_dilated(
            x, w, window_strides=(s, s), padding="VALID",
            dimension_numbers=("NCHW", "OIHW", "NCHW"))
        return jnp.tanh(y + b[None, :, None, None])

    x = conv(image, params["c1_w"], params["c1_b"], 4)
    x = conv(x, params["c2_w"], params["c2_b"], 2)
    x = conv(x, params["c3_w"], params["c3_b"], 1)
    flat = x.reshape(x.shape[0], -1)                                # NCHW flatten (C,H,W)
    feat = jnp.tanh(flat @ params["cfc_w"].T + params["cfc_b"])
    z = jnp.concatenate([feat, sens, action], axis=1)
    h = jnp.tanh(z @ params["fc1_w"].T + params["fc1_b"])
    return h @ params["fc3_w"].T + params["fc3_b"]


if __name__ == "__main__":
    key = jax.random.PRNGKey(0)
    kp, ki, ks, ka = jax.random.split(key, 4)
    params = init_params(kp)
    prepped = prepare_params(params)

    # conv_forward.fc_1 expects 64*7*7 features => image must be (B, 3, 84, 84).
    B = 2
    image = jax.random.normal(ki, (B, 3, 84, 84), jnp.float32)
    sens = jax.random.normal(ks, (B, SENS_SIZE), jnp.float32)
    action = jax.random.normal(ka, (B, 3), jnp.float32)

    out = jax.block_until_ready(critic_forward(prepped, image, sens, action))
    assert out.shape == (B, 1), out.shape

    ref = jax.block_until_ready(_reference_forward(params, image, sens, action))
    max_err = float(jnp.max(jnp.abs(out - ref)))
    # bf16 MXU inputs vs f32 reference -> relaxed tolerance.
    assert max_err < 5e-2, max_err

    print("KERNEL_OK")
</pallas_src>

<mosaic_0001>
module attributes {stable_mosaic.version = 11 : i64} {
  func.func @_mm_bias_tanh_kernel(%arg0: i32, %arg1: memref<256x192xbf16, #tpu.memory_space<vmem>>, %arg2: memref<192x128xbf16, #tpu.memory_space<vmem>>, %arg3: memref<1x128xf32, #tpu.memory_space<vmem>>, %arg4: memref<256x128xf32, #tpu.memory_space<vmem>>) attributes {dimension_semantics = [#tpu.dimension_semantics<parallel>], iteration_bounds = array<i64: 4>, scalar_prefetch = 0 : i64, scratch_operands = 0 : i64, tpu.core_type = #tpu.core_type<tc>, window_params = [{transform_indices = @transform_0, window_bounds = array<i64: 256, 192>}, {pipeline_mode = #tpu.pipeline_mode<synchronous>, transform_indices = @transform_1, window_bounds = array<i64: 192, 128>}, {pipeline_mode = #tpu.pipeline_mode<synchronous>, transform_indices = @transform_2, window_bounds = array<i64: 1, 128>}, {transform_indices = @transform_3, window_bounds = array<i64: 256, 128>}]} {
    %c0 = arith.constant 0 : index
    %c0_0 = arith.constant 0 : index
    %0 = vector.load %arg1[%c0, %c0_0] : memref<256x192xbf16, #tpu.memory_space<vmem>>, vector<256x192xbf16>
    %c0_1 = arith.constant 0 : index
    %c0_2 = arith.constant 0 : index
    %1 = vector.load %arg2[%c0_1, %c0_2] : memref<192x128xbf16, #tpu.memory_space<vmem>>, vector<192x128xbf16>
    %cst = arith.constant dense<0.000000e+00> : vector<256x128xf32>
    %2 = tpu.matmul %0, %1, %cst {dimension_numbers = #tpu.dot_dimension_numbers<[1], [0], [0], [1], [0, 0, 1, 1], [], []>} : vector<256x192xbf16>, vector<192x128xbf16>, vector<256x128xf32> -> vector<256x128xf32>
    %c0_3 = arith.constant 0 : index
    %c0_4 = arith.constant 0 : index
    %3 = vector.load %arg3[%c0_3, %c0_4] : memref<1x128xf32, #tpu.memory_space<vmem>>, vector<1x128xf32>
    %4 = vector.broadcast %3 : vector<1x128xf32> to vector<256x128xf32>
    %5 = arith.addf %2, %4 : vector<256x128xf32>
    %6 = math.tanh %5 : vector<256x128xf32>
    %c0_5 = arith.constant 0 : index
    %c0_6 = arith.constant 0 : index
    %7 = vector.load %arg4[%c0_5, %c0_6] : memref<256x128xf32, #tpu.memory_space<vmem>>, vector<256x128xf32>
    tpu.vector_store %arg4[%c0_5, %c0_6], %6 {strides = array<i32>} : memref<256x128xf32, #tpu.memory_space<vmem>>, vector<256x128xf32>,
    return
  }
  func.func @transform_0(%arg0: i32) -> (i32, i32) {
    %c0_i32 = arith.constant 0 : i32
    %c0_i32_0 = arith.constant 0 : i32
    return %arg0, %c0_i32 : i32, i32
  }
  func.func @transform_1(%arg0: i32) -> (i32, i32) {
    %c0_i32 = arith.constant 0 : i32
    %c0_i32_0 = arith.constant 0 : i32
    %c0_i32_1 = arith.constant 0 : i32
    return %c0_i32, %c0_i32_0 : i32, i32
  }
  func.func @transform_2(%arg0: i32) -> (i32, i32) {
    %c0_i32 = arith.constant 0 : i32
    %c0_i32_0 = arith.constant 0 : i32
    %c0_i32_1 = arith.constant 0 : i32
    return %c0_i32, %c0_i32_0 : i32, i32
  }
  func.func @transform_3(%arg0: i32) -> (i32, i32) {
    %c0_i32 = arith.constant 0 : i32
    %c0_i32_0 = arith.constant 0 : i32
    return %arg0, %c0_i32 : i32, i32
  }
}

module attributes {stable_mosaic.version = 11 : i64} {
  func.func @_mm_bias_tanh_kernel(%arg0: i32, %arg1: memref<162x512xbf16, #tpu.memory_space<vmem>>, %arg2: memref<512x128xbf16, #tpu.memory_space<vmem>>, %arg3: memref<1x128xf32, #tpu.memory_space<vmem>>, %arg4: memref<162x128xf32, #tpu.memory_space<vmem>>) attributes {dimension_semantics = [#tpu.dimension_semantics<parallel>], iteration_bounds = array<i64: 1>, scalar_prefetch = 0 : i64, scratch_operands = 0 : i64, tpu.core_type = #tpu.core_type<tc>, window_params = [{transform_indices = @transform_0, window_bounds = array<i64: 162, 512>}, {pipeline_mode = #tpu.pipeline_mode<synchronous>, transform_indices = @transform_1, window_bounds = array<i64: 512, 128>}, {pipeline_mode = #tpu.pipeline_mode<synchronous>, transform_indices = @transform_2, window_bounds = array<i64: 1, 128>}, {transform_indices = @transform_3, window_bounds = array<i64: 162, 128>}]} {
    %c0 = arith.constant 0 : index
    %c0_0 = arith.constant 0 : index
    %0 = vector.load %arg1[%c0, %c0_0] : memref<162x512xbf16, #tpu.memory_space<vmem>>, vector<162x512xbf16>
    %c0_1 = arith.constant 0 : index
    %c0_2 = arith.constant 0 : index
    %1 = vector.load %arg2[%c0_1, %c0_2] : memref<512x128xbf16, #tpu.memory_space<vmem>>, vector<512x128xbf16>
    %cst = arith.constant dense<0.000000e+00> : vector<162x128xf32>
    %2 = tpu.matmul %0, %1, %cst {dimension_numbers = #tpu.dot_dimension_numbers<[1], [0], [0], [1], [0, 0, 1, 1], [], []>} : vector<162x512xbf16>, vector<512x128xbf16>, vector<162x128xf32> -> vector<162x128xf32>
    %c0_3 = arith.constant 0 : index
    %c0_4 = arith.constant 0 : index
    %3 = vector.load %arg3[%c0_3, %c0_4] : memref<1x128xf32, #tpu.memory_space<vmem>>, vector<1x128xf32>
    %4 = vector.broadcast %3 : vector<1x128xf32> to vector<162x128xf32>
    %5 = arith.addf %2, %4 : vector<162x128xf32>
    %6 = math.tanh %5 : vector<162x128xf32>
    %c0_5 = arith.constant 0 : index
    %c0_6 = arith.constant 0 : index
    %7 = vector.load %arg4[%c0_5, %c0_6] : memref<162x128xf32, #tpu.memory_space<vmem>>, vector<162x128xf32>
    tpu.vector_store %arg4[%c0_5, %c0_6], %6 {strides = array<i32>} : memref<162x128xf32, #tpu.memory_space<vmem>>, vector<162x128xf32>,
    return
  }
  func.func @transform_0(%arg0: i32) -> (i32, i32) {
    %c0_i32 = arith.constant 0 : i32
    %c0_i32_0 = arith.constant 0 : i32
    return %arg0, %c0_i32 : i32, i32
  }
  func.func @transform_1(%arg0: i32) -> (i32, i32) {
    %c0_i32 = arith.constant 0 : i32
    %c0_i32_0 = arith.constant 0 : i32
    %c0_i32_1 = arith.constant 0 : i32
    return %c0_i32, %c0_i32_0 : i32, i32
  }
  func.func @transform_2(%arg0: i32) -> (i32, i32) {
    %c0_i32 = arith.constant 0 : i32
    %c0_i32_0 = arith.constant 0 : i32
    %c0_i32_1 = arith.constant 0 : i32
    return %c0_i32, %c0_i32_0 : i32, i32
  }
  func.func @transform_3(%arg0: i32) -> (i32, i32) {
    %c0_i32 = arith.constant 0 : i32
    %c0_i32_0 = arith.constant 0 : i32
    return %arg0, %c0_i32 : i32, i32
  }
}

module attributes {stable_mosaic.version = 11 : i64} {
  func.func @_mm_bias_tanh_kernel(%arg0: i32, %arg1: memref<98x576xbf16, #tpu.memory_space<vmem>>, %arg2: memref<576x128xbf16, #tpu.memory_space<vmem>>, %arg3: memref<1x128xf32, #tpu.memory_space<vmem>>, %arg4: memref<98x128xf32, #tpu.memory_space<vmem>>) attributes {dimension_semantics = [#tpu.dimension_semantics<parallel>], iteration_bounds = array<i64: 1>, scalar_prefetch = 0 : i64, scratch_operands = 0 : i64, tpu.core_type = #tpu.core_type<tc>, window_params = [{transform_indices = @transform_0, window_bounds = array<i64: 98, 576>}, {pipeline_mode = #tpu.pipeline_mode<synchronous>, transform_indices = @transform_1, window_bounds = array<i64: 576, 128>}, {pipeline_mode = #tpu.pipeline_mode<synchronous>, transform_indices = @transform_2, window_bounds = array<i64: 1, 128>}, {transform_indices = @transform_3, window_bounds = array<i64: 98, 128>}]} {
    %c0 = arith.constant 0 : index
    %c0_0 = arith.constant 0 : index
    %0 = vector.load %arg1[%c0, %c0_0] : memref<98x576xbf16, #tpu.memory_space<vmem>>, vector<98x576xbf16>
    %c0_1 = arith.constant 0 : index
    %c0_2 = arith.constant 0 : index
    %1 = vector.load %arg2[%c0_1, %c0_2] : memref<576x128xbf16, #tpu.memory_space<vmem>>, vector<576x128xbf16>
    %cst = arith.constant dense<0.000000e+00> : vector<98x128xf32>
    %2 = tpu.matmul %0, %1, %cst {dimension_numbers = #tpu.dot_dimension_numbers<[1], [0], [0], [1], [0, 0, 1, 1], [], []>} : vector<98x576xbf16>, vector<576x128xbf16>, vector<98x128xf32> -> vector<98x128xf32>
    %c0_3 = arith.constant 0 : index
    %c0_4 = arith.constant 0 : index
    %3 = vector.load %arg3[%c0_3, %c0_4] : memref<1x128xf32, #tpu.memory_space<vmem>>, vector<1x128xf32>
    %4 = vector.broadcast %3 : vector<1x128xf32> to vector<98x128xf32>
    %5 = arith.addf %2, %4 : vector<98x128xf32>
    %6 = math.tanh %5 : vector<98x128xf32>
    %c0_5 = arith.constant 0 : index
    %c0_6 = arith.constant 0 : index
    %7 = vector.load %arg4[%c0_5, %c0_6] : memref<98x128xf32, #tpu.memory_space<vmem>>, vector<98x128xf32>
    tpu.vector_store %arg4[%c0_5, %c0_6], %6 {strides = array<i32>} : memref<98x128xf32, #tpu.memory_space<vmem>>, vector<98x128xf32>,
    return
  }
  func.func @transform_0(%arg0: i32) -> (i32, i32) {
    %c0_i32 = arith.constant 0 : i32
    %c0_i32_0 = arith.constant 0 : i32
    return %arg0, %c0_i32 : i32, i32
  }
  func.func @transform_1(%arg0: i32) -> (i32, i32) {
    %c0_i32 = arith.constant 0 : i32
    %c0_i32_0 = arith.constant 0 : i32
    %c0_i32_1 = arith.constant 0 : i32
    return %c0_i32, %c0_i32_0 : i32, i32
  }
  func.func @transform_2(%arg0: i32) -> (i32, i32) {
    %c0_i32 = arith.constant 0 : i32
    %c0_i32_0 = arith.constant 0 : i32
    %c0_i32_1 = arith.constant 0 : i32
    return %c0_i32, %c0_i32_0 : i32, i32
  }
  func.func @transform_3(%arg0: i32) -> (i32, i32) {
    %c0_i32 = arith.constant 0 : i32
    %c0_i32_0 = arith.constant 0 : i32
    return %arg0, %c0_i32 : i32, i32
  }
}

module attributes {stable_mosaic.version = 11 : i64} {
  func.func @_head_kernel(%arg0: i32, %arg1: memref<2x3136xbf16, #tpu.memory_space<vmem>>, %arg2: memref<2x128xbf16, #tpu.memory_space<vmem>>, %arg3: memref<3136x512xbf16, #tpu.memory_space<vmem>>, %arg4: memref<1x512xf32, #tpu.memory_space<vmem>>, %arg5: memref<512x512xbf16, #tpu.memory_space<vmem>>, %arg6: memref<128x512xbf16, #tpu.memory_space<vmem>>, %arg7: memref<1x512xf32, #tpu.memory_space<vmem>>, %arg8: memref<512x128xbf16, #tpu.memory_space<vmem>>, %arg9: memref<1x128xf32, #tpu.memory_space<vmem>>, %arg10: memref<2x128xf32, #tpu.memory_space<vmem>>) attributes {dimension_semantics = [#tpu.dimension_semantics<parallel>], iteration_bounds = array<i64: 1>, scalar_prefetch = 0 : i64, scratch_operands = 0 : i64, tpu.core_type = #tpu.core_type<tc>, window_params = [{transform_indices = @transform_0, window_bounds = array<i64: 2, 3136>}, {transform_indices = @transform_1, window_bounds = array<i64: 2, 128>}, {pipeline_mode = #tpu.pipeline_mode<synchronous>, transform_indices = @transform_2, window_bounds = array<i64: 3136, 512>}, {pipeline_mode = #tpu.pipeline_mode<synchronous>, transform_indices = @transform_3, window_bounds = array<i64: 1, 512>}, {pipeline_mode = #tpu.pipeline_mode<synchronous>, transform_indices = @transform_4, window_bounds = array<i64: 512, 512>}, {pipeline_mode = #tpu.pipeline_mode<synchronous>, transform_indices = @transform_5, window_bounds = array<i64: 128, 512>}, {pipeline_mode = #tpu.pipeline_mode<synchronous>, transform_indices = @transform_6, window_bounds = array<i64: 1, 512>}, {pipeline_mode = #tpu.pipeline_mode<synchronous>, transform_indices = @transform_7, window_bounds = array<i64: 512, 128>}, {pipeline_mode = #tpu.pipeline_mode<synchronous>, transform_indices = @transform_8, window_bounds = array<i64: 1, 128>}, {transform_indices = @transform_9, window_bounds = array<i64: 2, 128>}]} {
    %c0 = arith.constant 0 : index
    %c0_0 = arith.constant 0 : index
    %0 = vector.load %arg1[%c0, %c0_0] : memref<2x3136xbf16, #tpu.memory_space<vmem>>, vector<2x3136xbf16>
    %c0_1 = arith.constant 0 : index
    %c0_2 = arith.constant 0 : index
    %1 = vector.load %arg3[%c0_1, %c0_2] : memref<3136x512xbf16, #tpu.memory_space<vmem>>, vector<3136x512xbf16>
    %cst = arith.constant dense<0.000000e+00> : vector<2x512xf32>
    %2 = tpu.matmul %0, %1, %cst {dimension_numbers = #tpu.dot_dimension_numbers<[1], [0], [0], [1], [0, 0, 1, 1], [], []>} : vector<2x3136xbf16>, vector<3136x512xbf16>, vector<2x512xf32> -> vector<2x512xf32>
    %c0_3 = arith.constant 0 : index
    %c0_4 = arith.constant 0 : index
    %3 = vector.load %arg4[%c0_3, %c0_4] : memref<1x512xf32, #tpu.memory_space<vmem>>, vector<1x512xf32>
    %4 = vector.broadcast %3 : vector<1x512xf32> to vector<2x512xf32>
    %5 = arith.addf %2, %4 : vector<2x512xf32>
    %6 = math.tanh %5 : vector<2x512xf32>
    %7 = arith.truncf %6 : vector<2x512xf32> to vector<2x512xbf16>
    %c0_5 = arith.constant 0 : index
    %c0_6 = arith.constant 0 : index
    %8 = vector.load %arg5[%c0_5, %c0_6] : memref<512x512xbf16, #tpu.memory_space<vmem>>, vector<512x512xbf16>
    %cst_7 = arith.constant dense<0.000000e+00> : vector<2x512xf32>
    %9 = tpu.matmul %7, %8, %cst_7 {dimension_numbers = #tpu.dot_dimension_numbers<[1], [0], [0], [1], [0, 0, 1, 1], [], []>} : vector<2x512xbf16>, vector<512x512xbf16>, vector<2x512xf32> -> vector<2x512xf32>
    %c0_8 = arith.constant 0 : index
    %c0_9 = arith.constant 0 : index
    %10 = vector.load %arg2[%c0_8, %c0_9] : memref<2x128xbf16, #tpu.memory_space<vmem>>, vector<2x128xbf16>
    %c0_10 = arith.constant 0 : index
    %c0_11 = arith.constant 0 : index
    %11 = vector.load %arg6[%c0_10, %c0_11] : memref<128x512xbf16, #tpu.memory_space<vmem>>, vector<128x512xbf16>
    %cst_12 = arith.constant dense<0.000000e+00> : vector<2x512xf32>
    %12 = tpu.matmul %10, %11, %cst_12 {dimension_numbers = #tpu.dot_dimension_numbers<[1], [0], [0], [1], [0, 0, 1, 1], [], []>} : vector<2x128xbf16>, vector<128x512xbf16>, vector<2x512xf32> -> vector<2x512xf32>
    %13 = arith.addf %9, %12 : vector<2x512xf32>
    %c0_13 = arith.constant 0 : index
    %c0_14 = arith.constant 0 : index
    %14 = vector.load %arg7[%c0_13, %c0_14] : memref<1x512xf32, #tpu.memory_space<vmem>>, vector<1x512xf32>
    %15 = vector.broadcast %14 : vector<1x512xf32> to vector<2x512xf32>
    %16 = arith.addf %13, %15 : vector<2x512xf32>
    %17 = math.tanh %16 : vector<2x512xf32>
    %18 = arith.truncf %17 : vector<2x512xf32> to vector<2x512xbf16>
    %c0_15 = arith.constant 0 : index
    %c0_16 = arith.constant 0 : index
    %19 = vector.load %arg8[%c0_15, %c0_16] : memref<512x128xbf16, #tpu.memory_space<vmem>>, vector<512x128xbf16>
    %cst_17 = arith.constant dense<0.000000e+00> : vector<2x128xf32>
    %20 = tpu.matmul %18, %19, %cst_17 {dimension_numbers = #tpu.dot_dimension_numbers<[1], [0], [0], [1], [0, 0, 1, 1], [], []>} : vector<2x512xbf16>, vector<512x128xbf16>, vector<2x128xf32> -> vector<2x128xf32>
    %c0_18 = arith.constant 0 : index
    %c0_19 = arith.constant 0 : index
    %21 = vector.load %arg9[%c0_18, %c0_19] : memref<1x128xf32, #tpu.memory_space<vmem>>, vector<1x128xf32>
    %22 = vector.broadcast %21 : vector<1x128xf32> to vector<2x128xf32>
    %23 = arith.addf %20, %22 : vector<2x128xf32>
    %c0_20 = arith.constant 0 : index
    %c0_21 = arith.constant 0 : index
    %24 = vector.load %arg10[%c0_20, %c0_21] : memref<2x128xf32, #tpu.memory_space<vmem>>, vector<2x128xf32>
    tpu.vector_store %arg10[%c0_20, %c0_21], %23 {strides = array<i32>} : memref<2x128xf32, #tpu.memory_space<vmem>>, vector<2x128xf32>,
    return
  }
  func.func @transform_0(%arg0: i32) -> (i32, i32) {
    %c0_i32 = arith.constant 0 : i32
    %c0_i32_0 = arith.constant 0 : i32
    return %arg0, %c0_i32 : i32, i32
  }
  func.func @transform_1(%arg0: i32) -> (i32, i32) {
    %c0_i32 = arith.constant 0 : i32
    %c0_i32_0 = arith.constant 0 : i32
    return %arg0, %c0_i32 : i32, i32
  }
  func.func @transform_2(%arg0: i32) -> (i32, i32) {
    %c0_i32 = arith.constant 0 : i32
    %c0_i32_0 = arith.constant 0 : i32
    %c0_i32_1 = arith.constant 0 : i32
    return %c0_i32, %c0_i32_0 : i32, i32
  }
  func.func @transform_3(%arg0: i32) -> (i32, i32) {
    %c0_i32 = arith.constant 0 : i32
    %c0_i32_0 = arith.constant 0 : i32
    %c0_i32_1 = arith.constant 0 : i32
    return %c0_i32, %c0_i32_0 : i32, i32
  }
  func.func @transform_4(%arg0: i32) -> (i32, i32) {
    %c0_i32 = arith.constant 0 : i32
    %c0_i32_0 = arith.constant 0 : i32
    %c0_i32_1 = arith.constant 0 : i32
    return %c0_i32, %c0_i32_0 : i32, i32
  }
  func.func @transform_5(%arg0: i32) -> (i32, i32) {
    %c0_i32 = arith.constant 0 : i32
    %c0_i32_0 = arith.constant 0 : i32
    %c0_i32_1 = arith.constant 0 : i32
    return %c0_i32, %c0_i32_0 : i32, i32
  }
  func.func @transform_6(%arg0: i32) -> (i32, i32) {
    %c0_i32 = arith.constant 0 : i32
    %c0_i32_0 = arith.constant 0 : i32
    %c0_i32_1 = arith.constant 0 : i32
    return %c0_i32, %c0_i32_0 : i32, i32
  }
  func.func @transform_7(%arg0: i32) -> (i32, i32) {
    %c0_i32 = arith.constant 0 : i32
    %c0_i32_0 = arith.constant 0 : i32
    %c0_i32_1 = arith.constant 0 : i32
    return %c0_i32, %c0_i32_0 : i32, i32
  }
  func.func @transform_8(%arg0: i32) -> (i32, i32) {
    %c0_i32 = arith.constant 0 : i32
    %c0_i32_0 = arith.constant 0 : i32
    %c0_i32_1 = arith.constant 0 : i32
    return %c0_i32, %c0_i32_0 : i32, i32
  }
  func.func @transform_9(%arg0: i32) -> (i32, i32) {
    %c0_i32 = arith.constant 0 : i32
    %c0_i32_0 = arith.constant 0 : i32
    return %arg0, %c0_i32 : i32, i32
  }
}

</mosaic_0001>

<llo_original>
// kernel: critic_forward.4
$region0: #{critic_forward.4}
  #allocation0 [shape = 'u32[]', space=smem, size = 0x4, offset = 0x4, fixed_abs, tag = 'smem constant byte address 0x4 - core index']
  #allocation1 [shape = 'u32[72,128]{1,0:T(1,128)}', space=vmem, size = 0x9000, scoped, tag = 'internal scratch']
  %s0 = inlined_call_operand.vmem [shape: bf16[1024,192], index: 0, kind: input, shape index: {}]
  %s1 = inlined_call_operand.vmem [shape: bf16[192,128], index: 1, kind: input, shape index: {}]
  %s2 = inlined_call_operand.vmem [shape: f32[1,128], index: 2, kind: input, shape index: {}]
  %s3 = inlined_call_operand.vmem [shape: f32[1024,128], index: 3, kind: output, shape index: {}]
  %s4 = sld [smem:[#allocation0]]
  $region45: #{critic_forward.4} parent=0
    _
  %s6 = ssub.s32 1, %s4
  %s7 = scalar_select 0, %s6, %s4
  loop: start=0, step=1, limit=6
  $region2: #{critic_forward.4} parent=0 // loop_pre_header
    _
  $region3: #{critic_forward.4} parent=0 // loop_header
    %s9 = sphi 0, %s13
    %p10 = scmp.ge.s32.totalorder %s9, 6
    %s19 = sphi 0, %s21
    %s22 = sphi 0, %s19
    %s23 = sphi 0, %s22
    %s39 = sphi 0, %s23
    %s43 = sphi 0, %s43
    %s45 = sphi 0, %s43
    %s46 = sphi 0, %s45
    %s60 = sphi 0, %s46
    %s64 = sphi 0, %s64
    %s66 = sphi 0, %s64
    %s67 = sphi 0, %s66
    %s81 = sphi 0, %s67
    %s87 = sphi 0, %s89
    %s90 = sphi 0, %s87
    %s91 = sphi 0, %s90
    %s107 = sphi 0, %s91
  $region4: #{critic_forward.4} parent=0 // loop_header_branch
    %12 = sbr.rel (%p10) target = $region8
  $region5: #{critic_forward.4} parent=0 // loop_body
    %s14 = ssub.s32 %s9, 1
    %s15 = ssub.s32 %s9, 2
    %s16 = sadd.s32 %s9, 1
    %s17 = ssub.s32 %s9, %s16
    %p18 = scmp.eq.s32.totalorder %s17, 0
    %s20 = sadd.s32 %s19, 1
    %s21 = scalar_select %p18, %s19, %s20
    %p24 = pneg %p18
    %p25 = scmp.eq.s32.totalorder %s9, 3
    %p26 = por %p24, %p25
    %p27 = scmp.ne.s32.totalorder %s19, %s22
    %p28 = scmp.eq.s32.totalorder %s9, 0
    %p29 = por %p27, %p28
    %p30 = scmp.ne.s32.totalorder %s19, %s22
    %p31 = scmp.eq.s32.totalorder %s14, 3
    %p32 = por %p30, %p31
    %p33 = scmp.ne.s32.totalorder %s22, %s23
    %p34 = scmp.eq.s32.totalorder %s14, 0
    %p35 = por %p33, %p34
    %p36 = scmp.ne.s32.totalorder %s22, %s23
    %p37 = scmp.eq.s32.totalorder %s15, 3
    %p38 = por %p36, %p37
    %p40 = scmp.ne.s32.totalorder %s23, %s39
    %p41 = scmp.eq.s32.totalorder %s15, 0
    %p42 = por %p40, %p41
    %s44 = sadd.s32 %s43, 1
    %p47 = scmp.eq.s32.totalorder %s9, 3
    %p48 = scmp.ne.s32.totalorder %s43, %s45
    %p49 = scmp.eq.s32.totalorder %s9, 0
    %p50 = por %p48, %p49
    %p51 = scmp.ne.s32.totalorder %s43, %s45
    %p52 = scmp.eq.s32.totalorder %s14, 3
    %p53 = por %p51, %p52
    %p54 = scmp.ne.s32.totalorder %s45, %s46
    %p55 = scmp.eq.s32.totalorder %s14, 0
    %p56 = por %p54, %p55
    %p57 = scmp.ne.s32.totalorder %s45, %s46
    %p58 = scmp.eq.s32.totalorder %s15, 3
    %p59 = por %p57, %p58
    %p61 = scmp.ne.s32.totalorder %s46, %s60
    %p62 = scmp.eq.s32.totalorder %s15, 0
    %p63 = por %p61, %p62
    %s65 = sadd.s32 %s64, 1
    %p68 = scmp.eq.s32.totalorder %s9, 3
    %p69 = scmp.ne.s32.totalorder %s64, %s66
    %p70 = scmp.eq.s32.totalorder %s9, 0
    %p71 = por %p69, %p70
    %p72 = scmp.ne.s32.totalorder %s64, %s66
    %p73 = scmp.eq.s32.totalorder %s14, 3
    %p74 = por %p72, %p73
    %p75 = scmp.ne.s32.totalorder %s66, %s67
    %p76 = scmp.eq.s32.totalorder %s14, 0
    %p77 = por %p75, %p76
    %p78 = scmp.ne.s32.totalorder %s66, %s67
    %p79 = scmp.eq.s32.totalorder %s15, 3
    %p80 = por %p78, %p79
    %p82 = scmp.ne.s32.totalorder %s67, %s81
    %p83 = scmp.eq.s32.totalorder %s15, 0
    %p84 = por %p82, %p83
    %s85 = ssub.s32 %s9, %s16
    %p86 = scmp.eq.s32.totalorder %s85, 0
    %s88 = sadd.s32 %s87, 1
    %s89 = scalar_select %p86, %s87, %s88
    %p92 = pneg %p86
    %p93 = scmp.eq.s32.totalorder %s9, 3
    %p94 = por %p92, %p93
    %p95 = scmp.ne.s32.totalorder %s87, %s90
    %p96 = scmp.eq.s32.totalorder %s9, 0
    %p97 = por %p95, %p96
    %p98 = scmp.ne.s32.totalorder %s87, %s90
    %p99 = scmp.eq.s32.totalorder %s14, 3
    %p100 = por %p98, %p99
    %p101 = scmp.ne.s32.totalorder %s90, %s91
    %p102 = scmp.eq.s32.totalorder %s14, 0
    %p103 = por %p101, %p102
    %p104 = scmp.ne.s32.totalorder %s90, %s91
    %p105 = scmp.eq.s32.totalorder %s15, 3
    %p106 = por %p104, %p105
    %p108 = scmp.ne.s32.totalorder %s91, %s107
    %p109 = scmp.eq.s32.totalorder %s15, 0
    %p110 = por %p108, %p109
    %p111 = scmp.le.s32.totalorder 1, %s9
    %p112 = scmp.lt.s32.totalorder %s9, 5
    %p113 = pnand %p111, %p112
    %p114 = pneg %p113
    // Predicated region
    $region9: #{critic_forward.4} parent=5 // pred_check
      _
    $region10: #{critic_forward.4} parent=5 // pred_check_branch
      %116 = sbr.rel (%p113) target = $region12
    $region11: #{critic_forward.4} parent=5 // pred_region
      %s117 = ssub.s32 %s9, 1
      // Predicated region
      $region13: #{critic_forward.4} parent=11 // pred_check
        %p118 = pneg %p56
      $region14: #{critic_forward.4} parent=11 // pred_check_branch
        %120 = sbr.rel (%p118) target = $region16
      $region15: #{critic_forward.4} parent=11 // pred_region
        _
      $region16: #{critic_forward.4} parent=11 // pred_fallthru
        _
      // Predicated region
      $region17: #{critic_forward.4} parent=11 // pred_check
        %p121 = pneg %p77
      $region18: #{critic_forward.4} parent=11 // pred_check_branch
        %123 = sbr.rel (%p121) target = $region20
      $region19: #{critic_forward.4} parent=11 // pred_region
        _
      $region20: #{critic_forward.4} parent=11 // pred_fallthru
        _
    $region12: #{critic_forward.4} parent=5 // pred_fallthru
      _
    %p124 = scmp.lt.s32.totalorder %s9, 4
    // Predicated region
    $region21: #{critic_forward.4} parent=5 // pred_check
      %p125 = pneg %p124
    $region22: #{critic_forward.4} parent=5 // pred_check_branch
      %127 = sbr.rel (%p125) target = $region24
    $region23: #{critic_forward.4} parent=5 // pred_region
      // Predicated region
      $region25: #{critic_forward.4} parent=23 // pred_check
        %p128 = pneg %p29
      $region26: #{critic_forward.4} parent=23 // pred_check_branch
        %130 = sbr.rel (%p128) target = $region28
      $region27: #{critic_forward.4} parent=23 // pred_region
        %s131 = smul.u32 32, %s9
        %p132 = scmp.lt.s32.totalorder %s131, 127
        %s133 = scalar_select %p132, %s131, 127
        %s134 = smul.addr %s133, 2
        %s135 = smul.addr %s134, 4
        %s136 = scalar_lea.vmem %s0, %s135
        %s137 = smul.u32 32, %s9
      $region28: #{critic_forward.4} parent=23 // pred_fallthru
        _
    $region24: #{critic_forward.4} parent=5 // pred_fallthru
      _
    %p138 = scmp.le.s32.totalorder 1, %s9
    %p139 = scmp.lt.s32.totalorder %s9, 5
    %p140 = pnand %p138, %p139
    %p141 = pneg %p140
    // Predicated region
    $region29: #{critic_forward.4} parent=5 // pred_check
      _
    $region30: #{critic_forward.4} parent=5 // pred_check_branch
      %143 = sbr.rel (%p140) target = $region32
    $region31: #{critic_forward.4} parent=5 // pred_region
      %s144 = ssub.s32 %s9, 1
      %s145 = smul.u32 32, %s14
      %p146 = scmp.lt.s32.totalorder %s145, 127
      %s147 = scalar_select %p146, %s145, 127
      %s148 = smul.addr %s147, 2
      %s149 = smul.addr %s148, 4
      %s150 = scalar_lea.vmem %s0, %s149
      %p151 = pneg %p35
      %p152 = pneg %p32
      %p153 = pneg %p56
      %p154 = pneg %p53
      %p155 = pneg %p77
      %p156 = pneg %p74
      %p157 = pneg %p103
      %p158 = pneg %p100
      %s159 = smul.u32 32, %s14
      %p160 = scmp.lt.s32.totalorder %s159, 127
      %s161 = scalar_select %p160, %s159, 127
      %s162 = smul.addr %s161, 8
      %s163 = scalar_lea.vmem %s3, %s162
      %s164 = smul.u32 32, %s14
      %p165 = scmp.lt.s32.totalorder %s164, 127
      %s166 = scalar_select %p165, %s164, 127
      %s167 = smul.addr %s166, 2
      %s168 = smul.addr %s167, 4
      %s169 = scalar_lea.vmem %s0, %s168
      %s170 = smul.u32 32, %s14
      %s171 = smul.u32 32, %s14
      %p172 = scmp.lt.s32.totalorder %s171, 127
      %s173 = scalar_select %p172, %s171, 127
      %s174 = smul.addr %s173, 8
      %s175 = scalar_lea.vmem %s3, %s174
      %s176 = smul.u32 32, %s14
      %v178 = vld [vmem:[%s169] sm:$0xff]
      %v179 = vld [vmem:[%s169 + $0x8] sm:$0xff]
      %v180 = vld [vmem:[%s169 + $0x10] sm:$0xff]
      %v181 = vld [vmem:[%s169 + $0x18] sm:$0xff]
      %v182 = vld [vmem:[%s169 + $0x20] sm:$0xff]
      %v183 = vld [vmem:[%s169 + $0x28] sm:$0xff]
      %v184 = vld [vmem:[%s169 + $0x30] sm:$0xff]
      %v185 = vld [vmem:[%s169 + $0x38] sm:$0xff]
      %v186 = vld [vmem:[%s169 + $0x40] sm:$0xff]
      %v187 = vld [vmem:[%s169 + $0x48] sm:$0xff]
      %v188 = vld [vmem:[%s169 + $0x50] sm:$0xff]
      %v189 = vld [vmem:[%s169 + $0x58] sm:$0xff]
      %v190 = vld [vmem:[%s169 + $0x60] sm:$0xff]
      %v191 = vld [vmem:[%s169 + $0x68] sm:$0xff]
      %v192 = vld [vmem:[%s169 + $0x70] sm:$0xff]
      %v193 = vld [vmem:[%s169 + $0x78] sm:$0xff]
      %v194 = vld [vmem:[%s169 + $0x80] sm:$0xff]
      %v195 = vld [vmem:[%s169 + $0x88] sm:$0xff]
      %v196 = vld [vmem:[%s169 + $0x90] sm:$0xff]
      %v197 = vld [vmem:[%s169 + $0x98] sm:$0xff]
      %v198 = vld [vmem:[%s169 + $0xa0] sm:$0xff]
      %v199 = vld [vmem:[%s169 + $0xa8] sm:$0xff]
      %v200 = vld [vmem:[%s169 + $0xb0] sm:$0xff]
      %v201 = vld [vmem:[%s169 + $0xb8] sm:$0xff]
      %v202 = vld [vmem:[%s169 + $0xc0] sm:$0xff]
      %v203 = vld [vmem:[%s169 + $0xc8] sm:$0xff]
      %v204 = vld [vmem:[%s169 + $0xd0] sm:$0xff]
      %v205 = vld [vmem:[%s169 + $0xd8] sm:$0xff]
      %v206 = vld [vmem:[%s169 + $0xe0] sm:$0xff]
      %v207 = vld [vmem:[%s169 + $0xe8] sm:$0xff]
      %v208 = vld [vmem:[%s169 + $0xf0] sm:$0xff]
      %v209 = vld [vmem:[%s169 + $0xf8] sm:$0xff]
      %v210 = vld [vmem:[%s1] sm:$0xf]
      %v211 = vld [vmem:[%s1 + $0x4] sm:$0xf]
      %v212 = vld [vmem:[%s1 + $0x8] sm:$0xf]
      %v213 = vld [vmem:[%s1 + $0xc] sm:$0xf]
      %v214 = vld [vmem:[%s1 + $0x10] sm:$0xf]
      %v215 = vld [vmem:[%s1 + $0x14] sm:$0xf]
      %v216 = vld [vmem:[%s1 + $0x18] sm:$0xf]
      %v217 = vld [vmem:[%s1 + $0x1c] sm:$0xf]
      %v218 = vld [vmem:[%s1 + $0x20] sm:$0xf]
      %v219 = vld [vmem:[%s1 + $0x24] sm:$0xf]
      %v220 = vld [vmem:[%s1 + $0x28] sm:$0xf]
      %v221 = vld [vmem:[%s1 + $0x2c] sm:$0xf]
      %v222 = vld [vmem:[%s1 + $0x30] sm:$0xf]
      %v223 = vld [vmem:[%s1 + $0x34] sm:$0xf]
      %v224 = vld [vmem:[%s1 + $0x38] sm:$0xf]
      %v225 = vld [vmem:[%s1 + $0x3c] sm:$0xf]
      %v226 = vld [vmem:[%s1 + $0x40] sm:$0xf]
      %v227 = vld [vmem:[%s1 + $0x44] sm:$0xf]
      %v228 = vld [vmem:[%s1 + $0x48] sm:$0xf]
      %v229 = vld [vmem:[%s1 + $0x4c] sm:$0xf]
      %v230 = vld [vmem:[%s1 + $0x50] sm:$0xf]
      %v231 = vld [vmem:[%s1 + $0x54] sm:$0xf]
      %v232 = vld [vmem:[%s1 + $0x58] sm:$0xf]
      %v233 = vld [vmem:[%s1 + $0x5c] sm:$0xf]
      %v234 = vld [vmem:[%s2] sm:$0x1]
      %v236 = vperm.slane %v234, 0
      %v270 = vunpack.c.l.b16 %v178
      %v271 = vunpack.c.h.b16 %v178
      %v272 = vunpack.c.l.b16 %v179
      %v273 = vunpack.c.h.b16 %v179
      %v274 = vunpack.c.l.b16 %v180
      %v275 = vunpack.c.h.b16 %v180
      %v276 = vunpack.c.l.b16 %v181
      %v277 = vunpack.c.h.b16 %v181
      %v278 = vunpack.c.l.b16 %v182
      %v279 = vunpack.c.h.b16 %v182
      %v280 = vunpack.c.l.b16 %v183
      %v281 = vunpack.c.h.b16 %v183
      %v282 = vunpack.c.l.b16 %v184
      %v283 = vunpack.c.h.b16 %v184
      %v284 = vunpack.c.l.b16 %v185
      %v285 = vunpack.c.h.b16 %v185
      %v286 = vunpack.c.l.b16 %v186
      %v287 = vunpack.c.h.b16 %v186
      %v288 = vunpack.c.l.b16 %v187
      %v289 = vunpack.c.h.b16 %v187
      %v290 = vunpack.c.l.b16 %v188
      %v291 = vunpack.c.h.b16 %v188
      %v292 = vunpack.c.l.b16 %v189
      %v293 = vunpack.c.h.b16 %v189
      %v294 = vunpack.c.l.b16 %v190
      %v295 = vunpack.c.h.b16 %v190
      %v296 = vunpack.c.l.b16 %v191
      %v297 = vunpack.c.h.b16 %v191
      %v298 = vunpack.c.l.b16 %v192
      %v299 = vunpack.c.h.b16 %v192
      %v300 = vunpack.c.l.b16 %v193
      %v301 = vunpack.c.h.b16 %v193
      %v302 = vunpack.c.l.b16 %v194
      %v303 = vunpack.c.h.b16 %v194
      %v304 = vunpack.c.l.b16 %v195
      %v305 = vunpack.c.h.b16 %v195
      %v306 = vunpack.c.l.b16 %v196
      %v307 = vunpack.c.h.b16 %v196
      %v308 = vunpack.c.l.b16 %v197
      %v309 = vunpack.c.h.b16 %v197
      %v310 = vunpack.c.l.b16 %v198
      %v311 = vunpack.c.h.b16 %v198
      %v312 = vunpack.c.l.b16 %v199
      %v313 = vunpack.c.h.b16 %v199
      %v314 = vunpack.c.l.b16 %v200
      %v315 = vunpack.c.h.b16 %v200
      %v316 = vunpack.c.l.b16 %v201
      %v317 = vunpack.c.h.b16 %v201
      %v318 = vunpack.c.l.b16 %v202
      %v319 = vunpack.c.h.b16 %v202
      %v320 = vunpack.c.l.b16 %v203
      %v321 = vunpack.c.h.b16 %v203
      %v322 = vunpack.c.l.b16 %v204
      %v323 = vunpack.c.h.b16 %v204
      %v324 = vunpack.c.l.b16 %v205
      %v325 = vunpack.c.h.b16 %v205
      %v326 = vunpack.c.l.b16 %v206
      %v327 = vunpack.c.h.b16 %v206
      %v328 = vunpack.c.l.b16 %v207
      %v329 = vunpack.c.h.b16 %v207
      %v330 = vunpack.c.l.b16 %v208
      %v331 = vunpack.c.h.b16 %v208
      %v332 = vunpack.c.l.b16 %v209
      %v333 = vunpack.c.h.b16 %v209
      %v334 = vpack.c.b16 %v272, %v270
      %v335 = vpack.c.b16 %v273, %v271
      %v336 = vpack.c.b16 %v276, %v274
      %v337 = vpack.c.b16 %v277, %v275
      %v338 = vpack.c.b16 %v280, %v278
      %v339 = vpack.c.b16 %v281, %v279
      %v340 = vpack.c.b16 %v284, %v282
      %v341 = vpack.c.b16 %v285, %v283
      %v342 = vpack.c.b16 %v288, %v286
      %v343 = vpack.c.b16 %v289, %v287
      %v344 = vpack.c.b16 %v292, %v290
      %v345 = vpack.c.b16 %v293, %v291
      %v346 = vpack.c.b16 %v296, %v294
      %v347 = vpack.c.b16 %v297, %v295
      %v348 = vpack.c.b16 %v300, %v298
      %v349 = vpack.c.b16 %v301, %v299
      %v350 = vpack.c.b16 %v304, %v302
      %v351 = vpack.c.b16 %v305, %v303
      %v352 = vpack.c.b16 %v308, %v306
      %v353 = vpack.c.b16 %v309, %v307
      %v354 = vpack.c.b16 %v312, %v310
      %v355 = vpack.c.b16 %v313, %v311
      %v356 = vpack.c.b16 %v316, %v314
      %v357 = vpack.c.b16 %v317, %v315
      %v358 = vpack.c.b16 %v320, %v318
      %v359 = vpack.c.b16 %v321, %v319
      %v360 = vpack.c.b16 %v324, %v322
      %v361 = vpack.c.b16 %v325, %v323
      %v362 = vpack.c.b16 %v328, %v326
      %v363 = vpack.c.b16 %v329, %v327
      %v364 = vpack.c.b16 %v332, %v330
      %v365 = vpack.c.b16 %v333, %v331
      %v406 = vunpack.c.l.b16 %v210
      %v407 = vunpack.c.l.b16 %v211
      %v408 = vunpack.c.l.b16 %v212
      %v409 = vunpack.c.l.b16 %v213
      %v410 = vunpack.c.l.b16 %v214
      %v411 = vunpack.c.l.b16 %v215
      %v412 = vunpack.c.l.b16 %v216
      %v413 = vunpack.c.l.b16 %v217
      %v414 = vunpack.c.l.b16 %v218
      %v415 = vunpack.c.l.b16 %v219
      %v416 = vunpack.c.l.b16 %v220
      %v417 = vunpack.c.l.b16 %v221
      %v418 = vunpack.c.l.b16 %v222
      %v419 = vunpack.c.l.b16 %v223
      %v420 = vunpack.c.l.b16 %v224
      %v421 = vunpack.c.l.b16 %v225
      %v422 = vunpack.c.l.b16 %v226
      %v423 = vunpack.c.l.b16 %v227
      %v424 = vunpack.c.l.b16 %v228
      %v425 = vunpack.c.l.b16 %v229
      %v426 = vunpack.c.l.b16 %v230
      %v427 = vunpack.c.l.b16 %v231
      %v428 = vunpack.c.l.b16 %v232
      %v429 = vunpack.c.l.b16 %v233
      %v430 = vpack.c.b16 %v407, %v406
      %v431 = vpack.c.b16 %v409, %v408
      %v432 = vpack.c.b16 %v411, %v410
      %v433 = vpack.c.b16 %v413, %v412
      %v434 = vpack.c.b16 %v415, %v414
      %v435 = vpack.c.b16 %v417, %v416
      %v436 = vpack.c.b16 %v419, %v418
      %v437 = vpack.c.b16 %v421, %v420
      %v438 = vpack.c.b16 %v423, %v422
      %v439 = vpack.c.b16 %v425, %v424
      %v440 = vpack.c.b16 %v427, %v426
      %v441 = vpack.c.b16 %v429, %v428
      %vm454 = vcmask 523264
      %v456 = vsel %vm454, %v335, 0
      %v459 = vsel %vm454, %v337, 0
      %v462 = vsel %vm454, %v339, 0
      %v465 = vsel %vm454, %v341, 0
      %v468 = vsel %vm454, %v343, 0
      %v471 = vsel %vm454, %v345, 0
      %v474 = vsel %vm454, %v347, 0
      %v477 = vsel %vm454, %v349, 0
      %v480 = vsel %vm454, %v351, 0
      %v483 = vsel %vm454, %v353, 0
      %v486 = vsel %vm454, %v355, 0
      %v489 = vsel %vm454, %v357, 0
      %v492 = vsel %vm454, %v359, 0
      %v495 = vsel %vm454, %v361, 0
      %v498 = vsel %vm454, %v363, 0
      %v501 = vsel %vm454, %v365, 0
      %503 = vmatpush.bf16.msra.mxu0 %v437
      %504 = vmatpush.bf16.msra.mxu0 %v436
      %505 = vmatpush.bf16.msra.mxu0 %v435
      %506 = vmatpush.bf16.msra.mxu0 %v434
      %507 = vmatpush.bf16.msra.mxu0 %v433
      %508 = vmatpush.bf16.msra.mxu0 %v432
      %509 = vmatpush.bf16.msra.mxu0 %v431
      %510 = vmatpush.bf16.msra.mxu0 %v430
      %511 = vmatmul.bf16.gmra.mxu0 %v334
      %v512 = vpop.f32.mrf.mxu0
      %v513 = vadd.f32 %v236, %v512
      %v514 = vpop.f32.mrf.mxu0
      %v515 = vadd.f32 %v236, %v514
      %516 = vmatmul.bf16.gmra.mxu0 %v336
      %v517 = vpop.f32.mrf.mxu0
      %v518 = vadd.f32 %v236, %v517
      %v519 = vpop.f32.mrf.mxu0
      %v520 = vadd.f32 %v236, %v519
      %521 = vmatmul.bf16.gmra.mxu0 %v338
      %v522 = vpop.f32.mrf.mxu0
      %v523 = vadd.f32 %v236, %v522
      %v524 = vpop.f32.mrf.mxu0
      %v525 = vadd.f32 %v236, %v524
      %526 = vmatmul.bf16.gmra.mxu0 %v340
      %v527 = vpop.f32.mrf.mxu0
      %v528 = vadd.f32 %v236, %v527
      %v529 = vpop.f32.mrf.mxu0
      %v530 = vadd.f32 %v236, %v529
      %531 = vmatmul.bf16.gmra.mxu0 %v342
      %v532 = vpop.f32.mrf.mxu0
      %v533 = vadd.f32 %v236, %v532
      %v534 = vpop.f32.mrf.mxu0
      %v535 = vadd.f32 %v236, %v534
      %536 = vmatmul.bf16.gmra.mxu0 %v344
      %v537 = vpop.f32.mrf.mxu0
      %v538 = vadd.f32 %v236, %v537
      %v539 = vpop.f32.mrf.mxu0
      %v540 = vadd.f32 %v236, %v539
      %541 = vmatmul.bf16.gmra.mxu0 %v346
      %v542 = vpop.f32.mrf.mxu0
      %v543 = vadd.f32 %v236, %v542
      %v544 = vpop.f32.mrf.mxu0
      %v545 = vadd.f32 %v236, %v544
      %546 = vmatmul.bf16.gmra.mxu0 %v348
      %v547 = vpop.f32.mrf.mxu0
      %v548 = vadd.f32 %v236, %v547
      %v549 = vpop.f32.mrf.mxu0
      %v550 = vadd.f32 %v236, %v549
      %551 = vmatmul.bf16.gmra.mxu0 %v350
      %v552 = vpop.f32.mrf.mxu0
      %v553 = vadd.f32 %v236, %v552
      %v554 = vpop.f32.mrf.mxu0
      %v555 = vadd.f32 %v236, %v554
      %556 = vmatmul.bf16.gmra.mxu0 %v352
      %v557 = vpop.f32.mrf.mxu0
      %v558 = vadd.f32 %v236, %v557
      %v559 = vpop.f32.mrf.mxu0
      %v560 = vadd.f32 %v236, %v559
      %561 = vmatmul.bf16.gmra.mxu0 %v354
      %v562 = vpop.f32.mrf.mxu0
      %v563 = vadd.f32 %v236, %v562
      %v564 = vpop.f32.mrf.mxu0
      %v565 = vadd.f32 %v236, %v564
      %566 = vmatmul.bf16.gmra.mxu0 %v356
      %v567 = vpop.f32.mrf.mxu0
      %v568 = vadd.f32 %v236, %v567
      %v569 = vpop.f32.mrf.mxu0
      %v570 = vadd.f32 %v236, %v569
      %571 = vmatmul.bf16.gmra.mxu0 %v358
      %v572 = vpop.f32.mrf.mxu0
      %v573 = vadd.f32 %v236, %v572
      %v574 = vpop.f32.mrf.mxu0
      %v575 = vadd.f32 %v236, %v574
      %576 = vmatmul.bf16.gmra.mxu0 %v360
      %v577 = vpop.f32.mrf.mxu0
      %v578 = vadd.f32 %v236, %v577
      %v579 = vpop.f32.mrf.mxu0
      %v580 = vadd.f32 %v236, %v579
      %581 = vmatmul.bf16.gmra.mxu0 %v362
      %v582 = vpop.f32.mrf.mxu0
      %v583 = vadd.f32 %v236, %v582
      %v584 = vpop.f32.mrf.mxu0
      %v585 = vadd.f32 %v236, %v584
      %586 = vmatmul.bf16.gmra.mxu0 %v364
      %v587 = vpop.f32.mrf.mxu0
      %v588 = vadd.f32 %v236, %v587
      %v589 = vpop.f32.mrf.mxu0
      %v590 = vadd.f32 %v236, %v589
      %591 = vdwg.mxu0
      %592 = vmatpush.bf16.msra.mxu0 0
      %593 = vmatpush.bf16.msra.mxu0 0
      %594 = vmatpush.bf16.msra.mxu0 0
      %595 = vmatpush.bf16.msra.mxu0 0
      %596 = vmatpush.bf16.msra.mxu0 %v441
      %597 = vmatpush.bf16.msra.mxu0 %v440
      %598 = vmatpush.bf16.msra.mxu0 %v439
      %599 = vmatpush.bf16.msra.mxu0 %v438
      %600 = vmatmul.bf16.gmra.mxu0 %v456
      %v601 = vpop.f32.mrf.mxu0
      %v602 = vadd.f32 %v513, %v601
      %v603 = vpop.f32.mrf.mxu0
      %v604 = vadd.f32 %v515, %v603
      %605 = vmatmul.bf16.gmra.mxu0 %v459
      %v606 = vpop.f32.mrf.mxu0
      %v607 = vadd.f32 %v518, %v606
      %v608 = vpop.f32.mrf.mxu0
      %v609 = vadd.f32 %v520, %v608
      %610 = vmatmul.bf16.gmra.mxu0 %v462
      %v611 = vpop.f32.mrf.mxu0
      %v612 = vadd.f32 %v523, %v611
      %v613 = vpop.f32.mrf.mxu0
      %v614 = vadd.f32 %v525, %v613
      %615 = vmatmul.bf16.gmra.mxu0 %v465
      %v616 = vpop.f32.mrf.mxu0
      %v617 = vadd.f32 %v528, %v616
      %v618 = vpop.f32.mrf.mxu0
      %v619 = vadd.f32 %v530, %v618
      %620 = vmatmul.bf16.gmra.mxu0 %v468
      %v621 = vpop.f32.mrf.mxu0
      %v622 = vadd.f32 %v533, %v621
      %v623 = vpop.f32.mrf.mxu0
      %v624 = vadd.f32 %v535, %v623
      %625 = vmatmul.bf16.gmra.mxu0 %v471
      %v626 = vpop.f32.mrf.mxu0
      %v627 = vadd.f32 %v538, %v626
      %v628 = vpop.f32.mrf.mxu0
      %v629 = vadd.f32 %v540, %v628
      %630 = vmatmul.bf16.gmra.mxu0 %v474
      %v631 = vpop.f32.mrf.mxu0
      %v632 = vadd.f32 %v543, %v631
      %v633 = vpop.f32.mrf.mxu0
      %v634 = vadd.f32 %v545, %v633
      %635 = vmatmul.bf16.gmra.mxu0 %v477
      %v636 = vpop.f32.mrf.mxu0
      %v637 = vadd.f32 %v548, %v636
      %v638 = vpop.f32.mrf.mxu0
      %v639 = vadd.f32 %v550, %v638
      %640 = vmatmul.bf16.gmra.mxu0 %v480
      %v641 = vpop.f32.mrf.mxu0
      %v642 = vadd.f32 %v553, %v641
      %v643 = vpop.f32.mrf.mxu0
      %v644 = vadd.f32 %v555, %v643
      %645 = vmatmul.bf16.gmra.mxu0 %v483
      %v646 = vpop.f32.mrf.mxu0
      %v647 = vadd.f32 %v558, %v646
      %v648 = vpop.f32.mrf.mxu0
      %v649 = vadd.f32 %v560, %v648
      %650 = vmatmul.bf16.gmra.mxu0 %v486
      %v651 = vpop.f32.mrf.mxu0
      %v652 = vadd.f32 %v563, %v651
      %v653 = vpop.f32.mrf.mxu0
      %v654 = vadd.f32 %v565, %v653
      %655 = vmatmul.bf16.gmra.mxu0 %v489
      %v656 = vpop.f32.mrf.mxu0
      %v657 = vadd.f32 %v568, %v656
      %v658 = vpop.f32.mrf.mxu0
      %v659 = vadd.f32 %v570, %v658
      %660 = vmatmul.bf16.gmra.mxu0 %v492
      %v661 = vpop.f32.mrf.mxu0
      %v662 = vadd.f32 %v573, %v661
      %v663 = vpop.f32.mrf.mxu0
      %v664 = vadd.f32 %v575, %v663
      %665 = vmatmul.bf16.gmra.mxu0 %v495
      %v666 = vpop.f32.mrf.mxu0
      %v667 = vadd.f32 %v578, %v666
      %v668 = vpop.f32.mrf.mxu0
      %v669 = vadd.f32 %v580, %v668
      %670 = vmatmul.bf16.gmra.mxu0 %v498
      %v671 = vpop.f32.mrf.mxu0
      %v672 = vadd.f32 %v583, %v671
      %v673 = vpop.f32.mrf.mxu0
      %v674 = vadd.f32 %v585, %v673
      %675 = vmatmul.bf16.gmra.mxu0 %v501
      %v676 = vpop.f32.mrf.mxu0
      %v677 = vadd.f32 %v588, %v676
      %v678 = vpop.f32.mrf.mxu0
      %v679 = vadd.f32 %v590, %v678
      %680 = vdwg.mxu0
      %v681 = vtanh.pop %v602
      %v682 = vtanh.pop %v604
      %v683 = vtanh.pop %v607
      %v684 = vtanh.pop %v609
      %v685 = vtanh.pop %v612
      %v686 = vtanh.pop %v614
      %v687 = vtanh.pop %v617
      %v688 = vtanh.pop %v619
      %v689 = vtanh.pop %v622
      %v690 = vtanh.pop %v624
      %v691 = vtanh.pop %v627
      %v692 = vtanh.pop %v629
      %v693 = vtanh.pop %v632
      %v694 = vtanh.pop %v634
      %v695 = vtanh.pop %v637
      %v696 = vtanh.pop %v639
      %v697 = vtanh.pop %v642
      %v698 = vtanh.pop %v644
      %v699 = vtanh.pop %v647
      %v700 = vtanh.pop %v649
      %v701 = vtanh.pop %v652
      %v702 = vtanh.pop %v654
      %v703 = vtanh.pop %v657
      %v704 = vtanh.pop %v659
      %v705 = vtanh.pop %v662
      %v706 = vtanh.pop %v664
      %v707 = vtanh.pop %v667
      %v708 = vtanh.pop %v669
      %v709 = vtanh.pop %v672
      %v710 = vtanh.pop %v674
      %v711 = vtanh.pop %v677
      %v712 = vtanh.pop %v679
      %713 = vst [vmem:[%s175] sm:$0xff] %v681
      %714 = vst [vmem:[%s175 + $0x8] sm:$0xff] %v682
      %715 = vst [vmem:[%s175 + $0x10] sm:$0xff] %v683
      %716 = vst [vmem:[%s175 + $0x18] sm:$0xff] %v684
      %717 = vst [vmem:[%s175 + $0x20] sm:$0xff] %v685
      %718 = vst [vmem:[%s175 + $0x28] sm:$0xff] %v686
      %719 = vst [vmem:[%s175 + $0x30] sm:$0xff] %v687
      %720 = vst [vmem:[%s175 + $0x38] sm:$0xff] %v688
      %721 = vst [vmem:[%s175 + $0x40] sm:$0xff] %v689
      %722 = vst [vmem:[%s175 + $0x48] sm:$0xff] %v690
      %723 = vst [vmem:[%s175 + $0x50] sm:$0xff] %v691
      %724 = vst [vmem:[%s175 + $0x58] sm:$0xff] %v692
      %725 = vst [vmem:[%s175 + $0x60] sm:$0xff] %v693
      %726 = vst [vmem:[%s175 + $0x68] sm:$0xff] %v694
      %727 = vst [vmem:[%s175 + $0x70] sm:$0xff] %v695
      %728 = vst [vmem:[%s175 + $0x78] sm:$0xff] %v696
      %729 = vst [vmem:[%s175 + $0x80] sm:$0xff] %v697
      %730 = vst [vmem:[%s175 + $0x88] sm:$0xff] %v698
      %731 = vst [vmem:[%s175 + $0x90] sm:$0xff] %v699
      %732 = vst [vmem:[%s175 + $0x98] sm:$0xff] %v700
      %733 = vst [vmem:[%s175 + $0xa0] sm:$0xff] %v701
      %734 = vst [vmem:[%s175 + $0xa8] sm:$0xff] %v702
      %735 = vst [vmem:[%s175 + $0xb0] sm:$0xff] %v703
      %736 = vst [vmem:[%s175 + $0xb8] sm:$0xff] %v704
      %737 = vst [vmem:[%s175 + $0xc0] sm:$0xff] %v705
      %738 = vst [vmem:[%s175 + $0xc8] sm:$0xff] %v706
      %739 = vst [vmem:[%s175 + $0xd0] sm:$0xff] %v707
      %740 = vst [vmem:[%s175 + $0xd8] sm:$0xff] %v708
      %741 = vst [vmem:[%s175 + $0xe0] sm:$0xff] %v709
      %742 = vst [vmem:[%s175 + $0xe8] sm:$0xff] %v710
      %743 = vst [vmem:[%s175 + $0xf0] sm:$0xff] %v711
      %744 = vst [vmem:[%s175 + $0xf8] sm:$0xff] %v712
      %s745 = smul.u32 32, %s14
      %p746 = scmp.lt.s32.totalorder %s745, 127
      %s747 = scalar_select %p746, %s745, 127
      %s748 = smul.addr %s747, 8
      %s749 = scalar_lea.vmem %s3, %s748
      // Predicated region
      $region33: #{critic_forward.4} parent=31 // pred_check
        %p750 = pneg %p100
      $region34: #{critic_forward.4} parent=31 // pred_check_branch
        %752 = sbr.rel (%p750) target = $region36
      $region35: #{critic_forward.4} parent=31 // pred_region
        %s753 = smul.u32 32, %s14
      $region36: #{critic_forward.4} parent=31 // pred_fallthru
        _
    $region32: #{critic_forward.4} parent=5 // pred_fallthru
      _
    %p754 = scmp.le.s32.totalorder 2, %s9
    // Predicated region
    $region37: #{critic_forward.4} parent=5 // pred_check
      %p755 = pneg %p754
    $region38: #{critic_forward.4} parent=5 // pred_check_branch
      %757 = sbr.rel (%p755) target = $region40
    $region39: #{critic_forward.4} parent=5 // pred_region
      %s758 = ssub.s32 %s9, 2
      // Predicated region
      $region41: #{critic_forward.4} parent=39 // pred_check
        %p759 = pneg %p106
      $region42: #{critic_forward.4} parent=39 // pred_check_branch
        %761 = sbr.rel (%p759) target = $region44
      $region43: #{critic_forward.4} parent=39 // pred_region
        %s762 = smul.u32 32, %s15
        %p763 = scmp.lt.s32.totalorder %s762, 127
        %s764 = scalar_select %p763, %s762, 127
        %s765 = smul.addr %s764, 8
        %s766 = scalar_lea.vmem %s3, %s765
      $region44: #{critic_forward.4} parent=39 // pred_fallthru
        _
    $region40: #{critic_forward.4} parent=5 // pred_fallthru
      _
  $region6: #{critic_forward.4} parent=0 // loop_footer
    %s13 = sadd.s32 1, %s9
  $region7: #{critic_forward.4} parent=0 // loop_footer_branch
    %8 = sbr.rel target = $region3
  $region8: #{critic_forward.4} parent=0 // loop_exit
    _

// kernel: critic_forward.5
$region0: #{critic_forward.5}
  #allocation0 [shape = 'u32[]', space=smem, size = 0x4, offset = 0x4, fixed_abs, tag = 'smem constant byte address 0x4 - core index']
  #allocation1 [shape = 'u32[72,128]{1,0:T(1,128)}', space=vmem, size = 0x9000, scoped, tag = 'internal scratch']
  %s0 = inlined_call_operand.vmem [shape: bf16[162,512], index: 0, kind: input, shape index: {}]
  %s1 = inlined_call_operand.vmem [shape: bf16[512,128], index: 1, kind: input, shape index: {}]
  %s2 = inlined_call_operand.vmem [shape: f32[1,128], index: 2, kind: input, shape index: {}]
  %s3 = inlined_call_operand.vmem [shape: f32[162,128], index: 3, kind: output, shape index: {}]
  %s4 = sld [smem:[#allocation0]]
  $region22: #{critic_forward.5} parent=0
    _
  %s6 = ssub.s32 1, %s4
  %s7 = scalar_select 0, %s6, %s4
  // Predicated region
  $region2: #{critic_forward.5} parent=0 // pred_check
    _
  $region3: #{critic_forward.5} parent=0 // pred_check_branch
    %9 = sbr.rel (0) target = $region5
  $region4: #{critic_forward.5} parent=0 // pred_region
    _
  $region5: #{critic_forward.5} parent=0 // pred_fallthru
    _
  // Predicated region
  $region6: #{critic_forward.5} parent=0 // pred_check
    _
  $region7: #{critic_forward.5} parent=0 // pred_check_branch
    %11 = sbr.rel (0) target = $region9
  $region8: #{critic_forward.5} parent=0 // pred_region
    _
  $region9: #{critic_forward.5} parent=0 // pred_fallthru
    _
  // Predicated region
  $region10: #{critic_forward.5} parent=0 // pred_check
    _
  $region11: #{critic_forward.5} parent=0 // pred_check_branch
    %13 = sbr.rel (0) target = $region13
  $region12: #{critic_forward.5} parent=0 // pred_region
    _
  $region13: #{critic_forward.5} parent=0 // pred_fallthru
    _
  %v14 = vld [vmem:[%s0] sm:$0xff]
  %v15 = vld [vmem:[%s0 + $0x8] sm:$0xff]
  %v16 = vld [vmem:[%s0 + $0x10] sm:$0xff]
  %v17 = vld [vmem:[%s0 + $0x18] sm:$0xff]
  %v18 = vld [vmem:[%s0 + $0x20] sm:$0xff]
  %v19 = vld [vmem:[%s0 + $0x28] sm:$0xff]
  %v20 = vld [vmem:[%s0 + $0x30] sm:$0xff]
  %v21 = vld [vmem:[%s0 + $0x38] sm:$0xff]
  %v22 = vld [vmem:[%s0 + $0x40] sm:$0xff]
  %v23 = vld [vmem:[%s0 + $0x48] sm:$0xff]
  %v24 = vld [vmem:[%s0 + $0x50] sm:$0xff]
  %v25 = vld [vmem:[%s0 + $0x58] sm:$0xff]
  %v26 = vld [vmem:[%s0 + $0x60] sm:$0xff]
  %v27 = vld [vmem:[%s0 + $0x68] sm:$0xff]
  %v28 = vld [vmem:[%s0 + $0x70] sm:$0xff]
  %v29 = vld [vmem:[%s0 + $0x78] sm:$0xff]
  %v30 = vld [vmem:[%s0 + $0x80] sm:$0xff]
  %v31 = vld [vmem:[%s0 + $0x88] sm:$0xff]
  %v32 = vld [vmem:[%s0 + $0x90] sm:$0xff]
  %v33 = vld [vmem:[%s0 + $0x98] sm:$0xff]
  %v34 = vld [vmem:[%s0 + $0xa0] sm:$0xff]
  %v35 = vld [vmem:[%s0 + $0xa8] sm:$0xff]
  %v36 = vld [vmem:[%s0 + $0xb0] sm:$0xff]
  %v37 = vld [vmem:[%s0 + $0xb8] sm:$0xff]
  %v38 = vld [vmem:[%s0 + $0xc0] sm:$0xff]
  %v39 = vld [vmem:[%s0 + $0xc8] sm:$0xff]
  %v40 = vld [vmem:[%s0 + $0xd0] sm:$0xff]
  %v41 = vld [vmem:[%s0 + $0xd8] sm:$0xff]
  %v42 = vld [vmem:[%s0 + $0xe0] sm:$0xff]
  %v43 = vld [vmem:[%s0 + $0xe8] sm:$0xff]
  %v44 = vld [vmem:[%s0 + $0xf0] sm:$0xff]
  %v45 = vld [vmem:[%s0 + $0xf8] sm:$0xff]
  %v46 = vld [vmem:[%s0 + $0x100] sm:$0xff]
  %v47 = vld [vmem:[%s0 + $0x108] sm:$0xff]
  %v48 = vld [vmem:[%s0 + $0x110] sm:$0xff]
  %v49 = vld [vmem:[%s0 + $0x118] sm:$0xff]
  %v50 = vld [vmem:[%s0 + $0x120] sm:$0xff]
  %v51 = vld [vmem:[%s0 + $0x128] sm:$0xff]
  %v52 = vld [vmem:[%s0 + $0x130] sm:$0xff]
  %v53 = vld [vmem:[%s0 + $0x138] sm:$0xff]
  %v54 = vld [vmem:[%s0 + $0x140] sm:$0x11]
  %v55 = vld [vmem:[%s0 + $0x148] sm:$0x11]
  %v56 = vld [vmem:[%s1] sm:$0xf]
  %v57 = vld [vmem:[%s1 + $0x4] sm:$0xf]
  %v58 = vld [vmem:[%s1 + $0x8] sm:$0xf]
  %v59 = vld [vmem:[%s1 + $0xc] sm:$0xf]
  %v60 = vld [vmem:[%s1 + $0x10] sm:$0xf]
  %v61 = vld [vmem:[%s1 + $0x14] sm:$0xf]
  %v62 = vld [vmem:[%s1 + $0x18] sm:$0xf]
  %v63 = vld [vmem:[%s1 + $0x1c] sm:$0xf]
  %v64 = vld [vmem:[%s1 + $0x20] sm:$0xf]
  %v65 = vld [vmem:[%s1 + $0x24] sm:$0xf]
  %v66 = vld [vmem:[%s1 + $0x28] sm:$0xf]
  %v67 = vld [vmem:[%s1 + $0x2c] sm:$0xf]
  %v68 = vld [vmem:[%s1 + $0x30] sm:$0xf]
  %v69 = vld [vmem:[%s1 + $0x34] sm:$0xf]
  %v70 = vld [vmem:[%s1 + $0x38] sm:$0xf]
  %v71 = vld [vmem:[%s1 + $0x3c] sm:$0xf]
  %v72 = vld [vmem:[%s1 + $0x40] sm:$0xf]
  %v73 = vld [vmem:[%s1 + $0x44] sm:$0xf]
  %v74 = vld [vmem:[%s1 + $0x48] sm:$0xf]
  %v75 = vld [vmem:[%s1 + $0x4c] sm:$0xf]
  %v76 = vld [vmem:[%s1 + $0x50] sm:$0xf]
  %v77 = vld [vmem:[%s1 + $0x54] sm:$0xf]
  %v78 = vld [vmem:[%s1 + $0x58] sm:$0xf]
  %v79 = vld [vmem:[%s1 + $0x5c] sm:$0xf]
  %v80 = vld [vmem:[%s1 + $0x60] sm:$0xf]
  %v81 = vld [vmem:[%s1 + $0x64] sm:$0xf]
  %v82 = vld [vmem:[%s1 + $0x68] sm:$0xf]
  %v83 = vld [vmem:[%s1 + $0x6c] sm:$0xf]
  %v84 = vld [vmem:[%s1 + $0x70] sm:$0xf]
  %v85 = vld [vmem:[%s1 + $0x74] sm:$0xf]
  %v86 = vld [vmem:[%s1 + $0x78] sm:$0xf]
  %v87 = vld [vmem:[%s1 + $0x7c] sm:$0xf]
  %v88 = vld [vmem:[%s1 + $0x80] sm:$0xf]
  %v89 = vld [vmem:[%s1 + $0x84] sm:$0xf]
  %v90 = vld [vmem:[%s1 + $0x88] sm:$0xf]
  %v91 = vld [vmem:[%s1 + $0x8c] sm:$0xf]
  %v92 = vld [vmem:[%s1 + $0x90] sm:$0xf]
  %v93 = vld [vmem:[%s1 + $0x94] sm:$0xf]
  %v94 = vld [vmem:[%s1 + $0x98] sm:$0xf]
  %v95 = vld [vmem:[%s1 + $0x9c] sm:$0xf]
  %v96 = vld [vmem:[%s1 + $0xa0] sm:$0xf]
  %v97 = vld [vmem:[%s1 + $0xa4] sm:$0xf]
  %v98 = vld [vmem:[%s1 + $0xa8] sm:$0xf]
  %v99 = vld [vmem:[%s1 + $0xac] sm:$0xf]
  %v100 = vld [vmem:[%s1 + $0xb0] sm:$0xf]
  %v101 = vld [vmem:[%s1 + $0xb4] sm:$0xf]
  %v102 = vld [vmem:[%s1 + $0xb8] sm:$0xf]
  %v103 = vld [vmem:[%s1 + $0xbc] sm:$0xf]
  %v104 = vld [vmem:[%s1 + $0xc0] sm:$0xf]
  %v105 = vld [vmem:[%s1 + $0xc4] sm:$0xf]
  %v106 = vld [vmem:[%s1 + $0xc8] sm:$0xf]
  %v107 = vld [vmem:[%s1 + $0xcc] sm:$0xf]
  %v108 = vld [vmem:[%s1 + $0xd0] sm:$0xf]
  %v109 = vld [vmem:[%s1 + $0xd4] sm:$0xf]
  %v110 = vld [vmem:[%s1 + $0xd8] sm:$0xf]
  %v111 = vld [vmem:[%s1 + $0xdc] sm:$0xf]
  %v112 = vld [vmem:[%s1 + $0xe0] sm:$0xf]
  %v113 = vld [vmem:[%s1 + $0xe4] sm:$0xf]
  %v114 = vld [vmem:[%s1 + $0xe8] sm:$0xf]
  %v115 = vld [vmem:[%s1 + $0xec] sm:$0xf]
  %v116 = vld [vmem:[%s1 + $0xf0] sm:$0xf]
  %v117 = vld [vmem:[%s1 + $0xf4] sm:$0xf]
  %v118 = vld [vmem:[%s1 + $0xf8] sm:$0xf]
  %v119 = vld [vmem:[%s1 + $0xfc] sm:$0xf]
  %v120 = vld [vmem:[%s2] sm:$0x1]
  %v122 = vperm.slane %v120, 0
  %v166 = vunpack.c.l.b16 %v14
  %v167 = vunpack.c.h.b16 %v14
  %v168 = vunpack.c.l.b16 %v15
  %v169 = vunpack.c.h.b16 %v15
  %v170 = vunpack.c.l.b16 %v16
  %v171 = vunpack.c.h.b16 %v16
  %v172 = vunpack.c.l.b16 %v17
  %v173 = vunpack.c.h.b16 %v17
  %v174 = vunpack.c.l.b16 %v18
  %v175 = vunpack.c.h.b16 %v18
  %v176 = vunpack.c.l.b16 %v19
  %v177 = vunpack.c.h.b16 %v19
  %v178 = vunpack.c.l.b16 %v20
  %v179 = vunpack.c.h.b16 %v20
  %v180 = vunpack.c.l.b16 %v21
  %v181 = vunpack.c.h.b16 %v21
  %v182 = vunpack.c.l.b16 %v22
  %v183 = vunpack.c.h.b16 %v22
  %v184 = vunpack.c.l.b16 %v23
  %v185 = vunpack.c.h.b16 %v23
  %v186 = vunpack.c.l.b16 %v24
  %v187 = vunpack.c.h.b16 %v24
  %v188 = vunpack.c.l.b16 %v25
  %v189 = vunpack.c.h.b16 %v25
  %v190 = vunpack.c.l.b16 %v26
  %v191 = vunpack.c.h.b16 %v26
  %v192 = vunpack.c.l.b16 %v27
  %v193 = vunpack.c.h.b16 %v27
  %v194 = vunpack.c.l.b16 %v28
  %v195 = vunpack.c.h.b16 %v28
  %v196 = vunpack.c.l.b16 %v29
  %v197 = vunpack.c.h.b16 %v29
  %v198 = vunpack.c.l.b16 %v30
  %v199 = vunpack.c.h.b16 %v30
  %v200 = vunpack.c.l.b16 %v31
  %v201 = vunpack.c.h.b16 %v31
  %v202 = vunpack.c.l.b16 %v32
  %v203 = vunpack.c.h.b16 %v32
  %v204 = vunpack.c.l.b16 %v33
  %v205 = vunpack.c.h.b16 %v33
  %v206 = vunpack.c.l.b16 %v34
  %v207 = vunpack.c.h.b16 %v34
  %v208 = vunpack.c.l.b16 %v35
  %v209 = vunpack.c.h.b16 %v35
  %v210 = vunpack.c.l.b16 %v36
  %v211 = vunpack.c.h.b16 %v36
  %v212 = vunpack.c.l.b16 %v37
  %v213 = vunpack.c.h.b16 %v37
  %v214 = vunpack.c.l.b16 %v38
  %v215 = vunpack.c.h.b16 %v38
  %v216 = vunpack.c.l.b16 %v39
  %v217 = vunpack.c.h.b16 %v39
  %v218 = vunpack.c.l.b16 %v40
  %v219 = vunpack.c.h.b16 %v40
  %v220 = vunpack.c.l.b16 %v41
  %v221 = vunpack.c.h.b16 %v41
  %v222 = vunpack.c.l.b16 %v42
  %v223 = vunpack.c.h.b16 %v42
  %v224 = vunpack.c.l.b16 %v43
  %v225 = vunpack.c.h.b16 %v43
  %v226 = vunpack.c.l.b16 %v44
  %v227 = vunpack.c.h.b16 %v44
  %v228 = vunpack.c.l.b16 %v45
  %v229 = vunpack.c.h.b16 %v45
  %v230 = vunpack.c.l.b16 %v46
  %v231 = vunpack.c.h.b16 %v46
  %v232 = vunpack.c.l.b16 %v47
  %v233 = vunpack.c.h.b16 %v47
  %v234 = vunpack.c.l.b16 %v48
  %v235 = vunpack.c.h.b16 %v48
  %v236 = vunpack.c.l.b16 %v49
  %v237 = vunpack.c.h.b16 %v49
  %v238 = vunpack.c.l.b16 %v50
  %v239 = vunpack.c.h.b16 %v50
  %v240 = vunpack.c.l.b16 %v51
  %v241 = vunpack.c.h.b16 %v51
  %v242 = vunpack.c.l.b16 %v52
  %v243 = vunpack.c.h.b16 %v52
  %v244 = vunpack.c.l.b16 %v53
  %v245 = vunpack.c.h.b16 %v53
  %v246 = vunpack.c.l.b16 %v54
  %v247 = vunpack.c.h.b16 %v54
  %v248 = vunpack.c.l.b16 %v55
  %v249 = vunpack.c.h.b16 %v55
  %v250 = vpack.c.b16 %v170, %v166
  %v251 = vpack.c.b16 %v171, %v167
  %v252 = vpack.c.b16 %v172, %v168
  %v253 = vpack.c.b16 %v173, %v169
  %v254 = vpack.c.b16 %v178, %v174
  %v255 = vpack.c.b16 %v179, %v175
  %v256 = vpack.c.b16 %v180, %v176
  %v257 = vpack.c.b16 %v181, %v177
  %v258 = vpack.c.b16 %v186, %v182
  %v259 = vpack.c.b16 %v187, %v183
  %v260 = vpack.c.b16 %v188, %v184
  %v261 = vpack.c.b16 %v189, %v185
  %v262 = vpack.c.b16 %v194, %v190
  %v263 = vpack.c.b16 %v195, %v191
  %v264 = vpack.c.b16 %v196, %v192
  %v265 = vpack.c.b16 %v197, %v193
  %v266 = vpack.c.b16 %v202, %v198
  %v267 = vpack.c.b16 %v203, %v199
  %v268 = vpack.c.b16 %v204, %v200
  %v269 = vpack.c.b16 %v205, %v201
  %v270 = vpack.c.b16 %v210, %v206
  %v271 = vpack.c.b16 %v211, %v207
  %v272 = vpack.c.b16 %v212, %v208
  %v273 = vpack.c.b16 %v213, %v209
  %v274 = vpack.c.b16 %v218, %v214
  %v275 = vpack.c.b16 %v219, %v215
  %v276 = vpack.c.b16 %v220, %v216
  %v277 = vpack.c.b16 %v221, %v217
  %v278 = vpack.c.b16 %v226, %v222
  %v279 = vpack.c.b16 %v227, %v223
  %v280 = vpack.c.b16 %v228, %v224
  %v281 = vpack.c.b16 %v229, %v225
  %v282 = vpack.c.b16 %v234, %v230
  %v283 = vpack.c.b16 %v235, %v231
  %v284 = vpack.c.b16 %v236, %v232
  %v285 = vpack.c.b16 %v237, %v233
  %v286 = vpack.c.b16 %v242, %v238
  %v287 = vpack.c.b16 %v243, %v239
  %v288 = vpack.c.b16 %v244, %v240
  %v289 = vpack.c.b16 %v245, %v241
  %v290 = vpack.c.b16 %v246, %v246
  %v291 = vpack.c.b16 %v247, %v247
  %v292 = vpack.c.b16 %v248, %v248
  %v293 = vpack.c.b16 %v249, %v249
  %v402 = vunpack.c.l.b16 %v56
  %v403 = vunpack.c.l.b16 %v57
  %v404 = vunpack.c.l.b16 %v58
  %v405 = vunpack.c.l.b16 %v59
  %v406 = vunpack.c.l.b16 %v60
  %v407 = vunpack.c.l.b16 %v61
  %v408 = vunpack.c.l.b16 %v62
  %v409 = vunpack.c.l.b16 %v63
  %v410 = vunpack.c.l.b16 %v64
  %v411 = vunpack.c.l.b16 %v65
  %v412 = vunpack.c.l.b16 %v66
  %v413 = vunpack.c.l.b16 %v67
  %v414 = vunpack.c.l.b16 %v68
  %v415 = vunpack.c.l.b16 %v69
  %v416 = vunpack.c.l.b16 %v70
  %v417 = vunpack.c.l.b16 %v71
  %v418 = vunpack.c.l.b16 %v72
  %v419 = vunpack.c.l.b16 %v73
  %v420 = vunpack.c.l.b16 %v74
  %v421 = vunpack.c.l.b16 %v75
  %v422 = vunpack.c.l.b16 %v76
  %v423 = vunpack.c.l.b16 %v77
  %v424 = vunpack.c.l.b16 %v78
  %v425 = vunpack.c.l.b16 %v79
  %v426 = vunpack.c.l.b16 %v80
  %v427 = vunpack.c.l.b16 %v81
  %v428 = vunpack.c.l.b16 %v82
  %v429 = vunpack.c.l.b16 %v83
  %v430 = vunpack.c.l.b16 %v84
  %v431 = vunpack.c.l.b16 %v85
  %v432 = vunpack.c.l.b16 %v86
  %v433 = vunpack.c.l.b16 %v87
  %v434 = vunpack.c.l.b16 %v88
  %v435 = vunpack.c.l.b16 %v89
  %v436 = vunpack.c.l.b16 %v90
  %v437 = vunpack.c.l.b16 %v91
  %v438 = vunpack.c.l.b16 %v92
  %v439 = vunpack.c.l.b16 %v93
  %v440 = vunpack.c.l.b16 %v94
  %v441 = vunpack.c.l.b16 %v95
  %v442 = vunpack.c.l.b16 %v96
  %v443 = vunpack.c.l.b16 %v97
  %v444 = vunpack.c.l.b16 %v98
  %v445 = vunpack.c.l.b16 %v99
  %v446 = vunpack.c.l.b16 %v100
  %v447 = vunpack.c.l.b16 %v101
  %v448 = vunpack.c.l.b16 %v102
  %v449 = vunpack.c.l.b16 %v103
  %v450 = vunpack.c.l.b16 %v104
  %v451 = vunpack.c.l.b16 %v105
  %v452 = vunpack.c.l.b16 %v106
  %v453 = vunpack.c.l.b16 %v107
  %v454 = vunpack.c.l.b16 %v108
  %v455 = vunpack.c.l.b16 %v109
  %v456 = vunpack.c.l.b16 %v110
  %v457 = vunpack.c.l.b16 %v111
  %v458 = vunpack.c.l.b16 %v112
  %v459 = vunpack.c.l.b16 %v113
  %v460 = vunpack.c.l.b16 %v114
  %v461 = vunpack.c.l.b16 %v115
  %v462 = vunpack.c.l.b16 %v116
  %v463 = vunpack.c.l.b16 %v117
  %v464 = vunpack.c.l.b16 %v118
  %v465 = vunpack.c.l.b16 %v119
  %v466 = vpack.c.b16 %v403, %v402
  %v467 = vpack.c.b16 %v405, %v404
  %v468 = vpack.c.b16 %v407, %v406
  %v469 = vpack.c.b16 %v409, %v408
  %v470 = vpack.c.b16 %v411, %v410
  %v471 = vpack.c.b16 %v413, %v412
  %v472 = vpack.c.b16 %v415, %v414
  %v473 = vpack.c.b16 %v417, %v416
  %v474 = vpack.c.b16 %v419, %v418
  %v475 = vpack.c.b16 %v421, %v420
  %v476 = vpack.c.b16 %v423, %v422
  %v477 = vpack.c.b16 %v425, %v424
  %v478 = vpack.c.b16 %v427, %v426
  %v479 = vpack.c.b16 %v429, %v428
  %v480 = vpack.c.b16 %v431, %v430
  %v481 = vpack.c.b16 %v433, %v432
  %v482 = vpack.c.b16 %v435, %v434
  %v483 = vpack.c.b16 %v437, %v436
  %v484 = vpack.c.b16 %v439, %v438
  %v485 = vpack.c.b16 %v441, %v440
  %v486 = vpack.c.b16 %v443, %v442
  %v487 = vpack.c.b16 %v445, %v444
  %v488 = vpack.c.b16 %v447, %v446
  %v489 = vpack.c.b16 %v449, %v448
  %v490 = vpack.c.b16 %v451, %v450
  %v491 = vpack.c.b16 %v453, %v452
  %v492 = vpack.c.b16 %v455, %v454
  %v493 = vpack.c.b16 %v457, %v456
  %v494 = vpack.c.b16 %v459, %v458
  %v495 = vpack.c.b16 %v461, %v460
  %v496 = vpack.c.b16 %v463, %v462
  %v497 = vpack.c.b16 %v465, %v464
  %530 = vmatpush.bf16.msra.mxu0 %v473
  %531 = vmatpush.bf16.msra.mxu0 %v472
  %532 = vmatpush.bf16.msra.mxu0 %v471
  %533 = vmatpush.bf16.msra.mxu0 %v470
  %534 = vmatpush.bf16.msra.mxu0 %v469
  %535 = vmatpush.bf16.msra.mxu0 %v468
  %536 = vmatpush.bf16.msra.mxu0 %v467
  %537 = vmatpush.bf16.msra.mxu0 %v466
  %538 = vmatmul.bf16.gmra.mxu0 %v250
  %v539 = vpop.f32.mrf.mxu0
  %v540 = vadd.f32 %v122, %v539
  %v541 = vpop.f32.mrf.mxu0
  %v542 = vadd.f32 %v122, %v541
  %543 = vmatmul.bf16.gmra.mxu0 %v254
  %v544 = vpop.f32.mrf.mxu0
  %v545 = vadd.f32 %v122, %v544
  %v546 = vpop.f32.mrf.mxu0
  %v547 = vadd.f32 %v122, %v546
  %548 = vmatmul.bf16.gmra.mxu0 %v258
  %v549 = vpop.f32.mrf.mxu0
  %v550 = vadd.f32 %v122, %v549
  %v551 = vpop.f32.mrf.mxu0
  %v552 = vadd.f32 %v122, %v551
  %553 = vmatmul.bf16.gmra.mxu0 %v262
  %v554 = vpop.f32.mrf.mxu0
  %v555 = vadd.f32 %v122, %v554
  %v556 = vpop.f32.mrf.mxu0
  %v557 = vadd.f32 %v122, %v556
  %558 = vmatmul.bf16.gmra.mxu0 %v266
  %v559 = vpop.f32.mrf.mxu0
  %v560 = vadd.f32 %v122, %v559
  %v561 = vpop.f32.mrf.mxu0
  %v562 = vadd.f32 %v122, %v561
  %563 = vmatmul.bf16.gmra.mxu0 %v270
  %v564 = vpop.f32.mrf.mxu0
  %v565 = vadd.f32 %v122, %v564
  %v566 = vpop.f32.mrf.mxu0
  %v567 = vadd.f32 %v122, %v566
  %568 = vmatmul.bf16.gmra.mxu0 %v274
  %v569 = vpop.f32.mrf.mxu0
  %v570 = vadd.f32 %v122, %v569
  %v571 = vpop.f32.mrf.mxu0
  %v572 = vadd.f32 %v122, %v571
  %573 = vmatmul.bf16.gmra.mxu0 %v278
  %v574 = vpop.f32.mrf.mxu0
  %v575 = vadd.f32 %v122, %v574
  %v576 = vpop.f32.mrf.mxu0
  %v577 = vadd.f32 %v122, %v576
  %578 = vmatmul.bf16.gmra.mxu0 %v282
  %v579 = vpop.f32.mrf.mxu0
  %v580 = vadd.f32 %v122, %v579
  %v581 = vpop.f32.mrf.mxu0
  %v582 = vadd.f32 %v122, %v581
  %583 = vmatmul.bf16.gmra.mxu0 %v286
  %v584 = vpop.f32.mrf.mxu0
  %v585 = vadd.f32 %v122, %v584
  %v586 = vpop.f32.mrf.mxu0
  %v587 = vadd.f32 %v122, %v586
  %588 = vmatmul.bf16.gmra.mxu0 %v290
  %v589 = vpop.f32.mrf.mxu0
  %v590 = vadd.f32 %v122, %v589
  %v591 = vpop.f32.mrf.mxu0
  %592 = vdwg.mxu0
  %593 = vmatpush.bf16.msra.mxu0 %v481
  %594 = vmatpush.bf16.msra.mxu0 %v480
  %595 = vmatpush.bf16.msra.mxu0 %v479
  %596 = vmatpush.bf16.msra.mxu0 %v478
  %597 = vmatpush.bf16.msra.mxu0 %v477
  %598 = vmatpush.bf16.msra.mxu0 %v476
  %599 = vmatpush.bf16.msra.mxu0 %v475
  %600 = vmatpush.bf16.msra.mxu0 %v474
  %601 = vmatmul.bf16.gmra.mxu0 %v251
  %v602 = vpop.f32.mrf.mxu0
  %v603 = vadd.f32 %v540, %v602
  %v604 = vpop.f32.mrf.mxu0
  %v605 = vadd.f32 %v542, %v604
  %606 = vmatmul.bf16.gmra.mxu0 %v255
  %v607 = vpop.f32.mrf.mxu0
  %v608 = vadd.f32 %v545, %v607
  %v609 = vpop.f32.mrf.mxu0
  %v610 = vadd.f32 %v547, %v609
  %611 = vmatmul.bf16.gmra.mxu0 %v259
  %v612 = vpop.f32.mrf.mxu0
  %v613 = vadd.f32 %v550, %v612
  %v614 = vpop.f32.mrf.mxu0
  %v615 = vadd.f32 %v552, %v614
  %616 = vmatmul.bf16.gmra.mxu0 %v263
  %v617 = vpop.f32.mrf.mxu0
  %v618 = vadd.f32 %v555, %v617
  %v619 = vpop.f32.mrf.mxu0
  %v620 = vadd.f32 %v557, %v619
  %621 = vmatmul.bf16.gmra.mxu0 %v267
  %v622 = vpop.f32.mrf.mxu0
  %v623 = vadd.f32 %v560, %v622
  %v624 = vpop.f32.mrf.mxu0
  %v625 = vadd.f32 %v562, %v624
  %626 = vmatmul.bf16.gmra.mxu0 %v271
  %v627 = vpop.f32.mrf.mxu0
  %v628 = vadd.f32 %v565, %v627
  %v629 = vpop.f32.mrf.mxu0
  %v630 = vadd.f32 %v567, %v629
  %631 = vmatmul.bf16.gmra.mxu0 %v275
  %v632 = vpop.f32.mrf.mxu0
  %v633 = vadd.f32 %v570, %v632
  %v634 = vpop.f32.mrf.mxu0
  %v635 = vadd.f32 %v572, %v634
  %636 = vmatmul.bf16.gmra.mxu0 %v279
  %v637 = vpop.f32.mrf.mxu0
  %v638 = vadd.f32 %v575, %v637
  %v639 = vpop.f32.mrf.mxu0
  %v640 = vadd.f32 %v577, %v639
  %641 = vmatmul.bf16.gmra.mxu0 %v283
  %v642 = vpop.f32.mrf.mxu0
  %v643 = vadd.f32 %v580, %v642
  %v644 = vpop.f32.mrf.mxu0
  %v645 = vadd.f32 %v582, %v644
  %646 = vmatmul.bf16.gmra.mxu0 %v287
  %v647 = vpop.f32.mrf.mxu0
  %v648 = vadd.f32 %v585, %v647
  %v649 = vpop.f32.mrf.mxu0
  %v650 = vadd.f32 %v587, %v649
  %651 = vmatmul.bf16.gmra.mxu0 %v291
  %v652 = vpop.f32.mrf.mxu0
  %v653 = vadd.f32 %v590, %v652
  %v654 = vpop.f32.mrf.mxu0
  %655 = vdwg.mxu0
  %656 = vmatpush.bf16.msra.mxu0 %v489
  %657 = vmatpush.bf16.msra.mxu0 %v488
  %658 = vmatpush.bf16.msra.mxu0 %v487
  %659 = vmatpush.bf16.msra.mxu0 %v486
  %660 = vmatpush.bf16.msra.mxu0 %v485
  %661 = vmatpush.bf16.msra.mxu0 %v484
  %662 = vmatpush.bf16.msra.mxu0 %v483
  %663 = vmatpush.bf16.msra.mxu0 %v482
  %664 = vmatmul.bf16.gmra.mxu0 %v252
  %v665 = vpop.f32.mrf.mxu0
  %v666 = vadd.f32 %v603, %v665
  %v667 = vpop.f32.mrf.mxu0
  %v668 = vadd.f32 %v605, %v667
  %669 = vmatmul.bf16.gmra.mxu0 %v256
  %v670 = vpop.f32.mrf.mxu0
  %v671 = vadd.f32 %v608, %v670
  %v672 = vpop.f32.mrf.mxu0
  %v673 = vadd.f32 %v610, %v672
  %674 = vmatmul.bf16.gmra.mxu0 %v260
  %v675 = vpop.f32.mrf.mxu0
  %v676 = vadd.f32 %v613, %v675
  %v677 = vpop.f32.mrf.mxu0
  %v678 = vadd.f32 %v615, %v677
  %679 = vmatmul.bf16.gmra.mxu0 %v264
  %v680 = vpop.f32.mrf.mxu0
  %v681 = vadd.f32 %v618, %v680
  %v682 = vpop.f32.mrf.mxu0
  %v683 = vadd.f32 %v620, %v682
  %684 = vmatmul.bf16.gmra.mxu0 %v268
  %v685 = vpop.f32.mrf.mxu0
  %v686 = vadd.f32 %v623, %v685
  %v687 = vpop.f32.mrf.mxu0
  %v688 = vadd.f32 %v625, %v687
  %689 = vmatmul.bf16.gmra.mxu0 %v272
  %v690 = vpop.f32.mrf.mxu0
  %v691 = vadd.f32 %v628, %v690
  %v692 = vpop.f32.mrf.mxu0
  %v693 = vadd.f32 %v630, %v692
  %694 = vmatmul.bf16.gmra.mxu0 %v276
  %v695 = vpop.f32.mrf.mxu0
  %v696 = vadd.f32 %v633, %v695
  %v697 = vpop.f32.mrf.mxu0
  %v698 = vadd.f32 %v635, %v697
  %699 = vmatmul.bf16.gmra.mxu0 %v280
  %v700 = vpop.f32.mrf.mxu0
  %v701 = vadd.f32 %v638, %v700
  %v702 = vpop.f32.mrf.mxu0
  %v703 = vadd.f32 %v640, %v702
  %704 = vmatmul.bf16.gmra.mxu0 %v284
  %v705 = vpop.f32.mrf.mxu0
  %v706 = vadd.f32 %v643, %v705
  %v707 = vpop.f32.mrf.mxu0
  %v708 = vadd.f32 %v645, %v707
  %709 = vmatmul.bf16.gmra.mxu0 %v288
  %v710 = vpop.f32.mrf.mxu0
  %v711 = vadd.f32 %v648, %v710
  %v712 = vpop.f32.mrf.mxu0
  %v713 = vadd.f32 %v650, %v712
  %714 = vmatmul.bf16.gmra.mxu0 %v292
  %v715 = vpop.f32.mrf.mxu0
  %v716 = vadd.f32 %v653, %v715
  %v717 = vpop.f32.mrf.mxu0
  %718 = vdwg.mxu0
  %719 = vmatpush.bf16.msra.mxu0 %v497
  %720 = vmatpush.bf16.msra.mxu0 %v496
  %721 = vmatpush.bf16.msra.mxu0 %v495
  %722 = vmatpush.bf16.msra.mxu0 %v494
  %723 = vmatpush.bf16.msra.mxu0 %v493
  %724 = vmatpush.bf16.msra.mxu0 %v492
  %725 = vmatpush.bf16.msra.mxu0 %v491
  %726 = vmatpush.bf16.msra.mxu0 %v490
  %727 = vmatmul.bf16.gmra.mxu0 %v253
  %v728 = vpop.f32.mrf.mxu0
  %v729 = vadd.f32 %v666, %v728
  %v730 = vpop.f32.mrf.mxu0
  %v731 = vadd.f32 %v668, %v730
  %732 = vmatmul.bf16.gmra.mxu0 %v257
  %v733 = vpop.f32.mrf.mxu0
  %v734 = vadd.f32 %v671, %v733
  %v735 = vpop.f32.mrf.mxu0
  %v736 = vadd.f32 %v673, %v735
  %737 = vmatmul.bf16.gmra.mxu0 %v261
  %v738 = vpop.f32.mrf.mxu0
  %v739 = vadd.f32 %v676, %v738
  %v740 = vpop.f32.mrf.mxu0
  %v741 = vadd.f32 %v678, %v740
  %742 = vmatmul.bf16.gmra.mxu0 %v265
  %v743 = vpop.f32.mrf.mxu0
  %v744 = vadd.f32 %v681, %v743
  %v745 = vpop.f32.mrf.mxu0
  %v746 = vadd.f32 %v683, %v745
  %747 = vmatmul.bf16.gmra.mxu0 %v269
  %v748 = vpop.f32.mrf.mxu0
  %v749 = vadd.f32 %v686, %v748
  %v750 = vpop.f32.mrf.mxu0
  %v751 = vadd.f32 %v688, %v750
  %752 = vmatmul.bf16.gmra.mxu0 %v273
  %v753 = vpop.f32.mrf.mxu0
  %v754 = vadd.f32 %v691, %v753
  %v755 = vpop.f32.mrf.mxu0
  %v756 = vadd.f32 %v693, %v755
  %757 = vmatmul.bf16.gmra.mxu0 %v277
  %v758 = vpop.f32.mrf.mxu0
  %v759 = vadd.f32 %v696, %v758
  %v760 = vpop.f32.mrf.mxu0
  %v761 = vadd.f32 %v698, %v760
  %762 = vmatmul.bf16.gmra.mxu0 %v281
  %v763 = vpop.f32.mrf.mxu0
  %v764 = vadd.f32 %v701, %v763
  %v765 = vpop.f32.mrf.mxu0
  %v766 = vadd.f32 %v703, %v765
  %767 = vmatmul.bf16.gmra.mxu0 %v285
  %v768 = vpop.f32.mrf.mxu0
  %v769 = vadd.f32 %v706, %v768
  %v770 = vpop.f32.mrf.mxu0
  %v771 = vadd.f32 %v708, %v770
  %772 = vmatmul.bf16.gmra.mxu0 %v289
  %v773 = vpop.f32.mrf.mxu0
  %v774 = vadd.f32 %v711, %v773
  %v775 = vpop.f32.mrf.mxu0
  %v776 = vadd.f32 %v713, %v775
  %777 = vmatmul.bf16.gmra.mxu0 %v293
  %v778 = vpop.f32.mrf.mxu0
  %v779 = vadd.f32 %v716, %v778
  %v780 = vpop.f32.mrf.mxu0
  %781 = vdwg.mxu0
  %v782 = vtanh.pop %v729
  %v783 = vtanh.pop %v731
  %v784 = vtanh.pop %v734
  %v785 = vtanh.pop %v736
  %v786 = vtanh.pop %v739
  %v787 = vtanh.pop %v741
  %v788 = vtanh.pop %v744
  %v789 = vtanh.pop %v746
  %v790 = vtanh.pop %v749
  %v791 = vtanh.pop %v751
  %v792 = vtanh.pop %v754
  %v793 = vtanh.pop %v756
  %v794 = vtanh.pop %v759
  %v795 = vtanh.pop %v761
  %v796 = vtanh.pop %v764
  %v797 = vtanh.pop %v766
  %v798 = vtanh.pop %v769
  %v799 = vtanh.pop %v771
  %v800 = vtanh.pop %v774
  %v801 = vtanh.pop %v776
  %v802 = vtanh.pop %v779
  %803 = vst [vmem:[%s3] sm:$0xff] %v782
  %804 = vst [vmem:[%s3 + $0x8] sm:$0xff] %v783
  %805 = vst [vmem:[%s3 + $0x10] sm:$0xff] %v784
  %806 = vst [vmem:[%s3 + $0x18] sm:$0xff] %v785
  %807 = vst [vmem:[%s3 + $0x20] sm:$0xff] %v786
  %808 = vst [vmem:[%s3 + $0x28] sm:$0xff] %v787
  %809 = vst [vmem:[%s3 + $0x30] sm:$0xff] %v788
  %810 = vst [vmem:[%s3 + $0x38] sm:$0xff] %v789
  %811 = vst [vmem:[%s3 + $0x40] sm:$0xff] %v790
  %812 = vst [vmem:[%s3 + $0x48] sm:$0xff] %v791
  %813 = vst [vmem:[%s3 + $0x50] sm:$0xff] %v792
  %814 = vst [vmem:[%s3 + $0x58] sm:$0xff] %v793
  %815 = vst [vmem:[%s3 + $0x60] sm:$0xff] %v794
  %816 = vst [vmem:[%s3 + $0x68] sm:$0xff] %v795
  %817 = vst [vmem:[%s3 + $0x70] sm:$0xff] %v796
  %818 = vst [vmem:[%s3 + $0x78] sm:$0xff] %v797
  %819 = vst [vmem:[%s3 + $0x80] sm:$0xff] %v798
  %820 = vst [vmem:[%s3 + $0x88] sm:$0xff] %v799
  %821 = vst [vmem:[%s3 + $0x90] sm:$0xff] %v800
  %822 = vst [vmem:[%s3 + $0x98] sm:$0xff] %v801
  %823 = vst [vmem:[%s3 + $0xa0] sm:$0x3] %v802
  // Predicated region
  $region14: #{critic_forward.5} parent=0 // pred_check
    _
  $region15: #{critic_forward.5} parent=0 // pred_check_branch
    %825 = sbr.rel (0) target = $region17
  $region16: #{critic_forward.5} parent=0 // pred_region
    _
  $region17: #{critic_forward.5} parent=0 // pred_fallthru
    _
  // Predicated region
  $region18: #{critic_forward.5} parent=0 // pred_check
    _
  $region19: #{critic_forward.5} parent=0 // pred_check_branch
    %827 = sbr.rel (0) target = $region21
  $region20: #{critic_forward.5} parent=0 // pred_region
    _
  $region21: #{critic_forward.5} parent=0 // pred_fallthru
    _

// kernel: critic_forward.6
$region0: #{critic_forward.6}
  #allocation0 [shape = 'u32[]', space=smem, size = 0x4, offset = 0x4, fixed_abs, tag = 'smem constant byte address 0x4 - core index']
  #allocation1 [shape = 'u32[72,128]{1,0:T(1,128)}', space=vmem, size = 0x9000, scoped, tag = 'internal scratch']
  %s0 = inlined_call_operand.vmem [shape: bf16[98,576], index: 0, kind: input, shape index: {}]
  %s1 = inlined_call_operand.vmem [shape: bf16[576,128], index: 1, kind: input, shape index: {}]
  %s2 = inlined_call_operand.vmem [shape: f32[1,128], index: 2, kind: input, shape index: {}]
  %s3 = inlined_call_operand.vmem [shape: f32[98,128], index: 3, kind: output, shape index: {}]
  %s4 = sld [smem:[#allocation0]]
  $region22: #{critic_forward.6} parent=0
    _
  %s6 = ssub.s32 1, %s4
  %s7 = scalar_select 0, %s6, %s4
  // Predicated region
  $region2: #{critic_forward.6} parent=0 // pred_check
    _
  $region3: #{critic_forward.6} parent=0 // pred_check_branch
    %9 = sbr.rel (0) target = $region5
  $region4: #{critic_forward.6} parent=0 // pred_region
    _
  $region5: #{critic_forward.6} parent=0 // pred_fallthru
    _
  // Predicated region
  $region6: #{critic_forward.6} parent=0 // pred_check
    _
  $region7: #{critic_forward.6} parent=0 // pred_check_branch
    %11 = sbr.rel (0) target = $region9
  $region8: #{critic_forward.6} parent=0 // pred_region
    _
  $region9: #{critic_forward.6} parent=0 // pred_fallthru
    _
  // Predicated region
  $region10: #{critic_forward.6} parent=0 // pred_check
    _
  $region11: #{critic_forward.6} parent=0 // pred_check_branch
    %13 = sbr.rel (0) target = $region13
  $region12: #{critic_forward.6} parent=0 // pred_region
    _
  $region13: #{critic_forward.6} parent=0 // pred_fallthru
    _
  %v15 = vld [vmem:[%s0] sm:$0xff]
  %v16 = vld [vmem:[%s0 + $0x8] sm:$0xff]
  %v17 = vld [vmem:[%s0 + $0x10] sm:$0xf]
  %v18 = vld [vmem:[%s0 + $0x14] sm:$0xff]
  %v19 = vld [vmem:[%s0 + $0x1c] sm:$0xff]
  %v20 = vld [vmem:[%s0 + $0x24] sm:$0xf]
  %v21 = vld [vmem:[%s0 + $0x28] sm:$0xff]
  %v22 = vld [vmem:[%s0 + $0x30] sm:$0xff]
  %v23 = vld [vmem:[%s0 + $0x38] sm:$0xf]
  %v24 = vld [vmem:[%s0 + $0x3c] sm:$0xff]
  %v25 = vld [vmem:[%s0 + $0x44] sm:$0xff]
  %v26 = vld [vmem:[%s0 + $0x4c] sm:$0xf]
  %v27 = vld [vmem:[%s0 + $0x50] sm:$0xff]
  %v28 = vld [vmem:[%s0 + $0x58] sm:$0xff]
  %v29 = vld [vmem:[%s0 + $0x60] sm:$0xf]
  %v30 = vld [vmem:[%s0 + $0x64] sm:$0xff]
  %v31 = vld [vmem:[%s0 + $0x6c] sm:$0xff]
  %v32 = vld [vmem:[%s0 + $0x74] sm:$0xf]
  %v33 = vld [vmem:[%s0 + $0x78] sm:$0xff]
  %v34 = vld [vmem:[%s0 + $0x80] sm:$0xff]
  %v35 = vld [vmem:[%s0 + $0x88] sm:$0xf]
  %v36 = vld [vmem:[%s0 + $0x8c] sm:$0xff]
  %v37 = vld [vmem:[%s0 + $0x94] sm:$0xff]
  %v38 = vld [vmem:[%s0 + $0x9c] sm:$0xf]
  %v39 = vld [vmem:[%s0 + $0xa0] sm:$0xff]
  %v40 = vld [vmem:[%s0 + $0xa8] sm:$0xff]
  %v41 = vld [vmem:[%s0 + $0xb0] sm:$0xf]
  %v42 = vld [vmem:[%s0 + $0xb4] sm:$0xff]
  %v43 = vld [vmem:[%s0 + $0xbc] sm:$0xff]
  %v44 = vld [vmem:[%s0 + $0xc4] sm:$0xf]
  %v45 = vld [vmem:[%s0 + $0xc8] sm:$0xff]
  %v46 = vld [vmem:[%s0 + $0xd0] sm:$0xff]
  %v47 = vld [vmem:[%s0 + $0xd8] sm:$0xf]
  %v48 = vld [vmem:[%s0 + $0xdc] sm:$0xff]
  %v49 = vld [vmem:[%s0 + $0xe4] sm:$0xff]
  %v50 = vld [vmem:[%s0 + $0xec] sm:$0xf]
  %v51 = vld [vmem:[%s0 + $0xf0] sm:$0x11]
  %v52 = vld [vmem:[%s0 + $0xf8] sm:$0x11]
  %v53 = vld [vmem:[%s0 + $0x100] sm:$0x1]
  %v54 = vld [vmem:[%s1] sm:$0xf]
  %v55 = vld [vmem:[%s1 + $0x4] sm:$0xf]
  %v56 = vld [vmem:[%s1 + $0x8] sm:$0xf]
  %v57 = vld [vmem:[%s1 + $0xc] sm:$0xf]
  %v58 = vld [vmem:[%s1 + $0x10] sm:$0xf]
  %v59 = vld [vmem:[%s1 + $0x14] sm:$0xf]
  %v60 = vld [vmem:[%s1 + $0x18] sm:$0xf]
  %v61 = vld [vmem:[%s1 + $0x1c] sm:$0xf]
  %v62 = vld [vmem:[%s1 + $0x20] sm:$0xf]
  %v63 = vld [vmem:[%s1 + $0x24] sm:$0xf]
  %v64 = vld [vmem:[%s1 + $0x28] sm:$0xf]
  %v65 = vld [vmem:[%s1 + $0x2c] sm:$0xf]
  %v66 = vld [vmem:[%s1 + $0x30] sm:$0xf]
  %v67 = vld [vmem:[%s1 + $0x34] sm:$0xf]
  %v68 = vld [vmem:[%s1 + $0x38] sm:$0xf]
  %v69 = vld [vmem:[%s1 + $0x3c] sm:$0xf]
  %v70 = vld [vmem:[%s1 + $0x40] sm:$0xf]
  %v71 = vld [vmem:[%s1 + $0x44] sm:$0xf]
  %v72 = vld [vmem:[%s1 + $0x48] sm:$0xf]
  %v73 = vld [vmem:[%s1 + $0x4c] sm:$0xf]
  %v74 = vld [vmem:[%s1 + $0x50] sm:$0xf]
  %v75 = vld [vmem:[%s1 + $0x54] sm:$0xf]
  %v76 = vld [vmem:[%s1 + $0x58] sm:$0xf]
  %v77 = vld [vmem:[%s1 + $0x5c] sm:$0xf]
  %v78 = vld [vmem:[%s1 + $0x60] sm:$0xf]
  %v79 = vld [vmem:[%s1 + $0x64] sm:$0xf]
  %v80 = vld [vmem:[%s1 + $0x68] sm:$0xf]
  %v81 = vld [vmem:[%s1 + $0x6c] sm:$0xf]
  %v82 = vld [vmem:[%s1 + $0x70] sm:$0xf]
  %v83 = vld [vmem:[%s1 + $0x74] sm:$0xf]
  %v84 = vld [vmem:[%s1 + $0x78] sm:$0xf]
  %v85 = vld [vmem:[%s1 + $0x7c] sm:$0xf]
  %v86 = vld [vmem:[%s1 + $0x80] sm:$0xf]
  %v87 = vld [vmem:[%s1 + $0x84] sm:$0xf]
  %v88 = vld [vmem:[%s1 + $0x88] sm:$0xf]
  %v89 = vld [vmem:[%s1 + $0x8c] sm:$0xf]
  %v90 = vld [vmem:[%s1 + $0x90] sm:$0xf]
  %v91 = vld [vmem:[%s1 + $0x94] sm:$0xf]
  %v92 = vld [vmem:[%s1 + $0x98] sm:$0xf]
  %v93 = vld [vmem:[%s1 + $0x9c] sm:$0xf]
  %v94 = vld [vmem:[%s1 + $0xa0] sm:$0xf]
  %v95 = vld [vmem:[%s1 + $0xa4] sm:$0xf]
  %v96 = vld [vmem:[%s1 + $0xa8] sm:$0xf]
  %v97 = vld [vmem:[%s1 + $0xac] sm:$0xf]
  %v98 = vld [vmem:[%s1 + $0xb0] sm:$0xf]
  %v99 = vld [vmem:[%s1 + $0xb4] sm:$0xf]
  %v100 = vld [vmem:[%s1 + $0xb8] sm:$0xf]
  %v101 = vld [vmem:[%s1 + $0xbc] sm:$0xf]
  %v102 = vld [vmem:[%s1 + $0xc0] sm:$0xf]
  %v103 = vld [vmem:[%s1 + $0xc4] sm:$0xf]
  %v104 = vld [vmem:[%s1 + $0xc8] sm:$0xf]
  %v105 = vld [vmem:[%s1 + $0xcc] sm:$0xf]
  %v106 = vld [vmem:[%s1 + $0xd0] sm:$0xf]
  %v107 = vld [vmem:[%s1 + $0xd4] sm:$0xf]
  %v108 = vld [vmem:[%s1 + $0xd8] sm:$0xf]
  %v109 = vld [vmem:[%s1 + $0xdc] sm:$0xf]
  %v110 = vld [vmem:[%s1 + $0xe0] sm:$0xf]
  %v111 = vld [vmem:[%s1 + $0xe4] sm:$0xf]
  %v112 = vld [vmem:[%s1 + $0xe8] sm:$0xf]
  %v113 = vld [vmem:[%s1 + $0xec] sm:$0xf]
  %v114 = vld [vmem:[%s1 + $0xf0] sm:$0xf]
  %v115 = vld [vmem:[%s1 + $0xf4] sm:$0xf]
  %v116 = vld [vmem:[%s1 + $0xf8] sm:$0xf]
  %v117 = vld [vmem:[%s1 + $0xfc] sm:$0xf]
  %v118 = vld [vmem:[%s1 + $0x100] sm:$0xf]
  %v119 = vld [vmem:[%s1 + $0x104] sm:$0xf]
  %v120 = vld [vmem:[%s1 + $0x108] sm:$0xf]
  %v121 = vld [vmem:[%s1 + $0x10c] sm:$0xf]
  %v122 = vld [vmem:[%s1 + $0x110] sm:$0xf]
  %v123 = vld [vmem:[%s1 + $0x114] sm:$0xf]
  %v124 = vld [vmem:[%s1 + $0x118] sm:$0xf]
  %v125 = vld [vmem:[%s1 + $0x11c] sm:$0xf]
  %v126 = vld [vmem:[%s2] sm:$0x1]
  %v128 = vperm.slane %v126, 0
  %v169 = vunpack.c.l.b16 %v15
  %v170 = vunpack.c.h.b16 %v15
  %v171 = vunpack.c.l.b16 %v16
  %v172 = vunpack.c.h.b16 %v16
  %v173 = vunpack.c.l.b16 %v17
  %v174 = vunpack.c.l.b16 %v18
  %v175 = vunpack.c.h.b16 %v18
  %v176 = vunpack.c.l.b16 %v19
  %v177 = vunpack.c.h.b16 %v19
  %v178 = vunpack.c.l.b16 %v20
  %v179 = vunpack.c.l.b16 %v21
  %v180 = vunpack.c.h.b16 %v21
  %v181 = vunpack.c.l.b16 %v22
  %v182 = vunpack.c.h.b16 %v22
  %v183 = vunpack.c.l.b16 %v23
  %v184 = vunpack.c.l.b16 %v24
  %v185 = vunpack.c.h.b16 %v24
  %v186 = vunpack.c.l.b16 %v25
  %v187 = vunpack.c.h.b16 %v25
  %v188 = vunpack.c.l.b16 %v26
  %v189 = vunpack.c.l.b16 %v27
  %v190 = vunpack.c.h.b16 %v27
  %v191 = vunpack.c.l.b16 %v28
  %v192 = vunpack.c.h.b16 %v28
  %v193 = vunpack.c.l.b16 %v29
  %v194 = vunpack.c.l.b16 %v30
  %v195 = vunpack.c.h.b16 %v30
  %v196 = vunpack.c.l.b16 %v31
  %v197 = vunpack.c.h.b16 %v31
  %v198 = vunpack.c.l.b16 %v32
  %v199 = vunpack.c.l.b16 %v33
  %v200 = vunpack.c.h.b16 %v33
  %v201 = vunpack.c.l.b16 %v34
  %v202 = vunpack.c.h.b16 %v34
  %v203 = vunpack.c.l.b16 %v35
  %v204 = vunpack.c.l.b16 %v36
  %v205 = vunpack.c.h.b16 %v36
  %v206 = vunpack.c.l.b16 %v37
  %v207 = vunpack.c.h.b16 %v37
  %v208 = vunpack.c.l.b16 %v38
  %v209 = vunpack.c.l.b16 %v39
  %v210 = vunpack.c.h.b16 %v39
  %v211 = vunpack.c.l.b16 %v40
  %v212 = vunpack.c.h.b16 %v40
  %v213 = vunpack.c.l.b16 %v41
  %v214 = vunpack.c.l.b16 %v42
  %v215 = vunpack.c.h.b16 %v42
  %v216 = vunpack.c.l.b16 %v43
  %v217 = vunpack.c.h.b16 %v43
  %v218 = vunpack.c.l.b16 %v44
  %v219 = vunpack.c.l.b16 %v45
  %v220 = vunpack.c.h.b16 %v45
  %v221 = vunpack.c.l.b16 %v46
  %v222 = vunpack.c.h.b16 %v46
  %v223 = vunpack.c.l.b16 %v47
  %v224 = vunpack.c.l.b16 %v48
  %v225 = vunpack.c.h.b16 %v48
  %v226 = vunpack.c.l.b16 %v49
  %v227 = vunpack.c.h.b16 %v49
  %v228 = vunpack.c.l.b16 %v50
  %v229 = vunpack.c.l.b16 %v51
  %v230 = vunpack.c.h.b16 %v51
  %v231 = vunpack.c.l.b16 %v52
  %v232 = vunpack.c.h.b16 %v52
  %v233 = vunpack.c.l.b16 %v53
  %v234 = vpack.c.b16 %v174, %v169
  %v235 = vpack.c.b16 %v175, %v170
  %v236 = vpack.c.b16 %v176, %v171
  %v237 = vpack.c.b16 %v177, %v172
  %v238 = vpack.c.b16 %v178, %v173
  %v239 = vpack.c.b16 %v184, %v179
  %v240 = vpack.c.b16 %v185, %v180
  %v241 = vpack.c.b16 %v186, %v181
  %v242 = vpack.c.b16 %v187, %v182
  %v243 = vpack.c.b16 %v188, %v183
  %v244 = vpack.c.b16 %v194, %v189
  %v245 = vpack.c.b16 %v195, %v190
  %v246 = vpack.c.b16 %v196, %v191
  %v247 = vpack.c.b16 %v197, %v192
  %v248 = vpack.c.b16 %v198, %v193
  %v249 = vpack.c.b16 %v204, %v199
  %v250 = vpack.c.b16 %v205, %v200
  %v251 = vpack.c.b16 %v206, %v201
  %v252 = vpack.c.b16 %v207, %v202
  %v253 = vpack.c.b16 %v208, %v203
  %v254 = vpack.c.b16 %v214, %v209
  %v255 = vpack.c.b16 %v215, %v210
  %v256 = vpack.c.b16 %v216, %v211
  %v257 = vpack.c.b16 %v217, %v212
  %v258 = vpack.c.b16 %v218, %v213
  %v259 = vpack.c.b16 %v224, %v219
  %v260 = vpack.c.b16 %v225, %v220
  %v261 = vpack.c.b16 %v226, %v221
  %v262 = vpack.c.b16 %v227, %v222
  %v263 = vpack.c.b16 %v228, %v223
  %v264 = vpack.c.b16 %v229, %v229
  %v265 = vpack.c.b16 %v230, %v230
  %v266 = vpack.c.b16 %v231, %v231
  %v267 = vpack.c.b16 %v232, %v232
  %v268 = vpack.c.b16 %v233, %v233
  %v369 = vunpack.c.l.b16 %v54
  %v370 = vunpack.c.l.b16 %v55
  %v371 = vunpack.c.l.b16 %v56
  %v372 = vunpack.c.l.b16 %v57
  %v373 = vunpack.c.l.b16 %v58
  %v374 = vunpack.c.l.b16 %v59
  %v375 = vunpack.c.l.b16 %v60
  %v376 = vunpack.c.l.b16 %v61
  %v377 = vunpack.c.l.b16 %v62
  %v378 = vunpack.c.l.b16 %v63
  %v379 = vunpack.c.l.b16 %v64
  %v380 = vunpack.c.l.b16 %v65
  %v381 = vunpack.c.l.b16 %v66
  %v382 = vunpack.c.l.b16 %v67
  %v383 = vunpack.c.l.b16 %v68
  %v384 = vunpack.c.l.b16 %v69
  %v385 = vunpack.c.l.b16 %v70
  %v386 = vunpack.c.l.b16 %v71
  %v387 = vunpack.c.l.b16 %v72
  %v388 = vunpack.c.l.b16 %v73
  %v389 = vunpack.c.l.b16 %v74
  %v390 = vunpack.c.l.b16 %v75
  %v391 = vunpack.c.l.b16 %v76
  %v392 = vunpack.c.l.b16 %v77
  %v393 = vunpack.c.l.b16 %v78
  %v394 = vunpack.c.l.b16 %v79
  %v395 = vunpack.c.l.b16 %v80
  %v396 = vunpack.c.l.b16 %v81
  %v397 = vunpack.c.l.b16 %v82
  %v398 = vunpack.c.l.b16 %v83
  %v399 = vunpack.c.l.b16 %v84
  %v400 = vunpack.c.l.b16 %v85
  %v401 = vunpack.c.l.b16 %v86
  %v402 = vunpack.c.l.b16 %v87
  %v403 = vunpack.c.l.b16 %v88
  %v404 = vunpack.c.l.b16 %v89
  %v405 = vunpack.c.l.b16 %v90
  %v406 = vunpack.c.l.b16 %v91
  %v407 = vunpack.c.l.b16 %v92
  %v408 = vunpack.c.l.b16 %v93
  %v409 = vunpack.c.l.b16 %v94
  %v410 = vunpack.c.l.b16 %v95
  %v411 = vunpack.c.l.b16 %v96
  %v412 = vunpack.c.l.b16 %v97
  %v413 = vunpack.c.l.b16 %v98
  %v414 = vunpack.c.l.b16 %v99
  %v415 = vunpack.c.l.b16 %v100
  %v416 = vunpack.c.l.b16 %v101
  %v417 = vunpack.c.l.b16 %v102
  %v418 = vunpack.c.l.b16 %v103
  %v419 = vunpack.c.l.b16 %v104
  %v420 = vunpack.c.l.b16 %v105
  %v421 = vunpack.c.l.b16 %v106
  %v422 = vunpack.c.l.b16 %v107
  %v423 = vunpack.c.l.b16 %v108
  %v424 = vunpack.c.l.b16 %v109
  %v425 = vunpack.c.l.b16 %v110
  %v426 = vunpack.c.l.b16 %v111
  %v427 = vunpack.c.l.b16 %v112
  %v428 = vunpack.c.l.b16 %v113
  %v429 = vunpack.c.l.b16 %v114
  %v430 = vunpack.c.l.b16 %v115
  %v431 = vunpack.c.l.b16 %v116
  %v432 = vunpack.c.l.b16 %v117
  %v433 = vunpack.c.l.b16 %v118
  %v434 = vunpack.c.l.b16 %v119
  %v435 = vunpack.c.l.b16 %v120
  %v436 = vunpack.c.l.b16 %v121
  %v437 = vunpack.c.l.b16 %v122
  %v438 = vunpack.c.l.b16 %v123
  %v439 = vunpack.c.l.b16 %v124
  %v440 = vunpack.c.l.b16 %v125
  %v441 = vpack.c.b16 %v370, %v369
  %v442 = vpack.c.b16 %v372, %v371
  %v443 = vpack.c.b16 %v374, %v373
  %v444 = vpack.c.b16 %v376, %v375
  %v445 = vpack.c.b16 %v378, %v377
  %v446 = vpack.c.b16 %v380, %v379
  %v447 = vpack.c.b16 %v382, %v381
  %v448 = vpack.c.b16 %v384, %v383
  %v449 = vpack.c.b16 %v386, %v385
  %v450 = vpack.c.b16 %v388, %v387
  %v451 = vpack.c.b16 %v390, %v389
  %v452 = vpack.c.b16 %v392, %v391
  %v453 = vpack.c.b16 %v394, %v393
  %v454 = vpack.c.b16 %v396, %v395
  %v455 = vpack.c.b16 %v398, %v397
  %v456 = vpack.c.b16 %v400, %v399
  %v457 = vpack.c.b16 %v402, %v401
  %v458 = vpack.c.b16 %v404, %v403
  %v459 = vpack.c.b16 %v406, %v405
  %v460 = vpack.c.b16 %v408, %v407
  %v461 = vpack.c.b16 %v410, %v409
  %v462 = vpack.c.b16 %v412, %v411
  %v463 = vpack.c.b16 %v414, %v413
  %v464 = vpack.c.b16 %v416, %v415
  %v465 = vpack.c.b16 %v418, %v417
  %v466 = vpack.c.b16 %v420, %v419
  %v467 = vpack.c.b16 %v422, %v421
  %v468 = vpack.c.b16 %v424, %v423
  %v469 = vpack.c.b16 %v426, %v425
  %v470 = vpack.c.b16 %v428, %v427
  %v471 = vpack.c.b16 %v430, %v429
  %v472 = vpack.c.b16 %v432, %v431
  %v473 = vpack.c.b16 %v434, %v433
  %v474 = vpack.c.b16 %v436, %v435
  %v475 = vpack.c.b16 %v438, %v437
  %v476 = vpack.c.b16 %v440, %v439
  %vm513 = vcmask 523264
  %v515 = vsel %vm513, %v238, 0
  %v518 = vsel %vm513, %v243, 0
  %v521 = vsel %vm513, %v248, 0
  %v524 = vsel %vm513, %v253, 0
  %v527 = vsel %vm513, %v258, 0
  %v530 = vsel %vm513, %v263, 0
  %v533 = vsel %vm513, %v268, 0
  %535 = vmatpush.bf16.msra.mxu0 %v448
  %536 = vmatpush.bf16.msra.mxu0 %v447
  %537 = vmatpush.bf16.msra.mxu0 %v446
  %538 = vmatpush.bf16.msra.mxu0 %v445
  %539 = vmatpush.bf16.msra.mxu0 %v444
  %540 = vmatpush.bf16.msra.mxu0 %v443
  %541 = vmatpush.bf16.msra.mxu0 %v442
  %542 = vmatpush.bf16.msra.mxu0 %v441
  %543 = vmatmul.bf16.gmra.mxu0 %v234
  %v544 = vpop.f32.mrf.mxu0
  %v545 = vadd.f32 %v128, %v544
  %v546 = vpop.f32.mrf.mxu0
  %v547 = vadd.f32 %v128, %v546
  %548 = vmatmul.bf16.gmra.mxu0 %v239
  %v549 = vpop.f32.mrf.mxu0
  %v550 = vadd.f32 %v128, %v549
  %v551 = vpop.f32.mrf.mxu0
  %v552 = vadd.f32 %v128, %v551
  %553 = vmatmul.bf16.gmra.mxu0 %v244
  %v554 = vpop.f32.mrf.mxu0
  %v555 = vadd.f32 %v128, %v554
  %v556 = vpop.f32.mrf.mxu0
  %v557 = vadd.f32 %v128, %v556
  %558 = vmatmul.bf16.gmra.mxu0 %v249
  %v559 = vpop.f32.mrf.mxu0
  %v560 = vadd.f32 %v128, %v559
  %v561 = vpop.f32.mrf.mxu0
  %v562 = vadd.f32 %v128, %v561
  %563 = vmatmul.bf16.gmra.mxu0 %v254
  %v564 = vpop.f32.mrf.mxu0
  %v565 = vadd.f32 %v128, %v564
  %v566 = vpop.f32.mrf.mxu0
  %v567 = vadd.f32 %v128, %v566
  %568 = vmatmul.bf16.gmra.mxu0 %v259
  %v569 = vpop.f32.mrf.mxu0
  %v570 = vadd.f32 %v128, %v569
  %v571 = vpop.f32.mrf.mxu0
  %v572 = vadd.f32 %v128, %v571
  %573 = vmatmul.bf16.gmra.mxu0 %v264
  %v574 = vpop.f32.mrf.mxu0
  %v575 = vadd.f32 %v128, %v574
  %v576 = vpop.f32.mrf.mxu0
  %577 = vdwg.mxu0
  %578 = vmatpush.bf16.msra.mxu0 %v456
  %579 = vmatpush.bf16.msra.mxu0 %v455
  %580 = vmatpush.bf16.msra.mxu0 %v454
  %581 = vmatpush.bf16.msra.mxu0 %v453
  %582 = vmatpush.bf16.msra.mxu0 %v452
  %583 = vmatpush.bf16.msra.mxu0 %v451
  %584 = vmatpush.bf16.msra.mxu0 %v450
  %585 = vmatpush.bf16.msra.mxu0 %v449
  %586 = vmatmul.bf16.gmra.mxu0 %v235
  %v587 = vpop.f32.mrf.mxu0
  %v588 = vadd.f32 %v545, %v587
  %v589 = vpop.f32.mrf.mxu0
  %v590 = vadd.f32 %v547, %v589
  %591 = vmatmul.bf16.gmra.mxu0 %v240
  %v592 = vpop.f32.mrf.mxu0
  %v593 = vadd.f32 %v550, %v592
  %v594 = vpop.f32.mrf.mxu0
  %v595 = vadd.f32 %v552, %v594
  %596 = vmatmul.bf16.gmra.mxu0 %v245
  %v597 = vpop.f32.mrf.mxu0
  %v598 = vadd.f32 %v555, %v597
  %v599 = vpop.f32.mrf.mxu0
  %v600 = vadd.f32 %v557, %v599
  %601 = vmatmul.bf16.gmra.mxu0 %v250
  %v602 = vpop.f32.mrf.mxu0
  %v603 = vadd.f32 %v560, %v602
  %v604 = vpop.f32.mrf.mxu0
  %v605 = vadd.f32 %v562, %v604
  %606 = vmatmul.bf16.gmra.mxu0 %v255
  %v607 = vpop.f32.mrf.mxu0
  %v608 = vadd.f32 %v565, %v607
  %v609 = vpop.f32.mrf.mxu0
  %v610 = vadd.f32 %v567, %v609
  %611 = vmatmul.bf16.gmra.mxu0 %v260
  %v612 = vpop.f32.mrf.mxu0
  %v613 = vadd.f32 %v570, %v612
  %v614 = vpop.f32.mrf.mxu0
  %v615 = vadd.f32 %v572, %v614
  %616 = vmatmul.bf16.gmra.mxu0 %v265
  %v617 = vpop.f32.mrf.mxu0
  %v618 = vadd.f32 %v575, %v617
  %v619 = vpop.f32.mrf.mxu0
  %620 = vdwg.mxu0
  %621 = vmatpush.bf16.msra.mxu0 %v464
  %622 = vmatpush.bf16.msra.mxu0 %v463
  %623 = vmatpush.bf16.msra.mxu0 %v462
  %624 = vmatpush.bf16.msra.mxu0 %v461
  %625 = vmatpush.bf16.msra.mxu0 %v460
  %626 = vmatpush.bf16.msra.mxu0 %v459
  %627 = vmatpush.bf16.msra.mxu0 %v458
  %628 = vmatpush.bf16.msra.mxu0 %v457
  %629 = vmatmul.bf16.gmra.mxu0 %v236
  %v630 = vpop.f32.mrf.mxu0
  %v631 = vadd.f32 %v588, %v630
  %v632 = vpop.f32.mrf.mxu0
  %v633 = vadd.f32 %v590, %v632
  %634 = vmatmul.bf16.gmra.mxu0 %v241
  %v635 = vpop.f32.mrf.mxu0
  %v636 = vadd.f32 %v593, %v635
  %v637 = vpop.f32.mrf.mxu0
  %v638 = vadd.f32 %v595, %v637
  %639 = vmatmul.bf16.gmra.mxu0 %v246
  %v640 = vpop.f32.mrf.mxu0
  %v641 = vadd.f32 %v598, %v640
  %v642 = vpop.f32.mrf.mxu0
  %v643 = vadd.f32 %v600, %v642
  %644 = vmatmul.bf16.gmra.mxu0 %v251
  %v645 = vpop.f32.mrf.mxu0
  %v646 = vadd.f32 %v603, %v645
  %v647 = vpop.f32.mrf.mxu0
  %v648 = vadd.f32 %v605, %v647
  %649 = vmatmul.bf16.gmra.mxu0 %v256
  %v650 = vpop.f32.mrf.mxu0
  %v651 = vadd.f32 %v608, %v650
  %v652 = vpop.f32.mrf.mxu0
  %v653 = vadd.f32 %v610, %v652
  %654 = vmatmul.bf16.gmra.mxu0 %v261
  %v655 = vpop.f32.mrf.mxu0
  %v656 = vadd.f32 %v613, %v655
  %v657 = vpop.f32.mrf.mxu0
  %v658 = vadd.f32 %v615, %v657
  %659 = vmatmul.bf16.gmra.mxu0 %v266
  %v660 = vpop.f32.mrf.mxu0
  %v661 = vadd.f32 %v618, %v660
  %v662 = vpop.f32.mrf.mxu0
  %663 = vdwg.mxu0
  %664 = vmatpush.bf16.msra.mxu0 %v472
  %665 = vmatpush.bf16.msra.mxu0 %v471
  %666 = vmatpush.bf16.msra.mxu0 %v470
  %667 = vmatpush.bf16.msra.mxu0 %v469
  %668 = vmatpush.bf16.msra.mxu0 %v468
  %669 = vmatpush.bf16.msra.mxu0 %v467
  %670 = vmatpush.bf16.msra.mxu0 %v466
  %671 = vmatpush.bf16.msra.mxu0 %v465
  %672 = vmatmul.bf16.gmra.mxu0 %v237
  %v673 = vpop.f32.mrf.mxu0
  %v674 = vadd.f32 %v631, %v673
  %v675 = vpop.f32.mrf.mxu0
  %v676 = vadd.f32 %v633, %v675
  %677 = vmatmul.bf16.gmra.mxu0 %v242
  %v678 = vpop.f32.mrf.mxu0
  %v679 = vadd.f32 %v636, %v678
  %v680 = vpop.f32.mrf.mxu0
  %v681 = vadd.f32 %v638, %v680
  %682 = vmatmul.bf16.gmra.mxu0 %v247
  %v683 = vpop.f32.mrf.mxu0
  %v684 = vadd.f32 %v641, %v683
  %v685 = vpop.f32.mrf.mxu0
  %v686 = vadd.f32 %v643, %v685
  %687 = vmatmul.bf16.gmra.mxu0 %v252
  %v688 = vpop.f32.mrf.mxu0
  %v689 = vadd.f32 %v646, %v688
  %v690 = vpop.f32.mrf.mxu0
  %v691 = vadd.f32 %v648, %v690
  %692 = vmatmul.bf16.gmra.mxu0 %v257
  %v693 = vpop.f32.mrf.mxu0
  %v694 = vadd.f32 %v651, %v693
  %v695 = vpop.f32.mrf.mxu0
  %v696 = vadd.f32 %v653, %v695
  %697 = vmatmul.bf16.gmra.mxu0 %v262
  %v698 = vpop.f32.mrf.mxu0
  %v699 = vadd.f32 %v656, %v698
  %v700 = vpop.f32.mrf.mxu0
  %v701 = vadd.f32 %v658, %v700
  %702 = vmatmul.bf16.gmra.mxu0 %v267
  %v703 = vpop.f32.mrf.mxu0
  %v704 = vadd.f32 %v661, %v703
  %v705 = vpop.f32.mrf.mxu0
  %706 = vdwg.mxu0
  %707 = vmatpush.bf16.msra.mxu0 0
  %708 = vmatpush.bf16.msra.mxu0 0
  %709 = vmatpush.bf16.msra.mxu0 0
  %710 = vmatpush.bf16.msra.mxu0 0
  %711 = vmatpush.bf16.msra.mxu0 %v476
  %712 = vmatpush.bf16.msra.mxu0 %v475
  %713 = vmatpush.bf16.msra.mxu0 %v474
  %714 = vmatpush.bf16.msra.mxu0 %v473
  %715 = vmatmul.bf16.gmra.mxu0 %v515
  %v716 = vpop.f32.mrf.mxu0
  %v717 = vadd.f32 %v674, %v716
  %v718 = vpop.f32.mrf.mxu0
  %v719 = vadd.f32 %v676, %v718
  %720 = vmatmul.bf16.gmra.mxu0 %v518
  %v721 = vpop.f32.mrf.mxu0
  %v722 = vadd.f32 %v679, %v721
  %v723 = vpop.f32.mrf.mxu0
  %v724 = vadd.f32 %v681, %v723
  %725 = vmatmul.bf16.gmra.mxu0 %v521
  %v726 = vpop.f32.mrf.mxu0
  %v727 = vadd.f32 %v684, %v726
  %v728 = vpop.f32.mrf.mxu0
  %v729 = vadd.f32 %v686, %v728
  %730 = vmatmul.bf16.gmra.mxu0 %v524
  %v731 = vpop.f32.mrf.mxu0
  %v732 = vadd.f32 %v689, %v731
  %v733 = vpop.f32.mrf.mxu0
  %v734 = vadd.f32 %v691, %v733
  %735 = vmatmul.bf16.gmra.mxu0 %v527
  %v736 = vpop.f32.mrf.mxu0
  %v737 = vadd.f32 %v694, %v736
  %v738 = vpop.f32.mrf.mxu0
  %v739 = vadd.f32 %v696, %v738
  %740 = vmatmul.bf16.gmra.mxu0 %v530
  %v741 = vpop.f32.mrf.mxu0
  %v742 = vadd.f32 %v699, %v741
  %v743 = vpop.f32.mrf.mxu0
  %v744 = vadd.f32 %v701, %v743
  %745 = vmatmul.bf16.gmra.mxu0 %v533
  %v746 = vpop.f32.mrf.mxu0
  %v747 = vadd.f32 %v704, %v746
  %v748 = vpop.f32.mrf.mxu0
  %749 = vdwg.mxu0
  %v750 = vtanh.pop %v717
  %v751 = vtanh.pop %v719
  %v752 = vtanh.pop %v722
  %v753 = vtanh.pop %v724
  %v754 = vtanh.pop %v727
  %v755 = vtanh.pop %v729
  %v756 = vtanh.pop %v732
  %v757 = vtanh.pop %v734
  %v758 = vtanh.pop %v737
  %v759 = vtanh.pop %v739
  %v760 = vtanh.pop %v742
  %v761 = vtanh.pop %v744
  %v762 = vtanh.pop %v747
  %763 = vst [vmem:[%s3] sm:$0xff] %v750
  %764 = vst [vmem:[%s3 + $0x8] sm:$0xff] %v751
  %765 = vst [vmem:[%s3 + $0x10] sm:$0xff] %v752
  %766 = vst [vmem:[%s3 + $0x18] sm:$0xff] %v753
  %767 = vst [vmem:[%s3 + $0x20] sm:$0xff] %v754
  %768 = vst [vmem:[%s3 + $0x28] sm:$0xff] %v755
  %769 = vst [vmem:[%s3 + $0x30] sm:$0xff] %v756
  %770 = vst [vmem:[%s3 + $0x38] sm:$0xff] %v757
  %771 = vst [vmem:[%s3 + $0x40] sm:$0xff] %v758
  %772 = vst [vmem:[%s3 + $0x48] sm:$0xff] %v759
  %773 = vst [vmem:[%s3 + $0x50] sm:$0xff] %v760
  %774 = vst [vmem:[%s3 + $0x58] sm:$0xff] %v761
  %775 = vst [vmem:[%s3 + $0x60] sm:$0x3] %v762
  // Predicated region
  $region14: #{critic_forward.6} parent=0 // pred_check
    _
  $region15: #{critic_forward.6} parent=0 // pred_check_branch
    %777 = sbr.rel (0) target = $region17
  $region16: #{critic_forward.6} parent=0 // pred_region
    _
  $region17: #{critic_forward.6} parent=0 // pred_fallthru
    _
  // Predicated region
  $region18: #{critic_forward.6} parent=0 // pred_check
    _
  $region19: #{critic_forward.6} parent=0 // pred_check_branch
    %779 = sbr.rel (0) target = $region21
  $region20: #{critic_forward.6} parent=0 // pred_region
    _
  $region21: #{critic_forward.6} parent=0 // pred_fallthru
    _

// kernel: critic_forward.7
$region0: #{critic_forward.7}
  #allocation0 [shape = 'u32[]', space=smem, size = 0x4, offset = 0x4, fixed_abs, tag = 'smem constant byte address 0x4 - core index']
  #allocation1 [shape = 'u32[72,128]{1,0:T(1,128)}', space=vmem, size = 0x9000, scoped, tag = 'internal scratch']
  %s0 = inlined_call_operand.vmem [shape: bf16[2,3136], index: 0, kind: input, shape index: {}]
  %s1 = inlined_call_operand.vmem [shape: bf16[2,128], index: 1, kind: input, shape index: {}]
  %s2 = inlined_call_operand.vmem [shape: bf16[3136,512], index: 2, kind: input, shape index: {}]
  %s3 = inlined_call_operand.vmem [shape: f32[1,512], index: 3, kind: input, shape index: {}]
  %s4 = inlined_call_operand.vmem [shape: bf16[512,512], index: 4, kind: input, shape index: {}]
  %s5 = inlined_call_operand.vmem [shape: bf16[128,512], index: 5, kind: input, shape index: {}]
  %s6 = inlined_call_operand.vmem [shape: f32[1,512], index: 6, kind: input, shape index: {}]
  %s7 = inlined_call_operand.vmem [shape: bf16[512,128], index: 7, kind: input, shape index: {}]
  %s8 = inlined_call_operand.vmem [shape: f32[1,128], index: 8, kind: input, shape index: {}]
  %s9 = inlined_call_operand.vmem [shape: f32[2,128], index: 9, kind: output, shape index: {}]
  %s10 = sld [smem:[#allocation0]]
  $region46: #{critic_forward.7} parent=0
    _
  %s12 = ssub.s32 1, %s10
  %s13 = scalar_select 0, %s12, %s10
  // Predicated region
  $region2: #{critic_forward.7} parent=0 // pred_check
    _
  $region3: #{critic_forward.7} parent=0 // pred_check_branch
    %15 = sbr.rel (0) target = $region5
  $region4: #{critic_forward.7} parent=0 // pred_region
    _
  $region5: #{critic_forward.7} parent=0 // pred_fallthru
    _
  // Predicated region
  $region6: #{critic_forward.7} parent=0 // pred_check
    _
  $region7: #{critic_forward.7} parent=0 // pred_check_branch
    %17 = sbr.rel (0) target = $region9
  $region8: #{critic_forward.7} parent=0 // pred_region
    _
  $region9: #{critic_forward.7} parent=0 // pred_fallthru
    _
  // Predicated region
  $region10: #{critic_forward.7} parent=0 // pred_check
    _
  $region11: #{critic_forward.7} parent=0 // pred_check_branch
    %19 = sbr.rel (0) target = $region13
  $region12: #{critic_forward.7} parent=0 // pred_region
    _
  $region13: #{critic_forward.7} parent=0 // pred_fallthru
    _
  // Predicated region
  $region14: #{critic_forward.7} parent=0 // pred_check
    _
  $region15: #{critic_forward.7} parent=0 // pred_check_branch
    %21 = sbr.rel (0) target = $region17
  $region16: #{critic_forward.7} parent=0 // pred_region
    _
  $region17: #{critic_forward.7} parent=0 // pred_fallthru
    _
  // Predicated region
  $region18: #{critic_forward.7} parent=0 // pred_check
    _
  $region19: #{critic_forward.7} parent=0 // pred_check_branch
    %23 = sbr.rel (0) target = $region21
  $region20: #{critic_forward.7} parent=0 // pred_region
    _
  $region21: #{critic_forward.7} parent=0 // pred_fallthru
    _
  // Predicated region
  $region22: #{critic_forward.7} parent=0 // pred_check
    _
  $region23: #{critic_forward.7} parent=0 // pred_check_branch
    %25 = sbr.rel (0) target = $region25
  $region24: #{critic_forward.7} parent=0 // pred_region
    _
  $region25: #{critic_forward.7} parent=0 // pred_fallthru
    _
  // Predicated region
  $region26: #{critic_forward.7} parent=0 // pred_check
    _
  $region27: #{critic_forward.7} parent=0 // pred_check_branch
    %27 = sbr.rel (0) target = $region29
  $region28: #{critic_forward.7} parent=0 // pred_region
    _
  $region29: #{critic_forward.7} parent=0 // pred_fallthru
    _
  // Predicated region
  $region30: #{critic_forward.7} parent=0 // pred_check
    _
  $region31: #{critic_forward.7} parent=0 // pred_check_branch
    %29 = sbr.rel (0) target = $region33
  $region32: #{critic_forward.7} parent=0 // pred_region
    _
  $region33: #{critic_forward.7} parent=0 // pred_fallthru
    _
  // Predicated region
  $region34: #{critic_forward.7} parent=0 // pred_check
    _
  $region35: #{critic_forward.7} parent=0 // pred_check_branch
    %31 = sbr.rel (0) target = $region37
  $region36: #{critic_forward.7} parent=0 // pred_region
    _
  $region37: #{critic_forward.7} parent=0 // pred_fallthru
    _
  %v33 = vld [vmem:[%s0] sm:$0xff]
  %v34 = vld [vmem:[%s0 + $0x8] sm:$0xff]
  %v35 = vld [vmem:[%s0 + $0x10] sm:$0xff]
  %v36 = vld [vmem:[%s0 + $0x18] sm:$0x1]
  %v37 = vld [vmem:[%s2] sm:$0xff]
  %v38 = vld [vmem:[%s2 + $0x8] sm:$0xff]
  %v39 = vld [vmem:[%s2 + $0x10] sm:$0xff]
  %v40 = vld [vmem:[%s2 + $0x18] sm:$0xff]
  %v41 = vld [vmem:[%s2 + $0x20] sm:$0xff]
  %v42 = vld [vmem:[%s2 + $0x28] sm:$0xff]
  %v43 = vld [vmem:[%s2 + $0x30] sm:$0xff]
  %v44 = vld [vmem:[%s2 + $0x38] sm:$0xff]
  %v45 = vld [vmem:[%s2 + $0x40] sm:$0xff]
  %v46 = vld [vmem:[%s2 + $0x48] sm:$0xff]
  %v47 = vld [vmem:[%s2 + $0x50] sm:$0xff]
  %v48 = vld [vmem:[%s2 + $0x58] sm:$0xff]
  %v49 = vld [vmem:[%s2 + $0x60] sm:$0xff]
  %v50 = vld [vmem:[%s2 + $0x68] sm:$0xff]
  %v51 = vld [vmem:[%s2 + $0x70] sm:$0xff]
  %v52 = vld [vmem:[%s2 + $0x78] sm:$0xff]
  %v53 = vld [vmem:[%s2 + $0x80] sm:$0xff]
  %v54 = vld [vmem:[%s2 + $0x88] sm:$0xff]
  %v55 = vld [vmem:[%s2 + $0x90] sm:$0xff]
  %v56 = vld [vmem:[%s2 + $0x98] sm:$0xff]
  %v57 = vld [vmem:[%s2 + $0xa0] sm:$0xff]
  %v58 = vld [vmem:[%s2 + $0xa8] sm:$0xff]
  %v59 = vld [vmem:[%s2 + $0xb0] sm:$0xff]
  %v60 = vld [vmem:[%s2 + $0xb8] sm:$0xff]
  %v61 = vld [vmem:[%s2 + $0xc0] sm:$0xff]
  %v62 = vld [vmem:[%s2 + $0xc8] sm:$0xff]
  %v63 = vld [vmem:[%s2 + $0xd0] sm:$0xff]
  %v64 = vld [vmem:[%s2 + $0xd8] sm:$0xff]
  %v65 = vld [vmem:[%s2 + $0xe0] sm:$0xff]
  %v66 = vld [vmem:[%s2 + $0xe8] sm:$0xff]
  %v67 = vld [vmem:[%s2 + $0xf0] sm:$0xff]
  %v68 = vld [vmem:[%s2 + $0xf8] sm:$0xff]
  %v69 = vld [vmem:[%s2 + $0x100] sm:$0xff]
  %v70 = vld [vmem:[%s2 + $0x108] sm:$0xff]
  %v71 = vld [vmem:[%s2 + $0x110] sm:$0xff]
  %v72 = vld [vmem:[%s2 + $0x118] sm:$0xff]
  %v73 = vld [vmem:[%s2 + $0x120] sm:$0xff]
  %v74 = vld [vmem:[%s2 + $0x128] sm:$0xff]
  %v75 = vld [vmem:[%s2 + $0x130] sm:$0xff]
  %v76 = vld [vmem:[%s2 + $0x138] sm:$0xff]
  %v77 = vld [vmem:[%s2 + $0x140] sm:$0xff]
  %v78 = vld [vmem:[%s2 + $0x148] sm:$0xff]
  %v79 = vld [vmem:[%s2 + $0x150] sm:$0xff]
  %v80 = vld [vmem:[%s2 + $0x158] sm:$0xff]
  %v81 = vld [vmem:[%s2 + $0x160] sm:$0xff]
  %v82 = vld [vmem:[%s2 + $0x168] sm:$0xff]
  %v83 = vld [vmem:[%s2 + $0x170] sm:$0xff]
  %v84 = vld [vmem:[%s2 + $0x178] sm:$0xff]
  %v85 = vld [vmem:[%s2 + $0x180] sm:$0xff]
  %v86 = vld [vmem:[%s2 + $0x188] sm:$0xff]
  %v87 = vld [vmem:[%s2 + $0x190] sm:$0xff]
  %v88 = vld [vmem:[%s2 + $0x198] sm:$0xff]
  %v89 = vld [vmem:[%s2 + $0x1a0] sm:$0xff]
  %v90 = vld [vmem:[%s2 + $0x1a8] sm:$0xff]
  %v91 = vld [vmem:[%s2 + $0x1b0] sm:$0xff]
  %v92 = vld [vmem:[%s2 + $0x1b8] sm:$0xff]
  %v93 = vld [vmem:[%s2 + $0x1c0] sm:$0xff]
  %v94 = vld [vmem:[%s2 + $0x1c8] sm:$0xff]
  %v95 = vld [vmem:[%s2 + $0x1d0] sm:$0xff]
  %v96 = vld [vmem:[%s2 + $0x1d8] sm:$0xff]
  %v97 = vld [vmem:[%s2 + $0x1e0] sm:$0xff]
  %v98 = vld [vmem:[%s2 + $0x1e8] sm:$0xff]
  %v99 = vld [vmem:[%s2 + $0x1f0] sm:$0xff]
  %v100 = vld [vmem:[%s2 + $0x1f8] sm:$0xff]
  %v101 = vld [vmem:[%s2 + $0x200] sm:$0xff]
  %v102 = vld [vmem:[%s2 + $0x208] sm:$0xff]
  %v103 = vld [vmem:[%s2 + $0x210] sm:$0xff]
  %v104 = vld [vmem:[%s2 + $0x218] sm:$0xff]
  %v105 = vld [vmem:[%s2 + $0x220] sm:$0xff]
  %v106 = vld [vmem:[%s2 + $0x228] sm:$0xff]
  %v107 = vld [vmem:[%s2 + $0x230] sm:$0xff]
  %v108 = vld [vmem:[%s2 + $0x238] sm:$0xff]
  %v109 = vld [vmem:[%s2 + $0x240] sm:$0xff]
  %v110 = vld [vmem:[%s2 + $0x248] sm:$0xff]
  %v111 = vld [vmem:[%s2 + $0x250] sm:$0xff]
  %v112 = vld [vmem:[%s2 + $0x258] sm:$0xff]
  %v113 = vld [vmem:[%s2 + $0x260] sm:$0xff]
  %v114 = vld [vmem:[%s2 + $0x268] sm:$0xff]
  %v115 = vld [vmem:[%s2 + $0x270] sm:$0xff]
  %v116 = vld [vmem:[%s2 + $0x278] sm:$0xff]
  %v117 = vld [vmem:[%s2 + $0x280] sm:$0xff]
  %v118 = vld [vmem:[%s2 + $0x288] sm:$0xff]
  %v119 = vld [vmem:[%s2 + $0x290] sm:$0xff]
  %v120 = vld [vmem:[%s2 + $0x298] sm:$0xff]
  %v121 = vld [vmem:[%s2 + $0x2a0] sm:$0xff]
  %v122 = vld [vmem:[%s2 + $0x2a8] sm:$0xff]
  %v123 = vld [vmem:[%s2 + $0x2b0] sm:$0xff]
  %v124 = vld [vmem:[%s2 + $0x2b8] sm:$0xff]
  %v125 = vld [vmem:[%s2 + $0x2c0] sm:$0xff]
  %v126 = vld [vmem:[%s2 + $0x2c8] sm:$0xff]
  %v127 = vld [vmem:[%s2 + $0x2d0] sm:$0xff]
  %v128 = vld [vmem:[%s2 + $0x2d8] sm:$0xff]
  %v129 = vld [vmem:[%s2 + $0x2e0] sm:$0xff]
  %v130 = vld [vmem:[%s2 + $0x2e8] sm:$0xff]
  %v131 = vld [vmem:[%s2 + $0x2f0] sm:$0xff]
  %v132 = vld [vmem:[%s2 + $0x2f8] sm:$0xff]
  %v133 = vld [vmem:[%s2 + $0x300] sm:$0xff]
  %v134 = vld [vmem:[%s2 + $0x308] sm:$0xff]
  %v135 = vld [vmem:[%s2 + $0x310] sm:$0xff]
  %v136 = vld [vmem:[%s2 + $0x318] sm:$0xff]
  %v137 = vld [vmem:[%s2 + $0x320] sm:$0xff]
  %v138 = vld [vmem:[%s2 + $0x328] sm:$0xff]
  %v139 = vld [vmem:[%s2 + $0x330] sm:$0xff]
  %v140 = vld [vmem:[%s2 + $0x338] sm:$0xff]
  %v141 = vld [vmem:[%s2 + $0x340] sm:$0xff]
  %v142 = vld [vmem:[%s2 + $0x348] sm:$0xff]
  %v143 = vld [vmem:[%s2 + $0x350] sm:$0xff]
  %v144 = vld [vmem:[%s2 + $0x358] sm:$0xff]
  %v145 = vld [vmem:[%s2 + $0x360] sm:$0xff]
  %v146 = vld [vmem:[%s2 + $0x368] sm:$0xff]
  %v147 = vld [vmem:[%s2 + $0x370] sm:$0xff]
  %v148 = vld [vmem:[%s2 + $0x378] sm:$0xff]
  %v149 = vld [vmem:[%s2 + $0x380] sm:$0xff]
  %v150 = vld [vmem:[%s2 + $0x388] sm:$0xff]
  %v151 = vld [vmem:[%s2 + $0x390] sm:$0xff]
  %v152 = vld [vmem:[%s2 + $0x398] sm:$0xff]
  %v153 = vld [vmem:[%s2 + $0x3a0] sm:$0xff]
  %v154 = vld [vmem:[%s2 + $0x3a8] sm:$0xff]
  %v155 = vld [vmem:[%s2 + $0x3b0] sm:$0xff]
  %v156 = vld [vmem:[%s2 + $0x3b8] sm:$0xff]
  %v157 = vld [vmem:[%s2 + $0x3c0] sm:$0xff]
  %v158 = vld [vmem:[%s2 + $0x3c8] sm:$0xff]
  %v159 = vld [vmem:[%s2 + $0x3d0] sm:$0xff]
  %v160 = vld [vmem:[%s2 + $0x3d8] sm:$0xff]
  %v161 = vld [vmem:[%s2 + $0x3e0] sm:$0xff]
  %v162 = vld [vmem:[%s2 + $0x3e8] sm:$0xff]
  %v163 = vld [vmem:[%s2 + $0x3f0] sm:$0xff]
  %v164 = vld [vmem:[%s2 + $0x3f8] sm:$0xff]
  %v165 = vld [vmem:[%s2 + $0x400] sm:$0xff]
  %v166 = vld [vmem:[%s2 + $0x408] sm:$0xff]
  %v167 = vld [vmem:[%s2 + $0x410] sm:$0xff]
  %v168 = vld [vmem:[%s2 + $0x418] sm:$0xff]
  %v169 = vld [vmem:[%s2 + $0x420] sm:$0xff]
  %v170 = vld [vmem:[%s2 + $0x428] sm:$0xff]
  %v171 = vld [vmem:[%s2 + $0x430] sm:$0xff]
  %v172 = vld [vmem:[%s2 + $0x438] sm:$0xff]
  %v173 = vld [vmem:[%s2 + $0x440] sm:$0xff]
  %v174 = vld [vmem:[%s2 + $0x448] sm:$0xff]
  %v175 = vld [vmem:[%s2 + $0x450] sm:$0xff]
  %v176 = vld [vmem:[%s2 + $0x458] sm:$0xff]
  %v177 = vld [vmem:[%s2 + $0x460] sm:$0xff]
  %v178 = vld [vmem:[%s2 + $0x468] sm:$0xff]
  %v179 = vld [vmem:[%s2 + $0x470] sm:$0xff]
  %v180 = vld [vmem:[%s2 + $0x478] sm:$0xff]
  %v181 = vld [vmem:[%s2 + $0x480] sm:$0xff]
  %v182 = vld [vmem:[%s2 + $0x488] sm:$0xff]
  %v183 = vld [vmem:[%s2 + $0x490] sm:$0xff]
  %v184 = vld [vmem:[%s2 + $0x498] sm:$0xff]
  %v185 = vld [vmem:[%s2 + $0x4a0] sm:$0xff]
  %v186 = vld [vmem:[%s2 + $0x4a8] sm:$0xff]
  %v187 = vld [vmem:[%s2 + $0x4b0] sm:$0xff]
  %v188 = vld [vmem:[%s2 + $0x4b8] sm:$0xff]
  %v189 = vld [vmem:[%s2 + $0x4c0] sm:$0xff]
  %v190 = vld [vmem:[%s2 + $0x4c8] sm:$0xff]
  %v191 = vld [vmem:[%s2 + $0x4d0] sm:$0xff]
  %v192 = vld [vmem:[%s2 + $0x4d8] sm:$0xff]
  %v193 = vld [vmem:[%s2 + $0x4e0] sm:$0xff]
  %v194 = vld [vmem:[%s2 + $0x4e8] sm:$0xff]
  %v195 = vld [vmem:[%s2 + $0x4f0] sm:$0xff]
  %v196 = vld [vmem:[%s2 + $0x4f8] sm:$0xff]
  %v197 = vld [vmem:[%s2 + $0x500] sm:$0xff]
  %v198 = vld [vmem:[%s2 + $0x508] sm:$0xff]
  %v199 = vld [vmem:[%s2 + $0x510] sm:$0xff]
  %v200 = vld [vmem:[%s2 + $0x518] sm:$0xff]
  %v201 = vld [vmem:[%s2 + $0x520] sm:$0xff]
  %v202 = vld [vmem:[%s2 + $0x528] sm:$0xff]
  %v203 = vld [vmem:[%s2 + $0x530] sm:$0xff]
  %v204 = vld [vmem:[%s2 + $0x538] sm:$0xff]
  %v205 = vld [vmem:[%s2 + $0x540] sm:$0xff]
  %v206 = vld [vmem:[%s2 + $0x548] sm:$0xff]
  %v207 = vld [vmem:[%s2 + $0x550] sm:$0xff]
  %v208 = vld [vmem:[%s2 + $0x558] sm:$0xff]
  %v209 = vld [vmem:[%s2 + $0x560] sm:$0xff]
  %v210 = vld [vmem:[%s2 + $0x568] sm:$0xff]
  %v211 = vld [vmem:[%s2 + $0x570] sm:$0xff]
  %v212 = vld [vmem:[%s2 + $0x578] sm:$0xff]
  %v213 = vld [vmem:[%s2 + $0x580] sm:$0xff]
  %v214 = vld [vmem:[%s2 + $0x588] sm:$0xff]
  %v215 = vld [vmem:[%s2 + $0x590] sm:$0xff]
  %v216 = vld [vmem:[%s2 + $0x598] sm:$0xff]
  %v217 = vld [vmem:[%s2 + $0x5a0] sm:$0xff]
  %v218 = vld [vmem:[%s2 + $0x5a8] sm:$0xff]
  %v219 = vld [vmem:[%s2 + $0x5b0] sm:$0xff]
  %v220 = vld [vmem:[%s2 + $0x5b8] sm:$0xff]
  %v221 = vld [vmem:[%s2 + $0x5c0] sm:$0xff]
  %v222 = vld [vmem:[%s2 + $0x5c8] sm:$0xff]
  %v223 = vld [vmem:[%s2 + $0x5d0] sm:$0xff]
  %v224 = vld [vmem:[%s2 + $0x5d8] sm:$0xff]
  %v225 = vld [vmem:[%s2 + $0x5e0] sm:$0xff]
  %v226 = vld [vmem:[%s2 + $0x5e8] sm:$0xff]
  %v227 = vld [vmem:[%s2 + $0x5f0] sm:$0xff]
  %v228 = vld [vmem:[%s2 + $0x5f8] sm:$0xff]
  %v229 = vld [vmem:[%s2 + $0x600] sm:$0xff]
  %v230 = vld [vmem:[%s2 + $0x608] sm:$0xff]
  %v231 = vld [vmem:[%s2 + $0x610] sm:$0xff]
  %v232 = vld [vmem:[%s2 + $0x618] sm:$0xff]
  %v233 = vld [vmem:[%s2 + $0x620] sm:$0xff]
  %v234 = vld [vmem:[%s2 + $0x628] sm:$0xff]
  %v235 = vld [vmem:[%s2 + $0x630] sm:$0xff]
  %v236 = vld [vmem:[%s2 + $0x638] sm:$0xff]
  %v237 = vld [vmem:[%s2 + $0x640] sm:$0xff]
  %v238 = vld [vmem:[%s2 + $0x648] sm:$0xff]
  %v239 = vld [vmem:[%s2 + $0x650] sm:$0xff]
  %v240 = vld [vmem:[%s2 + $0x658] sm:$0xff]
  %v241 = vld [vmem:[%s2 + $0x660] sm:$0xff]
  %v242 = vld [vmem:[%s2 + $0x668] sm:$0xff]
  %v243 = vld [vmem:[%s2 + $0x670] sm:$0xff]
  %v244 = vld [vmem:[%s2 + $0x678] sm:$0xff]
  %v245 = vld [vmem:[%s2 + $0x680] sm:$0xff]
  %v246 = vld [vmem:[%s2 + $0x688] sm:$0xff]
  %v247 = vld [vmem:[%s2 + $0x690] sm:$0xff]
  %v248 = vld [vmem:[%s2 + $0x698] sm:$0xff]
  %v249 = vld [vmem:[%s2 + $0x6a0] sm:$0xff]
  %v250 = vld [vmem:[%s2 + $0x6a8] sm:$0xff]
  %v251 = vld [vmem:[%s2 + $0x6b0] sm:$0xff]
  %v252 = vld [vmem:[%s2 + $0x6b8] sm:$0xff]
  %v253 = vld [vmem:[%s2 + $0x6c0] sm:$0xff]
  %v254 = vld [vmem:[%s2 + $0x6c8] sm:$0xff]
  %v255 = vld [vmem:[%s2 + $0x6d0] sm:$0xff]
  %v256 = vld [vmem:[%s2 + $0x6d8] sm:$0xff]
  %v257 = vld [vmem:[%s2 + $0x6e0] sm:$0xff]
  %v258 = vld [vmem:[%s2 + $0x6e8] sm:$0xff]
  %v259 = vld [vmem:[%s2 + $0x6f0] sm:$0xff]
  %v260 = vld [vmem:[%s2 + $0x6f8] sm:$0xff]
  %v261 = vld [vmem:[%s2 + $0x700] sm:$0xff]
  %v262 = vld [vmem:[%s2 + $0x708] sm:$0xff]
  %v263 = vld [vmem:[%s2 + $0x710] sm:$0xff]
  %v264 = vld [vmem:[%s2 + $0x718] sm:$0xff]
  %v265 = vld [vmem:[%s2 + $0x720] sm:$0xff]
  %v266 = vld [vmem:[%s2 + $0x728] sm:$0xff]
  %v267 = vld [vmem:[%s2 + $0x730] sm:$0xff]
  %v268 = vld [vmem:[%s2 + $0x738] sm:$0xff]
  %v269 = vld [vmem:[%s2 + $0x740] sm:$0xff]
  %v270 = vld [vmem:[%s2 + $0x748] sm:$0xff]
  %v271 = vld [vmem:[%s2 + $0x750] sm:$0xff]
  %v272 = vld [vmem:[%s2 + $0x758] sm:$0xff]
  %v273 = vld [vmem:[%s2 + $0x760] sm:$0xff]
  %v274 = vld [vmem:[%s2 + $0x768] sm:$0xff]
  %v275 = vld [vmem:[%s2 + $0x770] sm:$0xff]
  %v276 = vld [vmem:[%s2 + $0x778] sm:$0xff]
  %v277 = vld [vmem:[%s2 + $0x780] sm:$0xff]
  %v278 = vld [vmem:[%s2 + $0x788] sm:$0xff]
  %v279 = vld [vmem:[%s2 + $0x790] sm:$0xff]
  %v280 = vld [vmem:[%s2 + $0x798] sm:$0xff]
  %v281 = vld [vmem:[%s2 + $0x7a0] sm:$0xff]
  %v282 = vld [vmem:[%s2 + $0x7a8] sm:$0xff]
  %v283 = vld [vmem:[%s2 + $0x7b0] sm:$0xff]
  %v284 = vld [vmem:[%s2 + $0x7b8] sm:$0xff]
  %v285 = vld [vmem:[%s2 + $0x7c0] sm:$0xff]
  %v286 = vld [vmem:[%s2 + $0x7c8] sm:$0xff]
  %v287 = vld [vmem:[%s2 + $0x7d0] sm:$0xff]
  %v288 = vld [vmem:[%s2 + $0x7d8] sm:$0xff]
  %v289 = vld [vmem:[%s2 + $0x7e0] sm:$0xff]
  %v290 = vld [vmem:[%s2 + $0x7e8] sm:$0xff]
  %v291 = vld [vmem:[%s2 + $0x7f0] sm:$0xff]
  %v292 = vld [vmem:[%s2 + $0x7f8] sm:$0xff]
  %v293 = vld [vmem:[%s2 + $0x800] sm:$0xff]
  %v294 = vld [vmem:[%s2 + $0x808] sm:$0xff]
  %v295 = vld [vmem:[%s2 + $0x810] sm:$0xff]
  %v296 = vld [vmem:[%s2 + $0x818] sm:$0xff]
  %v297 = vld [vmem:[%s2 + $0x820] sm:$0xff]
  %v298 = vld [vmem:[%s2 + $0x828] sm:$0xff]
  %v299 = vld [vmem:[%s2 + $0x830] sm:$0xff]
  %v300 = vld [vmem:[%s2 + $0x838] sm:$0xff]
  %v301 = vld [vmem:[%s2 + $0x840] sm:$0xff]
  %v302 = vld [vmem:[%s2 + $0x848] sm:$0xff]
  %v303 = vld [vmem:[%s2 + $0x850] sm:$0xff]
  %v304 = vld [vmem:[%s2 + $0x858] sm:$0xff]
  %v305 = vld [vmem:[%s2 + $0x860] sm:$0xff]
  %v306 = vld [vmem:[%s2 + $0x868] sm:$0xff]
  %v307 = vld [vmem:[%s2 + $0x870] sm:$0xff]
  %v308 = vld [vmem:[%s2 + $0x878] sm:$0xff]
  %v309 = vld [vmem:[%s2 + $0x880] sm:$0xff]
  %v310 = vld [vmem:[%s2 + $0x888] sm:$0xff]
  %v311 = vld [vmem:[%s2 + $0x890] sm:$0xff]
  %v312 = vld [vmem:[%s2 + $0x898] sm:$0xff]
  %v313 = vld [vmem:[%s2 + $0x8a0] sm:$0xff]
  %v314 = vld [vmem:[%s2 + $0x8a8] sm:$0xff]
  %v315 = vld [vmem:[%s2 + $0x8b0] sm:$0xff]
  %v316 = vld [vmem:[%s2 + $0x8b8] sm:$0xff]
  %v317 = vld [vmem:[%s2 + $0x8c0] sm:$0xff]
  %v318 = vld [vmem:[%s2 + $0x8c8] sm:$0xff]
  %v319 = vld [vmem:[%s2 + $0x8d0] sm:$0xff]
  %v320 = vld [vmem:[%s2 + $0x8d8] sm:$0xff]
  %v321 = vld [vmem:[%s2 + $0x8e0] sm:$0xff]
  %v322 = vld [vmem:[%s2 + $0x8e8] sm:$0xff]
  %v323 = vld [vmem:[%s2 + $0x8f0] sm:$0xff]
  %v324 = vld [vmem:[%s2 + $0x8f8] sm:$0xff]
  %v325 = vld [vmem:[%s2 + $0x900] sm:$0xff]
  %v326 = vld [vmem:[%s2 + $0x908] sm:$0xff]
  %v327 = vld [vmem:[%s2 + $0x910] sm:$0xff]
  %v328 = vld [vmem:[%s2 + $0x918] sm:$0xff]
  %v329 = vld [vmem:[%s2 + $0x920] sm:$0xff]
  %v330 = vld [vmem:[%s2 + $0x928] sm:$0xff]
  %v331 = vld [vmem:[%s2 + $0x930] sm:$0xff]
  %v332 = vld [vmem:[%s2 + $0x938] sm:$0xff]
  %v333 = vld [vmem:[%s2 + $0x940] sm:$0xff]
  %v334 = vld [vmem:[%s2 + $0x948] sm:$0xff]
  %v335 = vld [vmem:[%s2 + $0x950] sm:$0xff]
  %v336 = vld [vmem:[%s2 + $0x958] sm:$0xff]
  %v337 = vld [vmem:[%s2 + $0x960] sm:$0xff]
  %v338 = vld [vmem:[%s2 + $0x968] sm:$0xff]
  %v339 = vld [vmem:[%s2 + $0x970] sm:$0xff]
  %v340 = vld [vmem:[%s2 + $0x978] sm:$0xff]
  %v341 = vld [vmem:[%s2 + $0x980] sm:$0xff]
  %v342 = vld [vmem:[%s2 + $0x988] sm:$0xff]
  %v343 = vld [vmem:[%s2 + $0x990] sm:$0xff]
  %v344 = vld [vmem:[%s2 + $0x998] sm:$0xff]
  %v345 = vld [vmem:[%s2 + $0x9a0] sm:$0xff]
  %v346 = vld [vmem:[%s2 + $0x9a8] sm:$0xff]
  %v347 = vld [vmem:[%s2 + $0x9b0] sm:$0xff]
  %v348 = vld [vmem:[%s2 + $0x9b8] sm:$0xff]
  %v349 = vld [vmem:[%s2 + $0x9c0] sm:$0xff]
  %v350 = vld [vmem:[%s2 + $0x9c8] sm:$0xff]
  %v351 = vld [vmem:[%s2 + $0x9d0] sm:$0xff]
  %v352 = vld [vmem:[%s2 + $0x9d8] sm:$0xff]
  %v353 = vld [vmem:[%s2 + $0x9e0] sm:$0xff]
  %v354 = vld [vmem:[%s2 + $0x9e8] sm:$0xff]
  %v355 = vld [vmem:[%s2 + $0x9f0] sm:$0xff]
  %v356 = vld [vmem:[%s2 + $0x9f8] sm:$0xff]
  %v357 = vld [vmem:[%s2 + $0xa00] sm:$0xff]
  %v358 = vld [vmem:[%s2 + $0xa08] sm:$0xff]
  %v359 = vld [vmem:[%s2 + $0xa10] sm:$0xff]
  %v360 = vld [vmem:[%s2 + $0xa18] sm:$0xff]
  %v361 = vld [vmem:[%s2 + $0xa20] sm:$0xff]
  %v362 = vld [vmem:[%s2 + $0xa28] sm:$0xff]
  %v363 = vld [vmem:[%s2 + $0xa30] sm:$0xff]
  %v364 = vld [vmem:[%s2 + $0xa38] sm:$0xff]
  %v365 = vld [vmem:[%s2 + $0xa40] sm:$0xff]
  %v366 = vld [vmem:[%s2 + $0xa48] sm:$0xff]
  %v367 = vld [vmem:[%s2 + $0xa50] sm:$0xff]
  %v368 = vld [vmem:[%s2 + $0xa58] sm:$0xff]
  %v369 = vld [vmem:[%s2 + $0xa60] sm:$0xff]
  %v370 = vld [vmem:[%s2 + $0xa68] sm:$0xff]
  %v371 = vld [vmem:[%s2 + $0xa70] sm:$0xff]
  %v372 = vld [vmem:[%s2 + $0xa78] sm:$0xff]
  %v373 = vld [vmem:[%s2 + $0xa80] sm:$0xff]
  %v374 = vld [vmem:[%s2 + $0xa88] sm:$0xff]
  %v375 = vld [vmem:[%s2 + $0xa90] sm:$0xff]
  %v376 = vld [vmem:[%s2 + $0xa98] sm:$0xff]
  %v377 = vld [vmem:[%s2 + $0xaa0] sm:$0xff]
  %v378 = vld [vmem:[%s2 + $0xaa8] sm:$0xff]
  %v379 = vld [vmem:[%s2 + $0xab0] sm:$0xff]
  %v380 = vld [vmem:[%s2 + $0xab8] sm:$0xff]
  %v381 = vld [vmem:[%s2 + $0xac0] sm:$0xff]
  %v382 = vld [vmem:[%s2 + $0xac8] sm:$0xff]
  %v383 = vld [vmem:[%s2 + $0xad0] sm:$0xff]
  %v384 = vld [vmem:[%s2 + $0xad8] sm:$0xff]
  %v385 = vld [vmem:[%s2 + $0xae0] sm:$0xff]
  %v386 = vld [vmem:[%s2 + $0xae8] sm:$0xff]
  %v387 = vld [vmem:[%s2 + $0xaf0] sm:$0xff]
  %v388 = vld [vmem:[%s2 + $0xaf8] sm:$0xff]
  %v389 = vld [vmem:[%s2 + $0xb00] sm:$0xff]
  %v390 = vld [vmem:[%s2 + $0xb08] sm:$0xff]
  %v391 = vld [vmem:[%s2 + $0xb10] sm:$0xff]
  %v392 = vld [vmem:[%s2 + $0xb18] sm:$0xff]
  %v393 = vld [vmem:[%s2 + $0xb20] sm:$0xff]
  %v394 = vld [vmem:[%s2 + $0xb28] sm:$0xff]
  %v395 = vld [vmem:[%s2 + $0xb30] sm:$0xff]
  %v396 = vld [vmem:[%s2 + $0xb38] sm:$0xff]
  %v397 = vld [vmem:[%s2 + $0xb40] sm:$0xff]
  %v398 = vld [vmem:[%s2 + $0xb48] sm:$0xff]
  %v399 = vld [vmem:[%s2 + $0xb50] sm:$0xff]
  %v400 = vld [vmem:[%s2 + $0xb58] sm:$0xff]
  %v401 = vld [vmem:[%s2 + $0xb60] sm:$0xff]
  %v402 = vld [vmem:[%s2 + $0xb68] sm:$0xff]
  %v403 = vld [vmem:[%s2 + $0xb70] sm:$0xff]
  %v404 = vld [vmem:[%s2 + $0xb78] sm:$0xff]
  %v405 = vld [vmem:[%s2 + $0xb80] sm:$0xff]
  %v406 = vld [vmem:[%s2 + $0xb88] sm:$0xff]
  %v407 = vld [vmem:[%s2 + $0xb90] sm:$0xff]
  %v408 = vld [vmem:[%s2 + $0xb98] sm:$0xff]
  %v409 = vld [vmem:[%s2 + $0xba0] sm:$0xff]
  %v410 = vld [vmem:[%s2 + $0xba8] sm:$0xff]
  %v411 = vld [vmem:[%s2 + $0xbb0] sm:$0xff]
  %v412 = vld [vmem:[%s2 + $0xbb8] sm:$0xff]
  %v413 = vld [vmem:[%s2 + $0xbc0] sm:$0xff]
  %v414 = vld [vmem:[%s2 + $0xbc8] sm:$0xff]
  %v415 = vld [vmem:[%s2 + $0xbd0] sm:$0xff]
  %v416 = vld [vmem:[%s2 + $0xbd8] sm:$0xff]
  %v417 = vld [vmem:[%s2 + $0xbe0] sm:$0xff]
  %v418 = vld [vmem:[%s2 + $0xbe8] sm:$0xff]
  %v419 = vld [vmem:[%s2 + $0xbf0] sm:$0xff]
  %v420 = vld [vmem:[%s2 + $0xbf8] sm:$0xff]
  %v421 = vld [vmem:[%s2 + $0xc00] sm:$0xff]
  %v422 = vld [vmem:[%s2 + $0xc08] sm:$0xff]
  %v423 = vld [vmem:[%s2 + $0xc10] sm:$0xff]
  %v424 = vld [vmem:[%s2 + $0xc18] sm:$0xff]
  %v425 = vld [vmem:[%s2 + $0xc20] sm:$0xff]
  %v426 = vld [vmem:[%s2 + $0xc28] sm:$0xff]
  %v427 = vld [vmem:[%s2 + $0xc30] sm:$0xff]
  %v428 = vld [vmem:[%s2 + $0xc38] sm:$0xff]
  %v429 = vld [vmem:[%s2 + $0xc40] sm:$0xff]
  %v430 = vld [vmem:[%s2 + $0xc48] sm:$0xff]
  %v431 = vld [vmem:[%s2 + $0xc50] sm:$0xff]
  %v432 = vld [vmem:[%s2 + $0xc58] sm:$0xff]
  %v433 = vld [vmem:[%s2 + $0xc60] sm:$0xff]
  %v434 = vld [vmem:[%s2 + $0xc68] sm:$0xff]
  %v435 = vld [vmem:[%s2 + $0xc70] sm:$0xff]
  %v436 = vld [vmem:[%s2 + $0xc78] sm:$0xff]
  %v437 = vld [vmem:[%s2 + $0xc80] sm:$0xff]
  %v438 = vld [vmem:[%s2 + $0xc88] sm:$0xff]
  %v439 = vld [vmem:[%s2 + $0xc90] sm:$0xff]
  %v440 = vld [vmem:[%s2 + $0xc98] sm:$0xff]
  %v441 = vld [vmem:[%s2 + $0xca0] sm:$0xff]
  %v442 = vld [vmem:[%s2 + $0xca8] sm:$0xff]
  %v443 = vld [vmem:[%s2 + $0xcb0] sm:$0xff]
  %v444 = vld [vmem:[%s2 + $0xcb8] sm:$0xff]
  %v445 = vld [vmem:[%s2 + $0xcc0] sm:$0xff]
  %v446 = vld [vmem:[%s2 + $0xcc8] sm:$0xff]
  %v447 = vld [vmem:[%s2 + $0xcd0] sm:$0xff]
  %v448 = vld [vmem:[%s2 + $0xcd8] sm:$0xff]
  %v449 = vld [vmem:[%s2 + $0xce0] sm:$0xff]
  %v450 = vld [vmem:[%s2 + $0xce8] sm:$0xff]
  %v451 = vld [vmem:[%s2 + $0xcf0] sm:$0xff]
  %v452 = vld [vmem:[%s2 + $0xcf8] sm:$0xff]
  %v453 = vld [vmem:[%s2 + $0xd00] sm:$0xff]
  %v454 = vld [vmem:[%s2 + $0xd08] sm:$0xff]
  %v455 = vld [vmem:[%s2 + $0xd10] sm:$0xff]
  %v456 = vld [vmem:[%s2 + $0xd18] sm:$0xff]
  %v457 = vld [vmem:[%s2 + $0xd20] sm:$0xff]
  %v458 = vld [vmem:[%s2 + $0xd28] sm:$0xff]
  %v459 = vld [vmem:[%s2 + $0xd30] sm:$0xff]
  %v460 = vld [vmem:[%s2 + $0xd38] sm:$0xff]
  %v461 = vld [vmem:[%s2 + $0xd40] sm:$0xff]
  %v462 = vld [vmem:[%s2 + $0xd48] sm:$0xff]
  %v463 = vld [vmem:[%s2 + $0xd50] sm:$0xff]
  %v464 = vld [vmem:[%s2 + $0xd58] sm:$0xff]
  %v465 = vld [vmem:[%s2 + $0xd60] sm:$0xff]
  %v466 = vld [vmem:[%s2 + $0xd68] sm:$0xff]
  %v467 = vld [vmem:[%s2 + $0xd70] sm:$0xff]
  %v468 = vld [vmem:[%s2 + $0xd78] sm:$0xff]
  %v469 = vld [vmem:[%s2 + $0xd80] sm:$0xff]
  %v470 = vld [vmem:[%s2 + $0xd88] sm:$0xff]
  %v471 = vld [vmem:[%s2 + $0xd90] sm:$0xff]
  %v472 = vld [vmem:[%s2 + $0xd98] sm:$0xff]
  %v473 = vld [vmem:[%s2 + $0xda0] sm:$0xff]
  %v474 = vld [vmem:[%s2 + $0xda8] sm:$0xff]
  %v475 = vld [vmem:[%s2 + $0xdb0] sm:$0xff]
  %v476 = vld [vmem:[%s2 + $0xdb8] sm:$0xff]
  %v477 = vld [vmem:[%s2 + $0xdc0] sm:$0xff]
  %v478 = vld [vmem:[%s2 + $0xdc8] sm:$0xff]
  %v479 = vld [vmem:[%s2 + $0xdd0] sm:$0xff]
  %v480 = vld [vmem:[%s2 + $0xdd8] sm:$0xff]
  %v481 = vld [vmem:[%s2 + $0xde0] sm:$0xff]
  %v482 = vld [vmem:[%s2 + $0xde8] sm:$0xff]
  %v483 = vld [vmem:[%s2 + $0xdf0] sm:$0xff]
  %v484 = vld [vmem:[%s2 + $0xdf8] sm:$0xff]
  %v485 = vld [vmem:[%s2 + $0xe00] sm:$0xff]
  %v486 = vld [vmem:[%s2 + $0xe08] sm:$0xff]
  %v487 = vld [vmem:[%s2 + $0xe10] sm:$0xff]
  %v488 = vld [vmem:[%s2 + $0xe18] sm:$0xff]
  %v489 = vld [vmem:[%s2 + $0xe20] sm:$0xff]
  %v490 = vld [vmem:[%s2 + $0xe28] sm:$0xff]
  %v491 = vld [vmem:[%s2 + $0xe30] sm:$0xff]
  %v492 = vld [vmem:[%s2 + $0xe38] sm:$0xff]
  %v493 = vld [vmem:[%s2 + $0xe40] sm:$0xff]
  %v494 = vld [vmem:[%s2 + $0xe48] sm:$0xff]
  %v495 = vld [vmem:[%s2 + $0xe50] sm:$0xff]
  %v496 = vld [vmem:[%s2 + $0xe58] sm:$0xff]
  %v497 = vld [vmem:[%s2 + $0xe60] sm:$0xff]
  %v498 = vld [vmem:[%s2 + $0xe68] sm:$0xff]
  %v499 = vld [vmem:[%s2 + $0xe70] sm:$0xff]
  %v500 = vld [vmem:[%s2 + $0xe78] sm:$0xff]
  %v501 = vld [vmem:[%s2 + $0xe80] sm:$0xff]
  %v502 = vld [vmem:[%s2 + $0xe88] sm:$0xff]
  %v503 = vld [vmem:[%s2 + $0xe90] sm:$0xff]
  %v504 = vld [vmem:[%s2 + $0xe98] sm:$0xff]
  %v505 = vld [vmem:[%s2 + $0xea0] sm:$0xff]
  %v506 = vld [vmem:[%s2 + $0xea8] sm:$0xff]
  %v507 = vld [vmem:[%s2 + $0xeb0] sm:$0xff]
  %v508 = vld [vmem:[%s2 + $0xeb8] sm:$0xff]
  %v509 = vld [vmem:[%s2 + $0xec0] sm:$0xff]
  %v510 = vld [vmem:[%s2 + $0xec8] sm:$0xff]
  %v511 = vld [vmem:[%s2 + $0xed0] sm:$0xff]
  %v512 = vld [vmem:[%s2 + $0xed8] sm:$0xff]
  %v513 = vld [vmem:[%s2 + $0xee0] sm:$0xff]
  %v514 = vld [vmem:[%s2 + $0xee8] sm:$0xff]
  %v515 = vld [vmem:[%s2 + $0xef0] sm:$0xff]
  %v516 = vld [vmem:[%s2 + $0xef8] sm:$0xff]
  %v517 = vld [vmem:[%s2 + $0xf00] sm:$0xff]
  %v518 = vld [vmem:[%s2 + $0xf08] sm:$0xff]
  %v519 = vld [vmem:[%s2 + $0xf10] sm:$0xff]
  %v520 = vld [vmem:[%s2 + $0xf18] sm:$0xff]
  %v521 = vld [vmem:[%s2 + $0xf20] sm:$0xff]
  %v522 = vld [vmem:[%s2 + $0xf28] sm:$0xff]
  %v523 = vld [vmem:[%s2 + $0xf30] sm:$0xff]
  %v524 = vld [vmem:[%s2 + $0xf38] sm:$0xff]
  %v525 = vld [vmem:[%s2 + $0xf40] sm:$0xff]
  %v526 = vld [vmem:[%s2 + $0xf48] sm:$0xff]
  %v527 = vld [vmem:[%s2 + $0xf50] sm:$0xff]
  %v528 = vld [vmem:[%s2 + $0xf58] sm:$0xff]
  %v529 = vld [vmem:[%s2 + $0xf60] sm:$0xff]
  %v530 = vld [vmem:[%s2 + $0xf68] sm:$0xff]
  %v531 = vld [vmem:[%s2 + $0xf70] sm:$0xff]
  %v532 = vld [vmem:[%s2 + $0xf78] sm:$0xff]
  %v533 = vld [vmem:[%s2 + $0xf80] sm:$0xff]
  %v534 = vld [vmem:[%s2 + $0xf88] sm:$0xff]
  %v535 = vld [vmem:[%s2 + $0xf90] sm:$0xff]
  %v536 = vld [vmem:[%s2 + $0xf98] sm:$0xff]
  %v537 = vld [vmem:[%s2 + $0xfa0] sm:$0xff]
  %v538 = vld [vmem:[%s2 + $0xfa8] sm:$0xff]
  %v539 = vld [vmem:[%s2 + $0xfb0] sm:$0xff]
  %v540 = vld [vmem:[%s2 + $0xfb8] sm:$0xff]
  %v541 = vld [vmem:[%s2 + $0xfc0] sm:$0xff]
  %v542 = vld [vmem:[%s2 + $0xfc8] sm:$0xff]
  %v543 = vld [vmem:[%s2 + $0xfd0] sm:$0xff]
  %v544 = vld [vmem:[%s2 + $0xfd8] sm:$0xff]
  %v545 = vld [vmem:[%s2 + $0xfe0] sm:$0xff]
  %v546 = vld [vmem:[%s2 + $0xfe8] sm:$0xff]
  %v547 = vld [vmem:[%s2 + $0xff0] sm:$0xff]
  %v548 = vld [vmem:[%s2 + $0xff8] sm:$0xff]
  %v549 = vld [vmem:[%s2 + $0x1000] sm:$0xff]
  %v550 = vld [vmem:[%s2 + $0x1008] sm:$0xff]
  %v551 = vld [vmem:[%s2 + $0x1010] sm:$0xff]
  %v552 = vld [vmem:[%s2 + $0x1018] sm:$0xff]
  %v553 = vld [vmem:[%s2 + $0x1020] sm:$0xff]
  %v554 = vld [vmem:[%s2 + $0x1028] sm:$0xff]
  %v555 = vld [vmem:[%s2 + $0x1030] sm:$0xff]
  %v556 = vld [vmem:[%s2 + $0x1038] sm:$0xff]
  %v557 = vld [vmem:[%s2 + $0x1040] sm:$0xff]
  %v558 = vld [vmem:[%s2 + $0x1048] sm:$0xff]
  %v559 = vld [vmem:[%s2 + $0x1050] sm:$0xff]
  %v560 = vld [vmem:[%s2 + $0x1058] sm:$0xff]
  %v561 = vld [vmem:[%s2 + $0x1060] sm:$0xff]
  %v562 = vld [vmem:[%s2 + $0x1068] sm:$0xff]
  %v563 = vld [vmem:[%s2 + $0x1070] sm:$0xff]
  %v564 = vld [vmem:[%s2 + $0x1078] sm:$0xff]
  %v565 = vld [vmem:[%s2 + $0x1080] sm:$0xff]
  %v566 = vld [vmem:[%s2 + $0x1088] sm:$0xff]
  %v567 = vld [vmem:[%s2 + $0x1090] sm:$0xff]
  %v568 = vld [vmem:[%s2 + $0x1098] sm:$0xff]
  %v569 = vld [vmem:[%s2 + $0x10a0] sm:$0xff]
  %v570 = vld [vmem:[%s2 + $0x10a8] sm:$0xff]
  %v571 = vld [vmem:[%s2 + $0x10b0] sm:$0xff]
  %v572 = vld [vmem:[%s2 + $0x10b8] sm:$0xff]
  %v573 = vld [vmem:[%s2 + $0x10c0] sm:$0xff]
  %v574 = vld [vmem:[%s2 + $0x10c8] sm:$0xff]
  %v575 = vld [vmem:[%s2 + $0x10d0] sm:$0xff]
  %v576 = vld [vmem:[%s2 + $0x10d8] sm:$0xff]
  %v577 = vld [vmem:[%s2 + $0x10e0] sm:$0xff]
  %v578 = vld [vmem:[%s2 + $0x10e8] sm:$0xff]
  %v579 = vld [vmem:[%s2 + $0x10f0] sm:$0xff]
  %v580 = vld [vmem:[%s2 + $0x10f8] sm:$0xff]
  %v581 = vld [vmem:[%s2 + $0x1100] sm:$0xff]
  %v582 = vld [vmem:[%s2 + $0x1108] sm:$0xff]
  %v583 = vld [vmem:[%s2 + $0x1110] sm:$0xff]
  %v584 = vld [vmem:[%s2 + $0x1118] sm:$0xff]
  %v585 = vld [vmem:[%s2 + $0x1120] sm:$0xff]
  %v586 = vld [vmem:[%s2 + $0x1128] sm:$0xff]
  %v587 = vld [vmem:[%s2 + $0x1130] sm:$0xff]
  %v588 = vld [vmem:[%s2 + $0x1138] sm:$0xff]
  %v589 = vld [vmem:[%s2 + $0x1140] sm:$0xff]
  %v590 = vld [vmem:[%s2 + $0x1148] sm:$0xff]
  %v591 = vld [vmem:[%s2 + $0x1150] sm:$0xff]
  %v592 = vld [vmem:[%s2 + $0x1158] sm:$0xff]
  %v593 = vld [vmem:[%s2 + $0x1160] sm:$0xff]
  %v594 = vld [vmem:[%s2 + $0x1168] sm:$0xff]
  %v595 = vld [vmem:[%s2 + $0x1170] sm:$0xff]
  %v596 = vld [vmem:[%s2 + $0x1178] sm:$0xff]
  %v597 = vld [vmem:[%s2 + $0x1180] sm:$0xff]
  %v598 = vld [vmem:[%s2 + $0x1188] sm:$0xff]
  %v599 = vld [vmem:[%s2 + $0x1190] sm:$0xff]
  %v600 = vld [vmem:[%s2 + $0x1198] sm:$0xff]
  %v601 = vld [vmem:[%s2 + $0x11a0] sm:$0xff]
  %v602 = vld [vmem:[%s2 + $0x11a8] sm:$0xff]
  %v603 = vld [vmem:[%s2 + $0x11b0] sm:$0xff]
  %v604 = vld [vmem:[%s2 + $0x11b8] sm:$0xff]
  %v605 = vld [vmem:[%s2 + $0x11c0] sm:$0xff]
  %v606 = vld [vmem:[%s2 + $0x11c8] sm:$0xff]
  %v607 = vld [vmem:[%s2 + $0x11d0] sm:$0xff]
  %v608 = vld [vmem:[%s2 + $0x11d8] sm:$0xff]
  %v609 = vld [vmem:[%s2 + $0x11e0] sm:$0xff]
  %v610 = vld [vmem:[%s2 + $0x11e8] sm:$0xff]
  %v611 = vld [vmem:[%s2 + $0x11f0] sm:$0xff]
  %v612 = vld [vmem:[%s2 + $0x11f8] sm:$0xff]
  %v613 = vld [vmem:[%s2 + $0x1200] sm:$0xff]
  %v614 = vld [vmem:[%s2 + $0x1208] sm:$0xff]
  %v615 = vld [vmem:[%s2 + $0x1210] sm:$0xff]
  %v616 = vld [vmem:[%s2 + $0x1218] sm:$0xff]
  %v617 = vld [vmem:[%s2 + $0x1220] sm:$0xff]
  %v618 = vld [vmem:[%s2 + $0x1228] sm:$0xff]
  %v619 = vld [vmem:[%s2 + $0x1230] sm:$0xff]
  %v620 = vld [vmem:[%s2 + $0x1238] sm:$0xff]
  %v621 = vld [vmem:[%s2 + $0x1240] sm:$0xff]
  %v622 = vld [vmem:[%s2 + $0x1248] sm:$0xff]
  %v623 = vld [vmem:[%s2 + $0x1250] sm:$0xff]
  %v624 = vld [vmem:[%s2 + $0x1258] sm:$0xff]
  %v625 = vld [vmem:[%s2 + $0x1260] sm:$0xff]
  %v626 = vld [vmem:[%s2 + $0x1268] sm:$0xff]
  %v627 = vld [vmem:[%s2 + $0x1270] sm:$0xff]
  %v628 = vld [vmem:[%s2 + $0x1278] sm:$0xff]
  %v629 = vld [vmem:[%s2 + $0x1280] sm:$0xff]
  %v630 = vld [vmem:[%s2 + $0x1288] sm:$0xff]
  %v631 = vld [vmem:[%s2 + $0x1290] sm:$0xff]
  %v632 = vld [vmem:[%s2 + $0x1298] sm:$0xff]
  %v633 = vld [vmem:[%s2 + $0x12a0] sm:$0xff]
  %v634 = vld [vmem:[%s2 + $0x12a8] sm:$0xff]
  %v635 = vld [vmem:[%s2 + $0x12b0] sm:$0xff]
  %v636 = vld [vmem:[%s2 + $0x12b8] sm:$0xff]
  %v637 = vld [vmem:[%s2 + $0x12c0] sm:$0xff]
  %v638 = vld [vmem:[%s2 + $0x12c8] sm:$0xff]
  %v639 = vld [vmem:[%s2 + $0x12d0] sm:$0xff]
  %v640 = vld [vmem:[%s2 + $0x12d8] sm:$0xff]
  %v641 = vld [vmem:[%s2 + $0x12e0] sm:$0xff]
  %v642 = vld [vmem:[%s2 + $0x12e8] sm:$0xff]
  %v643 = vld [vmem:[%s2 + $0x12f0] sm:$0xff]
  %v644 = vld [vmem:[%s2 + $0x12f8] sm:$0xff]
  %v645 = vld [vmem:[%s2 + $0x1300] sm:$0xff]
  %v646 = vld [vmem:[%s2 + $0x1308] sm:$0xff]
  %v647 = vld [vmem:[%s2 + $0x1310] sm:$0xff]
  %v648 = vld [vmem:[%s2 + $0x1318] sm:$0xff]
  %v649 = vld [vmem:[%s2 + $0x1320] sm:$0xff]
  %v650 = vld [vmem:[%s2 + $0x1328] sm:$0xff]
  %v651 = vld [vmem:[%s2 + $0x1330] sm:$0xff]
  %v652 = vld [vmem:[%s2 + $0x1338] sm:$0xff]
  %v653 = vld [vmem:[%s2 + $0x1340] sm:$0xff]
  %v654 = vld [vmem:[%s2 + $0x1348] sm:$0xff]
  %v655 = vld [vmem:[%s2 + $0x1350] sm:$0xff]
  %v656 = vld [vmem:[%s2 + $0x1358] sm:$0xff]
  %v657 = vld [vmem:[%s2 + $0x1360] sm:$0xff]
  %v658 = vld [vmem:[%s2 + $0x1368] sm:$0xff]
  %v659 = vld [vmem:[%s2 + $0x1370] sm:$0xff]
  %v660 = vld [vmem:[%s2 + $0x1378] sm:$0xff]
  %v661 = vld [vmem:[%s2 + $0x1380] sm:$0xff]
  %v662 = vld [vmem:[%s2 + $0x1388] sm:$0xff]
  %v663 = vld [vmem:[%s2 + $0x1390] sm:$0xff]
  %v664 = vld [vmem:[%s2 + $0x1398] sm:$0xff]
  %v665 = vld [vmem:[%s2 + $0x13a0] sm:$0xff]
  %v666 = vld [vmem:[%s2 + $0x13a8] sm:$0xff]
  %v667 = vld [vmem:[%s2 + $0x13b0] sm:$0xff]
  %v668 = vld [vmem:[%s2 + $0x13b8] sm:$0xff]
  %v669 = vld [vmem:[%s2 + $0x13c0] sm:$0xff]
  %v670 = vld [vmem:[%s2 + $0x13c8] sm:$0xff]
  %v671 = vld [vmem:[%s2 + $0x13d0] sm:$0xff]
  %v672 = vld [vmem:[%s2 + $0x13d8] sm:$0xff]
  %v673 = vld [vmem:[%s2 + $0x13e0] sm:$0xff]
  %v674 = vld [vmem:[%s2 + $0x13e8] sm:$0xff]
  %v675 = vld [vmem:[%s2 + $0x13f0] sm:$0xff]
  %v676 = vld [vmem:[%s2 + $0x13f8] sm:$0xff]
  %v677 = vld [vmem:[%s2 + $0x1400] sm:$0xff]
  %v678 = vld [vmem:[%s2 + $0x1408] sm:$0xff]
  %v679 = vld [vmem:[%s2 + $0x1410] sm:$0xff]
  %v680 = vld [vmem:[%s2 + $0x1418] sm:$0xff]
  %v681 = vld [vmem:[%s2 + $0x1420] sm:$0xff]
  %v682 = vld [vmem:[%s2 + $0x1428] sm:$0xff]
  %v683 = vld [vmem:[%s2 + $0x1430] sm:$0xff]
  %v684 = vld [vmem:[%s2 + $0x1438] sm:$0xff]
  %v685 = vld [vmem:[%s2 + $0x1440] sm:$0xff]
  %v686 = vld [vmem:[%s2 + $0x1448] sm:$0xff]
  %v687 = vld [vmem:[%s2 + $0x1450] sm:$0xff]
  %v688 = vld [vmem:[%s2 + $0x1458] sm:$0xff]
  %v689 = vld [vmem:[%s2 + $0x1460] sm:$0xff]
  %v690 = vld [vmem:[%s2 + $0x1468] sm:$0xff]
  %v691 = vld [vmem:[%s2 + $0x1470] sm:$0xff]
  %v692 = vld [vmem:[%s2 + $0x1478] sm:$0xff]
  %v693 = vld [vmem:[%s2 + $0x1480] sm:$0xff]
  %v694 = vld [vmem:[%s2 + $0x1488] sm:$0xff]
  %v695 = vld [vmem:[%s2 + $0x1490] sm:$0xff]
  %v696 = vld [vmem:[%s2 + $0x1498] sm:$0xff]
  %v697 = vld [vmem:[%s2 + $0x14a0] sm:$0xff]
  %v698 = vld [vmem:[%s2 + $0x14a8] sm:$0xff]
  %v699 = vld [vmem:[%s2 + $0x14b0] sm:$0xff]
  %v700 = vld [vmem:[%s2 + $0x14b8] sm:$0xff]
  %v701 = vld [vmem:[%s2 + $0x14c0] sm:$0xff]
  %v702 = vld [vmem:[%s2 + $0x14c8] sm:$0xff]
  %v703 = vld [vmem:[%s2 + $0x14d0] sm:$0xff]
  %v704 = vld [vmem:[%s2 + $0x14d8] sm:$0xff]
  %v705 = vld [vmem:[%s2 + $0x14e0] sm:$0xff]
  %v706 = vld [vmem:[%s2 + $0x14e8] sm:$0xff]
  %v707 = vld [vmem:[%s2 + $0x14f0] sm:$0xff]
  %v708 = vld [vmem:[%s2 + $0x14f8] sm:$0xff]
  %v709 = vld [vmem:[%s2 + $0x1500] sm:$0xff]
  %v710 = vld [vmem:[%s2 + $0x1508] sm:$0xff]
  %v711 = vld [vmem:[%s2 + $0x1510] sm:$0xff]
  %v712 = vld [vmem:[%s2 + $0x1518] sm:$0xff]
  %v713 = vld [vmem:[%s2 + $0x1520] sm:$0xff]
  %v714 = vld [vmem:[%s2 + $0x1528] sm:$0xff]
  %v715 = vld [vmem:[%s2 + $0x1530] sm:$0xff]
  %v716 = vld [vmem:[%s2 + $0x1538] sm:$0xff]
  %v717 = vld [vmem:[%s2 + $0x1540] sm:$0xff]
  %v718 = vld [vmem:[%s2 + $0x1548] sm:$0xff]
  %v719 = vld [vmem:[%s2 + $0x1550] sm:$0xff]
  %v720 = vld [vmem:[%s2 + $0x1558] sm:$0xff]
  %v721 = vld [vmem:[%s2 + $0x1560] sm:$0xff]
  %v722 = vld [vmem:[%s2 + $0x1568] sm:$0xff]
  %v723 = vld [vmem:[%s2 + $0x1570] sm:$0xff]
  %v724 = vld [vmem:[%s2 + $0x1578] sm:$0xff]
  %v725 = vld [vmem:[%s2 + $0x1580] sm:$0xff]
  %v726 = vld [vmem:[%s2 + $0x1588] sm:$0xff]
  %v727 = vld [vmem:[%s2 + $0x1590] sm:$0xff]
  %v728 = vld [vmem:[%s2 + $0x1598] sm:$0xff]
  %v729 = vld [vmem:[%s2 + $0x15a0] sm:$0xff]
  %v730 = vld [vmem:[%s2 + $0x15a8] sm:$0xff]
  %v731 = vld [vmem:[%s2 + $0x15b0] sm:$0xff]
  %v732 = vld [vmem:[%s2 + $0x15b8] sm:$0xff]
  %v733 = vld [vmem:[%s2 + $0x15c0] sm:$0xff]
  %v734 = vld [vmem:[%s2 + $0x15c8] sm:$0xff]
  %v735 = vld [vmem:[%s2 + $0x15d0] sm:$0xff]
  %v736 = vld [vmem:[%s2 + $0x15d8] sm:$0xff]
  %v737 = vld [vmem:[%s2 + $0x15e0] sm:$0xff]
  %v738 = vld [vmem:[%s2 + $0x15e8] sm:$0xff]
  %v739 = vld [vmem:[%s2 + $0x15f0] sm:$0xff]
  %v740 = vld [vmem:[%s2 + $0x15f8] sm:$0xff]
  %v741 = vld [vmem:[%s2 + $0x1600] sm:$0xff]
  %v742 = vld [vmem:[%s2 + $0x1608] sm:$0xff]
  %v743 = vld [vmem:[%s2 + $0x1610] sm:$0xff]
  %v744 = vld [vmem:[%s2 + $0x1618] sm:$0xff]
  %v745 = vld [vmem:[%s2 + $0x1620] sm:$0xff]
  %v746 = vld [vmem:[%s2 + $0x1628] sm:$0xff]
  %v747 = vld [vmem:[%s2 + $0x1630] sm:$0xff]
  %v748 = vld [vmem:[%s2 + $0x1638] sm:$0xff]
  %v749 = vld [vmem:[%s2 + $0x1640] sm:$0xff]
  %v750 = vld [vmem:[%s2 + $0x1648] sm:$0xff]
  %v751 = vld [vmem:[%s2 + $0x1650] sm:$0xff]
  %v752 = vld [vmem:[%s2 + $0x1658] sm:$0xff]
  %v753 = vld [vmem:[%s2 + $0x1660] sm:$0xff]
  %v754 = vld [vmem:[%s2 + $0x1668] sm:$0xff]
  %v755 = vld [vmem:[%s2 + $0x1670] sm:$0xff]
  %v756 = vld [vmem:[%s2 + $0x1678] sm:$0xff]
  %v757 = vld [vmem:[%s2 + $0x1680] sm:$0xff]
  %v758 = vld [vmem:[%s2 + $0x1688] sm:$0xff]
  %v759 = vld [vmem:[%s2 + $0x1690] sm:$0xff]
  %v760 = vld [vmem:[%s2 + $0x1698] sm:$0xff]
  %v761 = vld [vmem:[%s2 + $0x16a0] sm:$0xff]
  %v762 = vld [vmem:[%s2 + $0x16a8] sm:$0xff]
  %v763 = vld [vmem:[%s2 + $0x16b0] sm:$0xff]
  %v764 = vld [vmem:[%s2 + $0x16b8] sm:$0xff]
  %v765 = vld [vmem:[%s2 + $0x16c0] sm:$0xff]
  %v766 = vld [vmem:[%s2 + $0x16c8] sm:$0xff]
  %v767 = vld [vmem:[%s2 + $0x16d0] sm:$0xff]
  %v768 = vld [vmem:[%s2 + $0x16d8] sm:$0xff]
  %v769 = vld [vmem:[%s2 + $0x16e0] sm:$0xff]
  %v770 = vld [vmem:[%s2 + $0x16e8] sm:$0xff]
  %v771 = vld [vmem:[%s2 + $0x16f0] sm:$0xff]
  %v772 = vld [vmem:[%s2 + $0x16f8] sm:$0xff]
  %v773 = vld [vmem:[%s2 + $0x1700] sm:$0xff]
  %v774 = vld [vmem:[%s2 + $0x1708] sm:$0xff]
  %v775 = vld [vmem:[%s2 + $0x1710] sm:$0xff]
  %v776 = vld [vmem:[%s2 + $0x1718] sm:$0xff]
  %v777 = vld [vmem:[%s2 + $0x1720] sm:$0xff]
  %v778 = vld [vmem:[%s2 + $0x1728] sm:$0xff]
  %v779 = vld [vmem:[%s2 + $0x1730] sm:$0xff]
  %v780 = vld [vmem:[%s2 + $0x1738] sm:$0xff]
  %v781 = vld [vmem:[%s2 + $0x1740] sm:$0xff]
  %v782 = vld [vmem:[%s2 + $0x1748] sm:$0xff]
  %v783 = vld [vmem:[%s2 + $0x1750] sm:$0xff]
  %v784 = vld [vmem:[%s2 + $0x1758] sm:$0xff]
  %v785 = vld [vmem:[%s2 + $0x1760] sm:$0xff]
  %v786 = vld [vmem:[%s2 + $0x1768] sm:$0xff]
  %v787 = vld [vmem:[%s2 + $0x1770] sm:$0xff]
  %v788 = vld [vmem:[%s2 + $0x1778] sm:$0xff]
  %v789 = vld [vmem:[%s2 + $0x1780] sm:$0xff]
  %v790 = vld [vmem:[%s2 + $0x1788] sm:$0xff]
  %v791 = vld [vmem:[%s2 + $0x1790] sm:$0xff]
  %v792 = vld [vmem:[%s2 + $0x1798] sm:$0xff]
  %v793 = vld [vmem:[%s2 + $0x17a0] sm:$0xff]
  %v794 = vld [vmem:[%s2 + $0x17a8] sm:$0xff]
  %v795 = vld [vmem:[%s2 + $0x17b0] sm:$0xff]
  %v796 = vld [vmem:[%s2 + $0x17b8] sm:$0xff]
  %v797 = vld [vmem:[%s2 + $0x17c0] sm:$0xff]
  %v798 = vld [vmem:[%s2 + $0x17c8] sm:$0xff]
  %v799 = vld [vmem:[%s2 + $0x17d0] sm:$0xff]
  %v800 = vld [vmem:[%s2 + $0x17d8] sm:$0xff]
  %v801 = vld [vmem:[%s2 + $0x17e0] sm:$0xff]
  %v802 = vld [vmem:[%s2 + $0x17e8] sm:$0xff]
  %v803 = vld [vmem:[%s2 + $0x17f0] sm:$0xff]
  %v804 = vld [vmem:[%s2 + $0x17f8] sm:$0xff]
  %v805 = vld [vmem:[%s2 + $0x1800] sm:$0xff]
  %v806 = vld [vmem:[%s2 + $0x1808] sm:$0xff]
  %v807 = vld [vmem:[%s2 + $0x1810] sm:$0xff]
  %v808 = vld [vmem:[%s2 + $0x1818] sm:$0xff]
  %v809 = vld [vmem:[%s2 + $0x1820] sm:$0xff]
  %v810 = vld [vmem:[%s2 + $0x1828] sm:$0xff]
  %v811 = vld [vmem:[%s2 + $0x1830] sm:$0xff]
  %v812 = vld [vmem:[%s2 + $0x1838] sm:$0xff]
  %v813 = vld [vmem:[%s2 + $0x1840] sm:$0xff]
  %v814 = vld [vmem:[%s2 + $0x1848] sm:$0xff]
  %v815 = vld [vmem:[%s2 + $0x1850] sm:$0xff]
  %v816 = vld [vmem:[%s2 + $0x1858] sm:$0xff]
  %v817 = vld [vmem:[%s2 + $0x1860] sm:$0xff]
  %v818 = vld [vmem:[%s2 + $0x1868] sm:$0xff]
  %v819 = vld [vmem:[%s2 + $0x1870] sm:$0xff]
  %v820 = vld [vmem:[%s2 + $0x1878] sm:$0xff]
  %v821 = vld [vmem:[%s3] sm:$0xf]
  %v823 = vperm.slane %v821, 0
  %v824 = vperm.slane %v821, 1
  %v825 = vperm.slane %v821, 2
  %v826 = vperm.slane %v821, 3
  %832 = vst [vmem:[#allocation1] ss:$9 sm:$0xff] %v33
  %v833 = vld [vmem:[#allocation1] sm:$0xff]
  %v834 = vld [vmem:[#allocation1 + $0x9] sm:$0xff]
  %v835 = vld [vmem:[#allocation1 + $0x12] sm:$0xff]
  %v836 = vld [vmem:[#allocation1 + $0x1b] sm:$0xff]
  %v837 = vld [vmem:[#allocation1 + $0x24] sm:$0xff]
  %v838 = vld [vmem:[#allocation1 + $0x2d] sm:$0xff]
  %v839 = vld [vmem:[#allocation1 + $0x36] sm:$0xff]
  %v840 = vld [vmem:[#allocation1 + $0x3f] sm:$0xff]
  %842 = vst [vmem:[#allocation1] ss:$9 sm:$0xff] %v34
  %v843 = vld [vmem:[#allocation1] sm:$0xff]
  %v844 = vld [vmem:[#allocation1 + $0x9] sm:$0xff]
  %v845 = vld [vmem:[#allocation1 + $0x12] sm:$0xff]
  %v846 = vld [vmem:[#allocation1 + $0x1b] sm:$0xff]
  %v847 = vld [vmem:[#allocation1 + $0x24] sm:$0xff]
  %v848 = vld [vmem:[#allocation1 + $0x2d] sm:$0xff]
  %v849 = vld [vmem:[#allocation1 + $0x36] sm:$0xff]
  %v850 = vld [vmem:[#allocation1 + $0x3f] sm:$0xff]
  %852 = vst [vmem:[#allocation1] ss:$9 sm:$0xff] %v35
  %v853 = vld [vmem:[#allocation1] sm:$0xff]
  %v854 = vld [vmem:[#allocation1 + $0x9] sm:$0xff]
  %v855 = vld [vmem:[#allocation1 + $0x12] sm:$0xff]
  %v856 = vld [vmem:[#allocation1 + $0x1b] sm:$0xff]
  %v857 = vld [vmem:[#allocation1 + $0x24] sm:$0xff]
  %v858 = vld [vmem:[#allocation1 + $0x2d] sm:$0xff]
  %v859 = vld [vmem:[#allocation1 + $0x36] sm:$0xff]
  %v860 = vld [vmem:[#allocation1 + $0x3f] sm:$0xff]
  %862 = vst [vmem:[#allocation1] ss:$9 sm:$0xff] %v36
  %v863 = vld [vmem:[#allocation1] sm:$0xff]
  %v1672 = vunpack.c.l.b16 %v37
  %v1673 = vunpack.c.h.b16 %v37
  %v1674 = vunpack.c.l.b16 %v38
  %v1675 = vunpack.c.h.b16 %v38
  %v1676 = vunpack.c.l.b16 %v39
  %v1677 = vunpack.c.h.b16 %v39
  %v1678 = vunpack.c.l.b16 %v40
  %v1679 = vunpack.c.h.b16 %v40
  %v1680 = vunpack.c.l.b16 %v41
  %v1681 = vunpack.c.h.b16 %v41
  %v1682 = vunpack.c.l.b16 %v42
  %v1683 = vunpack.c.h.b16 %v42
  %v1684 = vunpack.c.l.b16 %v43
  %v1685 = vunpack.c.h.b16 %v43
  %v1686 = vunpack.c.l.b16 %v44
  %v1687 = vunpack.c.h.b16 %v44
  %v1688 = vunpack.c.l.b16 %v45
  %v1689 = vunpack.c.h.b16 %v45
  %v1690 = vunpack.c.l.b16 %v46
  %v1691 = vunpack.c.h.b16 %v46
  %v1692 = vunpack.c.l.b16 %v47
  %v1693 = vunpack.c.h.b16 %v47
  %v1694 = vunpack.c.l.b16 %v48
  %v1695 = vunpack.c.h.b16 %v48
  %v1696 = vunpack.c.l.b16 %v49
  %v1697 = vunpack.c.h.b16 %v49
  %v1698 = vunpack.c.l.b16 %v50
  %v1699 = vunpack.c.h.b16 %v50
  %v1700 = vunpack.c.l.b16 %v51
  %v1701 = vunpack.c.h.b16 %v51
  %v1702 = vunpack.c.l.b16 %v52
  %v1703 = vunpack.c.h.b16 %v52
  %v1704 = vunpack.c.l.b16 %v53
  %v1705 = vunpack.c.h.b16 %v53
  %v1706 = vunpack.c.l.b16 %v54
  %v1707 = vunpack.c.h.b16 %v54
  %v1708 = vunpack.c.l.b16 %v55
  %v1709 = vunpack.c.h.b16 %v55
  %v1710 = vunpack.c.l.b16 %v56
  %v1711 = vunpack.c.h.b16 %v56
  %v1712 = vunpack.c.l.b16 %v57
  %v1713 = vunpack.c.h.b16 %v57
  %v1714 = vunpack.c.l.b16 %v58
  %v1715 = vunpack.c.h.b16 %v58
  %v1716 = vunpack.c.l.b16 %v59
  %v1717 = vunpack.c.h.b16 %v59
  %v1718 = vunpack.c.l.b16 %v60
  %v1719 = vunpack.c.h.b16 %v60
  %v1720 = vunpack.c.l.b16 %v61
  %v1721 = vunpack.c.h.b16 %v61
  %v1722 = vunpack.c.l.b16 %v62
  %v1723 = vunpack.c.h.b16 %v62
  %v1724 = vunpack.c.l.b16 %v63
  %v1725 = vunpack.c.h.b16 %v63
  %v1726 = vunpack.c.l.b16 %v64
  %v1727 = vunpack.c.h.b16 %v64
  %v1728 = vunpack.c.l.b16 %v65
  %v1729 = vunpack.c.h.b16 %v65
  %v1730 = vunpack.c.l.b16 %v66
  %v1731 = vunpack.c.h.b16 %v66
  %v1732 = vunpack.c.l.b16 %v67
  %v1733 = vunpack.c.h.b16 %v67
  %v1734 = vunpack.c.l.b16 %v68
  %v1735 = vunpack.c.h.b16 %v68
  %v1736 = vunpack.c.l.b16 %v69
  %v1737 = vunpack.c.h.b16 %v69
  %v1738 = vunpack.c.l.b16 %v70
  %v1739 = vunpack.c.h.b16 %v70
  %v1740 = vunpack.c.l.b16 %v71
  %v1741 = vunpack.c.h.b16 %v71
  %v1742 = vunpack.c.l.b16 %v72
  %v1743 = vunpack.c.h.b16 %v72
  %v1744 = vunpack.c.l.b16 %v73
  %v1745 = vunpack.c.h.b16 %v73
  %v1746 = vunpack.c.l.b16 %v74
  %v1747 = vunpack.c.h.b16 %v74
  %v1748 = vunpack.c.l.b16 %v75
  %v1749 = vunpack.c.h.b16 %v75
  %v1750 = vunpack.c.l.b16 %v76
  %v1751 = vunpack.c.h.b16 %v76
  %v1752 = vunpack.c.l.b16 %v77
  %v1753 = vunpack.c.h.b16 %v77
  %v1754 = vunpack.c.l.b16 %v78
  %v1755 = vunpack.c.h.b16 %v78
  %v1756 = vunpack.c.l.b16 %v79
  %v1757 = vunpack.c.h.b16 %v79
  %v1758 = vunpack.c.l.b16 %v80
  %v1759 = vunpack.c.h.b16 %v80
  %v1760 = vunpack.c.l.b16 %v81
  %v1761 = vunpack.c.h.b16 %v81
  %v1762 = vunpack.c.l.b16 %v82
  %v1763 = vunpack.c.h.b16 %v82
  %v1764 = vunpack.c.l.b16 %v83
  %v1765 = vunpack.c.h.b16 %v83
  %v1766 = vunpack.c.l.b16 %v84
  %v1767 = vunpack.c.h.b16 %v84
  %v1768 = vunpack.c.l.b16 %v85
  %v1769 = vunpack.c.h.b16 %v85
  %v1770 = vunpack.c.l.b16 %v86
  %v1771 = vunpack.c.h.b16 %v86
  %v1772 = vunpack.c.l.b16 %v87
  %v1773 = vunpack.c.h.b16 %v87
  %v1774 = vunpack.c.l.b16 %v88
  %v1775 = vunpack.c.h.b16 %v88
  %v1776 = vunpack.c.l.b16 %v89
  %v1777 = vunpack.c.h.b16 %v89
  %v1778 = vunpack.c.l.b16 %v90
  %v1779 = vunpack.c.h.b16 %v90
  %v1780 = vunpack.c.l.b16 %v91
  %v1781 = vunpack.c.h.b16 %v91
  %v1782 = vunpack.c.l.b16 %v92
  %v1783 = vunpack.c.h.b16 %v92
  %v1784 = vunpack.c.l.b16 %v93
  %v1785 = vunpack.c.h.b16 %v93
  %v1786 = vunpack.c.l.b16 %v94
  %v1787 = vunpack.c.h.b16 %v94
  %v1788 = vunpack.c.l.b16 %v95
  %v1789 = vunpack.c.h.b16 %v95
  %v1790 = vunpack.c.l.b16 %v96
  %v1791 = vunpack.c.h.b16 %v96
  %v1792 = vunpack.c.l.b16 %v97
  %v1793 = vunpack.c.h.b16 %v97
  %v1794 = vunpack.c.l.b16 %v98
  %v1795 = vunpack.c.h.b16 %v98
  %v1796 = vunpack.c.l.b16 %v99
  %v1797 = vunpack.c.h.b16 %v99
  %v1798 = vunpack.c.l.b16 %v100
  %v1799 = vunpack.c.h.b16 %v100
  %v1800 = vunpack.c.l.b16 %v101
  %v1801 = vunpack.c.h.b16 %v101
  %v1802 = vunpack.c.l.b16 %v102
  %v1803 = vunpack.c.h.b16 %v102
  %v1804 = vunpack.c.l.b16 %v103
  %v1805 = vunpack.c.h.b16 %v103
  %v1806 = vunpack.c.l.b16 %v104
  %v1807 = vunpack.c.h.b16 %v104
  %v1808 = vunpack.c.l.b16 %v105
  %v1809 = vunpack.c.h.b16 %v105
  %v1810 = vunpack.c.l.b16 %v106
  %v1811 = vunpack.c.h.b16 %v106
  %v1812 = vunpack.c.l.b16 %v107
  %v1813 = vunpack.c.h.b16 %v107
  %v1814 = vunpack.c.l.b16 %v108
  %v1815 = vunpack.c.h.b16 %v108
  %v1816 = vunpack.c.l.b16 %v109
  %v1817 = vunpack.c.h.b16 %v109
  %v1818 = vunpack.c.l.b16 %v110
  %v1819 = vunpack.c.h.b16 %v110
  %v1820 = vunpack.c.l.b16 %v111
  %v1821 = vunpack.c.h.b16 %v111
  %v1822 = vunpack.c.l.b16 %v112
  %v1823 = vunpack.c.h.b16 %v112
  %v1824 = vunpack.c.l.b16 %v113
  %v1825 = vunpack.c.h.b16 %v113
  %v1826 = vunpack.c.l.b16 %v114
  %v1827 = vunpack.c.h.b16 %v114
  %v1828 = vunpack.c.l.b16 %v115
  %v1829 = vunpack.c.h.b16 %v115
  %v1830 = vunpack.c.l.b16 %v116
  %v1831 = vunpack.c.h.b16 %v116
  %v1832 = vunpack.c.l.b16 %v117
  %v1833 = vunpack.c.h.b16 %v117
  %v1834 = vunpack.c.l.b16 %v118
  %v1835 = vunpack.c.h.b16 %v118
  %v1836 = vunpack.c.l.b16 %v119
  %v1837 = vunpack.c.h.b16 %v119
  %v1838 = vunpack.c.l.b16 %v120
  %v1839 = vunpack.c.h.b16 %v120
  %v1840 = vunpack.c.l.b16 %v121
  %v1841 = vunpack.c.h.b16 %v121
  %v1842 = vunpack.c.l.b16 %v122
  %v1843 = vunpack.c.h.b16 %v122
  %v1844 = vunpack.c.l.b16 %v123
  %v1845 = vunpack.c.h.b16 %v123
  %v1846 = vunpack.c.l.b16 %v124
  %v1847 = vunpack.c.h.b16 %v124
  %v1848 = vunpack.c.l.b16 %v125
  %v1849 = vunpack.c.h.b16 %v125
  %v1850 = vunpack.c.l.b16 %v126
  %v1851 = vunpack.c.h.b16 %v126
  %v1852 = vunpack.c.l.b16 %v127
  %v1853 = vunpack.c.h.b16 %v127
  %v1854 = vunpack.c.l.b16 %v128
  %v1855 = vunpack.c.h.b16 %v128
  %v1856 = vunpack.c.l.b16 %v129
  %v1857 = vunpack.c.h.b16 %v129
  %v1858 = vunpack.c.l.b16 %v130
  %v1859 = vunpack.c.h.b16 %v130
  %v1860 = vunpack.c.l.b16 %v131
  %v1861 = vunpack.c.h.b16 %v131
  %v1862 = vunpack.c.l.b16 %v132
  %v1863 = vunpack.c.h.b16 %v132
  %v1864 = vunpack.c.l.b16 %v133
  %v1865 = vunpack.c.h.b16 %v133
  %v1866 = vunpack.c.l.b16 %v134
  %v1867 = vunpack.c.h.b16 %v134
  %v1868 = vunpack.c.l.b16 %v135
  %v1869 = vunpack.c.h.b16 %v135
  %v1870 = vunpack.c.l.b16 %v136
  %v1871 = vunpack.c.h.b16 %v136
  %v1872 = vunpack.c.l.b16 %v137
  %v1873 = vunpack.c.h.b16 %v137
  %v1874 = vunpack.c.l.b16 %v138
  %v1875 = vunpack.c.h.b16 %v138
  %v1876 = vunpack.c.l.b16 %v139
  %v1877 = vunpack.c.h.b16 %v139
  %v1878 = vunpack.c.l.b16 %v140
  %v1879 = vunpack.c.h.b16 %v140
  %v1880 = vunpack.c.l.b16 %v141
  %v1881 = vunpack.c.h.b16 %v141
  %v1882 = vunpack.c.l.b16 %v142
  %v1883 = vunpack.c.h.b16 %v142
  %v1884 = vunpack.c.l.b16 %v143
  %v1885 = vunpack.c.h.b16 %v143
  %v1886 = vunpack.c.l.b16 %v144
  %v1887 = vunpack.c.h.b16 %v144
  %v1888 = vunpack.c.l.b16 %v145
  %v1889 = vunpack.c.h.b16 %v145
  %v1890 = vunpack.c.l.b16 %v146
  %v1891 = vunpack.c.h.b16 %v146
  %v1892 = vunpack.c.l.b16 %v147
  %v1893 = vunpack.c.h.b16 %v147
  %v1894 = vunpack.c.l.b16 %v148
  %v1895 = vunpack.c.h.b16 %v148
  %v1896 = vunpack.c.l.b16 %v149
  %v1897 = vunpack.c.h.b16 %v149
  %v1898 = vunpack.c.l.b16 %v150
  %v1899 = vunpack.c.h.b16 %v150
  %v1900 = vunpack.c.l.b16 %v151
  %v1901 = vunpack.c.h.b16 %v151
  %v1902 = vunpack.c.l.b16 %v152
  %v1903 = vunpack.c.h.b16 %v152
  %v1904 = vunpack.c.l.b16 %v153
  %v1905 = vunpack.c.h.b16 %v153
  %v1906 = vunpack.c.l.b16 %v154
  %v1907 = vunpack.c.h.b16 %v154
  %v1908 = vunpack.c.l.b16 %v155
  %v1909 = vunpack.c.h.b16 %v155
  %v1910 = vunpack.c.l.b16 %v156
  %v1911 = vunpack.c.h.b16 %v156
  %v1912 = vunpack.c.l.b16 %v157
  %v1913 = vunpack.c.h.b16 %v157
  %v1914 = vunpack.c.l.b16 %v158
  %v1915 = vunpack.c.h.b16 %v158
  %v1916 = vunpack.c.l.b16 %v159
  %v1917 = vunpack.c.h.b16 %v159
  %v1918 = vunpack.c.l.b16 %v160
  %v1919 = vunpack.c.h.b16 %v160
  %v1920 = vunpack.c.l.b16 %v161
  %v1921 = vunpack.c.h.b16 %v161
  %v1922 = vunpack.c.l.b16 %v162
  %v1923 = vunpack.c.h.b16 %v162
  %v1924 = vunpack.c.l.b16 %v163
  %v1925 = vunpack.c.h.b16 %v163
  %v1926 = vunpack.c.l.b16 %v164
  %v1927 = vunpack.c.h.b16 %v164
  %v1928 = vunpack.c.l.b16 %v165
  %v1929 = vunpack.c.h.b16 %v165
  %v1930 = vunpack.c.l.b16 %v166
  %v1931 = vunpack.c.h.b16 %v166
  %v1932 = vunpack.c.l.b16 %v167
  %v1933 = vunpack.c.h.b16 %v167
  %v1934 = vunpack.c.l.b16 %v168
  %v1935 = vunpack.c.h.b16 %v168
  %v1936 = vunpack.c.l.b16 %v169
  %v1937 = vunpack.c.h.b16 %v169
  %v1938 = vunpack.c.l.b16 %v170
  %v1939 = vunpack.c.h.b16 %v170
  %v1940 = vunpack.c.l.b16 %v171
  %v1941 = vunpack.c.h.b16 %v171
  %v1942 = vunpack.c.l.b16 %v172
  %v1943 = vunpack.c.h.b16 %v172
  %v1944 = vunpack.c.l.b16 %v173
  %v1945 = vunpack.c.h.b16 %v173
  %v1946 = vunpack.c.l.b16 %v174
  %v1947 = vunpack.c.h.b16 %v174
  %v1948 = vunpack.c.l.b16 %v175
  %v1949 = vunpack.c.h.b16 %v175
  %v1950 = vunpack.c.l.b16 %v176
  %v1951 = vunpack.c.h.b16 %v176
  %v1952 = vunpack.c.l.b16 %v177
  %v1953 = vunpack.c.h.b16 %v177
  %v1954 = vunpack.c.l.b16 %v178
  %v1955 = vunpack.c.h.b16 %v178
  %v1956 = vunpack.c.l.b16 %v179
  %v1957 = vunpack.c.h.b16 %v179
  %v1958 = vunpack.c.l.b16 %v180
  %v1959 = vunpack.c.h.b16 %v180
  %v1960 = vunpack.c.l.b16 %v181
  %v1961 = vunpack.c.h.b16 %v181
  %v1962 = vunpack.c.l.b16 %v182
  %v1963 = vunpack.c.h.b16 %v182
  %v1964 = vunpack.c.l.b16 %v183
  %v1965 = vunpack.c.h.b16 %v183
  %v1966 = vunpack.c.l.b16 %v184
  %v1967 = vunpack.c.h.b16 %v184
  %v1968 = vunpack.c.l.b16 %v185
  %v1969 = vunpack.c.h.b16 %v185
  %v1970 = vunpack.c.l.b16 %v186
  %v1971 = vunpack.c.h.b16 %v186
  %v1972 = vunpack.c.l.b16 %v187
  %v1973 = vunpack.c.h.b16 %v187
  %v1974 = vunpack.c.l.b16 %v188
  %v1975 = vunpack.c.h.b16 %v188
  %v1976 = vunpack.c.l.b16 %v189
  %v1977 = vunpack.c.h.b16 %v189
  %v1978 = vunpack.c.l.b16 %v190
  %v1979 = vunpack.c.h.b16 %v190
  %v1980 = vunpack.c.l.b16 %v191
  %v1981 = vunpack.c.h.b16 %v191
  %v1982 = vunpack.c.l.b16 %v192
  %v1983 = vunpack.c.h.b16 %v192
  %v1984 = vunpack.c.l.b16 %v193
  %v1985 = vunpack.c.h.b16 %v193
  %v1986 = vunpack.c.l.b16 %v194
  %v1987 = vunpack.c.h.b16 %v194
  %v1988 = vunpack.c.l.b16 %v195
  %v1989 = vunpack.c.h.b16 %v195
  %v1990 = vunpack.c.l.b16 %v196
  %v1991 = vunpack.c.h.b16 %v196
  %v1992 = vunpack.c.l.b16 %v197
  %v1993 = vunpack.c.h.b16 %v197
  %v1994 = vunpack.c.l.b16 %v198
  %v1995 = vunpack.c.h.b16 %v198
  %v1996 = vunpack.c.l.b16 %v199
  %v1997 = vunpack.c.h.b16 %v199
  %v1998 = vunpack.c.l.b16 %v200
  %v1999 = vunpack.c.h.b16 %v200
  %v2000 = vunpack.c.l.b16 %v201
  %v2001 = vunpack.c.h.b16 %v201
  %v2002 = vunpack.c.l.b16 %v202
  %v2003 = vunpack.c.h.b16 %v202
  %v2004 = vunpack.c.l.b16 %v203
  %v2005 = vunpack.c.h.b16 %v203
  %v2006 = vunpack.c.l.b16 %v204
  %v2007 = vunpack.c.h.b16 %v204
  %v2008 = vunpack.c.l.b16 %v205
  %v2009 = vunpack.c.h.b16 %v205
  %v2010 = vunpack.c.l.b16 %v206
  %v2011 = vunpack.c.h.b16 %v206
  %v2012 = vunpack.c.l.b16 %v207
  %v2013 = vunpack.c.h.b16 %v207
  %v2014 = vunpack.c.l.b16 %v208
  %v2015 = vunpack.c.h.b16 %v208
  %v2016 = vunpack.c.l.b16 %v209
  %v2017 = vunpack.c.h.b16 %v209
  %v2018 = vunpack.c.l.b16 %v210
  %v2019 = vunpack.c.h.b16 %v210
  %v2020 = vunpack.c.l.b16 %v211
  %v2021 = vunpack.c.h.b16 %v211
  %v2022 = vunpack.c.l.b16 %v212
  %v2023 = vunpack.c.h.b16 %v212
  %v2024 = vunpack.c.l.b16 %v213
  %v2025 = vunpack.c.h.b16 %v213
  %v2026 = vunpack.c.l.b16 %v214
  %v2027 = vunpack.c.h.b16 %v214
  %v2028 = vunpack.c.l.b16 %v215
  %v2029 = vunpack.c.h.b16 %v215
  %v2030 = vunpack.c.l.b16 %v216
  %v2031 = vunpack.c.h.b16 %v216
  %v2032 = vunpack.c.l.b16 %v217
  %v2033 = vunpack.c.h.b16 %v217
  %v2034 = vunpack.c.l.b16 %v218
  %v2035 = vunpack.c.h.b16 %v218
  %v2036 = vunpack.c.l.b16 %v219
  %v2037 = vunpack.c.h.b16 %v219
  %v2038 = vunpack.c.l.b16 %v220
  %v2039 = vunpack.c.h.b16 %v220
  %v2040 = vunpack.c.l.b16 %v221
  %v2041 = vunpack.c.h.b16 %v221
  %v2042 = vunpack.c.l.b16 %v222
  %v2043 = vunpack.c.h.b16 %v222
  %v2044 = vunpack.c.l.b16 %v223
  %v2045 = vunpack.c.h.b16 %v223
  %v2046 = vunpack.c.l.b16 %v224
  %v2047 = vunpack.c.h.b16 %v224
  %v2048 = vunpack.c.l.b16 %v225
  %v2049 = vunpack.c.h.b16 %v225
  %v2050 = vunpack.c.l.b16 %v226
  %v2051 = vunpack.c.h.b16 %v226
  %v2052 = vunpack.c.l.b16 %v227
  %v2053 = vunpack.c.h.b16 %v227
  %v2054 = vunpack.c.l.b16 %v228
  %v2055 = vunpack.c.h.b16 %v228
  %v2056 = vunpack.c.l.b16 %v229
  %v2057 = vunpack.c.h.b16 %v229
  %v2058 = vunpack.c.l.b16 %v230
  %v2059 = vunpack.c.h.b16 %v230
  %v2060 = vunpack.c.l.b16 %v231
  %v2061 = vunpack.c.h.b16 %v231
  %v2062 = vunpack.c.l.b16 %v232
  %v2063 = vunpack.c.h.b16 %v232
  %v2064 = vunpack.c.l.b16 %v233
  %v2065 = vunpack.c.h.b16 %v233
  %v2066 = vunpack.c.l.b16 %v234
  %v2067 = vunpack.c.h.b16 %v234
  %v2068 = vunpack.c.l.b16 %v235
  %v2069 = vunpack.c.h.b16 %v235
  %v2070 = vunpack.c.l.b16 %v236
  %v2071 = vunpack.c.h.b16 %v236
  %v2072 = vunpack.c.l.b16 %v237
  %v2073 = vunpack.c.h.b16 %v237
  %v2074 = vunpack.c.l.b16 %v238
  %v2075 = vunpack.c.h.b16 %v238
  %v2076 = vunpack.c.l.b16 %v239
  %v2077 = vunpack.c.h.b16 %v239
  %v2078 = vunpack.c.l.b16 %v240
  %v2079 = vunpack.c.h.b16 %v240
  %v2080 = vunpack.c.l.b16 %v241
  %v2081 = vunpack.c.h.b16 %v241
  %v2082 = vunpack.c.l.b16 %v242
  %v2083 = vunpack.c.h.b16 %v242
  %v2084 = vunpack.c.l.b16 %v243
  %v2085 = vunpack.c.h.b16 %v243
  %v2086 = vunpack.c.l.b16 %v244
  %v2087 = vunpack.c.h.b16 %v244
  %v2088 = vunpack.c.l.b16 %v245
  %v2089 = vunpack.c.h.b16 %v245
  %v2090 = vunpack.c.l.b16 %v246
  %v2091 = vunpack.c.h.b16 %v246
  %v2092 = vunpack.c.l.b16 %v247
  %v2093 = vunpack.c.h.b16 %v247
  %v2094 = vunpack.c.l.b16 %v248
  %v2095 = vunpack.c.h.b16 %v248
  %v2096 = vunpack.c.l.b16 %v249
  %v2097 = vunpack.c.h.b16 %v249
  %v2098 = vunpack.c.l.b16 %v250
  %v2099 = vunpack.c.h.b16 %v250
  %v2100 = vunpack.c.l.b16 %v251
  %v2101 = vunpack.c.h.b16 %v251
  %v2102 = vunpack.c.l.b16 %v252
  %v2103 = vunpack.c.h.b16 %v252
  %v2104 = vunpack.c.l.b16 %v253
  %v2105 = vunpack.c.h.b16 %v253
  %v2106 = vunpack.c.l.b16 %v254
  %v2107 = vunpack.c.h.b16 %v254
  %v2108 = vunpack.c.l.b16 %v255
  %v2109 = vunpack.c.h.b16 %v255
  %v2110 = vunpack.c.l.b16 %v256
  %v2111 = vunpack.c.h.b16 %v256
  %v2112 = vunpack.c.l.b16 %v257
  %v2113 = vunpack.c.h.b16 %v257
  %v2114 = vunpack.c.l.b16 %v258
  %v2115 = vunpack.c.h.b16 %v258
  %v2116 = vunpack.c.l.b16 %v259
  %v2117 = vunpack.c.h.b16 %v259
  %v2118 = vunpack.c.l.b16 %v260
  %v2119 = vunpack.c.h.b16 %v260
  %v2120 = vunpack.c.l.b16 %v261
  %v2121 = vunpack.c.h.b16 %v261
  %v2122 = vunpack.c.l.b16 %v262
  %v2123 = vunpack.c.h.b16 %v262
  %v2124 = vunpack.c.l.b16 %v263
  %v2125 = vunpack.c.h.b16 %v263
  %v2126 = vunpack.c.l.b16 %v264
  %v2127 = vunpack.c.h.b16 %v264
  %v2128 = vunpack.c.l.b16 %v265
  %v2129 = vunpack.c.h.b16 %v265
  %v2130 = vunpack.c.l.b16 %v266
  %v2131 = vunpack.c.h.b16 %v266
  %v2132 = vunpack.c.l.b16 %v267
  %v2133 = vunpack.c.h.b16 %v267
  %v2134 = vunpack.c.l.b16 %v268
  %v2135 = vunpack.c.h.b16 %v268
  %v2136 = vunpack.c.l.b16 %v269
  %v2137 = vunpack.c.h.b16 %v269
  %v2138 = vunpack.c.l.b16 %v270
  %v2139 = vunpack.c.h.b16 %v270
  %v2140 = vunpack.c.l.b16 %v271
  %v2141 = vunpack.c.h.b16 %v271
  %v2142 = vunpack.c.l.b16 %v272
  %v2143 = vunpack.c.h.b16 %v272
  %v2144 = vunpack.c.l.b16 %v273
  %v2145 = vunpack.c.h.b16 %v273
  %v2146 = vunpack.c.l.b16 %v274
  %v2147 = vunpack.c.h.b16 %v274
  %v2148 = vunpack.c.l.b16 %v275
  %v2149 = vunpack.c.h.b16 %v275
  %v2150 = vunpack.c.l.b16 %v276
  %v2151 = vunpack.c.h.b16 %v276
  %v2152 = vunpack.c.l.b16 %v277
  %v2153 = vunpack.c.h.b16 %v277
  %v2154 = vunpack.c.l.b16 %v278
  %v2155 = vunpack.c.h.b16 %v278
  %v2156 = vunpack.c.l.b16 %v279
  %v2157 = vunpack.c.h.b16 %v279
  %v2158 = vunpack.c.l.b16 %v280
  %v2159 = vunpack.c.h.b16 %v280
  %v2160 = vunpack.c.l.b16 %v281
  %v2161 = vunpack.c.h.b16 %v281
  %v2162 = vunpack.c.l.b16 %v282
  %v2163 = vunpack.c.h.b16 %v282
  %v2164 = vunpack.c.l.b16 %v283
  %v2165 = vunpack.c.h.b16 %v283
  %v2166 = vunpack.c.l.b16 %v284
  %v2167 = vunpack.c.h.b16 %v284
  %v2168 = vunpack.c.l.b16 %v285
  %v2169 = vunpack.c.h.b16 %v285
  %v2170 = vunpack.c.l.b16 %v286
  %v2171 = vunpack.c.h.b16 %v286
  %v2172 = vunpack.c.l.b16 %v287
  %v2173 = vunpack.c.h.b16 %v287
  %v2174 = vunpack.c.l.b16 %v288
  %v2175 = vunpack.c.h.b16 %v288
  %v2176 = vunpack.c.l.b16 %v289
  %v2177 = vunpack.c.h.b16 %v289
  %v2178 = vunpack.c.l.b16 %v290
  %v2179 = vunpack.c.h.b16 %v290
  %v2180 = vunpack.c.l.b16 %v291
  %v2181 = vunpack.c.h.b16 %v291
  %v2182 = vunpack.c.l.b16 %v292
  %v2183 = vunpack.c.h.b16 %v292
  %v2184 = vunpack.c.l.b16 %v293
  %v2185 = vunpack.c.h.b16 %v293
  %v2186 = vunpack.c.l.b16 %v294
  %v2187 = vunpack.c.h.b16 %v294
  %v2188 = vunpack.c.l.b16 %v295
  %v2189 = vunpack.c.h.b16 %v295
  %v2190 = vunpack.c.l.b16 %v296
  %v2191 = vunpack.c.h.b16 %v296
  %v2192 = vunpack.c.l.b16 %v297
  %v2193 = vunpack.c.h.b16 %v297
  %v2194 = vunpack.c.l.b16 %v298
  %v2195 = vunpack.c.h.b16 %v298
  %v2196 = vunpack.c.l.b16 %v299
  %v2197 = vunpack.c.h.b16 %v299
  %v2198 = vunpack.c.l.b16 %v300
  %v2199 = vunpack.c.h.b16 %v300
  %v2200 = vunpack.c.l.b16 %v301
  %v2201 = vunpack.c.h.b16 %v301
  %v2202 = vunpack.c.l.b16 %v302
  %v2203 = vunpack.c.h.b16 %v302
  %v2204 = vunpack.c.l.b16 %v303
  %v2205 = vunpack.c.h.b16 %v303
  %v2206 = vunpack.c.l.b16 %v304
  %v2207 = vunpack.c.h.b16 %v304
  %v2208 = vunpack.c.l.b16 %v305
  %v2209 = vunpack.c.h.b16 %v305
  %v2210 = vunpack.c.l.b16 %v306
  %v2211 = vunpack.c.h.b16 %v306
  %v2212 = vunpack.c.l.b16 %v307
  %v2213 = vunpack.c.h.b16 %v307
  %v2214 = vunpack.c.l.b16 %v308
  %v2215 = vunpack.c.h.b16 %v308
  %v2216 = vunpack.c.l.b16 %v309
  %v2217 = vunpack.c.h.b16 %v309
  %v2218 = vunpack.c.l.b16 %v310
  %v2219 = vunpack.c.h.b16 %v310
  %v2220 = vunpack.c.l.b16 %v311
  %v2221 = vunpack.c.h.b16 %v311
  %v2222 = vunpack.c.l.b16 %v312
  %v2223 = vunpack.c.h.b16 %v312
  %v2224 = vunpack.c.l.b16 %v313
  %v2225 = vunpack.c.h.b16 %v313
  %v2226 = vunpack.c.l.b16 %v314
  %v2227 = vunpack.c.h.b16 %v314
  %v2228 = vunpack.c.l.b16 %v315
  %v2229 = vunpack.c.h.b16 %v315
  %v2230 = vunpack.c.l.b16 %v316
  %v2231 = vunpack.c.h.b16 %v316
  %v2232 = vunpack.c.l.b16 %v317
  %v2233 = vunpack.c.h.b16 %v317
  %v2234 = vunpack.c.l.b16 %v318
  %v2235 = vunpack.c.h.b16 %v318
  %v2236 = vunpack.c.l.b16 %v319
  %v2237 = vunpack.c.h.b16 %v319
  %v2238 = vunpack.c.l.b16 %v320
  %v2239 = vunpack.c.h.b16 %v320
  %v2240 = vunpack.c.l.b16 %v321
  %v2241 = vunpack.c.h.b16 %v321
  %v2242 = vunpack.c.l.b16 %v322
  %v2243 = vunpack.c.h.b16 %v322
  %v2244 = vunpack.c.l.b16 %v323
  %v2245 = vunpack.c.h.b16 %v323
  %v2246 = vunpack.c.l.b16 %v324
  %v2247 = vunpack.c.h.b16 %v324
  %v2248 = vunpack.c.l.b16 %v325
  %v2249 = vunpack.c.h.b16 %v325
  %v2250 = vunpack.c.l.b16 %v326
  %v2251 = vunpack.c.h.b16 %v326
  %v2252 = vunpack.c.l.b16 %v327
  %v2253 = vunpack.c.h.b16 %v327
  %v2254 = vunpack.c.l.b16 %v328
  %v2255 = vunpack.c.h.b16 %v328
  %v2256 = vunpack.c.l.b16 %v329
  %v2257 = vunpack.c.h.b16 %v329
  %v2258 = vunpack.c.l.b16 %v330
  %v2259 = vunpack.c.h.b16 %v330
  %v2260 = vunpack.c.l.b16 %v331
  %v2261 = vunpack.c.h.b16 %v331
  %v2262 = vunpack.c.l.b16 %v332
  %v2263 = vunpack.c.h.b16 %v332
  %v2264 = vunpack.c.l.b16 %v333
  %v2265 = vunpack.c.h.b16 %v333
  %v2266 = vunpack.c.l.b16 %v334
  %v2267 = vunpack.c.h.b16 %v334
  %v2268 = vunpack.c.l.b16 %v335
  %v2269 = vunpack.c.h.b16 %v335
  %v2270 = vunpack.c.l.b16 %v336
  %v2271 = vunpack.c.h.b16 %v336
  %v2272 = vunpack.c.l.b16 %v337
  %v2273 = vunpack.c.h.b16 %v337
  %v2274 = vunpack.c.l.b16 %v338
  %v2275 = vunpack.c.h.b16 %v338
  %v2276 = vunpack.c.l.b16 %v339
  %v2277 = vunpack.c.h.b16 %v339
  %v2278 = vunpack.c.l.b16 %v340
  %v2279 = vunpack.c.h.b16 %v340
  %v2280 = vunpack.c.l.b16 %v341
  %v2281 = vunpack.c.h.b16 %v341
  %v2282 = vunpack.c.l.b16 %v342
  %v2283 = vunpack.c.h.b16 %v342
  %v2284 = vunpack.c.l.b16 %v343
  %v2285 = vunpack.c.h.b16 %v343
  %v2286 = vunpack.c.l.b16 %v344
  %v2287 = vunpack.c.h.b16 %v344
  %v2288 = vunpack.c.l.b16 %v345
  %v2289 = vunpack.c.h.b16 %v345
  %v2290 = vunpack.c.l.b16 %v346
  %v2291 = vunpack.c.h.b16 %v346
  %v2292 = vunpack.c.l.b16 %v347
  %v2293 = vunpack.c.h.b16 %v347
  %v2294 = vunpack.c.l.b16 %v348
  %v2295 = vunpack.c.h.b16 %v348
  %v2296 = vunpack.c.l.b16 %v349
  %v2297 = vunpack.c.h.b16 %v349
  %v2298 = vunpack.c.l.b16 %v350
  %v2299 = vunpack.c.h.b16 %v350
  %v2300 = vunpack.c.l.b16 %v351
  %v2301 = vunpack.c.h.b16 %v351
  %v2302 = vunpack.c.l.b16 %v352
  %v2303 = vunpack.c.h.b16 %v352
  %v2304 = vunpack.c.l.b16 %v353
  %v2305 = vunpack.c.h.b16 %v353
  %v2306 = vunpack.c.l.b16 %v354
  %v2307 = vunpack.c.h.b16 %v354
  %v2308 = vunpack.c.l.b16 %v355
  %v2309 = vunpack.c.h.b16 %v355
  %v2310 = vunpack.c.l.b16 %v356
  %v2311 = vunpack.c.h.b16 %v356
  %v2312 = vunpack.c.l.b16 %v357
  %v2313 = vunpack.c.h.b16 %v357
  %v2314 = vunpack.c.l.b16 %v358
  %v2315 = vunpack.c.h.b16 %v358
  %v2316 = vunpack.c.l.b16 %v359
  %v2317 = vunpack.c.h.b16 %v359
  %v2318 = vunpack.c.l.b16 %v360
  %v2319 = vunpack.c.h.b16 %v360
  %v2320 = vunpack.c.l.b16 %v361
  %v2321 = vunpack.c.h.b16 %v361
  %v2322 = vunpack.c.l.b16 %v362
  %v2323 = vunpack.c.h.b16 %v362
  %v2324 = vunpack.c.l.b16 %v363
  %v2325 = vunpack.c.h.b16 %v363
  %v2326 = vunpack.c.l.b16 %v364
  %v2327 = vunpack.c.h.b16 %v364
  %v2328 = vunpack.c.l.b16 %v365
  %v2329 = vunpack.c.h.b16 %v365
  %v2330 = vunpack.c.l.b16 %v366
  %v2331 = vunpack.c.h.b16 %v366
  %v2332 = vunpack.c.l.b16 %v367
  %v2333 = vunpack.c.h.b16 %v367
  %v2334 = vunpack.c.l.b16 %v368
  %v2335 = vunpack.c.h.b16 %v368
  %v2336 = vunpack.c.l.b16 %v369
  %v2337 = vunpack.c.h.b16 %v369
  %v2338 = vunpack.c.l.b16 %v370
  %v2339 = vunpack.c.h.b16 %v370
  %v2340 = vunpack.c.l.b16 %v371
  %v2341 = vunpack.c.h.b16 %v371
  %v2342 = vunpack.c.l.b16 %v372
  %v2343 = vunpack.c.h.b16 %v372
  %v2344 = vunpack.c.l.b16 %v373
  %v2345 = vunpack.c.h.b16 %v373
  %v2346 = vunpack.c.l.b16 %v374
  %v2347 = vunpack.c.h.b16 %v374
  %v2348 = vunpack.c.l.b16 %v375
  %v2349 = vunpack.c.h.b16 %v375
  %v2350 = vunpack.c.l.b16 %v376
  %v2351 = vunpack.c.h.b16 %v376
  %v2352 = vunpack.c.l.b16 %v377
  %v2353 = vunpack.c.h.b16 %v377
  %v2354 = vunpack.c.l.b16 %v378
  %v2355 = vunpack.c.h.b16 %v378
  %v2356 = vunpack.c.l.b16 %v379
  %v2357 = vunpack.c.h.b16 %v379
  %v2358 = vunpack.c.l.b16 %v380
  %v2359 = vunpack.c.h.b16 %v380
  %v2360 = vunpack.c.l.b16 %v381
  %v2361 = vunpack.c.h.b16 %v381
  %v2362 = vunpack.c.l.b16 %v382
  %v2363 = vunpack.c.h.b16 %v382
  %v2364 = vunpack.c.l.b16 %v383
  %v2365 = vunpack.c.h.b16 %v383
  %v2366 = vunpack.c.l.b16 %v384
  %v2367 = vunpack.c.h.b16 %v384
  %v2368 = vunpack.c.l.b16 %v385
  %v2369 = vunpack.c.h.b16 %v385
  %v2370 = vunpack.c.l.b16 %v386
  %v2371 = vunpack.c.h.b16 %v386
  %v2372 = vunpack.c.l.b16 %v387
  %v2373 = vunpack.c.h.b16 %v387
  %v2374 = vunpack.c.l.b16 %v388
  %v2375 = vunpack.c.h.b16 %v388
  %v2376 = vunpack.c.l.b16 %v389
  %v2377 = vunpack.c.h.b16 %v389
  %v2378 = vunpack.c.l.b16 %v390
  %v2379 = vunpack.c.h.b16 %v390
  %v2380 = vunpack.c.l.b16 %v391
  %v2381 = vunpack.c.h.b16 %v391
  %v2382 = vunpack.c.l.b16 %v392
  %v2383 = vunpack.c.h.b16 %v392
  %v2384 = vunpack.c.l.b16 %v393
  %v2385 = vunpack.c.h.b16 %v393
  %v2386 = vunpack.c.l.b16 %v394
  %v2387 = vunpack.c.h.b16 %v394
  %v2388 = vunpack.c.l.b16 %v395
  %v2389 = vunpack.c.h.b16 %v395
  %v2390 = vunpack.c.l.b16 %v396
  %v2391 = vunpack.c.h.b16 %v396
  %v2392 = vunpack.c.l.b16 %v397
  %v2393 = vunpack.c.h.b16 %v397
  %v2394 = vunpack.c.l.b16 %v398
  %v2395 = vunpack.c.h.b16 %v398
  %v2396 = vunpack.c.l.b16 %v399
  %v2397 = vunpack.c.h.b16 %v399
  %v2398 = vunpack.c.l.b16 %v400
  %v2399 = vunpack.c.h.b16 %v400
  %v2400 = vunpack.c.l.b16 %v401
  %v2401 = vunpack.c.h.b16 %v401
  %v2402 = vunpack.c.l.b16 %v402
  %v2403 = vunpack.c.h.b16 %v402
  %v2404 = vunpack.c.l.b16 %v403
  %v2405 = vunpack.c.h.b16 %v403
  %v2406 = vunpack.c.l.b16 %v404
  %v2407 = vunpack.c.h.b16 %v404
  %v2408 = vunpack.c.l.b16 %v405
  %v2409 = vunpack.c.h.b16 %v405
  %v2410 = vunpack.c.l.b16 %v406
  %v2411 = vunpack.c.h.b16 %v406
  %v2412 = vunpack.c.l.b16 %v407
  %v2413 = vunpack.c.h.b16 %v407
  %v2414 = vunpack.c.l.b16 %v408
  %v2415 = vunpack.c.h.b16 %v408
  %v2416 = vunpack.c.l.b16 %v409
  %v2417 = vunpack.c.h.b16 %v409
  %v2418 = vunpack.c.l.b16 %v410
  %v2419 = vunpack.c.h.b16 %v410
  %v2420 = vunpack.c.l.b16 %v411
  %v2421 = vunpack.c.h.b16 %v411
  %v2422 = vunpack.c.l.b16 %v412
  %v2423 = vunpack.c.h.b16 %v412
  %v2424 = vunpack.c.l.b16 %v413
  %v2425 = vunpack.c.h.b16 %v413
  %v2426 = vunpack.c.l.b16 %v414
  %v2427 = vunpack.c.h.b16 %v414
  %v2428 = vunpack.c.l.b16 %v415
  %v2429 = vunpack.c.h.b16 %v415
  %v2430 = vunpack.c.l.b16 %v416
  %v2431 = vunpack.c.h.b16 %v416
  %v2432 = vunpack.c.l.b16 %v417
  %v2433 = vunpack.c.h.b16 %v417
  %v2434 = vunpack.c.l.b16 %v418
  %v2435 = vunpack.c.h.b16 %v418
  %v2436 = vunpack.c.l.b16 %v419
  %v2437 = vunpack.c.h.b16 %v419
  %v2438 = vunpack.c.l.b16 %v420
  %v2439 = vunpack.c.h.b16 %v420
  %v2440 = vunpack.c.l.b16 %v421
  %v2441 = vunpack.c.h.b16 %v421
  %v2442 = vunpack.c.l.b16 %v422
  %v2443 = vunpack.c.h.b16 %v422
  %v2444 = vunpack.c.l.b16 %v423
  %v2445 = vunpack.c.h.b16 %v423
  %v2446 = vunpack.c.l.b16 %v424
  %v2447 = vunpack.c.h.b16 %v424
  %v2448 = vunpack.c.l.b16 %v425
  %v2449 = vunpack.c.h.b16 %v425
  %v2450 = vunpack.c.l.b16 %v426
  %v2451 = vunpack.c.h.b16 %v426
  %v2452 = vunpack.c.l.b16 %v427
  %v2453 = vunpack.c.h.b16 %v427
  %v2454 = vunpack.c.l.b16 %v428
  %v2455 = vunpack.c.h.b16 %v428
  %v2456 = vunpack.c.l.b16 %v429
  %v2457 = vunpack.c.h.b16 %v429
  %v2458 = vunpack.c.l.b16 %v430
  %v2459 = vunpack.c.h.b16 %v430
  %v2460 = vunpack.c.l.b16 %v431
  %v2461 = vunpack.c.h.b16 %v431
  %v2462 = vunpack.c.l.b16 %v432
  %v2463 = vunpack.c.h.b16 %v432
  %v2464 = vunpack.c.l.b16 %v433
  %v2465 = vunpack.c.h.b16 %v433
  %v2466 = vunpack.c.l.b16 %v434
  %v2467 = vunpack.c.h.b16 %v434
  %v2468 = vunpack.c.l.b16 %v435
  %v2469 = vunpack.c.h.b16 %v435
  %v2470 = vunpack.c.l.b16 %v436
  %v2471 = vunpack.c.h.b16 %v436
  %v2472 = vunpack.c.l.b16 %v437
  %v2473 = vunpack.c.h.b16 %v437
  %v2474 = vunpack.c.l.b16 %v438
  %v2475 = vunpack.c.h.b16 %v438
  %v2476 = vunpack.c.l.b16 %v439
  %v2477 = vunpack.c.h.b16 %v439
  %v2478 = vunpack.c.l.b16 %v440
  %v2479 = vunpack.c.h.b16 %v440
  %v2480 = vunpack.c.l.b16 %v441
  %v2481 = vunpack.c.h.b16 %v441
  %v2482 = vunpack.c.l.b16 %v442
  %v2483 = vunpack.c.h.b16 %v442
  %v2484 = vunpack.c.l.b16 %v443
  %v2485 = vunpack.c.h.b16 %v443
  %v2486 = vunpack.c.l.b16 %v444
  %v2487 = vunpack.c.h.b16 %v444
  %v2488 = vunpack.c.l.b16 %v445
  %v2489 = vunpack.c.h.b16 %v445
  %v2490 = vunpack.c.l.b16 %v446
  %v2491 = vunpack.c.h.b16 %v446
  %v2492 = vunpack.c.l.b16 %v447
  %v2493 = vunpack.c.h.b16 %v447
  %v2494 = vunpack.c.l.b16 %v448
  %v2495 = vunpack.c.h.b16 %v448
  %v2496 = vunpack.c.l.b16 %v449
  %v2497 = vunpack.c.h.b16 %v449
  %v2498 = vunpack.c.l.b16 %v450
  %v2499 = vunpack.c.h.b16 %v450
  %v2500 = vunpack.c.l.b16 %v451
  %v2501 = vunpack.c.h.b16 %v451
  %v2502 = vunpack.c.l.b16 %v452
  %v2503 = vunpack.c.h.b16 %v452
  %v2504 = vunpack.c.l.b16 %v453
  %v2505 = vunpack.c.h.b16 %v453
  %v2506 = vunpack.c.l.b16 %v454
  %v2507 = vunpack.c.h.b16 %v454
  %v2508 = vunpack.c.l.b16 %v455
  %v2509 = vunpack.c.h.b16 %v455
  %v2510 = vunpack.c.l.b16 %v456
  %v2511 = vunpack.c.h.b16 %v456
  %v2512 = vunpack.c.l.b16 %v457
  %v2513 = vunpack.c.h.b16 %v457
  %v2514 = vunpack.c.l.b16 %v458
  %v2515 = vunpack.c.h.b16 %v458
  %v2516 = vunpack.c.l.b16 %v459
  %v2517 = vunpack.c.h.b16 %v459
  %v2518 = vunpack.c.l.b16 %v460
  %v2519 = vunpack.c.h.b16 %v460
  %v2520 = vunpack.c.l.b16 %v461
  %v2521 = vunpack.c.h.b16 %v461
  %v2522 = vunpack.c.l.b16 %v462
  %v2523 = vunpack.c.h.b16 %v462
  %v2524 = vunpack.c.l.b16 %v463
  %v2525 = vunpack.c.h.b16 %v463
  %v2526 = vunpack.c.l.b16 %v464
  %v2527 = vunpack.c.h.b16 %v464
  %v2528 = vunpack.c.l.b16 %v465
  %v2529 = vunpack.c.h.b16 %v465
  %v2530 = vunpack.c.l.b16 %v466
  %v2531 = vunpack.c.h.b16 %v466
  %v2532 = vunpack.c.l.b16 %v467
  %v2533 = vunpack.c.h.b16 %v467
  %v2534 = vunpack.c.l.b16 %v468
  %v2535 = vunpack.c.h.b16 %v468
  %v2536 = vunpack.c.l.b16 %v469
  %v2537 = vunpack.c.h.b16 %v469
  %v2538 = vunpack.c.l.b16 %v470
  %v2539 = vunpack.c.h.b16 %v470
  %v2540 = vunpack.c.l.b16 %v471
  %v2541 = vunpack.c.h.b16 %v471
  %v2542 = vunpack.c.l.b16 %v472
  %v2543 = vunpack.c.h.b16 %v472
  %v2544 = vunpack.c.l.b16 %v473
  %v2545 = vunpack.c.h.b16 %v473
  %v2546 = vunpack.c.l.b16 %v474
  %v2547 = vunpack.c.h.b16 %v474
  %v2548 = vunpack.c.l.b16 %v475
  %v2549 = vunpack.c.h.b16 %v475
  %v2550 = vunpack.c.l.b16 %v476
  %v2551 = vunpack.c.h.b16 %v476
  %v2552 = vunpack.c.l.b16 %v477
  %v2553 = vunpack.c.h.b16 %v477
  %v2554 = vunpack.c.l.b16 %v478
  %v2555 = vunpack.c.h.b16 %v478
  %v2556 = vunpack.c.l.b16 %v479
  %v2557 = vunpack.c.h.b16 %v479
  %v2558 = vunpack.c.l.b16 %v480
  %v2559 = vunpack.c.h.b16 %v480
  %v2560 = vunpack.c.l.b16 %v481
  %v2561 = vunpack.c.h.b16 %v481
  %v2562 = vunpack.c.l.b16 %v482
  %v2563 = vunpack.c.h.b16 %v482
  %v2564 = vunpack.c.l.b16 %v483
  %v2565 = vunpack.c.h.b16 %v483
  %v2566 = vunpack.c.l.b16 %v484
  %v2567 = vunpack.c.h.b16 %v484
  %v2568 = vunpack.c.l.b16 %v485
  %v2569 = vunpack.c.h.b16 %v485
  %v2570 = vunpack.c.l.b16 %v486
  %v2571 = vunpack.c.h.b16 %v486
  %v2572 = vunpack.c.l.b16 %v487
  %v2573 = vunpack.c.h.b16 %v487
  %v2574 = vunpack.c.l.b16 %v488
  %v2575 = vunpack.c.h.b16 %v488
  %v2576 = vunpack.c.l.b16 %v489
  %v2577 = vunpack.c.h.b16 %v489
  %v2578 = vunpack.c.l.b16 %v490
  %v2579 = vunpack.c.h.b16 %v490
  %v2580 = vunpack.c.l.b16 %v491
  %v2581 = vunpack.c.h.b16 %v491
  %v2582 = vunpack.c.l.b16 %v492
  %v2583 = vunpack.c.h.b16 %v492
  %v2584 = vunpack.c.l.b16 %v493
  %v2585 = vunpack.c.h.b16 %v493
  %v2586 = vunpack.c.l.b16 %v494
  %v2587 = vunpack.c.h.b16 %v494
  %v2588 = vunpack.c.l.b16 %v495
  %v2589 = vunpack.c.h.b16 %v495
  %v2590 = vunpack.c.l.b16 %v496
  %v2591 = vunpack.c.h.b16 %v496
  %v2592 = vunpack.c.l.b16 %v497
  %v2593 = vunpack.c.h.b16 %v497
  %v2594 = vunpack.c.l.b16 %v498
  %v2595 = vunpack.c.h.b16 %v498
  %v2596 = vunpack.c.l.b16 %v499
  %v2597 = vunpack.c.h.b16 %v499
  %v2598 = vunpack.c.l.b16 %v500
  %v2599 = vunpack.c.h.b16 %v500
  %v2600 = vunpack.c.l.b16 %v501
  %v2601 = vunpack.c.h.b16 %v501
  %v2602 = vunpack.c.l.b16 %v502
  %v2603 = vunpack.c.h.b16 %v502
  %v2604 = vunpack.c.l.b16 %v503
  %v2605 = vunpack.c.h.b16 %v503
  %v2606 = vunpack.c.l.b16 %v504
  %v2607 = vunpack.c.h.b16 %v504
  %v2608 = vunpack.c.l.b16 %v505
  %v2609 = vunpack.c.h.b16 %v505
  %v2610 = vunpack.c.l.b16 %v506
  %v2611 = vunpack.c.h.b16 %v506
  %v2612 = vunpack.c.l.b16 %v507
  %v2613 = vunpack.c.h.b16 %v507
  %v2614 = vunpack.c.l.b16 %v508
  %v2615 = vunpack.c.h.b16 %v508
  %v2616 = vunpack.c.l.b16 %v509
  %v2617 = vunpack.c.h.b16 %v509
  %v2618 = vunpack.c.l.b16 %v510
  %v2619 = vunpack.c.h.b16 %v510
  %v2620 = vunpack.c.l.b16 %v511
  %v2621 = vunpack.c.h.b16 %v511
  %v2622 = vunpack.c.l.b16 %v512
  %v2623 = vunpack.c.h.b16 %v512
  %v2624 = vunpack.c.l.b16 %v513
  %v2625 = vunpack.c.h.b16 %v513
  %v2626 = vunpack.c.l.b16 %v514
  %v2627 = vunpack.c.h.b16 %v514
  %v2628 = vunpack.c.l.b16 %v515
  %v2629 = vunpack.c.h.b16 %v515
  %v2630 = vunpack.c.l.b16 %v516
  %v2631 = vunpack.c.h.b16 %v516
  %v2632 = vunpack.c.l.b16 %v517
  %v2633 = vunpack.c.h.b16 %v517
  %v2634 = vunpack.c.l.b16 %v518
  %v2635 = vunpack.c.h.b16 %v518
  %v2636 = vunpack.c.l.b16 %v519
  %v2637 = vunpack.c.h.b16 %v519
  %v2638 = vunpack.c.l.b16 %v520
  %v2639 = vunpack.c.h.b16 %v520
  %v2640 = vunpack.c.l.b16 %v521
  %v2641 = vunpack.c.h.b16 %v521
  %v2642 = vunpack.c.l.b16 %v522
  %v2643 = vunpack.c.h.b16 %v522
  %v2644 = vunpack.c.l.b16 %v523
  %v2645 = vunpack.c.h.b16 %v523
  %v2646 = vunpack.c.l.b16 %v524
  %v2647 = vunpack.c.h.b16 %v524
  %v2648 = vunpack.c.l.b16 %v525
  %v2649 = vunpack.c.h.b16 %v525
  %v2650 = vunpack.c.l.b16 %v526
  %v2651 = vunpack.c.h.b16 %v526
  %v2652 = vunpack.c.l.b16 %v527
  %v2653 = vunpack.c.h.b16 %v527
  %v2654 = vunpack.c.l.b16 %v528
  %v2655 = vunpack.c.h.b16 %v528
  %v2656 = vunpack.c.l.b16 %v529
  %v2657 = vunpack.c.h.b16 %v529
  %v2658 = vunpack.c.l.b16 %v530
  %v2659 = vunpack.c.h.b16 %v530
  %v2660 = vunpack.c.l.b16 %v531
  %v2661 = vunpack.c.h.b16 %v531
  %v2662 = vunpack.c.l.b16 %v532
  %v2663 = vunpack.c.h.b16 %v532
  %v2664 = vunpack.c.l.b16 %v533
  %v2665 = vunpack.c.h.b16 %v533
  %v2666 = vunpack.c.l.b16 %v534
  %v2667 = vunpack.c.h.b16 %v534
  %v2668 = vunpack.c.l.b16 %v535
  %v2669 = vunpack.c.h.b16 %v535
  %v2670 = vunpack.c.l.b16 %v536
  %v2671 = vunpack.c.h.b16 %v536
  %v2672 = vunpack.c.l.b16 %v537
  %v2673 = vunpack.c.h.b16 %v537
  %v2674 = vunpack.c.l.b16 %v538
  %v2675 = vunpack.c.h.b16 %v538
  %v2676 = vunpack.c.l.b16 %v539
  %v2677 = vunpack.c.h.b16 %v539
  %v2678 = vunpack.c.l.b16 %v540
  %v2679 = vunpack.c.h.b16 %v540
  %v2680 = vunpack.c.l.b16 %v541
  %v2681 = vunpack.c.h.b16 %v541
  %v2682 = vunpack.c.l.b16 %v542
  %v2683 = vunpack.c.h.b16 %v542
  %v2684 = vunpack.c.l.b16 %v543
  %v2685 = vunpack.c.h.b16 %v543
  %v2686 = vunpack.c.l.b16 %v544
  %v2687 = vunpack.c.h.b16 %v544
  %v2688 = vunpack.c.l.b16 %v545
  %v2689 = vunpack.c.h.b16 %v545
  %v2690 = vunpack.c.l.b16 %v546
  %v2691 = vunpack.c.h.b16 %v546
  %v2692 = vunpack.c.l.b16 %v547
  %v2693 = vunpack.c.h.b16 %v547
  %v2694 = vunpack.c.l.b16 %v548
  %v2695 = vunpack.c.h.b16 %v548
  %v2696 = vunpack.c.l.b16 %v549
  %v2697 = vunpack.c.h.b16 %v549
  %v2698 = vunpack.c.l.b16 %v550
  %v2699 = vunpack.c.h.b16 %v550
  %v2700 = vunpack.c.l.b16 %v551
  %v2701 = vunpack.c.h.b16 %v551
  %v2702 = vunpack.c.l.b16 %v552
  %v2703 = vunpack.c.h.b16 %v552
  %v2704 = vunpack.c.l.b16 %v553
  %v2705 = vunpack.c.h.b16 %v553
  %v2706 = vunpack.c.l.b16 %v554
  %v2707 = vunpack.c.h.b16 %v554
  %v2708 = vunpack.c.l.b16 %v555
  %v2709 = vunpack.c.h.b16 %v555
  %v2710 = vunpack.c.l.b16 %v556
  %v2711 = vunpack.c.h.b16 %v556
  %v2712 = vunpack.c.l.b16 %v557
  %v2713 = vunpack.c.h.b16 %v557
  %v2714 = vunpack.c.l.b16 %v558
  %v2715 = vunpack.c.h.b16 %v558
  %v2716 = vunpack.c.l.b16 %v559
  %v2717 = vunpack.c.h.b16 %v559
  %v2718 = vunpack.c.l.b16 %v560
  %v2719 = vunpack.c.h.b16 %v560
  %v2720 = vunpack.c.l.b16 %v561
  %v2721 = vunpack.c.h.b16 %v561
  %v2722 = vunpack.c.l.b16 %v562
  %v2723 = vunpack.c.h.b16 %v562
  %v2724 = vunpack.c.l.b16 %v563
  %v2725 = vunpack.c.h.b16 %v563
  %v2726 = vunpack.c.l.b16 %v564
  %v2727 = vunpack.c.h.b16 %v564
  %v2728 = vunpack.c.l.b16 %v565
  %v2729 = vunpack.c.h.b16 %v565
  %v2730 = vunpack.c.l.b16 %v566
  %v2731 = vunpack.c.h.b16 %v566
  %v2732 = vunpack.c.l.b16 %v567
  %v2733 = vunpack.c.h.b16 %v567
  %v2734 = vunpack.c.l.b16 %v568
  %v2735 = vunpack.c.h.b16 %v568
  %v2736 = vunpack.c.l.b16 %v569
  %v2737 = vunpack.c.h.b16 %v569
  %v2738 = vunpack.c.l.b16 %v570
  %v2739 = vunpack.c.h.b16 %v570
  %v2740 = vunpack.c.l.b16 %v571
  %v2741 = vunpack.c.h.b16 %v571
  %v2742 = vunpack.c.l.b16 %v572
  %v2743 = vunpack.c.h.b16 %v572
  %v2744 = vunpack.c.l.b16 %v573
  %v2745 = vunpack.c.h.b16 %v573
  %v2746 = vunpack.c.l.b16 %v574
  %v2747 = vunpack.c.h.b16 %v574
  %v2748 = vunpack.c.l.b16 %v575
  %v2749 = vunpack.c.h.b16 %v575
  %v2750 = vunpack.c.l.b16 %v576
  %v2751 = vunpack.c.h.b16 %v576
  %v2752 = vunpack.c.l.b16 %v577
  %v2753 = vunpack.c.h.b16 %v577
  %v2754 = vunpack.c.l.b16 %v578
  %v2755 = vunpack.c.h.b16 %v578
  %v2756 = vunpack.c.l.b16 %v579
  %v2757 = vunpack.c.h.b16 %v579
  %v2758 = vunpack.c.l.b16 %v580
  %v2759 = vunpack.c.h.b16 %v580
  %v2760 = vunpack.c.l.b16 %v581
  %v2761 = vunpack.c.h.b16 %v581
  %v2762 = vunpack.c.l.b16 %v582
  %v2763 = vunpack.c.h.b16 %v582
  %v2764 = vunpack.c.l.b16 %v583
  %v2765 = vunpack.c.h.b16 %v583
  %v2766 = vunpack.c.l.b16 %v584
  %v2767 = vunpack.c.h.b16 %v584
  %v2768 = vunpack.c.l.b16 %v585
  %v2769 = vunpack.c.h.b16 %v585
  %v2770 = vunpack.c.l.b16 %v586
  %v2771 = vunpack.c.h.b16 %v586
  %v2772 = vunpack.c.l.b16 %v587
  %v2773 = vunpack.c.h.b16 %v587
  %v2774 = vunpack.c.l.b16 %v588
  %v2775 = vunpack.c.h.b16 %v588
  %v2776 = vunpack.c.l.b16 %v589
  %v2777 = vunpack.c.h.b16 %v589
  %v2778 = vunpack.c.l.b16 %v590
  %v2779 = vunpack.c.h.b16 %v590
  %v2780 = vunpack.c.l.b16 %v591
  %v2781 = vunpack.c.h.b16 %v591
  %v2782 = vunpack.c.l.b16 %v592
  %v2783 = vunpack.c.h.b16 %v592
  %v2784 = vunpack.c.l.b16 %v593
  %v2785 = vunpack.c.h.b16 %v593
  %v2786 = vunpack.c.l.b16 %v594
  %v2787 = vunpack.c.h.b16 %v594
  %v2788 = vunpack.c.l.b16 %v595
  %v2789 = vunpack.c.h.b16 %v595
  %v2790 = vunpack.c.l.b16 %v596
  %v2791 = vunpack.c.h.b16 %v596
  %v2792 = vunpack.c.l.b16 %v597
  %v2793 = vunpack.c.h.b16 %v597
  %v2794 = vunpack.c.l.b16 %v598
  %v2795 = vunpack.c.h.b16 %v598
  %v2796 = vunpack.c.l.b16 %v599
  %v2797 = vunpack.c.h.b16 %v599
  %v2798 = vunpack.c.l.b16 %v600
  %v2799 = vunpack.c.h.b16 %v600
  %v2800 = vunpack.c.l.b16 %v601
  %v2801 = vunpack.c.h.b16 %v601
  %v2802 = vunpack.c.l.b16 %v602
  %v2803 = vunpack.c.h.b16 %v602
  %v2804 = vunpack.c.l.b16 %v603
  %v2805 = vunpack.c.h.b16 %v603
  %v2806 = vunpack.c.l.b16 %v604
  %v2807 = vunpack.c.h.b16 %v604
  %v2808 = vunpack.c.l.b16 %v605
  %v2809 = vunpack.c.h.b16 %v605
  %v2810 = vunpack.c.l.b16 %v606
  %v2811 = vunpack.c.h.b16 %v606
  %v2812 = vunpack.c.l.b16 %v607
  %v2813 = vunpack.c.h.b16 %v607
  %v2814 = vunpack.c.l.b16 %v608
  %v2815 = vunpack.c.h.b16 %v608
  %v2816 = vunpack.c.l.b16 %v609
  %v2817 = vunpack.c.h.b16 %v609
  %v2818 = vunpack.c.l.b16 %v610
  %v2819 = vunpack.c.h.b16 %v610
  %v2820 = vunpack.c.l.b16 %v611
  %v2821 = vunpack.c.h.b16 %v611
  %v2822 = vunpack.c.l.b16 %v612
  %v2823 = vunpack.c.h.b16 %v612
  %v2824 = vunpack.c.l.b16 %v613
  %v2825 = vunpack.c.h.b16 %v613
  %v2826 = vunpack.c.l.b16 %v614
  %v2827 = vunpack.c.h.b16 %v614
  %v2828 = vunpack.c.l.b16 %v615
  %v2829 = vunpack.c.h.b16 %v615
  %v2830 = vunpack.c.l.b16 %v616
  %v2831 = vunpack.c.h.b16 %v616
  %v2832 = vunpack.c.l.b16 %v617
  %v2833 = vunpack.c.h.b16 %v617
  %v2834 = vunpack.c.l.b16 %v618
  %v2835 = vunpack.c.h.b16 %v618
  %v2836 = vunpack.c.l.b16 %v619
  %v2837 = vunpack.c.h.b16 %v619
  %v2838 = vunpack.c.l.b16 %v620
  %v2839 = vunpack.c.h.b16 %v620
  %v2840 = vunpack.c.l.b16 %v621
  %v2841 = vunpack.c.h.b16 %v621
  %v2842 = vunpack.c.l.b16 %v622
  %v2843 = vunpack.c.h.b16 %v622
  %v2844 = vunpack.c.l.b16 %v623
  %v2845 = vunpack.c.h.b16 %v623
  %v2846 = vunpack.c.l.b16 %v624
  %v2847 = vunpack.c.h.b16 %v624
  %v2848 = vunpack.c.l.b16 %v625
  %v2849 = vunpack.c.h.b16 %v625
  %v2850 = vunpack.c.l.b16 %v626
  %v2851 = vunpack.c.h.b16 %v626
  %v2852 = vunpack.c.l.b16 %v627
  %v2853 = vunpack.c.h.b16 %v627
  %v2854 = vunpack.c.l.b16 %v628
  %v2855 = vunpack.c.h.b16 %v628
  %v2856 = vunpack.c.l.b16 %v629
  %v2857 = vunpack.c.h.b16 %v629
  %v2858 = vunpack.c.l.b16 %v630
  %v2859 = vunpack.c.h.b16 %v630
  %v2860 = vunpack.c.l.b16 %v631
  %v2861 = vunpack.c.h.b16 %v631
  %v2862 = vunpack.c.l.b16 %v632
  %v2863 = vunpack.c.h.b16 %v632
  %v2864 = vunpack.c.l.b16 %v633
  %v2865 = vunpack.c.h.b16 %v633
  %v2866 = vunpack.c.l.b16 %v634
  %v2867 = vunpack.c.h.b16 %v634
  %v2868 = vunpack.c.l.b16 %v635
  %v2869 = vunpack.c.h.b16 %v635
  %v2870 = vunpack.c.l.b16 %v636
  %v2871 = vunpack.c.h.b16 %v636
  %v2872 = vunpack.c.l.b16 %v637
  %v2873 = vunpack.c.h.b16 %v637
  %v2874 = vunpack.c.l.b16 %v638
  %v2875 = vunpack.c.h.b16 %v638
  %v2876 = vunpack.c.l.b16 %v639
  %v2877 = vunpack.c.h.b16 %v639
  %v2878 = vunpack.c.l.b16 %v640
  %v2879 = vunpack.c.h.b16 %v640
  %v2880 = vunpack.c.l.b16 %v641
  %v2881 = vunpack.c.h.b16 %v641
  %v2882 = vunpack.c.l.b16 %v642
  %v2883 = vunpack.c.h.b16 %v642
  %v2884 = vunpack.c.l.b16 %v643
  %v2885 = vunpack.c.h.b16 %v643
  %v2886 = vunpack.c.l.b16 %v644
  %v2887 = vunpack.c.h.b16 %v644
  %v2888 = vunpack.c.l.b16 %v645
  %v2889 = vunpack.c.h.b16 %v645
  %v2890 = vunpack.c.l.b16 %v646
  %v2891 = vunpack.c.h.b16 %v646
  %v2892 = vunpack.c.l.b16 %v647
  %v2893 = vunpack.c.h.b16 %v647
  %v2894 = vunpack.c.l.b16 %v648
  %v2895 = vunpack.c.h.b16 %v648
  %v2896 = vunpack.c.l.b16 %v649
  %v2897 = vunpack.c.h.b16 %v649
  %v2898 = vunpack.c.l.b16 %v650
  %v2899 = vunpack.c.h.b16 %v650
  %v2900 = vunpack.c.l.b16 %v651
  %v2901 = vunpack.c.h.b16 %v651
  %v2902 = vunpack.c.l.b16 %v652
  %v2903 = vunpack.c.h.b16 %v652
  %v2904 = vunpack.c.l.b16 %v653
  %v2905 = vunpack.c.h.b16 %v653
  %v2906 = vunpack.c.l.b16 %v654
  %v2907 = vunpack.c.h.b16 %v654
  %v2908 = vunpack.c.l.b16 %v655
  %v2909 = vunpack.c.h.b16 %v655
  %v2910 = vunpack.c.l.b16 %v656
  %v2911 = vunpack.c.h.b16 %v656
  %v2912 = vunpack.c.l.b16 %v657
  %v2913 = vunpack.c.h.b16 %v657
  %v2914 = vunpack.c.l.b16 %v658
  %v2915 = vunpack.c.h.b16 %v658
  %v2916 = vunpack.c.l.b16 %v659
  %v2917 = vunpack.c.h.b16 %v659
  %v2918 = vunpack.c.l.b16 %v660
  %v2919 = vunpack.c.h.b16 %v660
  %v2920 = vunpack.c.l.b16 %v661
  %v2921 = vunpack.c.h.b16 %v661
  %v2922 = vunpack.c.l.b16 %v662
  %v2923 = vunpack.c.h.b16 %v662
  %v2924 = vunpack.c.l.b16 %v663
  %v2925 = vunpack.c.h.b16 %v663
  %v2926 = vunpack.c.l.b16 %v664
  %v2927 = vunpack.c.h.b16 %v664
  %v2928 = vunpack.c.l.b16 %v665
  %v2929 = vunpack.c.h.b16 %v665
  %v2930 = vunpack.c.l.b16 %v666
  %v2931 = vunpack.c.h.b16 %v666
  %v2932 = vunpack.c.l.b16 %v667
  %v2933 = vunpack.c.h.b16 %v667
  %v2934 = vunpack.c.l.b16 %v668
  %v2935 = vunpack.c.h.b16 %v668
  %v2936 = vunpack.c.l.b16 %v669
  %v2937 = vunpack.c.h.b16 %v669
  %v2938 = vunpack.c.l.b16 %v670
  %v2939 = vunpack.c.h.b16 %v670
  %v2940 = vunpack.c.l.b16 %v671
  %v2941 = vunpack.c.h.b16 %v671
  %v2942 = vunpack.c.l.b16 %v672
  %v2943 = vunpack.c.h.b16 %v672
  %v2944 = vunpack.c.l.b16 %v673
  %v2945 = vunpack.c.h.b16 %v673
  %v2946 = vunpack.c.l.b16 %v674
  %v2947 = vunpack.c.h.b16 %v674
  %v2948 = vunpack.c.l.b16 %v675
  %v2949 = vunpack.c.h.b16 %v675
  %v2950 = vunpack.c.l.b16 %v676
  %v2951 = vunpack.c.h.b16 %v676
  %v2952 = vunpack.c.l.b16 %v677
  %v2953 = vunpack.c.h.b16 %v677
  %v2954 = vunpack.c.l.b16 %v678
  %v2955 = vunpack.c.h.b16 %v678
  %v2956 = vunpack.c.l.b16 %v679
  %v2957 = vunpack.c.h.b16 %v679
  %v2958 = vunpack.c.l.b16 %v680
  %v2959 = vunpack.c.h.b16 %v680
  %v2960 = vunpack.c.l.b16 %v681
  %v2961 = vunpack.c.h.b16 %v681
  %v2962 = vunpack.c.l.b16 %v682
  %v2963 = vunpack.c.h.b16 %v682
  %v2964 = vunpack.c.l.b16 %v683
  %v2965 = vunpack.c.h.b16 %v683
  %v2966 = vunpack.c.l.b16 %v684
  %v2967 = vunpack.c.h.b16 %v684
  %v2968 = vunpack.c.l.b16 %v685
  %v2969 = vunpack.c.h.b16 %v685
  %v2970 = vunpack.c.l.b16 %v686
  %v2971 = vunpack.c.h.b16 %v686
  %v2972 = vunpack.c.l.b16 %v687
  %v2973 = vunpack.c.h.b16 %v687
  %v2974 = vunpack.c.l.b16 %v688
  %v2975 = vunpack.c.h.b16 %v688
  %v2976 = vunpack.c.l.b16 %v689
  %v2977 = vunpack.c.h.b16 %v689
  %v2978 = vunpack.c.l.b16 %v690
  %v2979 = vunpack.c.h.b16 %v690
  %v2980 = vunpack.c.l.b16 %v691
  %v2981 = vunpack.c.h.b16 %v691
  %v2982 = vunpack.c.l.b16 %v692
  %v2983 = vunpack.c.h.b16 %v692
  %v2984 = vunpack.c.l.b16 %v693
  %v2985 = vunpack.c.h.b16 %v693
  %v2986 = vunpack.c.l.b16 %v694
  %v2987 = vunpack.c.h.b16 %v694
  %v2988 = vunpack.c.l.b16 %v695
  %v2989 = vunpack.c.h.b16 %v695
  %v2990 = vunpack.c.l.b16 %v696
  %v2991 = vunpack.c.h.b16 %v696
  %v2992 = vunpack.c.l.b16 %v697
  %v2993 = vunpack.c.h.b16 %v697
  %v2994 = vunpack.c.l.b16 %v698
  %v2995 = vunpack.c.h.b16 %v698
  %v2996 = vunpack.c.l.b16 %v699
  %v2997 = vunpack.c.h.b16 %v699
  %v2998 = vunpack.c.l.b16 %v700
  %v2999 = vunpack.c.h.b16 %v700
  %v3000 = vunpack.c.l.b16 %v701
  %v3001 = vunpack.c.h.b16 %v701
  %v3002 = vunpack.c.l.b16 %v702
  %v3003 = vunpack.c.h.b16 %v702
  %v3004 = vunpack.c.l.b16 %v703
  %v3005 = vunpack.c.h.b16 %v703
  %v3006 = vunpack.c.l.b16 %v704
  %v3007 = vunpack.c.h.b16 %v704
  %v3008 = vunpack.c.l.b16 %v705
  %v3009 = vunpack.c.h.b16 %v705
  %v3010 = vunpack.c.l.b16 %v706
  %v3011 = vunpack.c.h.b16 %v706
  %v3012 = vunpack.c.l.b16 %v707
  %v3013 = vunpack.c.h.b16 %v707
  %v3014 = vunpack.c.l.b16 %v708
  %v3015 = vunpack.c.h.b16 %v708
  %v3016 = vunpack.c.l.b16 %v709
  %v3017 = vunpack.c.h.b16 %v709
  %v3018 = vunpack.c.l.b16 %v710
  %v3019 = vunpack.c.h.b16 %v710
  %v3020 = vunpack.c.l.b16 %v711
  %v3021 = vunpack.c.h.b16 %v711
  %v3022 = vunpack.c.l.b16 %v712
  %v3023 = vunpack.c.h.b16 %v712
  %v3024 = vunpack.c.l.b16 %v713
  %v3025 = vunpack.c.h.b16 %v713
  %v3026 = vunpack.c.l.b16 %v714
  %v3027 = vunpack.c.h.b16 %v714
  %v3028 = vunpack.c.l.b16 %v715
  %v3029 = vunpack.c.h.b16 %v715
  %v3030 = vunpack.c.l.b16 %v716
  %v3031 = vunpack.c.h.b16 %v716
  %v3032 = vunpack.c.l.b16 %v717
  %v3033 = vunpack.c.h.b16 %v717
  %v3034 = vunpack.c.l.b16 %v718
  %v3035 = vunpack.c.h.b16 %v718
  %v3036 = vunpack.c.l.b16 %v719
  %v3037 = vunpack.c.h.b16 %v719
  %v3038 = vunpack.c.l.b16 %v720
  %v3039 = vunpack.c.h.b16 %v720
  %v3040 = vunpack.c.l.b16 %v721
  %v3041 = vunpack.c.h.b16 %v721
  %v3042 = vunpack.c.l.b16 %v722
  %v3043 = vunpack.c.h.b16 %v722
  %v3044 = vunpack.c.l.b16 %v723
  %v3045 = vunpack.c.h.b16 %v723
  %v3046 = vunpack.c.l.b16 %v724
  %v3047 = vunpack.c.h.b16 %v724
  %v3048 = vunpack.c.l.b16 %v725
  %v3049 = vunpack.c.h.b16 %v725
  %v3050 = vunpack.c.l.b16 %v726
  %v3051 = vunpack.c.h.b16 %v726
  %v3052 = vunpack.c.l.b16 %v727
  %v3053 = vunpack.c.h.b16 %v727
  %v3054 = vunpack.c.l.b16 %v728
  %v3055 = vunpack.c.h.b16 %v728
  %v3056 = vunpack.c.l.b16 %v729
  %v3057 = vunpack.c.h.b16 %v729
  %v3058 = vunpack.c.l.b16 %v730
  %v3059 = vunpack.c.h.b16 %v730
  %v3060 = vunpack.c.l.b16 %v731
  %v3061 = vunpack.c.h.b16 %v731
  %v3062 = vunpack.c.l.b16 %v732
  %v3063 = vunpack.c.h.b16 %v732
  %v3064 = vunpack.c.l.b16 %v733
  %v3065 = vunpack.c.h.b16 %v733
  %v3066 = vunpack.c.l.b16 %v734
  %v3067 = vunpack.c.h.b16 %v734
  %v3068 = vunpack.c.l.b16 %v735
  %v3069 = vunpack.c.h.b16 %v735
  %v3070 = vunpack.c.l.b16 %v736
  %v3071 = vunpack.c.h.b16 %v736
  %v3072 = vunpack.c.l.b16 %v737
  %v3073 = vunpack.c.h.b16 %v737
  %v3074 = vunpack.c.l.b16 %v738
  %v3075 = vunpack.c.h.b16 %v738
  %v3076 = vunpack.c.l.b16 %v739
  %v3077 = vunpack.c.h.b16 %v739
  %v3078 = vunpack.c.l.b16 %v740
  %v3079 = vunpack.c.h.b16 %v740
  %v3080 = vunpack.c.l.b16 %v741
  %v3081 = vunpack.c.h.b16 %v741
  %v3082 = vunpack.c.l.b16 %v742
  %v3083 = vunpack.c.h.b16 %v742
  %v3084 = vunpack.c.l.b16 %v743
  %v3085 = vunpack.c.h.b16 %v743
  %v3086 = vunpack.c.l.b16 %v744
  %v3087 = vunpack.c.h.b16 %v744
  %v3088 = vunpack.c.l.b16 %v745
  %v3089 = vunpack.c.h.b16 %v745
  %v3090 = vunpack.c.l.b16 %v746
  %v3091 = vunpack.c.h.b16 %v746
  %v3092 = vunpack.c.l.b16 %v747
  %v3093 = vunpack.c.h.b16 %v747
  %v3094 = vunpack.c.l.b16 %v748
  %v3095 = vunpack.c.h.b16 %v748
  %v3096 = vunpack.c.l.b16 %v749
  %v3097 = vunpack.c.h.b16 %v749
  %v3098 = vunpack.c.l.b16 %v750
  %v3099 = vunpack.c.h.b16 %v750
  %v3100 = vunpack.c.l.b16 %v751
  %v3101 = vunpack.c.h.b16 %v751
  %v3102 = vunpack.c.l.b16 %v752
  %v3103 = vunpack.c.h.b16 %v752
  %v3104 = vunpack.c.l.b16 %v753
  %v3105 = vunpack.c.h.b16 %v753
  %v3106 = vunpack.c.l.b16 %v754
  %v3107 = vunpack.c.h.b16 %v754
  %v3108 = vunpack.c.l.b16 %v755
  %v3109 = vunpack.c.h.b16 %v755
  %v3110 = vunpack.c.l.b16 %v756
  %v3111 = vunpack.c.h.b16 %v756
  %v3112 = vunpack.c.l.b16 %v757
  %v3113 = vunpack.c.h.b16 %v757
  %v3114 = vunpack.c.l.b16 %v758
  %v3115 = vunpack.c.h.b16 %v758
  %v3116 = vunpack.c.l.b16 %v759
  %v3117 = vunpack.c.h.b16 %v759
  %v3118 = vunpack.c.l.b16 %v760
  %v3119 = vunpack.c.h.b16 %v760
  %v3120 = vunpack.c.l.b16 %v761
  %v3121 = vunpack.c.h.b16 %v761
  %v3122 = vunpack.c.l.b16 %v762
  %v3123 = vunpack.c.h.b16 %v762
  %v3124 = vunpack.c.l.b16 %v763
  %v3125 = vunpack.c.h.b16 %v763
  %v3126 = vunpack.c.l.b16 %v764
  %v3127 = vunpack.c.h.b16 %v764
  %v3128 = vunpack.c.l.b16 %v765
  %v3129 = vunpack.c.h.b16 %v765
  %v3130 = vunpack.c.l.b16 %v766
  %v3131 = vunpack.c.h.b16 %v766
  %v3132 = vunpack.c.l.b16 %v767
  %v3133 = vunpack.c.h.b16 %v767
  %v3134 = vunpack.c.l.b16 %v768
  %v3135 = vunpack.c.h.b16 %v768
  %v3136 = vunpack.c.l.b16 %v769
  %v3137 = vunpack.c.h.b16 %v769
  %v3138 = vunpack.c.l.b16 %v770
  %v3139 = vunpack.c.h.b16 %v770
  %v3140 = vunpack.c.l.b16 %v771
  %v3141 = vunpack.c.h.b16 %v771
  %v3142 = vunpack.c.l.b16 %v772
  %v3143 = vunpack.c.h.b16 %v772
  %v3144 = vunpack.c.l.b16 %v773
  %v3145 = vunpack.c.h.b16 %v773
  %v3146 = vunpack.c.l.b16 %v774
  %v3147 = vunpack.c.h.b16 %v774
  %v3148 = vunpack.c.l.b16 %v775
  %v3149 = vunpack.c.h.b16 %v775
  %v3150 = vunpack.c.l.b16 %v776
  %v3151 = vunpack.c.h.b16 %v776
  %v3152 = vunpack.c.l.b16 %v777
  %v3153 = vunpack.c.h.b16 %v777
  %v3154 = vunpack.c.l.b16 %v778
  %v3155 = vunpack.c.h.b16 %v778
  %v3156 = vunpack.c.l.b16 %v779
  %v3157 = vunpack.c.h.b16 %v779
  %v3158 = vunpack.c.l.b16 %v780
  %v3159 = vunpack.c.h.b16 %v780
  %v3160 = vunpack.c.l.b16 %v781
  %v3161 = vunpack.c.h.b16 %v781
  %v3162 = vunpack.c.l.b16 %v782
  %v3163 = vunpack.c.h.b16 %v782
  %v3164 = vunpack.c.l.b16 %v783
  %v3165 = vunpack.c.h.b16 %v783
  %v3166 = vunpack.c.l.b16 %v784
  %v3167 = vunpack.c.h.b16 %v784
  %v3168 = vunpack.c.l.b16 %v785
  %v3169 = vunpack.c.h.b16 %v785
  %v3170 = vunpack.c.l.b16 %v786
  %v3171 = vunpack.c.h.b16 %v786
  %v3172 = vunpack.c.l.b16 %v787
  %v3173 = vunpack.c.h.b16 %v787
  %v3174 = vunpack.c.l.b16 %v788
  %v3175 = vunpack.c.h.b16 %v788
  %v3176 = vunpack.c.l.b16 %v789
  %v3177 = vunpack.c.h.b16 %v789
  %v3178 = vunpack.c.l.b16 %v790
  %v3179 = vunpack.c.h.b16 %v790
  %v3180 = vunpack.c.l.b16 %v791
  %v3181 = vunpack.c.h.b16 %v791
  %v3182 = vunpack.c.l.b16 %v792
  %v3183 = vunpack.c.h.b16 %v792
  %v3184 = vunpack.c.l.b16 %v793
  %v3185 = vunpack.c.h.b16 %v793
  %v3186 = vunpack.c.l.b16 %v794
  %v3187 = vunpack.c.h.b16 %v794
  %v3188 = vunpack.c.l.b16 %v795
  %v3189 = vunpack.c.h.b16 %v795
  %v3190 = vunpack.c.l.b16 %v796
  %v3191 = vunpack.c.h.b16 %v796
  %v3192 = vunpack.c.l.b16 %v797
  %v3193 = vunpack.c.h.b16 %v797
  %v3194 = vunpack.c.l.b16 %v798
  %v3195 = vunpack.c.h.b16 %v798
  %v3196 = vunpack.c.l.b16 %v799
  %v3197 = vunpack.c.h.b16 %v799
  %v3198 = vunpack.c.l.b16 %v800
  %v3199 = vunpack.c.h.b16 %v800
  %v3200 = vunpack.c.l.b16 %v801
  %v3201 = vunpack.c.h.b16 %v801
  %v3202 = vunpack.c.l.b16 %v802
  %v3203 = vunpack.c.h.b16 %v802
  %v3204 = vunpack.c.l.b16 %v803
  %v3205 = vunpack.c.h.b16 %v803
  %v3206 = vunpack.c.l.b16 %v804
  %v3207 = vunpack.c.h.b16 %v804
  %v3208 = vunpack.c.l.b16 %v805
  %v3209 = vunpack.c.h.b16 %v805
  %v3210 = vunpack.c.l.b16 %v806
  %v3211 = vunpack.c.h.b16 %v806
  %v3212 = vunpack.c.l.b16 %v807
  %v3213 = vunpack.c.h.b16 %v807
  %v3214 = vunpack.c.l.b16 %v808
  %v3215 = vunpack.c.h.b16 %v808
  %v3216 = vunpack.c.l.b16 %v809
  %v3217 = vunpack.c.h.b16 %v809
  %v3218 = vunpack.c.l.b16 %v810
  %v3219 = vunpack.c.h.b16 %v810
  %v3220 = vunpack.c.l.b16 %v811
  %v3221 = vunpack.c.h.b16 %v811
  %v3222 = vunpack.c.l.b16 %v812
  %v3223 = vunpack.c.h.b16 %v812
  %v3224 = vunpack.c.l.b16 %v813
  %v3225 = vunpack.c.h.b16 %v813
  %v3226 = vunpack.c.l.b16 %v814
  %v3227 = vunpack.c.h.b16 %v814
  %v3228 = vunpack.c.l.b16 %v815
  %v3229 = vunpack.c.h.b16 %v815
  %v3230 = vunpack.c.l.b16 %v816
  %v3231 = vunpack.c.h.b16 %v816
  %v3232 = vunpack.c.l.b16 %v817
  %v3233 = vunpack.c.h.b16 %v817
  %v3234 = vunpack.c.l.b16 %v818
  %v3235 = vunpack.c.h.b16 %v818
  %v3236 = vunpack.c.l.b16 %v819
  %v3237 = vunpack.c.h.b16 %v819
  %v3238 = vunpack.c.l.b16 %v820
  %v3239 = vunpack.c.h.b16 %v820
  %v3240 = vpack.c.b16 %v1676, %v1672
  %v3241 = vpack.c.b16 %v1677, %v1673
  %v3242 = vpack.c.b16 %v1678, %v1674
  %v3243 = vpack.c.b16 %v1679, %v1675
  %v3244 = vpack.c.b16 %v1684, %v1680
  %v3245 = vpack.c.b16 %v1685, %v1681
  %v3246 = vpack.c.b16 %v1686, %v1682
  %v3247 = vpack.c.b16 %v1687, %v1683
  %v3248 = vpack.c.b16 %v1692, %v1688
  %v3249 = vpack.c.b16 %v1693, %v1689
  %v3250 = vpack.c.b16 %v1694, %v1690
  %v3251 = vpack.c.b16 %v1695, %v1691
  %v3252 = vpack.c.b16 %v1700, %v1696
  %v3253 = vpack.c.b16 %v1701, %v1697
  %v3254 = vpack.c.b16 %v1702, %v1698
  %v3255 = vpack.c.b16 %v1703, %v1699
  %v3256 = vpack.c.b16 %v1708, %v1704
  %v3257 = vpack.c.b16 %v1709, %v1705
  %v3258 = vpack.c.b16 %v1710, %v1706
  %v3259 = vpack.c.b16 %v1711, %v1707
  %v3260 = vpack.c.b16 %v1716, %v1712
  %v3261 = vpack.c.b16 %v1717, %v1713
  %v3262 = vpack.c.b16 %v1718, %v1714
  %v3263 = vpack.c.b16 %v1719, %v1715
  %v3264 = vpack.c.b16 %v1724, %v1720
  %v3265 = vpack.c.b16 %v1725, %v1721
  %v3266 = vpack.c.b16 %v1726, %v1722
  %v3267 = vpack.c.b16 %v1727, %v1723
  %v3268 = vpack.c.b16 %v1732, %v1728
  %v3269 = vpack.c.b16 %v1733, %v1729
  %v3270 = vpack.c.b16 %v1734, %v1730
  %v3271 = vpack.c.b16 %v1735, %v1731
  %v3272 = vpack.c.b16 %v1740, %v1736
  %v3273 = vpack.c.b16 %v1741, %v1737
  %v3274 = vpack.c.b16 %v1742, %v1738
  %v3275 = vpack.c.b16 %v1743, %v1739
  %v3276 = vpack.c.b16 %v1748, %v1744
  %v3277 = vpack.c.b16 %v1749, %v1745
  %v3278 = vpack.c.b16 %v1750, %v1746
  %v3279 = vpack.c.b16 %v1751, %v1747
  %v3280 = vpack.c.b16 %v1756, %v1752
  %v3281 = vpack.c.b16 %v1757, %v1753
  %v3282 = vpack.c.b16 %v1758, %v1754
  %v3283 = vpack.c.b16 %v1759, %v1755
  %v3284 = vpack.c.b16 %v1764, %v1760
  %v3285 = vpack.c.b16 %v1765, %v1761
  %v3286 = vpack.c.b16 %v1766, %v1762
  %v3287 = vpack.c.b16 %v1767, %v1763
  %v3288 = vpack.c.b16 %v1772, %v1768
  %v3289 = vpack.c.b16 %v1773, %v1769
  %v3290 = vpack.c.b16 %v1774, %v1770
  %v3291 = vpack.c.b16 %v1775, %v1771
  %v3292 = vpack.c.b16 %v1780, %v1776
  %v3293 = vpack.c.b16 %v1781, %v1777
  %v3294 = vpack.c.b16 %v1782, %v1778
  %v3295 = vpack.c.b16 %v1783, %v1779
  %v3296 = vpack.c.b16 %v1788, %v1784
  %v3297 = vpack.c.b16 %v1789, %v1785
  %v3298 = vpack.c.b16 %v1790, %v1786
  %v3299 = vpack.c.b16 %v1791, %v1787
  %v3300 = vpack.c.b16 %v1796, %v1792
  %v3301 = vpack.c.b16 %v1797, %v1793
  %v3302 = vpack.c.b16 %v1798, %v1794
  %v3303 = vpack.c.b16 %v1799, %v1795
  %v3304 = vpack.c.b16 %v1804, %v1800
  %v3305 = vpack.c.b16 %v1805, %v1801
  %v3306 = vpack.c.b16 %v1806, %v1802
  %v3307 = vpack.c.b16 %v1807, %v1803
  %v3308 = vpack.c.b16 %v1812, %v1808
  %v3309 = vpack.c.b16 %v1813, %v1809
  %v3310 = vpack.c.b16 %v1814, %v1810
  %v3311 = vpack.c.b16 %v1815, %v1811
  %v3312 = vpack.c.b16 %v1820, %v1816
  %v3313 = vpack.c.b16 %v1821, %v1817
  %v3314 = vpack.c.b16 %v1822, %v1818
  %v3315 = vpack.c.b16 %v1823, %v1819
  %v3316 = vpack.c.b16 %v1828, %v1824
  %v3317 = vpack.c.b16 %v1829, %v1825
  %v3318 = vpack.c.b16 %v1830, %v1826
  %v3319 = vpack.c.b16 %v1831, %v1827
  %v3320 = vpack.c.b16 %v1836, %v1832
  %v3321 = vpack.c.b16 %v1837, %v1833
  %v3322 = vpack.c.b16 %v1838, %v1834
  %v3323 = vpack.c.b16 %v1839, %v1835
  %v3324 = vpack.c.b16 %v1844, %v1840
  %v3325 = vpack.c.b16 %v1845, %v1841
  %v3326 = vpack.c.b16 %v1846, %v1842
  %v3327 = vpack.c.b16 %v1847, %v1843
  %v3328 = vpack.c.b16 %v1852, %v1848
  %v3329 = vpack.c.b16 %v1853, %v1849
  %v3330 = vpack.c.b16 %v1854, %v1850
  %v3331 = vpack.c.b16 %v1855, %v1851
  %v3332 = vpack.c.b16 %v1860, %v1856
  %v3333 = vpack.c.b16 %v1861, %v1857
  %v3334 = vpack.c.b16 %v1862, %v1858
  %v3335 = vpack.c.b16 %v1863, %v1859
  %v3336 = vpack.c.b16 %v1868, %v1864
  %v3337 = vpack.c.b16 %v1869, %v1865
  %v3338 = vpack.c.b16 %v1870, %v1866
  %v3339 = vpack.c.b16 %v1871, %v1867
  %v3340 = vpack.c.b16 %v1876, %v1872
  %v3341 = vpack.c.b16 %v1877, %v1873
  %v3342 = vpack.c.b16 %v1878, %v1874
  %v3343 = vpack.c.b16 %v1879, %v1875
  %v3344 = vpack.c.b16 %v1884, %v1880
  %v3345 = vpack.c.b16 %v1885, %v1881
  %v3346 = vpack.c.b16 %v1886, %v1882
  %v3347 = vpack.c.b16 %v1887, %v1883
  %v3348 = vpack.c.b16 %v1892, %v1888
  %v3349 = vpack.c.b16 %v1893, %v1889
  %v3350 = vpack.c.b16 %v1894, %v1890
  %v3351 = vpack.c.b16 %v1895, %v1891
  %v3352 = vpack.c.b16 %v1900, %v1896
  %v3353 = vpack.c.b16 %v1901, %v1897
  %v3354 = vpack.c.b16 %v1902, %v1898
  %v3355 = vpack.c.b16 %v1903, %v1899
  %v3356 = vpack.c.b16 %v1908, %v1904
  %v3357 = vpack.c.b16 %v1909, %v1905
  %v3358 = vpack.c.b16 %v1910, %v1906
  %v3359 = vpack.c.b16 %v1911, %v1907
  %v3360 = vpack.c.b16 %v1916, %v1912
  %v3361 = vpack.c.b16 %v1917, %v1913
  %v3362 = vpack.c.b16 %v1918, %v1914
  %v3363 = vpack.c.b16 %v1919, %v1915
  %v3364 = vpack.c.b16 %v1924, %v1920
  %v3365 = vpack.c.b16 %v1925, %v1921
  %v3366 = vpack.c.b16 %v1926, %v1922
  %v3367 = vpack.c.b16 %v1927, %v1923
  %v3368 = vpack.c.b16 %v1932, %v1928
  %v3369 = vpack.c.b16 %v1933, %v1929
  %v3370 = vpack.c.b16 %v1934, %v1930
  %v3371 = vpack.c.b16 %v1935, %v1931
  %v3372 = vpack.c.b16 %v1940, %v1936
  %v3373 = vpack.c.b16 %v1941, %v1937
  %v3374 = vpack.c.b16 %v1942, %v1938
  %v3375 = vpack.c.b16 %v1943, %v1939
  %v3376 = vpack.c.b16 %v1948, %v1944
  %v3377 = vpack.c.b16 %v1949, %v1945
  %v3378 = vpack.c.b16 %v1950, %v1946
  %v3379 = vpack.c.b16 %v1951, %v1947
  %v3380 = vpack.c.b16 %v1956, %v1952
  %v3381 = vpack.c.b16 %v1957, %v1953
  %v3382 = vpack.c.b16 %v1958, %v1954
  %v3383 = vpack.c.b16 %v1959, %v1955
  %v3384 = vpack.c.b16 %v1964, %v1960
  %v3385 = vpack.c.b16 %v1965, %v1961
  %v3386 = vpack.c.b16 %v1966, %v1962
  %v3387 = vpack.c.b16 %v1967, %v1963
  %v3388 = vpack.c.b16 %v1972, %v1968
  %v3389 = vpack.c.b16 %v1973, %v1969
  %v3390 = vpack.c.b16 %v1974, %v1970
  %v3391 = vpack.c.b16 %v1975, %v1971
  %v3392 = vpack.c.b16 %v1980, %v1976
  %v3393 = vpack.c.b16 %v1981, %v1977
  %v3394 = vpack.c.b16 %v1982, %v1978
  %v3395 = vpack.c.b16 %v1983, %v1979
  %v3396 = vpack.c.b16 %v1988, %v1984
  %v3397 = vpack.c.b16 %v1989, %v1985
  %v3398 = vpack.c.b16 %v1990, %v1986
  %v3399 = vpack.c.b16 %v1991, %v1987
  %v3400 = vpack.c.b16 %v1996, %v1992
  %v3401 = vpack.c.b16 %v1997, %v1993
  %v3402 = vpack.c.b16 %v1998, %v1994
  %v3403 = vpack.c.b16 %v1999, %v1995
  %v3404 = vpack.c.b16 %v2004, %v2000
  %v3405 = vpack.c.b16 %v2005, %v2001
  %v3406 = vpack.c.b16 %v2006, %v2002
  %v3407 = vpack.c.b16 %v2007, %v2003
  %v3408 = vpack.c.b16 %v2012, %v2008
  %v3409 = vpack.c.b16 %v2013, %v2009
  %v3410 = vpack.c.b16 %v2014, %v2010
  %v3411 = vpack.c.b16 %v2015, %v2011
  %v3412 = vpack.c.b16 %v2020, %v2016
  %v3413 = vpack.c.b16 %v2021, %v2017
  %v3414 = vpack.c.b16 %v2022, %v2018
  %v3415 = vpack.c.b16 %v2023, %v2019
  %v3416 = vpack.c.b16 %v2028, %v2024
  %v3417 = vpack.c.b16 %v2029, %v2025
  %v3418 = vpack.c.b16 %v2030, %v2026
  %v3419 = vpack.c.b16 %v2031, %v2027
  %v3420 = vpack.c.b16 %v2036, %v2032
  %v3421 = vpack.c.b16 %v2037, %v2033
  %v3422 = vpack.c.b16 %v2038, %v2034
  %v3423 = vpack.c.b16 %v2039, %v2035
  %v3424 = vpack.c.b16 %v2044, %v2040
  %v3425 = vpack.c.b16 %v2045, %v2041
  %v3426 = vpack.c.b16 %v2046, %v2042
  %v3427 = vpack.c.b16 %v2047, %v2043
  %v3428 = vpack.c.b16 %v2052, %v2048
  %v3429 = vpack.c.b16 %v2053, %v2049
  %v3430 = vpack.c.b16 %v2054, %v2050
  %v3431 = vpack.c.b16 %v2055, %v2051
  %v3432 = vpack.c.b16 %v2060, %v2056
  %v3433 = vpack.c.b16 %v2061, %v2057
  %v3434 = vpack.c.b16 %v2062, %v2058
  %v3435 = vpack.c.b16 %v2063, %v2059
  %v3436 = vpack.c.b16 %v2068, %v2064
  %v3437 = vpack.c.b16 %v2069, %v2065
  %v3438 = vpack.c.b16 %v2070, %v2066
  %v3439 = vpack.c.b16 %v2071, %v2067
  %v3440 = vpack.c.b16 %v2076, %v2072
  %v3441 = vpack.c.b16 %v2077, %v2073
  %v3442 = vpack.c.b16 %v2078, %v2074
  %v3443 = vpack.c.b16 %v2079, %v2075
  %v3444 = vpack.c.b16 %v2084, %v2080
  %v3445 = vpack.c.b16 %v2085, %v2081
  %v3446 = vpack.c.b16 %v2086, %v2082
  %v3447 = vpack.c.b16 %v2087, %v2083
  %v3448 = vpack.c.b16 %v2092, %v2088
  %v3449 = vpack.c.b16 %v2093, %v2089
  %v3450 = vpack.c.b16 %v2094, %v2090
  %v3451 = vpack.c.b16 %v2095, %v2091
  %v3452 = vpack.c.b16 %v2100, %v2096
  %v3453 = vpack.c.b16 %v2101, %v2097
  %v3454 = vpack.c.b16 %v2102, %v2098
  %v3455 = vpack.c.b16 %v2103, %v2099
  %v3456 = vpack.c.b16 %v2108, %v2104
  %v3457 = vpack.c.b16 %v2109, %v2105
  %v3458 = vpack.c.b16 %v2110, %v2106
  %v3459 = vpack.c.b16 %v2111, %v2107
  %v3460 = vpack.c.b16 %v2116, %v2112
  %v3461 = vpack.c.b16 %v2117, %v2113
  %v3462 = vpack.c.b16 %v2118, %v2114
  %v3463 = vpack.c.b16 %v2119, %v2115
  %v3464 = vpack.c.b16 %v2124, %v2120
  %v3465 = vpack.c.b16 %v2125, %v2121
  %v3466 = vpack.c.b16 %v2126, %v2122
  %v3467 = vpack.c.b16 %v2127, %v2123
  %v3468 = vpack.c.b16 %v2132, %v2128
  %v3469 = vpack.c.b16 %v2133, %v2129
  %v3470 = vpack.c.b16 %v2134, %v2130
  %v3471 = vpack.c.b16 %v2135, %v2131
  %v3472 = vpack.c.b16 %v2140, %v2136
  %v3473 = vpack.c.b16 %v2141, %v2137
  %v3474 = vpack.c.b16 %v2142, %v2138
  %v3475 = vpack.c.b16 %v2143, %v2139
  %v3476 = vpack.c.b16 %v2148, %v2144
  %v3477 = vpack.c.b16 %v2149, %v2145
  %v3478 = vpack.c.b16 %v2150, %v2146
  %v3479 = vpack.c.b16 %v2151, %v2147
  %v3480 = vpack.c.b16 %v2156, %v2152
  %v3481 = vpack.c.b16 %v2157, %v2153
  %v3482 = vpack.c.b16 %v2158, %v2154
  %v3483 = vpack.c.b16 %v2159, %v2155
  %v3484 = vpack.c.b16 %v2164, %v2160
  %v3485 = vpack.c.b16 %v2165, %v2161
  %v3486 = vpack.c.b16 %v2166, %v2162
  %v3487 = vpack.c.b16 %v2167, %v2163
  %v3488 = vpack.c.b16 %v2172, %v2168
  %v3489 = vpack.c.b16 %v2173, %v2169
  %v3490 = vpack.c.b16 %v2174, %v2170
  %v3491 = vpack.c.b16 %v2175, %v2171
  %v3492 = vpack.c.b16 %v2180, %v2176
  %v3493 = vpack.c.b16 %v2181, %v2177
  %v3494 = vpack.c.b16 %v2182, %v2178
  %v3495 = vpack.c.b16 %v2183, %v2179
  %v3496 = vpack.c.b16 %v2188, %v2184
  %v3497 = vpack.c.b16 %v2189, %v2185
  %v3498 = vpack.c.b16 %v2190, %v2186
  %v3499 = vpack.c.b16 %v2191, %v2187
  %v3500 = vpack.c.b16 %v2196, %v2192
  %v3501 = vpack.c.b16 %v2197, %v2193
  %v3502 = vpack.c.b16 %v2198, %v2194
  %v3503 = vpack.c.b16 %v2199, %v2195
  %v3504 = vpack.c.b16 %v2204, %v2200
  %v3505 = vpack.c.b16 %v2205, %v2201
  %v3506 = vpack.c.b16 %v2206, %v2202
  %v3507 = vpack.c.b16 %v2207, %v2203
  %v3508 = vpack.c.b16 %v2212, %v2208
  %v3509 = vpack.c.b16 %v2213, %v2209
  %v3510 = vpack.c.b16 %v2214, %v2210
  %v3511 = vpack.c.b16 %v2215, %v2211
  %v3512 = vpack.c.b16 %v2220, %v2216
  %v3513 = vpack.c.b16 %v2221, %v2217
  %v3514 = vpack.c.b16 %v2222, %v2218
  %v3515 = vpack.c.b16 %v2223, %v2219
  %v3516 = vpack.c.b16 %v2228, %v2224
  %v3517 = vpack.c.b16 %v2229, %v2225
  %v3518 = vpack.c.b16 %v2230, %v2226
  %v3519 = vpack.c.b16 %v2231, %v2227
  %v3520 = vpack.c.b16 %v2236, %v2232
  %v3521 = vpack.c.b16 %v2237, %v2233
  %v3522 = vpack.c.b16 %v2238, %v2234
  %v3523 = vpack.c.b16 %v2239, %v2235
  %v3524 = vpack.c.b16 %v2244, %v2240
  %v3525 = vpack.c.b16 %v2245, %v2241
  %v3526 = vpack.c.b16 %v2246, %v2242
  %v3527 = vpack.c.b16 %v2247, %v2243
  %v3528 = vpack.c.b16 %v2252, %v2248
  %v3529 = vpack.c.b16 %v2253, %v2249
  %v3530 = vpack.c.b16 %v2254, %v2250
  %v3531 = vpack.c.b16 %v2255, %v2251
  %v3532 = vpack.c.b16 %v2260, %v2256
  %v3533 = vpack.c.b16 %v2261, %v2257
  %v3534 = vpack.c.b16 %v2262, %v2258
  %v3535 = vpack.c.b16 %v2263, %v2259
  %v3536 = vpack.c.b16 %v2268, %v2264
  %v3537 = vpack.c.b16 %v2269, %v2265
  %v3538 = vpack.c.b16 %v2270, %v2266
  %v3539 = vpack.c.b16 %v2271, %v2267
  %v3540 = vpack.c.b16 %v2276, %v2272
  %v3541 = vpack.c.b16 %v2277, %v2273
  %v3542 = vpack.c.b16 %v2278, %v2274
  %v3543 = vpack.c.b16 %v2279, %v2275
  %v3544 = vpack.c.b16 %v2284, %v2280
  %v3545 = vpack.c.b16 %v2285, %v2281
  %v3546 = vpack.c.b16 %v2286, %v2282
  %v3547 = vpack.c.b16 %v2287, %v2283
  %v3548 = vpack.c.b16 %v2292, %v2288
  %v3549 = vpack.c.b16 %v2293, %v2289
  %v3550 = vpack.c.b16 %v2294, %v2290
  %v3551 = vpack.c.b16 %v2295, %v2291
  %v3552 = vpack.c.b16 %v2300, %v2296
  %v3553 = vpack.c.b16 %v2301, %v2297
  %v3554 = vpack.c.b16 %v2302, %v2298
  %v3555 = vpack.c.b16 %v2303, %v2299
  %v3556 = vpack.c.b16 %v2308, %v2304
  %v3557 = vpack.c.b16 %v2309, %v2305
  %v3558 = vpack.c.b16 %v2310, %v2306
  %v3559 = vpack.c.b16 %v2311, %v2307
  %v3560 = vpack.c.b16 %v2316, %v2312
  %v3561 = vpack.c.b16 %v2317, %v2313
  %v3562 = vpack.c.b16 %v2318, %v2314
  %v3563 = vpack.c.b16 %v2319, %v2315
  %v3564 = vpack.c.b16 %v2324, %v2320
  %v3565 = vpack.c.b16 %v2325, %v2321
  %v3566 = vpack.c.b16 %v2326, %v2322
  %v3567 = vpack.c.b16 %v2327, %v2323
  %v3568 = vpack.c.b16 %v2332, %v2328
  %v3569 = vpack.c.b16 %v2333, %v2329
  %v3570 = vpack.c.b16 %v2334, %v2330
  %v3571 = vpack.c.b16 %v2335, %v2331
  %v3572 = vpack.c.b16 %v2340, %v2336
  %v3573 = vpack.c.b16 %v2341, %v2337
  %v3574 = vpack.c.b16 %v2342, %v2338
  %v3575 = vpack.c.b16 %v2343, %v2339
  %v3576 = vpack.c.b16 %v2348, %v2344
  %v3577 = vpack.c.b16 %v2349, %v2345
  %v3578 = vpack.c.b16 %v2350, %v2346
  %v3579 = vpack.c.b16 %v2351, %v2347
  %v3580 = vpack.c.b16 %v2356, %v2352
  %v3581 = vpack.c.b16 %v2357, %v2353
  %v3582 = vpack.c.b16 %v2358, %v2354
  %v3583 = vpack.c.b16 %v2359, %v2355
  %v3584 = vpack.c.b16 %v2364, %v2360
  %v3585 = vpack.c.b16 %v2365, %v2361
  %v3586 = vpack.c.b16 %v2366, %v2362
  %v3587 = vpack.c.b16 %v2367, %v2363
  %v3588 = vpack.c.b16 %v2372, %v2368
  %v3589 = vpack.c.b16 %v2373, %v2369
  %v3590 = vpack.c.b16 %v2374, %v2370
  %v3591 = vpack.c.b16 %v2375, %v2371
  %v3592 = vpack.c.b16 %v2380, %v2376
  %v3593 = vpack.c.b16 %v2381, %v2377
  %v3594 = vpack.c.b16 %v2382, %v2378
  %v3595 = vpack.c.b16 %v2383, %v2379
  %v3596 = vpack.c.b16 %v2388, %v2384
  %v3597 = vpack.c.b16 %v2389, %v2385
  %v3598 = vpack.c.b16 %v2390, %v2386
  %v3599 = vpack.c.b16 %v2391, %v2387
  %v3600 = vpack.c.b16 %v2396, %v2392
  %v3601 = vpack.c.b16 %v2397, %v2393
  %v3602 = vpack.c.b16 %v2398, %v2394
  %v3603 = vpack.c.b16 %v2399, %v2395
  %v3604 = vpack.c.b16 %v2404, %v2400
  %v3605 = vpack.c.b16 %v2405, %v2401
  %v3606 = vpack.c.b16 %v2406, %v2402
  %v3607 = vpack.c.b16 %v2407, %v2403
  %v3608 = vpack.c.b16 %v2412, %v2408
  %v3609 = vpack.c.b16 %v2413, %v2409
  %v3610 = vpack.c.b16 %v2414, %v2410
  %v3611 = vpack.c.b16 %v2415, %v2411
  %v3612 = vpack.c.b16 %v2420, %v2416
  %v3613 = vpack.c.b16 %v2421, %v2417
  %v3614 = vpack.c.b16 %v2422, %v2418
  %v3615 = vpack.c.b16 %v2423, %v2419
  %v3616 = vpack.c.b16 %v2428, %v2424
  %v3617 = vpack.c.b16 %v2429, %v2425
  %v3618 = vpack.c.b16 %v2430, %v2426
  %v3619 = vpack.c.b16 %v2431, %v2427
  %v3620 = vpack.c.b16 %v2436, %v2432
  %v3621 = vpack.c.b16 %v2437, %v2433
  %v3622 = vpack.c.b16 %v2438, %v2434
  %v3623 = vpack.c.b16 %v2439, %v2435
  %v3624 = vpack.c.b16 %v2444, %v2440
  %v3625 = vpack.c.b16 %v2445, %v2441
  %v3626 = vpack.c.b16 %v2446, %v2442
  %v3627 = vpack.c.b16 %v2447, %v2443
  %v3628 = vpack.c.b16 %v2452, %v2448
  %v3629 = vpack.c.b16 %v2453, %v2449
  %v3630 = vpack.c.b16 %v2454, %v2450
  %v3631 = vpack.c.b16 %v2455, %v2451
  %v3632 = vpack.c.b16 %v2460, %v2456
  %v3633 = vpack.c.b16 %v2461, %v2457
  %v3634 = vpack.c.b16 %v2462, %v2458
  %v3635 = vpack.c.b16 %v2463, %v2459
  %v3636 = vpack.c.b16 %v2468, %v2464
  %v3637 = vpack.c.b16 %v2469, %v2465
  %v3638 = vpack.c.b16 %v2470, %v2466
  %v3639 = vpack.c.b16 %v2471, %v2467
  %v3640 = vpack.c.b16 %v2476, %v2472
  %v3641 = vpack.c.b16 %v2477, %v2473
  %v3642 = vpack.c.b16 %v2478, %v2474
  %v3643 = vpack.c.b16 %v2479, %v2475
  %v3644 = vpack.c.b16 %v2484, %v2480
  %v3645 = vpack.c.b16 %v2485, %v2481
  %v3646 = vpack.c.b16 %v2486, %v2482
  %v3647 = vpack.c.b16 %v2487, %v2483
  %v3648 = vpack.c.b16 %v2492, %v2488
  %v3649 = vpack.c.b16 %v2493, %v2489
  %v3650 = vpack.c.b16 %v2494, %v2490
  %v3651 = vpack.c.b16 %v2495, %v2491
  %v3652 = vpack.c.b16 %v2500, %v2496
  %v3653 = vpack.c.b16 %v2501, %v2497
  %v3654 = vpack.c.b16 %v2502, %v2498
  %v3655 = vpack.c.b16 %v2503, %v2499
  %v3656 = vpack.c.b16 %v2508, %v2504
  %v3657 = vpack.c.b16 %v2509, %v2505
  %v3658 = vpack.c.b16 %v2510, %v2506
  %v3659 = vpack.c.b16 %v2511, %v2507
  %v3660 = vpack.c.b16 %v2516, %v2512
  %v3661 = vpack.c.b16 %v2517, %v2513
  %v3662 = vpack.c.b16 %v2518, %v2514
  %v3663 = vpack.c.b16 %v2519, %v2515
  %v3664 = vpack.c.b16 %v2524, %v2520
  %v3665 = vpack.c.b16 %v2525, %v2521
  %v3666 = vpack.c.b16 %v2526, %v2522
  %v3667 = vpack.c.b16 %v2527, %v2523
  %v3668 = vpack.c.b16 %v2532, %v2528
  %v3669 = vpack.c.b16 %v2533, %v2529
  %v3670 = vpack.c.b16 %v2534, %v2530
  %v3671 = vpack.c.b16 %v2535, %v2531
  %v3672 = vpack.c.b16 %v2540, %v2536
  %v3673 = vpack.c.b16 %v2541, %v2537
  %v3674 = vpack.c.b16 %v2542, %v2538
  %v3675 = vpack.c.b16 %v2543, %v2539
  %v3676 = vpack.c.b16 %v2548, %v2544
  %v3677 = vpack.c.b16 %v2549, %v2545
  %v3678 = vpack.c.b16 %v2550, %v2546
  %v3679 = vpack.c.b16 %v2551, %v2547
  %v3680 = vpack.c.b16 %v2556, %v2552
  %v3681 = vpack.c.b16 %v2557, %v2553
  %v3682 = vpack.c.b16 %v2558, %v2554
  %v3683 = vpack.c.b16 %v2559, %v2555
  %v3684 = vpack.c.b16 %v2564, %v2560
  %v3685 = vpack.c.b16 %v2565, %v2561
  %v3686 = vpack.c.b16 %v2566, %v2562
  %v3687 = vpack.c.b16 %v2567, %v2563
  %v3688 = vpack.c.b16 %v2572, %v2568
  %v3689 = vpack.c.b16 %v2573, %v2569
  %v3690 = vpack.c.b16 %v2574, %v2570
  %v3691 = vpack.c.b16 %v2575, %v2571
  %v3692 = vpack.c.b16 %v2580, %v2576
  %v3693 = vpack.c.b16 %v2581, %v2577
  %v3694 = vpack.c.b16 %v2582, %v2578
  %v3695 = vpack.c.b16 %v2583, %v2579
  %v3696 = vpack.c.b16 %v2588, %v2584
  %v3697 = vpack.c.b16 %v2589, %v2585
  %v3698 = vpack.c.b16 %v2590, %v2586
  %v3699 = vpack.c.b16 %v2591, %v2587
  %v3700 = vpack.c.b16 %v2596, %v2592
  %v3701 = vpack.c.b16 %v2597, %v2593
  %v3702 = vpack.c.b16 %v2598, %v2594
  %v3703 = vpack.c.b16 %v2599, %v2595
  %v3704 = vpack.c.b16 %v2604, %v2600
  %v3705 = vpack.c.b16 %v2605, %v2601
  %v3706 = vpack.c.b16 %v2606, %v2602
  %v3707 = vpack.c.b16 %v2607, %v2603
  %v3708 = vpack.c.b16 %v2612, %v2608
  %v3709 = vpack.c.b16 %v2613, %v2609
  %v3710 = vpack.c.b16 %v2614, %v2610
  %v3711 = vpack.c.b16 %v2615, %v2611
  %v3712 = vpack.c.b16 %v2620, %v2616
  %v3713 = vpack.c.b16 %v2621, %v2617
  %v3714 = vpack.c.b16 %v2622, %v2618
  %v3715 = vpack.c.b16 %v2623, %v2619
  %v3716 = vpack.c.b16 %v2628, %v2624
  %v3717 = vpack.c.b16 %v2629, %v2625
  %v3718 = vpack.c.b16 %v2630, %v2626
  %v3719 = vpack.c.b16 %v2631, %v2627
  %v3720 = vpack.c.b16 %v2636, %v2632
  %v3721 = vpack.c.b16 %v2637, %v2633
  %v3722 = vpack.c.b16 %v2638, %v2634
  %v3723 = vpack.c.b16 %v2639, %v2635
  %v3724 = vpack.c.b16 %v2644, %v2640
  %v3725 = vpack.c.b16 %v2645, %v2641
  %v3726 = vpack.c.b16 %v2646, %v2642
  %v3727 = vpack.c.b16 %v2647, %v2643
  %v3728 = vpack.c.b16 %v2652, %v2648
  %v3729 = vpack.c.b16 %v2653, %v2649
  %v3730 = vpack.c.b16 %v2654, %v2650
  %v3731 = vpack.c.b16 %v2655, %v2651
  %v3732 = vpack.c.b16 %v2660, %v2656
  %v3733 = vpack.c.b16 %v2661, %v2657
  %v3734 = vpack.c.b16 %v2662, %v2658
  %v3735 = vpack.c.b16 %v2663, %v2659
  %v3736 = vpack.c.b16 %v2668, %v2664
  %v3737 = vpack.c.b16 %v2669, %v2665
  %v3738 = vpack.c.b16 %v2670, %v2666
  %v3739 = vpack.c.b16 %v2671, %v2667
  %v3740 = vpack.c.b16 %v2676, %v2672
  %v3741 = vpack.c.b16 %v2677, %v2673
  %v3742 = vpack.c.b16 %v2678, %v2674
  %v3743 = vpack.c.b16 %v2679, %v2675
  %v3744 = vpack.c.b16 %v2684, %v2680
  %v3745 = vpack.c.b16 %v2685, %v2681
  %v3746 = vpack.c.b16 %v2686, %v2682
  %v3747 = vpack.c.b16 %v2687, %v2683
  %v3748 = vpack.c.b16 %v2692, %v2688
  %v3749 = vpack.c.b16 %v2693, %v2689
  %v3750 = vpack.c.b16 %v2694, %v2690
  %v3751 = vpack.c.b16 %v2695, %v2691
  %v3752 = vpack.c.b16 %v2700, %v2696
  %v3753 = vpack.c.b16 %v2701, %v2697
  %v3754 = vpack.c.b16 %v2702, %v2698
  %v3755 = vpack.c.b16 %v2703, %v2699
  %v3756 = vpack.c.b16 %v2708, %v2704
  %v3757 = vpack.c.b16 %v2709, %v2705
  %v3758 = vpack.c.b16 %v2710, %v2706
  %v3759 = vpack.c.b16 %v2711, %v2707
  %v3760 = vpack.c.b16 %v2716, %v2712
  %v3761 = vpack.c.b16 %v2717, %v2713
  %v3762 = vpack.c.b16 %v2718, %v2714
  %v3763 = vpack.c.b16 %v2719, %v2715
  %v3764 = vpack.c.b16 %v2724, %v2720
  %v3765 = vpack.c.b16 %v2725, %v2721
  %v3766 = vpack.c.b16 %v2726, %v2722
  %v3767 = vpack.c.b16 %v2727, %v2723
  %v3768 = vpack.c.b16 %v2732, %v2728
  %v3769 = vpack.c.b16 %v2733, %v2729
  %v3770 = vpack.c.b16 %v2734, %v2730
  %v3771 = vpack.c.b16 %v2735, %v2731
  %v3772 = vpack.c.b16 %v2740, %v2736
  %v3773 = vpack.c.b16 %v2741, %v2737
  %v3774 = vpack.c.b16 %v2742, %v2738
  %v3775 = vpack.c.b16 %v2743, %v2739
  %v3776 = vpack.c.b16 %v2748, %v2744
  %v3777 = vpack.c.b16 %v2749, %v2745
  %v3778 = vpack.c.b16 %v2750, %v2746
  %v3779 = vpack.c.b16 %v2751, %v2747
  %v3780 = vpack.c.b16 %v2756, %v2752
  %v3781 = vpack.c.b16 %v2757, %v2753
  %v3782 = vpack.c.b16 %v2758, %v2754
  %v3783 = vpack.c.b16 %v2759, %v2755
  %v3784 = vpack.c.b16 %v2764, %v2760
  %v3785 = vpack.c.b16 %v2765, %v2761
  %v3786 = vpack.c.b16 %v2766, %v2762
  %v3787 = vpack.c.b16 %v2767, %v2763
  %v3788 = vpack.c.b16 %v2772, %v2768
  %v3789 = vpack.c.b16 %v2773, %v2769
  %v3790 = vpack.c.b16 %v2774, %v2770
  %v3791 = vpack.c.b16 %v2775, %v2771
  %v3792 = vpack.c.b16 %v2780, %v2776
  %v3793 = vpack.c.b16 %v2781, %v2777
  %v3794 = vpack.c.b16 %v2782, %v2778
  %v3795 = vpack.c.b16 %v2783, %v2779
  %v3796 = vpack.c.b16 %v2788, %v2784
  %v3797 = vpack.c.b16 %v2789, %v2785
  %v3798 = vpack.c.b16 %v2790, %v2786
  %v3799 = vpack.c.b16 %v2791, %v2787
  %v3800 = vpack.c.b16 %v2796, %v2792
  %v3801 = vpack.c.b16 %v2797, %v2793
  %v3802 = vpack.c.b16 %v2798, %v2794
  %v3803 = vpack.c.b16 %v2799, %v2795
  %v3804 = vpack.c.b16 %v2804, %v2800
  %v3805 = vpack.c.b16 %v2805, %v2801
  %v3806 = vpack.c.b16 %v2806, %v2802
  %v3807 = vpack.c.b16 %v2807, %v2803
  %v3808 = vpack.c.b16 %v2812, %v2808
  %v3809 = vpack.c.b16 %v2813, %v2809
  %v3810 = vpack.c.b16 %v2814, %v2810
  %v3811 = vpack.c.b16 %v2815, %v2811
  %v3812 = vpack.c.b16 %v2820, %v2816
  %v3813 = vpack.c.b16 %v2821, %v2817
  %v3814 = vpack.c.b16 %v2822, %v2818
  %v3815 = vpack.c.b16 %v2823, %v2819
  %v3816 = vpack.c.b16 %v2828, %v2824
  %v3817 = vpack.c.b16 %v2829, %v2825
  %v3818 = vpack.c.b16 %v2830, %v2826
  %v3819 = vpack.c.b16 %v2831, %v2827
  %v3820 = vpack.c.b16 %v2836, %v2832
  %v3821 = vpack.c.b16 %v2837, %v2833
  %v3822 = vpack.c.b16 %v2838, %v2834
  %v3823 = vpack.c.b16 %v2839, %v2835
  %v3824 = vpack.c.b16 %v2844, %v2840
  %v3825 = vpack.c.b16 %v2845, %v2841
  %v3826 = vpack.c.b16 %v2846, %v2842
  %v3827 = vpack.c.b16 %v2847, %v2843
  %v3828 = vpack.c.b16 %v2852, %v2848
  %v3829 = vpack.c.b16 %v2853, %v2849
  %v3830 = vpack.c.b16 %v2854, %v2850
  %v3831 = vpack.c.b16 %v2855, %v2851
  %v3832 = vpack.c.b16 %v2860, %v2856
  %v3833 = vpack.c.b16 %v2861, %v2857
  %v3834 = vpack.c.b16 %v2862, %v2858
  %v3835 = vpack.c.b16 %v2863, %v2859
  %v3836 = vpack.c.b16 %v2868, %v2864
  %v3837 = vpack.c.b16 %v2869, %v2865
  %v3838 = vpack.c.b16 %v2870, %v2866
  %v3839 = vpack.c.b16 %v2871, %v2867
  %v3840 = vpack.c.b16 %v2876, %v2872
  %v3841 = vpack.c.b16 %v2877, %v2873
  %v3842 = vpack.c.b16 %v2878, %v2874
  %v3843 = vpack.c.b16 %v2879, %v2875
  %v3844 = vpack.c.b16 %v2884, %v2880
  %v3845 = vpack.c.b16 %v2885, %v2881
  %v3846 = vpack.c.b16 %v2886, %v2882
  %v3847 = vpack.c.b16 %v2887, %v2883
  %v3848 = vpack.c.b16 %v2892, %v2888
  %v3849 = vpack.c.b16 %v2893, %v2889
  %v3850 = vpack.c.b16 %v2894, %v2890
  %v3851 = vpack.c.b16 %v2895, %v2891
  %v3852 = vpack.c.b16 %v2900, %v2896
  %v3853 = vpack.c.b16 %v2901, %v2897
  %v3854 = vpack.c.b16 %v2902, %v2898
  %v3855 = vpack.c.b16 %v2903, %v2899
  %v3856 = vpack.c.b16 %v2908, %v2904
  %v3857 = vpack.c.b16 %v2909, %v2905
  %v3858 = vpack.c.b16 %v2910, %v2906
  %v3859 = vpack.c.b16 %v2911, %v2907
  %v3860 = vpack.c.b16 %v2916, %v2912
  %v3861 = vpack.c.b16 %v2917, %v2913
  %v3862 = vpack.c.b16 %v2918, %v2914
  %v3863 = vpack.c.b16 %v2919, %v2915
  %v3864 = vpack.c.b16 %v2924, %v2920
  %v3865 = vpack.c.b16 %v2925, %v2921
  %v3866 = vpack.c.b16 %v2926, %v2922
  %v3867 = vpack.c.b16 %v2927, %v2923
  %v3868 = vpack.c.b16 %v2932, %v2928
  %v3869 = vpack.c.b16 %v2933, %v2929
  %v3870 = vpack.c.b16 %v2934, %v2930
  %v3871 = vpack.c.b16 %v2935, %v2931
  %v3872 = vpack.c.b16 %v2940, %v2936
  %v3873 = vpack.c.b16 %v2941, %v2937
  %v3874 = vpack.c.b16 %v2942, %v2938
  %v3875 = vpack.c.b16 %v2943, %v2939
  %v3876 = vpack.c.b16 %v2948, %v2944
  %v3877 = vpack.c.b16 %v2949, %v2945
  %v3878 = vpack.c.b16 %v2950, %v2946
  %v3879 = vpack.c.b16 %v2951, %v2947
  %v3880 = vpack.c.b16 %v2956, %v2952
  %v3881 = vpack.c.b16 %v2957, %v2953
  %v3882 = vpack.c.b16 %v2958, %v2954
  %v3883 = vpack.c.b16 %v2959, %v2955
  %v3884 = vpack.c.b16 %v2964, %v2960
  %v3885 = vpack.c.b16 %v2965, %v2961
  %v3886 = vpack.c.b16 %v2966, %v2962
  %v3887 = vpack.c.b16 %v2967, %v2963
  %v3888 = vpack.c.b16 %v2972, %v2968
  %v3889 = vpack.c.b16 %v2973, %v2969
  %v3890 = vpack.c.b16 %v2974, %v2970
  %v3891 = vpack.c.b16 %v2975, %v2971
  %v3892 = vpack.c.b16 %v2980, %v2976
  %v3893 = vpack.c.b16 %v2981, %v2977
  %v3894 = vpack.c.b16 %v2982, %v2978
  %v3895 = vpack.c.b16 %v2983, %v2979
  %v3896 = vpack.c.b16 %v2988, %v2984
  %v3897 = vpack.c.b16 %v2989, %v2985
  %v3898 = vpack.c.b16 %v2990, %v2986
  %v3899 = vpack.c.b16 %v2991, %v2987
  %v3900 = vpack.c.b16 %v2996, %v2992
  %v3901 = vpack.c.b16 %v2997, %v2993
  %v3902 = vpack.c.b16 %v2998, %v2994
  %v3903 = vpack.c.b16 %v2999, %v2995
  %v3904 = vpack.c.b16 %v3004, %v3000
  %v3905 = vpack.c.b16 %v3005, %v3001
  %v3906 = vpack.c.b16 %v3006, %v3002
  %v3907 = vpack.c.b16 %v3007, %v3003
  %v3908 = vpack.c.b16 %v3012, %v3008
  %v3909 = vpack.c.b16 %v3013, %v3009
  %v3910 = vpack.c.b16 %v3014, %v3010
  %v3911 = vpack.c.b16 %v3015, %v3011
  %v3912 = vpack.c.b16 %v3020, %v3016
  %v3913 = vpack.c.b16 %v3021, %v3017
  %v3914 = vpack.c.b16 %v3022, %v3018
  %v3915 = vpack.c.b16 %v3023, %v3019
  %v3916 = vpack.c.b16 %v3028, %v3024
  %v3917 = vpack.c.b16 %v3029, %v3025
  %v3918 = vpack.c.b16 %v3030, %v3026
  %v3919 = vpack.c.b16 %v3031, %v3027
  %v3920 = vpack.c.b16 %v3036, %v3032
  %v3921 = vpack.c.b16 %v3037, %v3033
  %v3922 = vpack.c.b16 %v3038, %v3034
  %v3923 = vpack.c.b16 %v3039, %v3035
  %v3924 = vpack.c.b16 %v3044, %v3040
  %v3925 = vpack.c.b16 %v3045, %v3041
  %v3926 = vpack.c.b16 %v3046, %v3042
  %v3927 = vpack.c.b16 %v3047, %v3043
  %v3928 = vpack.c.b16 %v3052, %v3048
  %v3929 = vpack.c.b16 %v3053, %v3049
  %v3930 = vpack.c.b16 %v3054, %v3050
  %v3931 = vpack.c.b16 %v3055, %v3051
  %v3932 = vpack.c.b16 %v3060, %v3056
  %v3933 = vpack.c.b16 %v3061, %v3057
  %v3934 = vpack.c.b16 %v3062, %v3058
  %v3935 = vpack.c.b16 %v3063, %v3059
  %v3936 = vpack.c.b16 %v3068, %v3064
  %v3937 = vpack.c.b16 %v3069, %v3065
  %v3938 = vpack.c.b16 %v3070, %v3066
  %v3939 = vpack.c.b16 %v3071, %v3067
  %v3940 = vpack.c.b16 %v3076, %v3072
  %v3941 = vpack.c.b16 %v3077, %v3073
  %v3942 = vpack.c.b16 %v3078, %v3074
  %v3943 = vpack.c.b16 %v3079, %v3075
  %v3944 = vpack.c.b16 %v3084, %v3080
  %v3945 = vpack.c.b16 %v3085, %v3081
  %v3946 = vpack.c.b16 %v3086, %v3082
  %v3947 = vpack.c.b16 %v3087, %v3083
  %v3948 = vpack.c.b16 %v3092, %v3088
  %v3949 = vpack.c.b16 %v3093, %v3089
  %v3950 = vpack.c.b16 %v3094, %v3090
  %v3951 = vpack.c.b16 %v3095, %v3091
  %v3952 = vpack.c.b16 %v3100, %v3096
  %v3953 = vpack.c.b16 %v3101, %v3097
  %v3954 = vpack.c.b16 %v3102, %v3098
  %v3955 = vpack.c.b16 %v3103, %v3099
  %v3956 = vpack.c.b16 %v3108, %v3104
  %v3957 = vpack.c.b16 %v3109, %v3105
  %v3958 = vpack.c.b16 %v3110, %v3106
  %v3959 = vpack.c.b16 %v3111, %v3107
  %v3960 = vpack.c.b16 %v3116, %v3112
  %v3961 = vpack.c.b16 %v3117, %v3113
  %v3962 = vpack.c.b16 %v3118, %v3114
  %v3963 = vpack.c.b16 %v3119, %v3115
  %v3964 = vpack.c.b16 %v3124, %v3120
  %v3965 = vpack.c.b16 %v3125, %v3121
  %v3966 = vpack.c.b16 %v3126, %v3122
  %v3967 = vpack.c.b16 %v3127, %v3123
  %v3968 = vpack.c.b16 %v3132, %v3128
  %v3969 = vpack.c.b16 %v3133, %v3129
  %v3970 = vpack.c.b16 %v3134, %v3130
  %v3971 = vpack.c.b16 %v3135, %v3131
  %v3972 = vpack.c.b16 %v3140, %v3136
  %v3973 = vpack.c.b16 %v3141, %v3137
  %v3974 = vpack.c.b16 %v3142, %v3138
  %v3975 = vpack.c.b16 %v3143, %v3139
  %v3976 = vpack.c.b16 %v3148, %v3144
  %v3977 = vpack.c.b16 %v3149, %v3145
  %v3978 = vpack.c.b16 %v3150, %v3146
  %v3979 = vpack.c.b16 %v3151, %v3147
  %v3980 = vpack.c.b16 %v3156, %v3152
  %v3981 = vpack.c.b16 %v3157, %v3153
  %v3982 = vpack.c.b16 %v3158, %v3154
  %v3983 = vpack.c.b16 %v3159, %v3155
  %v3984 = vpack.c.b16 %v3164, %v3160
  %v3985 = vpack.c.b16 %v3165, %v3161
  %v3986 = vpack.c.b16 %v3166, %v3162
  %v3987 = vpack.c.b16 %v3167, %v3163
  %v3988 = vpack.c.b16 %v3172, %v3168
  %v3989 = vpack.c.b16 %v3173, %v3169
  %v3990 = vpack.c.b16 %v3174, %v3170
  %v3991 = vpack.c.b16 %v3175, %v3171
  %v3992 = vpack.c.b16 %v3180, %v3176
  %v3993 = vpack.c.b16 %v3181, %v3177
  %v3994 = vpack.c.b16 %v3182, %v3178
  %v3995 = vpack.c.b16 %v3183, %v3179
  %v3996 = vpack.c.b16 %v3188, %v3184
  %v3997 = vpack.c.b16 %v3189, %v3185
  %v3998 = vpack.c.b16 %v3190, %v3186
  %v3999 = vpack.c.b16 %v3191, %v3187
  %v4000 = vpack.c.b16 %v3196, %v3192
  %v4001 = vpack.c.b16 %v3197, %v3193
  %v4002 = vpack.c.b16 %v3198, %v3194
  %v4003 = vpack.c.b16 %v3199, %v3195
  %v4004 = vpack.c.b16 %v3204, %v3200
  %v4005 = vpack.c.b16 %v3205, %v3201
  %v4006 = vpack.c.b16 %v3206, %v3202
  %v4007 = vpack.c.b16 %v3207, %v3203
  %v4008 = vpack.c.b16 %v3212, %v3208
  %v4009 = vpack.c.b16 %v3213, %v3209
  %v4010 = vpack.c.b16 %v3214, %v3210
  %v4011 = vpack.c.b16 %v3215, %v3211
  %v4012 = vpack.c.b16 %v3220, %v3216
  %v4013 = vpack.c.b16 %v3221, %v3217
  %v4014 = vpack.c.b16 %v3222, %v3218
  %v4015 = vpack.c.b16 %v3223, %v3219
  %v4016 = vpack.c.b16 %v3228, %v3224
  %v4017 = vpack.c.b16 %v3229, %v3225
  %v4018 = vpack.c.b16 %v3230, %v3226
  %v4019 = vpack.c.b16 %v3231, %v3227
  %v4020 = vpack.c.b16 %v3236, %v3232
  %v4021 = vpack.c.b16 %v3237, %v3233
  %v4022 = vpack.c.b16 %v3238, %v3234
  %v4023 = vpack.c.b16 %v3239, %v3235
  %vm4808 = vcmask 523264
  %v4809 = vsel %vm4808, %v863, 0
  %4811 = vmatpush.bf16.msra.mxu0 %v3268
  %4812 = vmatpush.bf16.msra.mxu0 %v3264
  %4813 = vmatpush.bf16.msra.mxu0 %v3260
  %4814 = vmatpush.bf16.msra.mxu0 %v3256
  %4815 = vmatpush.bf16.msra.mxu0 %v3252
  %4816 = vmatpush.bf16.msra.mxu0 %v3248
  %4817 = vmatpush.bf16.msra.mxu0 %v3244
  %4818 = vmatpush.bf16.msra.mxu0 %v3240
  %4819 = vmatmul.bf16.gmra.mxu0 %v833
  %v4820 = vpop.f32.mrf.mxu0
  %v4821 = vadd.f32 %v823, %v4820
  %v4822 = vpop.f32.mrf.mxu0
  %4823 = vdwg.mxu0
  %4824 = vmatpush.bf16.msra.mxu0 %v3300
  %4825 = vmatpush.bf16.msra.mxu0 %v3296
  %4826 = vmatpush.bf16.msra.mxu0 %v3292
  %4827 = vmatpush.bf16.msra.mxu0 %v3288
  %4828 = vmatpush.bf16.msra.mxu0 %v3284
  %4829 = vmatpush.bf16.msra.mxu0 %v3280
  %4830 = vmatpush.bf16.msra.mxu0 %v3276
  %4831 = vmatpush.bf16.msra.mxu0 %v3272
  %4832 = vmatmul.bf16.gmra.mxu0 %v834
  %v4833 = vpop.f32.mrf.mxu0
  %v4834 = vadd.f32 %v4821, %v4833
  %v4835 = vpop.f32.mrf.mxu0
  %4836 = vdwg.mxu0
  %4837 = vmatpush.bf16.msra.mxu0 %v3332
  %4838 = vmatpush.bf16.msra.mxu0 %v3328
  %4839 = vmatpush.bf16.msra.mxu0 %v3324
  %4840 = vmatpush.bf16.msra.mxu0 %v3320
  %4841 = vmatpush.bf16.msra.mxu0 %v3316
  %4842 = vmatpush.bf16.msra.mxu0 %v3312
  %4843 = vmatpush.bf16.msra.mxu0 %v3308
  %4844 = vmatpush.bf16.msra.mxu0 %v3304
  %4845 = vmatmul.bf16.gmra.mxu0 %v835
  %v4846 = vpop.f32.mrf.mxu0
  %v4847 = vadd.f32 %v4834, %v4846
  %v4848 = vpop.f32.mrf.mxu0
  %4849 = vdwg.mxu0
  %4850 = vmatpush.bf16.msra.mxu0 %v3364
  %4851 = vmatpush.bf16.msra.mxu0 %v3360
  %4852 = vmatpush.bf16.msra.mxu0 %v3356
  %4853 = vmatpush.bf16.msra.mxu0 %v3352
  %4854 = vmatpush.bf16.msra.mxu0 %v3348
  %4855 = vmatpush.bf16.msra.mxu0 %v3344
  %4856 = vmatpush.bf16.msra.mxu0 %v3340
  %4857 = vmatpush.bf16.msra.mxu0 %v3336
  %4858 = vmatmul.bf16.gmra.mxu0 %v836
  %v4859 = vpop.f32.mrf.mxu0
  %v4860 = vadd.f32 %v4847, %v4859
  %v4861 = vpop.f32.mrf.mxu0
  %4862 = vdwg.mxu0
  %4863 = vmatpush.bf16.msra.mxu0 %v3396
  %4864 = vmatpush.bf16.msra.mxu0 %v3392
  %4865 = vmatpush.bf16.msra.mxu0 %v3388
  %4866 = vmatpush.bf16.msra.mxu0 %v3384
  %4867 = vmatpush.bf16.msra.mxu0 %v3380
  %4868 = vmatpush.bf16.msra.mxu0 %v3376
  %4869 = vmatpush.bf16.msra.mxu0 %v3372
  %4870 = vmatpush.bf16.msra.mxu0 %v3368
  %4871 = vmatmul.bf16.gmra.mxu0 %v837
  %v4872 = vpop.f32.mrf.mxu0
  %v4873 = vadd.f32 %v4860, %v4872
  %v4874 = vpop.f32.mrf.mxu0
  %4875 = vdwg.mxu0
  %4876 = vmatpush.bf16.msra.mxu0 %v3428
  %4877 = vmatpush.bf16.msra.mxu0 %v3424
  %4878 = vmatpush.bf16.msra.mxu0 %v3420
  %4879 = vmatpush.bf16.msra.mxu0 %v3416
  %4880 = vmatpush.bf16.msra.mxu0 %v3412
  %4881 = vmatpush.bf16.msra.mxu0 %v3408
  %4882 = vmatpush.bf16.msra.mxu0 %v3404
  %4883 = vmatpush.bf16.msra.mxu0 %v3400
  %4884 = vmatmul.bf16.gmra.mxu0 %v838
  %v4885 = vpop.f32.mrf.mxu0
  %v4886 = vadd.f32 %v4873, %v4885
  %v4887 = vpop.f32.mrf.mxu0
  %4888 = vdwg.mxu0
  %4889 = vmatpush.bf16.msra.mxu0 %v3460
  %4890 = vmatpush.bf16.msra.mxu0 %v3456
  %4891 = vmatpush.bf16.msra.mxu0 %v3452
  %4892 = vmatpush.bf16.msra.mxu0 %v3448
  %4893 = vmatpush.bf16.msra.mxu0 %v3444
  %4894 = vmatpush.bf16.msra.mxu0 %v3440
  %4895 = vmatpush.bf16.msra.mxu0 %v3436
  %4896 = vmatpush.bf16.msra.mxu0 %v3432
  %4897 = vmatmul.bf16.gmra.mxu0 %v839
  %v4898 = vpop.f32.mrf.mxu0
  %v4899 = vadd.f32 %v4886, %v4898
  %v4900 = vpop.f32.mrf.mxu0
  %4901 = vdwg.mxu0
  %4902 = vmatpush.bf16.msra.mxu0 %v3492
  %4903 = vmatpush.bf16.msra.mxu0 %v3488
  %4904 = vmatpush.bf16.msra.mxu0 %v3484
  %4905 = vmatpush.bf16.msra.mxu0 %v3480
  %4906 = vmatpush.bf16.msra.mxu0 %v3476
  %4907 = vmatpush.bf16.msra.mxu0 %v3472
  %4908 = vmatpush.bf16.msra.mxu0 %v3468
  %4909 = vmatpush.bf16.msra.mxu0 %v3464
  %4910 = vmatmul.bf16.gmra.mxu0 %v840
  %v4911 = vpop.f32.mrf.mxu0
  %v4912 = vadd.f32 %v4899, %v4911
  %v4913 = vpop.f32.mrf.mxu0
  %4914 = vdwg.mxu0
  %4915 = vmatpush.bf16.msra.mxu0 %v3524
  %4916 = vmatpush.bf16.msra.mxu0 %v3520
  %4917 = vmatpush.bf16.msra.mxu0 %v3516
  %4918 = vmatpush.bf16.msra.mxu0 %v3512
  %4919 = vmatpush.bf16.msra.mxu0 %v3508
  %4920 = vmatpush.bf16.msra.mxu0 %v3504
  %4921 = vmatpush.bf16.msra.mxu0 %v3500
  %4922 = vmatpush.bf16.msra.mxu0 %v3496
  %4923 = vmatmul.bf16.gmra.mxu0 %v843
  %v4924 = vpop.f32.mrf.mxu0
  %v4925 = vadd.f32 %v4912, %v4924
  %v4926 = vpop.f32.mrf.mxu0
  %4927 = vdwg.mxu0
  %4928 = vmatpush.bf16.msra.mxu0 %v3556
  %4929 = vmatpush.bf16.msra.mxu0 %v3552
  %4930 = vmatpush.bf16.msra.mxu0 %v3548
  %4931 = vmatpush.bf16.msra.mxu0 %v3544
  %4932 = vmatpush.bf16.msra.mxu0 %v3540
  %4933 = vmatpush.bf16.msra.mxu0 %v3536
  %4934 = vmatpush.bf16.msra.mxu0 %v3532
  %4935 = vmatpush.bf16.msra.mxu0 %v3528
  %4936 = vmatmul.bf16.gmra.mxu0 %v844
  %v4937 = vpop.f32.mrf.mxu0
  %v4938 = vadd.f32 %v4925, %v4937
  %v4939 = vpop.f32.mrf.mxu0
  %4940 = vdwg.mxu0
  %4941 = vmatpush.bf16.msra.mxu0 %v3588
  %4942 = vmatpush.bf16.msra.mxu0 %v3584
  %4943 = vmatpush.bf16.msra.mxu0 %v3580
  %4944 = vmatpush.bf16.msra.mxu0 %v3576
  %4945 = vmatpush.bf16.msra.mxu0 %v3572
  %4946 = vmatpush.bf16.msra.mxu0 %v3568
  %4947 = vmatpush.bf16.msra.mxu0 %v3564
  %4948 = vmatpush.bf16.msra.mxu0 %v3560
  %4949 = vmatmul.bf16.gmra.mxu0 %v845
  %v4950 = vpop.f32.mrf.mxu0
  %v4951 = vadd.f32 %v4938, %v4950
  %v4952 = vpop.f32.mrf.mxu0
  %4953 = vdwg.mxu0
  %4954 = vmatpush.bf16.msra.mxu0 %v3620
  %4955 = vmatpush.bf16.msra.mxu0 %v3616
  %4956 = vmatpush.bf16.msra.mxu0 %v3612
  %4957 = vmatpush.bf16.msra.mxu0 %v3608
  %4958 = vmatpush.bf16.msra.mxu0 %v3604
  %4959 = vmatpush.bf16.msra.mxu0 %v3600
  %4960 = vmatpush.bf16.msra.mxu0 %v3596
  %4961 = vmatpush.bf16.msra.mxu0 %v3592
  %4962 = vmatmul.bf16.gmra.mxu0 %v846
  %v4963 = vpop.f32.mrf.mxu0
  %v4964 = vadd.f32 %v4951, %v4963
  %v4965 = vpop.f32.mrf.mxu0
  %4966 = vdwg.mxu0
  %4967 = vmatpush.bf16.msra.mxu0 %v3652
  %4968 = vmatpush.bf16.msra.mxu0 %v3648
  %4969 = vmatpush.bf16.msra.mxu0 %v3644
  %4970 = vmatpush.bf16.msra.mxu0 %v3640
  %4971 = vmatpush.bf16.msra.mxu0 %v3636
  %4972 = vmatpush.bf16.msra.mxu0 %v3632
  %4973 = vmatpush.bf16.msra.mxu0 %v3628
  %4974 = vmatpush.bf16.msra.mxu0 %v3624
  %4975 = vmatmul.bf16.gmra.mxu0 %v847
  %v4976 = vpop.f32.mrf.mxu0
  %v4977 = vadd.f32 %v4964, %v4976
  %v4978 = vpop.f32.mrf.mxu0
  %4979 = vdwg.mxu0
  %4980 = vmatpush.bf16.msra.mxu0 %v3684
  %4981 = vmatpush.bf16.msra.mxu0 %v3680
  %4982 = vmatpush.bf16.msra.mxu0 %v3676
  %4983 = vmatpush.bf16.msra.mxu0 %v3672
  %4984 = vmatpush.bf16.msra.mxu0 %v3668
  %4985 = vmatpush.bf16.msra.mxu0 %v3664
  %4986 = vmatpush.bf16.msra.mxu0 %v3660
  %4987 = vmatpush.bf16.msra.mxu0 %v3656
  %4988 = vmatmul.bf16.gmra.mxu0 %v848
  %v4989 = vpop.f32.mrf.mxu0
  %v4990 = vadd.f32 %v4977, %v4989
  %v4991 = vpop.f32.mrf.mxu0
  %4992 = vdwg.mxu0
  %4993 = vmatpush.bf16.msra.mxu0 %v3716
  %4994 = vmatpush.bf16.msra.mxu0 %v3712
  %4995 = vmatpush.bf16.msra.mxu0 %v3708
  %4996 = vmatpush.bf16.msra.mxu0 %v3704
  %4997 = vmatpush.bf16.msra.mxu0 %v3700
  %4998 = vmatpush.bf16.msra.mxu0 %v3696
  %4999 = vmatpush.bf16.msra.mxu0 %v3692
  %5000 = vmatpush.bf16.msra.mxu0 %v3688
  %5001 = vmatmul.bf16.gmra.mxu0 %v849
  %v5002 = vpop.f32.mrf.mxu0
  %v5003 = vadd.f32 %v4990, %v5002
  %v5004 = vpop.f32.mrf.mxu0
  %5005 = vdwg.mxu0
  %5006 = vmatpush.bf16.msra.mxu0 %v3748
  %5007 = vmatpush.bf16.msra.mxu0 %v3744
  %5008 = vmatpush.bf16.msra.mxu0 %v3740
  %5009 = vmatpush.bf16.msra.mxu0 %v3736
  %5010 = vmatpush.bf16.msra.mxu0 %v3732
  %5011 = vmatpush.bf16.msra.mxu0 %v3728
  %5012 = vmatpush.bf16.msra.mxu0 %v3724
  %5013 = vmatpush.bf16.msra.mxu0 %v3720
  %5014 = vmatmul.bf16.gmra.mxu0 %v850
  %v5015 = vpop.f32.mrf.mxu0
  %v5016 = vadd.f32 %v5003, %v5015
  %v5017 = vpop.f32.mrf.mxu0
  %5018 = vdwg.mxu0
  %5019 = vmatpush.bf16.msra.mxu0 %v3780
  %5020 = vmatpush.bf16.msra.mxu0 %v3776
  %5021 = vmatpush.bf16.msra.mxu0 %v3772
  %5022 = vmatpush.bf16.msra.mxu0 %v3768
  %5023 = vmatpush.bf16.msra.mxu0 %v3764
  %5024 = vmatpush.bf16.msra.mxu0 %v3760
  %5025 = vmatpush.bf16.msra.mxu0 %v3756
  %5026 = vmatpush.bf16.msra.mxu0 %v3752
  %5027 = vmatmul.bf16.gmra.mxu0 %v853
  %v5028 = vpop.f32.mrf.mxu0
  %v5029 = vadd.f32 %v5016, %v5028
  %v5030 = vpop.f32.mrf.mxu0
  %5031 = vdwg.mxu0
  %5032 = vmatpush.bf16.msra.mxu0 %v3812
  %5033 = vmatpush.bf16.msra.mxu0 %v3808
  %5034 = vmatpush.bf16.msra.mxu0 %v3804
  %5035 = vmatpush.bf16.msra.mxu0 %v3800
  %5036 = vmatpush.bf16.msra.mxu0 %v3796
  %5037 = vmatpush.bf16.msra.mxu0 %v3792
  %5038 = vmatpush.bf16.msra.mxu0 %v3788
  %5039 = vmatpush.bf16.msra.mxu0 %v3784
  %5040 = vmatmul.bf16.gmra.mxu0 %v854
  %v5041 = vpop.f32.mrf.mxu0
  %v5042 = vadd.f32 %v5029, %v5041
  %v5043 = vpop.f32.mrf.mxu0
  %5044 = vdwg.mxu0
  %5045 = vmatpush.bf16.msra.mxu0 %v3844
  %5046 = vmatpush.bf16.msra.mxu0 %v3840
  %5047 = vmatpush.bf16.msra.mxu0 %v3836
  %5048 = vmatpush.bf16.msra.mxu0 %v3832
  %5049 = vmatpush.bf16.msra.mxu0 %v3828
  %5050 = vmatpush.bf16.msra.mxu0 %v3824
  %5051 = vmatpush.bf16.msra.mxu0 %v3820
  %5052 = vmatpush.bf16.msra.mxu0 %v3816
  %5053 = vmatmul.bf16.gmra.mxu0 %v855
  %v5054 = vpop.f32.mrf.mxu0
  %v5055 = vadd.f32 %v5042, %v5054
  %v5056 = vpop.f32.mrf.mxu0
  %5057 = vdwg.mxu0
  %5058 = vmatpush.bf16.msra.mxu0 %v3876
  %5059 = vmatpush.bf16.msra.mxu0 %v3872
  %5060 = vmatpush.bf16.msra.mxu0 %v3868
  %5061 = vmatpush.bf16.msra.mxu0 %v3864
  %5062 = vmatpush.bf16.msra.mxu0 %v3860
  %5063 = vmatpush.bf16.msra.mxu0 %v3856
  %5064 = vmatpush.bf16.msra.mxu0 %v3852
  %5065 = vmatpush.bf16.msra.mxu0 %v3848
  %5066 = vmatmul.bf16.gmra.mxu0 %v856
  %v5067 = vpop.f32.mrf.mxu0
  %v5068 = vadd.f32 %v5055, %v5067
  %v5069 = vpop.f32.mrf.mxu0
  %5070 = vdwg.mxu0
  %5071 = vmatpush.bf16.msra.mxu0 %v3908
  %5072 = vmatpush.bf16.msra.mxu0 %v3904
  %5073 = vmatpush.bf16.msra.mxu0 %v3900
  %5074 = vmatpush.bf16.msra.mxu0 %v3896
  %5075 = vmatpush.bf16.msra.mxu0 %v3892
  %5076 = vmatpush.bf16.msra.mxu0 %v3888
  %5077 = vmatpush.bf16.msra.mxu0 %v3884
  %5078 = vmatpush.bf16.msra.mxu0 %v3880
  %5079 = vmatmul.bf16.gmra.mxu0 %v857
  %v5080 = vpop.f32.mrf.mxu0
  %v5081 = vadd.f32 %v5068, %v5080
  %v5082 = vpop.f32.mrf.mxu0
  %5083 = vdwg.mxu0
  %5084 = vmatpush.bf16.msra.mxu0 %v3940
  %5085 = vmatpush.bf16.msra.mxu0 %v3936
  %5086 = vmatpush.bf16.msra.mxu0 %v3932
  %5087 = vmatpush.bf16.msra.mxu0 %v3928
  %5088 = vmatpush.bf16.msra.mxu0 %v3924
  %5089 = vmatpush.bf16.msra.mxu0 %v3920
  %5090 = vmatpush.bf16.msra.mxu0 %v3916
  %5091 = vmatpush.bf16.msra.mxu0 %v3912
  %5092 = vmatmul.bf16.gmra.mxu0 %v858
  %v5093 = vpop.f32.mrf.mxu0
  %v5094 = vadd.f32 %v5081, %v5093
  %v5095 = vpop.f32.mrf.mxu0
  %5096 = vdwg.mxu0
  %5097 = vmatpush.bf16.msra.mxu0 %v3972
  %5098 = vmatpush.bf16.msra.mxu0 %v3968
  %5099 = vmatpush.bf16.msra.mxu0 %v3964
  %5100 = vmatpush.bf16.msra.mxu0 %v3960
  %5101 = vmatpush.bf16.msra.mxu0 %v3956
  %5102 = vmatpush.bf16.msra.mxu0 %v3952
  %5103 = vmatpush.bf16.msra.mxu0 %v3948
  %5104 = vmatpush.bf16.msra.mxu0 %v3944
  %5105 = vmatmul.bf16.gmra.mxu0 %v859
  %v5106 = vpop.f32.mrf.mxu0
  %v5107 = vadd.f32 %v5094, %v5106
  %v5108 = vpop.f32.mrf.mxu0
  %5109 = vdwg.mxu0
  %5110 = vmatpush.bf16.msra.mxu0 %v4004
  %5111 = vmatpush.bf16.msra.mxu0 %v4000
  %5112 = vmatpush.bf16.msra.mxu0 %v3996
  %5113 = vmatpush.bf16.msra.mxu0 %v3992
  %5114 = vmatpush.bf16.msra.mxu0 %v3988
  %5115 = vmatpush.bf16.msra.mxu0 %v3984
  %5116 = vmatpush.bf16.msra.mxu0 %v3980
  %5117 = vmatpush.bf16.msra.mxu0 %v3976
  %5118 = vmatmul.bf16.gmra.mxu0 %v860
  %v5119 = vpop.f32.mrf.mxu0
  %v5120 = vadd.f32 %v5107, %v5119
  %v5121 = vpop.f32.mrf.mxu0
  %5122 = vdwg.mxu0
  %5123 = vmatpush.bf16.msra.mxu0 0
  %5124 = vmatpush.bf16.msra.mxu0 0
  %5125 = vmatpush.bf16.msra.mxu0 0
  %5126 = vmatpush.bf16.msra.mxu0 0
  %5127 = vmatpush.bf16.msra.mxu0 %v4020
  %5128 = vmatpush.bf16.msra.mxu0 %v4016
  %5129 = vmatpush.bf16.msra.mxu0 %v4012
  %5130 = vmatpush.bf16.msra.mxu0 %v4008
  %5131 = vmatmul.bf16.gmra.mxu0 %v4809
  %v5132 = vpop.f32.mrf.mxu0
  %v5133 = vadd.f32 %v5120, %v5132
  %v5134 = vpop.f32.mrf.mxu0
  %5135 = vdwg.mxu0
  %5136 = vmatpush.bf16.msra.mxu0 %v3269
  %5137 = vmatpush.bf16.msra.mxu0 %v3265
  %5138 = vmatpush.bf16.msra.mxu0 %v3261
  %5139 = vmatpush.bf16.msra.mxu0 %v3257
  %5140 = vmatpush.bf16.msra.mxu0 %v3253
  %5141 = vmatpush.bf16.msra.mxu0 %v3249
  %5142 = vmatpush.bf16.msra.mxu0 %v3245
  %5143 = vmatpush.bf16.msra.mxu0 %v3241
  %5144 = vmatmul.bf16.gmra.mxu0 %v833
  %v5145 = vpop.f32.mrf.mxu0
  %v5146 = vadd.f32 %v824, %v5145
  %v5147 = vpop.f32.mrf.mxu0
  %5148 = vdwg.mxu0
  %5149 = vmatpush.bf16.msra.mxu0 %v3301
  %5150 = vmatpush.bf16.msra.mxu0 %v3297
  %5151 = vmatpush.bf16.msra.mxu0 %v3293
  %5152 = vmatpush.bf16.msra.mxu0 %v3289
  %5153 = vmatpush.bf16.msra.mxu0 %v3285
  %5154 = vmatpush.bf16.msra.mxu0 %v3281
  %5155 = vmatpush.bf16.msra.mxu0 %v3277
  %5156 = vmatpush.bf16.msra.mxu0 %v3273
  %5157 = vmatmul.bf16.gmra.mxu0 %v834
  %v5158 = vpop.f32.mrf.mxu0
  %v5159 = vadd.f32 %v5146, %v5158
  %v5160 = vpop.f32.mrf.mxu0
  %5161 = vdwg.mxu0
  %5162 = vmatpush.bf16.msra.mxu0 %v3333
  %5163 = vmatpush.bf16.msra.mxu0 %v3329
  %5164 = vmatpush.bf16.msra.mxu0 %v3325
  %5165 = vmatpush.bf16.msra.mxu0 %v3321
  %5166 = vmatpush.bf16.msra.mxu0 %v3317
  %5167 = vmatpush.bf16.msra.mxu0 %v3313
  %5168 = vmatpush.bf16.msra.mxu0 %v3309
  %5169 = vmatpush.bf16.msra.mxu0 %v3305
  %5170 = vmatmul.bf16.gmra.mxu0 %v835
  %v5171 = vpop.f32.mrf.mxu0
  %v5172 = vadd.f32 %v5159, %v5171
  %v5173 = vpop.f32.mrf.mxu0
  %5174 = vdwg.mxu0
  %5175 = vmatpush.bf16.msra.mxu0 %v3365
  %5176 = vmatpush.bf16.msra.mxu0 %v3361
  %5177 = vmatpush.bf16.msra.mxu0 %v3357
  %5178 = vmatpush.bf16.msra.mxu0 %v3353
  %5179 = vmatpush.bf16.msra.mxu0 %v3349
  %5180 = vmatpush.bf16.msra.mxu0 %v3345
  %5181 = vmatpush.bf16.msra.mxu0 %v3341
  %5182 = vmatpush.bf16.msra.mxu0 %v3337
  %5183 = vmatmul.bf16.gmra.mxu0 %v836
  %v5184 = vpop.f32.mrf.mxu0
  %v5185 = vadd.f32 %v5172, %v5184
  %v5186 = vpop.f32.mrf.mxu0
  %5187 = vdwg.mxu0
  %5188 = vmatpush.bf16.msra.mxu0 %v3397
  %5189 = vmatpush.bf16.msra.mxu0 %v3393
  %5190 = vmatpush.bf16.msra.mxu0 %v3389
  %5191 = vmatpush.bf16.msra.mxu0 %v3385
  %5192 = vmatpush.bf16.msra.mxu0 %v3381
  %5193 = vmatpush.bf16.msra.mxu0 %v3377
  %5194 = vmatpush.bf16.msra.mxu0 %v3373
  %5195 = vmatpush.bf16.msra.mxu0 %v3369
  %5196 = vmatmul.bf16.gmra.mxu0 %v837
  %v5197 = vpop.f32.mrf.mxu0
  %v5198 = vadd.f32 %v5185, %v5197
  %v5199 = vpop.f32.mrf.mxu0
  %5200 = vdwg.mxu0
  %5201 = vmatpush.bf16.msra.mxu0 %v3429
  %5202 = vmatpush.bf16.msra.mxu0 %v3425
  %5203 = vmatpush.bf16.msra.mxu0 %v3421
  %5204 = vmatpush.bf16.msra.mxu0 %v3417
  %5205 = vmatpush.bf16.msra.mxu0 %v3413
  %5206 = vmatpush.bf16.msra.mxu0 %v3409
  %5207 = vmatpush.bf16.msra.mxu0 %v3405
  %5208 = vmatpush.bf16.msra.mxu0 %v3401
  %5209 = vmatmul.bf16.gmra.mxu0 %v838
  %v5210 = vpop.f32.mrf.mxu0
  %v5211 = vadd.f32 %v5198, %v5210
  %v5212 = vpop.f32.mrf.mxu0
  %5213 = vdwg.mxu0
  %5214 = vmatpush.bf16.msra.mxu0 %v3461
  %5215 = vmatpush.bf16.msra.mxu0 %v3457
  %5216 = vmatpush.bf16.msra.mxu0 %v3453
  %5217 = vmatpush.bf16.msra.mxu0 %v3449
  %5218 = vmatpush.bf16.msra.mxu0 %v3445
  %5219 = vmatpush.bf16.msra.mxu0 %v3441
  %5220 = vmatpush.bf16.msra.mxu0 %v3437
  %5221 = vmatpush.bf16.msra.mxu0 %v3433
  %5222 = vmatmul.bf16.gmra.mxu0 %v839
  %v5223 = vpop.f32.mrf.mxu0
  %v5224 = vadd.f32 %v5211, %v5223
  %v5225 = vpop.f32.mrf.mxu0
  %5226 = vdwg.mxu0
  %5227 = vmatpush.bf16.msra.mxu0 %v3493
  %5228 = vmatpush.bf16.msra.mxu0 %v3489
  %5229 = vmatpush.bf16.msra.mxu0 %v3485
  %5230 = vmatpush.bf16.msra.mxu0 %v3481
  %5231 = vmatpush.bf16.msra.mxu0 %v3477
  %5232 = vmatpush.bf16.msra.mxu0 %v3473
  %5233 = vmatpush.bf16.msra.mxu0 %v3469
  %5234 = vmatpush.bf16.msra.mxu0 %v3465
  %5235 = vmatmul.bf16.gmra.mxu0 %v840
  %v5236 = vpop.f32.mrf.mxu0
  %v5237 = vadd.f32 %v5224, %v5236
  %v5238 = vpop.f32.mrf.mxu0
  %5239 = vdwg.mxu0
  %5240 = vmatpush.bf16.msra.mxu0 %v3525
  %5241 = vmatpush.bf16.msra.mxu0 %v3521
  %5242 = vmatpush.bf16.msra.mxu0 %v3517
  %5243 = vmatpush.bf16.msra.mxu0 %v3513
  %5244 = vmatpush.bf16.msra.mxu0 %v3509
  %5245 = vmatpush.bf16.msra.mxu0 %v3505
  %5246 = vmatpush.bf16.msra.mxu0 %v3501
  %5247 = vmatpush.bf16.msra.mxu0 %v3497
  %5248 = vmatmul.bf16.gmra.mxu0 %v843
  %v5249 = vpop.f32.mrf.mxu0
  %v5250 = vadd.f32 %v5237, %v5249
  %v5251 = vpop.f32.mrf.mxu0
  %5252 = vdwg.mxu0
  %5253 = vmatpush.bf16.msra.mxu0 %v3557
  %5254 = vmatpush.bf16.msra.mxu0 %v3553
  %5255 = vmatpush.bf16.msra.mxu0 %v3549
  %5256 = vmatpush.bf16.msra.mxu0 %v3545
  %5257 = vmatpush.bf16.msra.mxu0 %v3541
  %5258 = vmatpush.bf16.msra.mxu0 %v3537
  %5259 = vmatpush.bf16.msra.mxu0 %v3533
  %5260 = vmatpush.bf16.msra.mxu0 %v3529
  %5261 = vmatmul.bf16.gmra.mxu0 %v844
  %v5262 = vpop.f32.mrf.mxu0
  %v5263 = vadd.f32 %v5250, %v5262
  %v5264 = vpop.f32.mrf.mxu0
  %5265 = vdwg.mxu0
  %5266 = vmatpush.bf16.msra.mxu0 %v3589
  %5267 = vmatpush.bf16.msra.mxu0 %v3585
  %5268 = vmatpush.bf16.msra.mxu0 %v3581
  %5269 = vmatpush.bf16.msra.mxu0 %v3577
  %5270 = vmatpush.bf16.msra.mxu0 %v3573
  %5271 = vmatpush.bf16.msra.mxu0 %v3569
  %5272 = vmatpush.bf16.msra.mxu0 %v3565
  %5273 = vmatpush.bf16.msra.mxu0 %v3561
  %5274 = vmatmul.bf16.gmra.mxu0 %v845
  %v5275 = vpop.f32.mrf.mxu0
  %v5276 = vadd.f32 %v5263, %v5275
  %v5277 = vpop.f32.mrf.mxu0
  %5278 = vdwg.mxu0
  %5279 = vmatpush.bf16.msra.mxu0 %v3621
  %5280 = vmatpush.bf16.msra.mxu0 %v3617
  %5281 = vmatpush.bf16.msra.mxu0 %v3613
  %5282 = vmatpush.bf16.msra.mxu0 %v3609
  %5283 = vmatpush.bf16.msra.mxu0 %v3605
  %5284 = vmatpush.bf16.msra.mxu0 %v3601
  %5285 = vmatpush.bf16.msra.mxu0 %v3597
  %5286 = vmatpush.bf16.msra.mxu0 %v3593
  %5287 = vmatmul.bf16.gmra.mxu0 %v846
  %v5288 = vpop.f32.mrf.mxu0
  %v5289 = vadd.f32 %v5276, %v5288
  %v5290 = vpop.f32.mrf.mxu0
  %5291 = vdwg.mxu0
  %5292 = vmatpush.bf16.msra.mxu0 %v3653
  %5293 = vmatpush.bf16.msra.mxu0 %v3649
  %5294 = vmatpush.bf16.msra.mxu0 %v3645
  %5295 = vmatpush.bf16.msra.mxu0 %v3641
  %5296 = vmatpush.bf16.msra.mxu0 %v3637
  %5297 = vmatpush.bf16.msra.mxu0 %v3633
  %5298 = vmatpush.bf16.msra.mxu0 %v3629
  %5299 = vmatpush.bf16.msra.mxu0 %v3625
  %5300 = vmatmul.bf16.gmra.mxu0 %v847
  %v5301 = vpop.f32.mrf.mxu0
  %v5302 = vadd.f32 %v5289, %v5301
  %v5303 = vpop.f32.mrf.mxu0
  %5304 = vdwg.mxu0
  %5305 = vmatpush.bf16.msra.mxu0 %v3685
  %5306 = vmatpush.bf16.msra.mxu0 %v3681
  %5307 = vmatpush.bf16.msra.mxu0 %v3677
  %5308 = vmatpush.bf16.msra.mxu0 %v3673
  %5309 = vmatpush.bf16.msra.mxu0 %v3669
  %5310 = vmatpush.bf16.msra.mxu0 %v3665
  %5311 = vmatpush.bf16.msra.mxu0 %v3661
  %5312 = vmatpush.bf16.msra.mxu0 %v3657
  %5313 = vmatmul.bf16.gmra.mxu0 %v848
  %v5314 = vpop.f32.mrf.mxu0
  %v5315 = vadd.f32 %v5302, %v5314
  %v5316 = vpop.f32.mrf.mxu0
  %5317 = vdwg.mxu0
  %5318 = vmatpush.bf16.msra.mxu0 %v3717
  %5319 = vmatpush.bf16.msra.mxu0 %v3713
  %5320 = vmatpush.bf16.msra.mxu0 %v3709
  %5321 = vmatpush.bf16.msra.mxu0 %v3705
  %5322 = vmatpush.bf16.msra.mxu0 %v3701
  %5323 = vmatpush.bf16.msra.mxu0 %v3697
  %5324 = vmatpush.bf16.msra.mxu0 %v3693
  %5325 = vmatpush.bf16.msra.mxu0 %v3689
  %5326 = vmatmul.bf16.gmra.mxu0 %v849
  %v5327 = vpop.f32.mrf.mxu0
  %v5328 = vadd.f32 %v5315, %v5327
  %v5329 = vpop.f32.mrf.mxu0
  %5330 = vdwg.mxu0
  %5331 = vmatpush.bf16.msra.mxu0 %v3749
  %5332 = vmatpush.bf16.msra.mxu0 %v3745
  %5333 = vmatpush.bf16.msra.mxu0 %v3741
  %5334 = vmatpush.bf16.msra.mxu0 %v3737
  %5335 = vmatpush.bf16.msra.mxu0 %v3733
  %5336 = vmatpush.bf16.msra.mxu0 %v3729
  %5337 = vmatpush.bf16.msra.mxu0 %v3725
  %5338 = vmatpush.bf16.msra.mxu0 %v3721
  %5339 = vmatmul.bf16.gmra.mxu0 %v850
  %v5340 = vpop.f32.mrf.mxu0
  %v5341 = vadd.f32 %v5328, %v5340
  %v5342 = vpop.f32.mrf.mxu0
  %5343 = vdwg.mxu0
  %5344 = vmatpush.bf16.msra.mxu0 %v3781
  %5345 = vmatpush.bf16.msra.mxu0 %v3777
  %5346 = vmatpush.bf16.msra.mxu0 %v3773
  %5347 = vmatpush.bf16.msra.mxu0 %v3769
  %5348 = vmatpush.bf16.msra.mxu0 %v3765
  %5349 = vmatpush.bf16.msra.mxu0 %v3761
  %5350 = vmatpush.bf16.msra.mxu0 %v3757
  %5351 = vmatpush.bf16.msra.mxu0 %v3753
  %5352 = vmatmul.bf16.gmra.mxu0 %v853
  %v5353 = vpop.f32.mrf.mxu0
  %v5354 = vadd.f32 %v5341, %v5353
  %v5355 = vpop.f32.mrf.mxu0
  %5356 = vdwg.mxu0
  %5357 = vmatpush.bf16.msra.mxu0 %v3813
  %5358 = vmatpush.bf16.msra.mxu0 %v3809
  %5359 = vmatpush.bf16.msra.mxu0 %v3805
  %5360 = vmatpush.bf16.msra.mxu0 %v3801
  %5361 = vmatpush.bf16.msra.mxu0 %v3797
  %5362 = vmatpush.bf16.msra.mxu0 %v3793
  %5363 = vmatpush.bf16.msra.mxu0 %v3789
  %5364 = vmatpush.bf16.msra.mxu0 %v3785
  %5365 = vmatmul.bf16.gmra.mxu0 %v854
  %v5366 = vpop.f32.mrf.mxu0
  %v5367 = vadd.f32 %v5354, %v5366
  %v5368 = vpop.f32.mrf.mxu0
  %5369 = vdwg.mxu0
  %5370 = vmatpush.bf16.msra.mxu0 %v3845
  %5371 = vmatpush.bf16.msra.mxu0 %v3841
  %5372 = vmatpush.bf16.msra.mxu0 %v3837
  %5373 = vmatpush.bf16.msra.mxu0 %v3833
  %5374 = vmatpush.bf16.msra.mxu0 %v3829
  %5375 = vmatpush.bf16.msra.mxu0 %v3825
  %5376 = vmatpush.bf16.msra.mxu0 %v3821
  %5377 = vmatpush.bf16.msra.mxu0 %v3817
  %5378 = vmatmul.bf16.gmra.mxu0 %v855
  %v5379 = vpop.f32.mrf.mxu0
  %v5380 = vadd.f32 %v5367, %v5379
  %v5381 = vpop.f32.mrf.mxu0
  %5382 = vdwg.mxu0
  %5383 = vmatpush.bf16.msra.mxu0 %v3877
  %5384 = vmatpush.bf16.msra.mxu0 %v3873
  %5385 = vmatpush.bf16.msra.mxu0 %v3869
  %5386 = vmatpush.bf16.msra.mxu0 %v3865
  %5387 = vmatpush.bf16.msra.mxu0 %v3861
  %5388 = vmatpush.bf16.msra.mxu0 %v3857
  %5389 = vmatpush.bf16.msra.mxu0 %v3853
  %5390 = vmatpush.bf16.msra.mxu0 %v3849
  %5391 = vmatmul.bf16.gmra.mxu0 %v856
  %v5392 = vpop.f32.mrf.mxu0
  %v5393 = vadd.f32 %v5380, %v5392
  %v5394 = vpop.f32.mrf.mxu0
  %5395 = vdwg.mxu0
  %5396 = vmatpush.bf16.msra.mxu0 %v3909
  %5397 = vmatpush.bf16.msra.mxu0 %v3905
  %5398 = vmatpush.bf16.msra.mxu0 %v3901
  %5399 = vmatpush.bf16.msra.mxu0 %v3897
  %5400 = vmatpush.bf16.msra.mxu0 %v3893
  %5401 = vmatpush.bf16.msra.mxu0 %v3889
  %5402 = vmatpush.bf16.msra.mxu0 %v3885
  %5403 = vmatpush.bf16.msra.mxu0 %v3881
  %5404 = vmatmul.bf16.gmra.mxu0 %v857
  %v5405 = vpop.f32.mrf.mxu0
  %v5406 = vadd.f32 %v5393, %v5405
  %v5407 = vpop.f32.mrf.mxu0
  %5408 = vdwg.mxu0
  %5409 = vmatpush.bf16.msra.mxu0 %v3941
  %5410 = vmatpush.bf16.msra.mxu0 %v3937
  %5411 = vmatpush.bf16.msra.mxu0 %v3933
  %5412 = vmatpush.bf16.msra.mxu0 %v3929
  %5413 = vmatpush.bf16.msra.mxu0 %v3925
  %5414 = vmatpush.bf16.msra.mxu0 %v3921
  %5415 = vmatpush.bf16.msra.mxu0 %v3917
  %5416 = vmatpush.bf16.msra.mxu0 %v3913
  %5417 = vmatmul.bf16.gmra.mxu0 %v858
  %v5418 = vpop.f32.mrf.mxu0
  %v5419 = vadd.f32 %v5406, %v5418
  %v5420 = vpop.f32.mrf.mxu0
  %5421 = vdwg.mxu0
  %5422 = vmatpush.bf16.msra.mxu0 %v3973
  %5423 = vmatpush.bf16.msra.mxu0 %v3969
  %5424 = vmatpush.bf16.msra.mxu0 %v3965
  %5425 = vmatpush.bf16.msra.mxu0 %v3961
  %5426 = vmatpush.bf16.msra.mxu0 %v3957
  %5427 = vmatpush.bf16.msra.mxu0 %v3953
  %5428 = vmatpush.bf16.msra.mxu0 %v3949
  %5429 = vmatpush.bf16.msra.mxu0 %v3945
  %5430 = vmatmul.bf16.gmra.mxu0 %v859
  %v5431 = vpop.f32.mrf.mxu0
  %v5432 = vadd.f32 %v5419, %v5431
  %v5433 = vpop.f32.mrf.mxu0
  %5434 = vdwg.mxu0
  %5435 = vmatpush.bf16.msra.mxu0 %v4005
  %5436 = vmatpush.bf16.msra.mxu0 %v4001
  %5437 = vmatpush.bf16.msra.mxu0 %v3997
  %5438 = vmatpush.bf16.msra.mxu0 %v3993
  %5439 = vmatpush.bf16.msra.mxu0 %v3989
  %5440 = vmatpush.bf16.msra.mxu0 %v3985
  %5441 = vmatpush.bf16.msra.mxu0 %v3981
  %5442 = vmatpush.bf16.msra.mxu0 %v3977
  %5443 = vmatmul.bf16.gmra.mxu0 %v860
  %v5444 = vpop.f32.mrf.mxu0
  %v5445 = vadd.f32 %v5432, %v5444
  %v5446 = vpop.f32.mrf.mxu0
  %5447 = vdwg.mxu0
  %5448 = vmatpush.bf16.msra.mxu0 0
  %5449 = vmatpush.bf16.msra.mxu0 0
  %5450 = vmatpush.bf16.msra.mxu0 0
  %5451 = vmatpush.bf16.msra.mxu0 0
  %5452 = vmatpush.bf16.msra.mxu0 %v4021
  %5453 = vmatpush.bf16.msra.mxu0 %v4017
  %5454 = vmatpush.bf16.msra.mxu0 %v4013
  %5455 = vmatpush.bf16.msra.mxu0 %v4009
  %5456 = vmatmul.bf16.gmra.mxu0 %v4809
  %v5457 = vpop.f32.mrf.mxu0
  %v5458 = vadd.f32 %v5445, %v5457
  %v5459 = vpop.f32.mrf.mxu0
  %5460 = vdwg.mxu0
  %5461 = vmatpush.bf16.msra.mxu0 %v3270
  %5462 = vmatpush.bf16.msra.mxu0 %v3266
  %5463 = vmatpush.bf16.msra.mxu0 %v3262
  %5464 = vmatpush.bf16.msra.mxu0 %v3258
  %5465 = vmatpush.bf16.msra.mxu0 %v3254
  %5466 = vmatpush.bf16.msra.mxu0 %v3250
  %5467 = vmatpush.bf16.msra.mxu0 %v3246
  %5468 = vmatpush.bf16.msra.mxu0 %v3242
  %5469 = vmatmul.bf16.gmra.mxu0 %v833
  %v5470 = vpop.f32.mrf.mxu0
  %v5471 = vadd.f32 %v825, %v5470
  %v5472 = vpop.f32.mrf.mxu0
  %5473 = vdwg.mxu0
  %5474 = vmatpush.bf16.msra.mxu0 %v3302
  %5475 = vmatpush.bf16.msra.mxu0 %v3298
  %5476 = vmatpush.bf16.msra.mxu0 %v3294
  %5477 = vmatpush.bf16.msra.mxu0 %v3290
  %5478 = vmatpush.bf16.msra.mxu0 %v3286
  %5479 = vmatpush.bf16.msra.mxu0 %v3282
  %5480 = vmatpush.bf16.msra.mxu0 %v3278
  %5481 = vmatpush.bf16.msra.mxu0 %v3274
  %5482 = vmatmul.bf16.gmra.mxu0 %v834
  %v5483 = vpop.f32.mrf.mxu0
  %v5484 = vadd.f32 %v5471, %v5483
  %v5485 = vpop.f32.mrf.mxu0
  %5486 = vdwg.mxu0
  %5487 = vmatpush.bf16.msra.mxu0 %v3334
  %5488 = vmatpush.bf16.msra.mxu0 %v3330
  %5489 = vmatpush.bf16.msra.mxu0 %v3326
  %5490 = vmatpush.bf16.msra.mxu0 %v3322
  %5491 = vmatpush.bf16.msra.mxu0 %v3318
  %5492 = vmatpush.bf16.msra.mxu0 %v3314
  %5493 = vmatpush.bf16.msra.mxu0 %v3310
  %5494 = vmatpush.bf16.msra.mxu0 %v3306
  %5495 = vmatmul.bf16.gmra.mxu0 %v835
  %v5496 = vpop.f32.mrf.mxu0
  %v5497 = vadd.f32 %v5484, %v5496
  %v5498 = vpop.f32.mrf.mxu0
  %5499 = vdwg.mxu0
  %5500 = vmatpush.bf16.msra.mxu0 %v3366
  %5501 = vmatpush.bf16.msra.mxu0 %v3362
  %5502 = vmatpush.bf16.msra.mxu0 %v3358
  %5503 = vmatpush.bf16.msra.mxu0 %v3354
  %5504 = vmatpush.bf16.msra.mxu0 %v3350
  %5505 = vmatpush.bf16.msra.mxu0 %v3346
  %5506 = vmatpush.bf16.msra.mxu0 %v3342
  %5507 = vmatpush.bf16.msra.mxu0 %v3338
  %5508 = vmatmul.bf16.gmra.mxu0 %v836
  %v5509 = vpop.f32.mrf.mxu0
  %v5510 = vadd.f32 %v5497, %v5509
  %v5511 = vpop.f32.mrf.mxu0
  %5512 = vdwg.mxu0
  %5513 = vmatpush.bf16.msra.mxu0 %v3398
  %5514 = vmatpush.bf16.msra.mxu0 %v3394
  %5515 = vmatpush.bf16.msra.mxu0 %v3390
  %5516 = vmatpush.bf16.msra.mxu0 %v3386
  %5517 = vmatpush.bf16.msra.mxu0 %v3382
  %5518 = vmatpush.bf16.msra.mxu0 %v3378
  %5519 = vmatpush.bf16.msra.mxu0 %v3374
  %5520 = vmatpush.bf16.msra.mxu0 %v3370
  %5521 = vmatmul.bf16.gmra.mxu0 %v837
  %v5522 = vpop.f32.mrf.mxu0
  %v5523 = vadd.f32 %v5510, %v5522
  %v5524 = vpop.f32.mrf.mxu0
  %5525 = vdwg.mxu0
  %5526 = vmatpush.bf16.msra.mxu0 %v3430
  %5527 = vmatpush.bf16.msra.mxu0 %v3426
  %5528 = vmatpush.bf16.msra.mxu0 %v3422
  %5529 = vmatpush.bf16.msra.mxu0 %v3418
  %5530 = vmatpush.bf16.msra.mxu0 %v3414
  %5531 = vmatpush.bf16.msra.mxu0 %v3410
  %5532 = vmatpush.bf16.msra.mxu0 %v3406
  %5533 = vmatpush.bf16.msra.mxu0 %v3402
  %5534 = vmatmul.bf16.gmra.mxu0 %v838
  %v5535 = vpop.f32.mrf.mxu0
  %v5536 = vadd.f32 %v5523, %v5535
  %v5537 = vpop.f32.mrf.mxu0
  %5538 = vdwg.mxu0
  %5539 = vmatpush.bf16.msra.mxu0 %v3462
  %5540 = vmatpush.bf16.msra.mxu0 %v3458
  %5541 = vmatpush.bf16.msra.mxu0 %v3454
  %5542 = vmatpush.bf16.msra.mxu0 %v3450
  %5543 = vmatpush.bf16.msra.mxu0 %v3446
  %5544 = vmatpush.bf16.msra.mxu0 %v3442
  %5545 = vmatpush.bf16.msra.mxu0 %v3438
  %5546 = vmatpush.bf16.msra.mxu0 %v3434
  %5547 = vmatmul.bf16.gmra.mxu0 %v839
  %v5548 = vpop.f32.mrf.mxu0
  %v5549 = vadd.f32 %v5536, %v5548
  %v5550 = vpop.f32.mrf.mxu0
  %5551 = vdwg.mxu0
  %5552 = vmatpush.bf16.msra.mxu0 %v3494
  %5553 = vmatpush.bf16.msra.mxu0 %v3490
  %5554 = vmatpush.bf16.msra.mxu0 %v3486
  %5555 = vmatpush.bf16.msra.mxu0 %v3482
  %5556 = vmatpush.bf16.msra.mxu0 %v3478
  %5557 = vmatpush.bf16.msra.mxu0 %v3474
  %5558 = vmatpush.bf16.msra.mxu0 %v3470
  %5559 = vmatpush.bf16.msra.mxu0 %v3466
  %5560 = vmatmul.bf16.gmra.mxu0 %v840
  %v5561 = vpop.f32.mrf.mxu0
  %v5562 = vadd.f32 %v5549, %v5561
  %v5563 = vpop.f32.mrf.mxu0
  %5564 = vdwg.mxu0
  %5565 = vmatpush.bf16.msra.mxu0 %v3526
  %5566 = vmatpush.bf16.msra.mxu0 %v3522
  %5567 = vmatpush.bf16.msra.mxu0 %v3518
  %5568 = vmatpush.bf16.msra.mxu0 %v3514
  %5569 = vmatpush.bf16.msra.mxu0 %v3510
  %5570 = vmatpush.bf16.msra.mxu0 %v3506
  %5571 = vmatpush.bf16.msra.mxu0 %v3502
  %5572 = vmatpush.bf16.msra.mxu0 %v3498
  %5573 = vmatmul.bf16.gmra.mxu0 %v843
  %v5574 = vpop.f32.mrf.mxu0
  %v5575 = vadd.f32 %v5562, %v5574
  %v5576 = vpop.f32.mrf.mxu0
  %5577 = vdwg.mxu0
  %5578 = vmatpush.bf16.msra.mxu0 %v3558
  %5579 = vmatpush.bf16.msra.mxu0 %v3554
  %5580 = vmatpush.bf16.msra.mxu0 %v3550
  %5581 = vmatpush.bf16.msra.mxu0 %v3546
  %5582 = vmatpush.bf16.msra.mxu0 %v3542
  %5583 = vmatpush.bf16.msra.mxu0 %v3538
  %5584 = vmatpush.bf16.msra.mxu0 %v3534
  %5585 = vmatpush.bf16.msra.mxu0 %v3530
  %5586 = vmatmul.bf16.gmra.mxu0 %v844
  %v5587 = vpop.f32.mrf.mxu0
  %v5588 = vadd.f32 %v5575, %v5587
  %v5589 = vpop.f32.mrf.mxu0
  %5590 = vdwg.mxu0
  %5591 = vmatpush.bf16.msra.mxu0 %v3590
  %5592 = vmatpush.bf16.msra.mxu0 %v3586
  %5593 = vmatpush.bf16.msra.mxu0 %v3582
  %5594 = vmatpush.bf16.msra.mxu0 %v3578
  %5595 = vmatpush.bf16.msra.mxu0 %v3574
  %5596 = vmatpush.bf16.msra.mxu0 %v3570
  %5597 = vmatpush.bf16.msra.mxu0 %v3566
  %5598 = vmatpush.bf16.msra.mxu0 %v3562
  %5599 = vmatmul.bf16.gmra.mxu0 %v845
  %v5600 = vpop.f32.mrf.mxu0
  %v5601 = vadd.f32 %v5588, %v5600
  %v5602 = vpop.f32.mrf.mxu0
  %5603 = vdwg.mxu0
  %5604 = vmatpush.bf16.msra.mxu0 %v3622
  %5605 = vmatpush.bf16.msra.mxu0 %v3618
  %5606 = vmatpush.bf16.msra.mxu0 %v3614
  %5607 = vmatpush.bf16.msra.mxu0 %v3610
  %5608 = vmatpush.bf16.msra.mxu0 %v3606
  %5609 = vmatpush.bf16.msra.mxu0 %v3602
  %5610 = vmatpush.bf16.msra.mxu0 %v3598
  %5611 = vmatpush.bf16.msra.mxu0 %v3594
  %5612 = vmatmul.bf16.gmra.mxu0 %v846
  %v5613 = vpop.f32.mrf.mxu0
  %v5614 = vadd.f32 %v5601, %v5613
  %v5615 = vpop.f32.mrf.mxu0
  %5616 = vdwg.mxu0
  %5617 = vmatpush.bf16.msra.mxu0 %v3654
  %5618 = vmatpush.bf16.msra.mxu0 %v3650
  %5619 = vmatpush.bf16.msra.mxu0 %v3646
  %5620 = vmatpush.bf16.msra.mxu0 %v3642
  %5621 = vmatpush.bf16.msra.mxu0 %v3638
  %5622 = vmatpush.bf16.msra.mxu0 %v3634
  %5623 = vmatpush.bf16.msra.mxu0 %v3630
  %5624 = vmatpush.bf16.msra.mxu0 %v3626
  %5625 = vmatmul.bf16.gmra.mxu0 %v847
  %v5626 = vpop.f32.mrf.mxu0
  %v5627 = vadd.f32 %v5614, %v5626
  %v5628 = vpop.f32.mrf.mxu0
  %5629 = vdwg.mxu0
  %5630 = vmatpush.bf16.msra.mxu0 %v3686
  %5631 = vmatpush.bf16.msra.mxu0 %v3682
  %5632 = vmatpush.bf16.msra.mxu0 %v3678
  %5633 = vmatpush.bf16.msra.mxu0 %v3674
  %5634 = vmatpush.bf16.msra.mxu0 %v3670
  %5635 = vmatpush.bf16.msra.mxu0 %v3666
  %5636 = vmatpush.bf16.msra.mxu0 %v3662
  %5637 = vmatpush.bf16.msra.mxu0 %v3658
  %5638 = vmatmul.bf16.gmra.mxu0 %v848
  %v5639 = vpop.f32.mrf.mxu0
  %v5640 = vadd.f32 %v5627, %v5639
  %v5641 = vpop.f32.mrf.mxu0
  %5642 = vdwg.mxu0
  %5643 = vmatpush.bf16.msra.mxu0 %v3718
  %5644 = vmatpush.bf16.msra.mxu0 %v3714
  %5645 = vmatpush.bf16.msra.mxu0 %v3710
  %5646 = vmatpush.bf16.msra.mxu0 %v3706
  %5647 = vmatpush.bf16.msra.mxu0 %v3702
  %5648 = vmatpush.bf16.msra.mxu0 %v3698
  %5649 = vmatpush.bf16.msra.mxu0 %v3694
  %5650 = vmatpush.bf16.msra.mxu0 %v3690
  %5651 = vmatmul.bf16.gmra.mxu0 %v849
  %v5652 = vpop.f32.mrf.mxu0
  %v5653 = vadd.f32 %v5640, %v5652
  %v5654 = vpop.f32.mrf.mxu0
  %5655 = vdwg.mxu0
  %5656 = vmatpush.bf16.msra.mxu0 %v3750
  %5657 = vmatpush.bf16.msra.mxu0 %v3746
  %5658 = vmatpush.bf16.msra.mxu0 %v3742
  %5659 = vmatpush.bf16.msra.mxu0 %v3738
  %5660 = vmatpush.bf16.msra.mxu0 %v3734
  %5661 = vmatpush.bf16.msra.mxu0 %v3730
  %5662 = vmatpush.bf16.msra.mxu0 %v3726
  %5663 = vmatpush.bf16.msra.mxu0 %v3722
  %5664 = vmatmul.bf16.gmra.mxu0 %v850
  %v5665 = vpop.f32.mrf.mxu0
  %v5666 = vadd.f32 %v5653, %v5665
  %v5667 = vpop.f32.mrf.mxu0
  %5668 = vdwg.mxu0
  %5669 = vmatpush.bf16.msra.mxu0 %v3782
  %5670 = vmatpush.bf16.msra.mxu0 %v3778
  %5671 = vmatpush.bf16.msra.mxu0 %v3774
  %5672 = vmatpush.bf16.msra.mxu0 %v3770
  %5673 = vmatpush.bf16.msra.mxu0 %v3766
  %5674 = vmatpush.bf16.msra.mxu0 %v3762
  %5675 = vmatpush.bf16.msra.mxu0 %v3758
  %5676 = vmatpush.bf16.msra.mxu0 %v3754
  %5677 = vmatmul.bf16.gmra.mxu0 %v853
  %v5678 = vpop.f32.mrf.mxu0
  %v5679 = vadd.f32 %v5666, %v5678
  %v5680 = vpop.f32.mrf.mxu0
  %5681 = vdwg.mxu0
  %5682 = vmatpush.bf16.msra.mxu0 %v3814
  %5683 = vmatpush.bf16.msra.mxu0 %v3810
  %5684 = vmatpush.bf16.msra.mxu0 %v3806
  %5685 = vmatpush.bf16.msra.mxu0 %v3802
  %5686 = vmatpush.bf16.msra.mxu0 %v3798
  %5687 = vmatpush.bf16.msra.mxu0 %v3794
  %5688 = vmatpush.bf16.msra.mxu0 %v3790
  %5689 = vmatpush.bf16.msra.mxu0 %v3786
  %5690 = vmatmul.bf16.gmra.mxu0 %v854
  %v5691 = vpop.f32.mrf.mxu0
  %v5692 = vadd.f32 %v5679, %v5691
  %v5693 = vpop.f32.mrf.mxu0
  %5694 = vdwg.mxu0
  %5695 = vmatpush.bf16.msra.mxu0 %v3846
  %5696 = vmatpush.bf16.msra.mxu0 %v3842
  %5697 = vmatpush.bf16.msra.mxu0 %v3838
  %5698 = vmatpush.bf16.msra.mxu0 %v3834
  %5699 = vmatpush.bf16.msra.mxu0 %v3830
  %5700 = vmatpush.bf16.msra.mxu0 %v3826
  %5701 = vmatpush.bf16.msra.mxu0 %v3822
  %5702 = vmatpush.bf16.msra.mxu0 %v3818
  %5703 = vmatmul.bf16.gmra.mxu0 %v855
  %v5704 = vpop.f32.mrf.mxu0
  %v5705 = vadd.f32 %v5692, %v5704
  %v5706 = vpop.f32.mrf.mxu0
  %5707 = vdwg.mxu0
  %5708 = vmatpush.bf16.msra.mxu0 %v3878
  %5709 = vmatpush.bf16.msra.mxu0 %v3874
  %5710 = vmatpush.bf16.msra.mxu0 %v3870
  %5711 = vmatpush.bf16.msra.mxu0 %v3866
  %5712 = vmatpush.bf16.msra.mxu0 %v3862
  %5713 = vmatpush.bf16.msra.mxu0 %v3858
  %5714 = vmatpush.bf16.msra.mxu0 %v3854
  %5715 = vmatpush.bf16.msra.mxu0 %v3850
  %5716 = vmatmul.bf16.gmra.mxu0 %v856
  %v5717 = vpop.f32.mrf.mxu0
  %v5718 = vadd.f32 %v5705, %v5717
  %v5719 = vpop.f32.mrf.mxu0
  %5720 = vdwg.mxu0
  %5721 = vmatpush.bf16.msra.mxu0 %v3910
  %5722 = vmatpush.bf16.msra.mxu0 %v3906
  %5723 = vmatpush.bf16.msra.mxu0 %v3902
  %5724 = vmatpush.bf16.msra.mxu0 %v3898
  %5725 = vmatpush.bf16.msra.mxu0 %v3894
  %5726 = vmatpush.bf16.msra.mxu0 %v3890
  %5727 = vmatpush.bf16.msra.mxu0 %v3886
  %5728 = vmatpush.bf16.msra.mxu0 %v3882
  %5729 = vmatmul.bf16.gmra.mxu0 %v857
  %v5730 = vpop.f32.mrf.mxu0
  %v5731 = vadd.f32 %v5718, %v5730
  %v5732 = vpop.f32.mrf.mxu0
  %5733 = vdwg.mxu0
  %5734 = vmatpush.bf16.msra.mxu0 %v3942
  %5735 = vmatpush.bf16.msra.mxu0 %v3938
  %5736 = vmatpush.bf16.msra.mxu0 %v3934
  %5737 = vmatpush.bf16.msra.mxu0 %v3930
  %5738 = vmatpush.bf16.msra.mxu0 %v3926
  %5739 = vmatpush.bf16.msra.mxu0 %v3922
  %5740 = vmatpush.bf16.msra.mxu0 %v3918
  %5741 = vmatpush.bf16.msra.mxu0 %v3914
  %5742 = vmatmul.bf16.gmra.mxu0 %v858
  %v5743 = vpop.f32.mrf.mxu0
  %v5744 = vadd.f32 %v5731, %v5743
  %v5745 = vpop.f32.mrf.mxu0
  %5746 = vdwg.mxu0
  %5747 = vmatpush.bf16.msra.mxu0 %v3974
  %5748 = vmatpush.bf16.msra.mxu0 %v3970
  %5749 = vmatpush.bf16.msra.mxu0 %v3966
  %5750 = vmatpush.bf16.msra.mxu0 %v3962
  %5751 = vmatpush.bf16.msra.mxu0 %v3958
  %5752 = vmatpush.bf16.msra.mxu0 %v3954
  %5753 = vmatpush.bf16.msra.mxu0 %v3950
  %5754 = vmatpush.bf16.msra.mxu0 %v3946
  %5755 = vmatmul.bf16.gmra.mxu0 %v859
  %v5756 = vpop.f32.mrf.mxu0
  %v5757 = vadd.f32 %v5744, %v5756
  %v5758 = vpop.f32.mrf.mxu0
  %5759 = vdwg.mxu0
  %5760 = vmatpush.bf16.msra.mxu0 %v4006
  %5761 = vmatpush.bf16.msra.mxu0 %v4002
  %5762 = vmatpush.bf16.msra.mxu0 %v3998
  %5763 = vmatpush.bf16.msra.mxu0 %v3994
  %5764 = vmatpush.bf16.msra.mxu0 %v3990
  %5765 = vmatpush.bf16.msra.mxu0 %v3986
  %5766 = vmatpush.bf16.msra.mxu0 %v3982
  %5767 = vmatpush.bf16.msra.mxu0 %v3978
  %5768 = vmatmul.bf16.gmra.mxu0 %v860
  %v5769 = vpop.f32.mrf.mxu0
  %v5770 = vadd.f32 %v5757, %v5769
  %v5771 = vpop.f32.mrf.mxu0
  %5772 = vdwg.mxu0
  %5773 = vmatpush.bf16.msra.mxu0 0
  %5774 = vmatpush.bf16.msra.mxu0 0
  %5775 = vmatpush.bf16.msra.mxu0 0
  %5776 = vmatpush.bf16.msra.mxu0 0
  %5777 = vmatpush.bf16.msra.mxu0 %v4022
  %5778 = vmatpush.bf16.msra.mxu0 %v4018
  %5779 = vmatpush.bf16.msra.mxu0 %v4014
  %5780 = vmatpush.bf16.msra.mxu0 %v4010
  %5781 = vmatmul.bf16.gmra.mxu0 %v4809
  %v5782 = vpop.f32.mrf.mxu0
  %v5783 = vadd.f32 %v5770, %v5782
  %v5784 = vpop.f32.mrf.mxu0
  %5785 = vdwg.mxu0
  %5786 = vmatpush.bf16.msra.mxu0 %v3271
  %5787 = vmatpush.bf16.msra.mxu0 %v3267
  %5788 = vmatpush.bf16.msra.mxu0 %v3263
  %5789 = vmatpush.bf16.msra.mxu0 %v3259
  %5790 = vmatpush.bf16.msra.mxu0 %v3255
  %5791 = vmatpush.bf16.msra.mxu0 %v3251
  %5792 = vmatpush.bf16.msra.mxu0 %v3247
  %5793 = vmatpush.bf16.msra.mxu0 %v3243
  %5794 = vmatmul.bf16.gmra.mxu0 %v833
  %v5795 = vpop.f32.mrf.mxu0
  %v5796 = vadd.f32 %v826, %v5795
  %v5797 = vpop.f32.mrf.mxu0
  %5798 = vdwg.mxu0
  %5799 = vmatpush.bf16.msra.mxu0 %v3303
  %5800 = vmatpush.bf16.msra.mxu0 %v3299
  %5801 = vmatpush.bf16.msra.mxu0 %v3295
  %5802 = vmatpush.bf16.msra.mxu0 %v3291
  %5803 = vmatpush.bf16.msra.mxu0 %v3287
  %5804 = vmatpush.bf16.msra.mxu0 %v3283
  %5805 = vmatpush.bf16.msra.mxu0 %v3279
  %5806 = vmatpush.bf16.msra.mxu0 %v3275
  %5807 = vmatmul.bf16.gmra.mxu0 %v834
  %v5808 = vpop.f32.mrf.mxu0
  %v5809 = vadd.f32 %v5796, %v5808
  %v5810 = vpop.f32.mrf.mxu0
  %5811 = vdwg.mxu0
  %5812 = vmatpush.bf16.msra.mxu0 %v3335
  %5813 = vmatpush.bf16.msra.mxu0 %v3331
  %5814 = vmatpush.bf16.msra.mxu0 %v3327
  %5815 = vmatpush.bf16.msra.mxu0 %v3323
  %5816 = vmatpush.bf16.msra.mxu0 %v3319
  %5817 = vmatpush.bf16.msra.mxu0 %v3315
  %5818 = vmatpush.bf16.msra.mxu0 %v3311
  %5819 = vmatpush.bf16.msra.mxu0 %v3307
  %5820 = vmatmul.bf16.gmra.mxu0 %v835
  %v5821 = vpop.f32.mrf.mxu0
  %v5822 = vadd.f32 %v5809, %v5821
  %v5823 = vpop.f32.mrf.mxu0
  %5824 = vdwg.mxu0
  %5825 = vmatpush.bf16.msra.mxu0 %v3367
  %5826 = vmatpush.bf16.msra.mxu0 %v3363
  %5827 = vmatpush.bf16.msra.mxu0 %v3359
  %5828 = vmatpush.bf16.msra.mxu0 %v3355
  %5829 = vmatpush.bf16.msra.mxu0 %v3351
  %5830 = vmatpush.bf16.msra.mxu0 %v3347
  %5831 = vmatpush.bf16.msra.mxu0 %v3343
  %5832 = vmatpush.bf16.msra.mxu0 %v3339
  %5833 = vmatmul.bf16.gmra.mxu0 %v836
  %v5834 = vpop.f32.mrf.mxu0
  %v5835 = vadd.f32 %v5822, %v5834
  %v5836 = vpop.f32.mrf.mxu0
  %5837 = vdwg.mxu0
  %5838 = vmatpush.bf16.msra.mxu0 %v3399
  %5839 = vmatpush.bf16.msra.mxu0 %v3395
  %5840 = vmatpush.bf16.msra.mxu0 %v3391
  %5841 = vmatpush.bf16.msra.mxu0 %v3387
  %5842 = vmatpush.bf16.msra.mxu0 %v3383
  %5843 = vmatpush.bf16.msra.mxu0 %v3379
  %5844 = vmatpush.bf16.msra.mxu0 %v3375
  %5845 = vmatpush.bf16.msra.mxu0 %v3371
  %5846 = vmatmul.bf16.gmra.mxu0 %v837
  %v5847 = vpop.f32.mrf.mxu0
  %v5848 = vadd.f32 %v5835, %v5847
  %v5849 = vpop.f32.mrf.mxu0
  %5850 = vdwg.mxu0
  %5851 = vmatpush.bf16.msra.mxu0 %v3431
  %5852 = vmatpush.bf16.msra.mxu0 %v3427
  %5853 = vmatpush.bf16.msra.mxu0 %v3423
  %5854 = vmatpush.bf16.msra.mxu0 %v3419
  %5855 = vmatpush.bf16.msra.mxu0 %v3415
  %5856 = vmatpush.bf16.msra.mxu0 %v3411
  %5857 = vmatpush.bf16.msra.mxu0 %v3407
  %5858 = vmatpush.bf16.msra.mxu0 %v3403
  %5859 = vmatmul.bf16.gmra.mxu0 %v838
  %v5860 = vpop.f32.mrf.mxu0
  %v5861 = vadd.f32 %v5848, %v5860
  %v5862 = vpop.f32.mrf.mxu0
  %5863 = vdwg.mxu0
  %5864 = vmatpush.bf16.msra.mxu0 %v3463
  %5865 = vmatpush.bf16.msra.mxu0 %v3459
  %5866 = vmatpush.bf16.msra.mxu0 %v3455
  %5867 = vmatpush.bf16.msra.mxu0 %v3451
  %5868 = vmatpush.bf16.msra.mxu0 %v3447
  %5869 = vmatpush.bf16.msra.mxu0 %v3443
  %5870 = vmatpush.bf16.msra.mxu0 %v3439
  %5871 = vmatpush.bf16.msra.mxu0 %v3435
  %5872 = vmatmul.bf16.gmra.mxu0 %v839
  %v5873 = vpop.f32.mrf.mxu0
  %v5874 = vadd.f32 %v5861, %v5873
  %v5875 = vpop.f32.mrf.mxu0
  %5876 = vdwg.mxu0
  %5877 = vmatpush.bf16.msra.mxu0 %v3495
  %5878 = vmatpush.bf16.msra.mxu0 %v3491
  %5879 = vmatpush.bf16.msra.mxu0 %v3487
  %5880 = vmatpush.bf16.msra.mxu0 %v3483
  %5881 = vmatpush.bf16.msra.mxu0 %v3479
  %5882 = vmatpush.bf16.msra.mxu0 %v3475
  %5883 = vmatpush.bf16.msra.mxu0 %v3471
  %5884 = vmatpush.bf16.msra.mxu0 %v3467
  %5885 = vmatmul.bf16.gmra.mxu0 %v840
  %v5886 = vpop.f32.mrf.mxu0
  %v5887 = vadd.f32 %v5874, %v5886
  %v5888 = vpop.f32.mrf.mxu0
  %5889 = vdwg.mxu0
  %5890 = vmatpush.bf16.msra.mxu0 %v3527
  %5891 = vmatpush.bf16.msra.mxu0 %v3523
  %5892 = vmatpush.bf16.msra.mxu0 %v3519
  %5893 = vmatpush.bf16.msra.mxu0 %v3515
  %5894 = vmatpush.bf16.msra.mxu0 %v3511
  %5895 = vmatpush.bf16.msra.mxu0 %v3507
  %5896 = vmatpush.bf16.msra.mxu0 %v3503
  %5897 = vmatpush.bf16.msra.mxu0 %v3499
  %5898 = vmatmul.bf16.gmra.mxu0 %v843
  %v5899 = vpop.f32.mrf.mxu0
  %v5900 = vadd.f32 %v5887, %v5899
  %v5901 = vpop.f32.mrf.mxu0
  %5902 = vdwg.mxu0
  %5903 = vmatpush.bf16.msra.mxu0 %v3559
  %5904 = vmatpush.bf16.msra.mxu0 %v3555
  %5905 = vmatpush.bf16.msra.mxu0 %v3551
  %5906 = vmatpush.bf16.msra.mxu0 %v3547
  %5907 = vmatpush.bf16.msra.mxu0 %v3543
  %5908 = vmatpush.bf16.msra.mxu0 %v3539
  %5909 = vmatpush.bf16.msra.mxu0 %v3535
  %5910 = vmatpush.bf16.msra.mxu0 %v3531
  %5911 = vmatmul.bf16.gmra.mxu0 %v844
  %v5912 = vpop.f32.mrf.mxu0
  %v5913 = vadd.f32 %v5900, %v5912
  %v5914 = vpop.f32.mrf.mxu0
  %5915 = vdwg.mxu0
  %5916 = vmatpush.bf16.msra.mxu0 %v3591
  %5917 = vmatpush.bf16.msra.mxu0 %v3587
  %5918 = vmatpush.bf16.msra.mxu0 %v3583
  %5919 = vmatpush.bf16.msra.mxu0 %v3579
  %5920 = vmatpush.bf16.msra.mxu0 %v3575
  %5921 = vmatpush.bf16.msra.mxu0 %v3571
  %5922 = vmatpush.bf16.msra.mxu0 %v3567
  %5923 = vmatpush.bf16.msra.mxu0 %v3563
  %5924 = vmatmul.bf16.gmra.mxu0 %v845
  %v5925 = vpop.f32.mrf.mxu0
  %v5926 = vadd.f32 %v5913, %v5925
  %v5927 = vpop.f32.mrf.mxu0
  %5928 = vdwg.mxu0
  %5929 = vmatpush.bf16.msra.mxu0 %v3623
  %5930 = vmatpush.bf16.msra.mxu0 %v3619
  %5931 = vmatpush.bf16.msra.mxu0 %v3615
  %5932 = vmatpush.bf16.msra.mxu0 %v3611
  %5933 = vmatpush.bf16.msra.mxu0 %v3607
  %5934 = vmatpush.bf16.msra.mxu0 %v3603
  %5935 = vmatpush.bf16.msra.mxu0 %v3599
  %5936 = vmatpush.bf16.msra.mxu0 %v3595
  %5937 = vmatmul.bf16.gmra.mxu0 %v846
  %v5938 = vpop.f32.mrf.mxu0
  %v5939 = vadd.f32 %v5926, %v5938
  %v5940 = vpop.f32.mrf.mxu0
  %5941 = vdwg.mxu0
  %5942 = vmatpush.bf16.msra.mxu0 %v3655
  %5943 = vmatpush.bf16.msra.mxu0 %v3651
  %5944 = vmatpush.bf16.msra.mxu0 %v3647
  %5945 = vmatpush.bf16.msra.mxu0 %v3643
  %5946 = vmatpush.bf16.msra.mxu0 %v3639
  %5947 = vmatpush.bf16.msra.mxu0 %v3635
  %5948 = vmatpush.bf16.msra.mxu0 %v3631
  %5949 = vmatpush.bf16.msra.mxu0 %v3627
  %5950 = vmatmul.bf16.gmra.mxu0 %v847
  %v5951 = vpop.f32.mrf.mxu0
  %v5952 = vadd.f32 %v5939, %v5951
  %v5953 = vpop.f32.mrf.mxu0
  %5954 = vdwg.mxu0
  %5955 = vmatpush.bf16.msra.mxu0 %v3687
  %5956 = vmatpush.bf16.msra.mxu0 %v3683
  %5957 = vmatpush.bf16.msra.mxu0 %v3679
  %5958 = vmatpush.bf16.msra.mxu0 %v3675
  %5959 = vmatpush.bf16.msra.mxu0 %v3671
  %5960 = vmatpush.bf16.msra.mxu0 %v3667
  %5961 = vmatpush.bf16.msra.mxu0 %v3663
  %5962 = vmatpush.bf16.msra.mxu0 %v3659
  %5963 = vmatmul.bf16.gmra.mxu0 %v848
  %v5964 = vpop.f32.mrf.mxu0
  %v5965 = vadd.f32 %v5952, %v5964
  %v5966 = vpop.f32.mrf.mxu0
  %5967 = vdwg.mxu0
  %5968 = vmatpush.bf16.msra.mxu0 %v3719
  %5969 = vmatpush.bf16.msra.mxu0 %v3715
  %5970 = vmatpush.bf16.msra.mxu0 %v3711
  %5971 = vmatpush.bf16.msra.mxu0 %v3707
  %5972 = vmatpush.bf16.msra.mxu0 %v3703
  %5973 = vmatpush.bf16.msra.mxu0 %v3699
  %5974 = vmatpush.bf16.msra.mxu0 %v3695
  %5975 = vmatpush.bf16.msra.mxu0 %v3691
  %5976 = vmatmul.bf16.gmra.mxu0 %v849
  %v5977 = vpop.f32.mrf.mxu0
  %v5978 = vadd.f32 %v5965, %v5977
  %v5979 = vpop.f32.mrf.mxu0
  %5980 = vdwg.mxu0
  %5981 = vmatpush.bf16.msra.mxu0 %v3751
  %5982 = vmatpush.bf16.msra.mxu0 %v3747
  %5983 = vmatpush.bf16.msra.mxu0 %v3743
  %5984 = vmatpush.bf16.msra.mxu0 %v3739
  %5985 = vmatpush.bf16.msra.mxu0 %v3735
  %5986 = vmatpush.bf16.msra.mxu0 %v3731
  %5987 = vmatpush.bf16.msra.mxu0 %v3727
  %5988 = vmatpush.bf16.msra.mxu0 %v3723
  %5989 = vmatmul.bf16.gmra.mxu0 %v850
  %v5990 = vpop.f32.mrf.mxu0
  %v5991 = vadd.f32 %v5978, %v5990
  %v5992 = vpop.f32.mrf.mxu0
  %5993 = vdwg.mxu0
  %5994 = vmatpush.bf16.msra.mxu0 %v3783
  %5995 = vmatpush.bf16.msra.mxu0 %v3779
  %5996 = vmatpush.bf16.msra.mxu0 %v3775
  %5997 = vmatpush.bf16.msra.mxu0 %v3771
  %5998 = vmatpush.bf16.msra.mxu0 %v3767
  %5999 = vmatpush.bf16.msra.mxu0 %v3763
  %6000 = vmatpush.bf16.msra.mxu0 %v3759
  %6001 = vmatpush.bf16.msra.mxu0 %v3755
  %6002 = vmatmul.bf16.gmra.mxu0 %v853
  %v6003 = vpop.f32.mrf.mxu0
  %v6004 = vadd.f32 %v5991, %v6003
  %v6005 = vpop.f32.mrf.mxu0
  %6006 = vdwg.mxu0
  %6007 = vmatpush.bf16.msra.mxu0 %v3815
  %6008 = vmatpush.bf16.msra.mxu0 %v3811
  %6009 = vmatpush.bf16.msra.mxu0 %v3807
  %6010 = vmatpush.bf16.msra.mxu0 %v3803
  %6011 = vmatpush.bf16.msra.mxu0 %v3799
  %6012 = vmatpush.bf16.msra.mxu0 %v3795
  %6013 = vmatpush.bf16.msra.mxu0 %v3791
  %6014 = vmatpush.bf16.msra.mxu0 %v3787
  %6015 = vmatmul.bf16.gmra.mxu0 %v854
  %v6016 = vpop.f32.mrf.mxu0
  %v6017 = vadd.f32 %v6004, %v6016
  %v6018 = vpop.f32.mrf.mxu0
  %6019 = vdwg.mxu0
  %6020 = vmatpush.bf16.msra.mxu0 %v3847
  %6021 = vmatpush.bf16.msra.mxu0 %v3843
  %6022 = vmatpush.bf16.msra.mxu0 %v3839
  %6023 = vmatpush.bf16.msra.mxu0 %v3835
  %6024 = vmatpush.bf16.msra.mxu0 %v3831
  %6025 = vmatpush.bf16.msra.mxu0 %v3827
  %6026 = vmatpush.bf16.msra.mxu0 %v3823
  %6027 = vmatpush.bf16.msra.mxu0 %v3819
  %6028 = vmatmul.bf16.gmra.mxu0 %v855
  %v6029 = vpop.f32.mrf.mxu0
  %v6030 = vadd.f32 %v6017, %v6029
  %v6031 = vpop.f32.mrf.mxu0
  %6032 = vdwg.mxu0
  %6033 = vmatpush.bf16.msra.mxu0 %v3879
  %6034 = vmatpush.bf16.msra.mxu0 %v3875
  %6035 = vmatpush.bf16.msra.mxu0 %v3871
  %6036 = vmatpush.bf16.msra.mxu0 %v3867
  %6037 = vmatpush.bf16.msra.mxu0 %v3863
  %6038 = vmatpush.bf16.msra.mxu0 %v3859
  %6039 = vmatpush.bf16.msra.mxu0 %v3855
  %6040 = vmatpush.bf16.msra.mxu0 %v3851
  %6041 = vmatmul.bf16.gmra.mxu0 %v856
  %v6042 = vpop.f32.mrf.mxu0
  %v6043 = vadd.f32 %v6030, %v6042
  %v6044 = vpop.f32.mrf.mxu0
  %6045 = vdwg.mxu0
  %6046 = vmatpush.bf16.msra.mxu0 %v3911
  %6047 = vmatpush.bf16.msra.mxu0 %v3907
  %6048 = vmatpush.bf16.msra.mxu0 %v3903
  %6049 = vmatpush.bf16.msra.mxu0 %v3899
  %6050 = vmatpush.bf16.msra.mxu0 %v3895
  %6051 = vmatpush.bf16.msra.mxu0 %v3891
  %6052 = vmatpush.bf16.msra.mxu0 %v3887
  %6053 = vmatpush.bf16.msra.mxu0 %v3883
  %6054 = vmatmul.bf16.gmra.mxu0 %v857
  %v6055 = vpop.f32.mrf.mxu0
  %v6056 = vadd.f32 %v6043, %v6055
  %v6057 = vpop.f32.mrf.mxu0
  %6058 = vdwg.mxu0
  %6059 = vmatpush.bf16.msra.mxu0 %v3943
  %6060 = vmatpush.bf16.msra.mxu0 %v3939
  %6061 = vmatpush.bf16.msra.mxu0 %v3935
  %6062 = vmatpush.bf16.msra.mxu0 %v3931
  %6063 = vmatpush.bf16.msra.mxu0 %v3927
  %6064 = vmatpush.bf16.msra.mxu0 %v3923
  %6065 = vmatpush.bf16.msra.mxu0 %v3919
  %6066 = vmatpush.bf16.msra.mxu0 %v3915
  %6067 = vmatmul.bf16.gmra.mxu0 %v858
  %v6068 = vpop.f32.mrf.mxu0
  %v6069 = vadd.f32 %v6056, %v6068
  %v6070 = vpop.f32.mrf.mxu0
  %6071 = vdwg.mxu0
  %6072 = vmatpush.bf16.msra.mxu0 %v3975
  %6073 = vmatpush.bf16.msra.mxu0 %v3971
  %6074 = vmatpush.bf16.msra.mxu0 %v3967
  %6075 = vmatpush.bf16.msra.mxu0 %v3963
  %6076 = vmatpush.bf16.msra.mxu0 %v3959
  %6077 = vmatpush.bf16.msra.mxu0 %v3955
  %6078 = vmatpush.bf16.msra.mxu0 %v3951
  %6079 = vmatpush.bf16.msra.mxu0 %v3947
  %6080 = vmatmul.bf16.gmra.mxu0 %v859
  %v6081 = vpop.f32.mrf.mxu0
  %v6082 = vadd.f32 %v6069, %v6081
  %v6083 = vpop.f32.mrf.mxu0
  %6084 = vdwg.mxu0
  %6085 = vmatpush.bf16.msra.mxu0 %v4007
  %6086 = vmatpush.bf16.msra.mxu0 %v4003
  %6087 = vmatpush.bf16.msra.mxu0 %v3999
  %6088 = vmatpush.bf16.msra.mxu0 %v3995
  %6089 = vmatpush.bf16.msra.mxu0 %v3991
  %6090 = vmatpush.bf16.msra.mxu0 %v3987
  %6091 = vmatpush.bf16.msra.mxu0 %v3983
  %6092 = vmatpush.bf16.msra.mxu0 %v3979
  %6093 = vmatmul.bf16.gmra.mxu0 %v860
  %v6094 = vpop.f32.mrf.mxu0
  %v6095 = vadd.f32 %v6082, %v6094
  %v6096 = vpop.f32.mrf.mxu0
  %6097 = vdwg.mxu0
  %6098 = vmatpush.bf16.msra.mxu0 0
  %6099 = vmatpush.bf16.msra.mxu0 0
  %6100 = vmatpush.bf16.msra.mxu0 0
  %6101 = vmatpush.bf16.msra.mxu0 0
  %6102 = vmatpush.bf16.msra.mxu0 %v4023
  %6103 = vmatpush.bf16.msra.mxu0 %v4019
  %6104 = vmatpush.bf16.msra.mxu0 %v4015
  %6105 = vmatpush.bf16.msra.mxu0 %v4011
  %6106 = vmatmul.bf16.gmra.mxu0 %v4809
  %v6107 = vpop.f32.mrf.mxu0
  %v6108 = vadd.f32 %v6095, %v6107
  %v6109 = vpop.f32.mrf.mxu0
  %6110 = vdwg.mxu0
  %v6111 = vtanh.pop %v5133
  %v6112 = vtanh.pop %v5458
  %v6113 = vtanh.pop %v5783
  %v6114 = vtanh.pop %v6108
  %v6115 = vpack.c.bf16 %v6111, %v6111
  %v6116 = vpack.c.bf16 %v6112, %v6112
  %v6117 = vpack.c.bf16 %v6113, %v6113
  %v6118 = vpack.c.bf16 %v6114, %v6114
  %v6119 = vld [vmem:[%s4] sm:$0xff]
  %v6120 = vld [vmem:[%s4 + $0x8] sm:$0xff]
  %v6121 = vld [vmem:[%s4 + $0x10] sm:$0xff]
  %v6122 = vld [vmem:[%s4 + $0x18] sm:$0xff]
  %v6123 = vld [vmem:[%s4 + $0x20] sm:$0xff]
  %v6124 = vld [vmem:[%s4 + $0x28] sm:$0xff]
  %v6125 = vld [vmem:[%s4 + $0x30] sm:$0xff]
  %v6126 = vld [vmem:[%s4 + $0x38] sm:$0xff]
  %v6127 = vld [vmem:[%s4 + $0x40] sm:$0xff]
  %v6128 = vld [vmem:[%s4 + $0x48] sm:$0xff]
  %v6129 = vld [vmem:[%s4 + $0x50] sm:$0xff]
  %v6130 = vld [vmem:[%s4 + $0x58] sm:$0xff]
  %v6131 = vld [vmem:[%s4 + $0x60] sm:$0xff]
  %v6132 = vld [vmem:[%s4 + $0x68] sm:$0xff]
  %v6133 = vld [vmem:[%s4 + $0x70] sm:$0xff]
  %v6134 = vld [vmem:[%s4 + $0x78] sm:$0xff]
  %v6135 = vld [vmem:[%s4 + $0x80] sm:$0xff]
  %v6136 = vld [vmem:[%s4 + $0x88] sm:$0xff]
  %v6137 = vld [vmem:[%s4 + $0x90] sm:$0xff]
  %v6138 = vld [vmem:[%s4 + $0x98] sm:$0xff]
  %v6139 = vld [vmem:[%s4 + $0xa0] sm:$0xff]
  %v6140 = vld [vmem:[%s4 + $0xa8] sm:$0xff]
  %v6141 = vld [vmem:[%s4 + $0xb0] sm:$0xff]
  %v6142 = vld [vmem:[%s4 + $0xb8] sm:$0xff]
  %v6143 = vld [vmem:[%s4 + $0xc0] sm:$0xff]
  %v6144 = vld [vmem:[%s4 + $0xc8] sm:$0xff]
  %v6145 = vld [vmem:[%s4 + $0xd0] sm:$0xff]
  %v6146 = vld [vmem:[%s4 + $0xd8] sm:$0xff]
  %v6147 = vld [vmem:[%s4 + $0xe0] sm:$0xff]
  %v6148 = vld [vmem:[%s4 + $0xe8] sm:$0xff]
  %v6149 = vld [vmem:[%s4 + $0xf0] sm:$0xff]
  %v6150 = vld [vmem:[%s4 + $0xf8] sm:$0xff]
  %v6151 = vld [vmem:[%s4 + $0x100] sm:$0xff]
  %v6152 = vld [vmem:[%s4 + $0x108] sm:$0xff]
  %v6153 = vld [vmem:[%s4 + $0x110] sm:$0xff]
  %v6154 = vld [vmem:[%s4 + $0x118] sm:$0xff]
  %v6155 = vld [vmem:[%s4 + $0x120] sm:$0xff]
  %v6156 = vld [vmem:[%s4 + $0x128] sm:$0xff]
  %v6157 = vld [vmem:[%s4 + $0x130] sm:$0xff]
  %v6158 = vld [vmem:[%s4 + $0x138] sm:$0xff]
  %v6159 = vld [vmem:[%s4 + $0x140] sm:$0xff]
  %v6160 = vld [vmem:[%s4 + $0x148] sm:$0xff]
  %v6161 = vld [vmem:[%s4 + $0x150] sm:$0xff]
  %v6162 = vld [vmem:[%s4 + $0x158] sm:$0xff]
  %v6163 = vld [vmem:[%s4 + $0x160] sm:$0xff]
  %v6164 = vld [vmem:[%s4 + $0x168] sm:$0xff]
  %v6165 = vld [vmem:[%s4 + $0x170] sm:$0xff]
  %v6166 = vld [vmem:[%s4 + $0x178] sm:$0xff]
  %v6167 = vld [vmem:[%s4 + $0x180] sm:$0xff]
  %v6168 = vld [vmem:[%s4 + $0x188] sm:$0xff]
  %v6169 = vld [vmem:[%s4 + $0x190] sm:$0xff]
  %v6170 = vld [vmem:[%s4 + $0x198] sm:$0xff]
  %v6171 = vld [vmem:[%s4 + $0x1a0] sm:$0xff]
  %v6172 = vld [vmem:[%s4 + $0x1a8] sm:$0xff]
  %v6173 = vld [vmem:[%s4 + $0x1b0] sm:$0xff]
  %v6174 = vld [vmem:[%s4 + $0x1b8] sm:$0xff]
  %v6175 = vld [vmem:[%s4 + $0x1c0] sm:$0xff]
  %v6176 = vld [vmem:[%s4 + $0x1c8] sm:$0xff]
  %v6177 = vld [vmem:[%s4 + $0x1d0] sm:$0xff]
  %v6178 = vld [vmem:[%s4 + $0x1d8] sm:$0xff]
  %v6179 = vld [vmem:[%s4 + $0x1e0] sm:$0xff]
  %v6180 = vld [vmem:[%s4 + $0x1e8] sm:$0xff]
  %v6181 = vld [vmem:[%s4 + $0x1f0] sm:$0xff]
  %v6182 = vld [vmem:[%s4 + $0x1f8] sm:$0xff]
  %v6183 = vld [vmem:[%s4 + $0x200] sm:$0xff]
  %v6184 = vld [vmem:[%s4 + $0x208] sm:$0xff]
  %v6185 = vld [vmem:[%s4 + $0x210] sm:$0xff]
  %v6186 = vld [vmem:[%s4 + $0x218] sm:$0xff]
  %v6187 = vld [vmem:[%s4 + $0x220] sm:$0xff]
  %v6188 = vld [vmem:[%s4 + $0x228] sm:$0xff]
  %v6189 = vld [vmem:[%s4 + $0x230] sm:$0xff]
  %v6190 = vld [vmem:[%s4 + $0x238] sm:$0xff]
  %v6191 = vld [vmem:[%s4 + $0x240] sm:$0xff]
  %v6192 = vld [vmem:[%s4 + $0x248] sm:$0xff]
  %v6193 = vld [vmem:[%s4 + $0x250] sm:$0xff]
  %v6194 = vld [vmem:[%s4 + $0x258] sm:$0xff]
  %v6195 = vld [vmem:[%s4 + $0x260] sm:$0xff]
  %v6196 = vld [vmem:[%s4 + $0x268] sm:$0xff]
  %v6197 = vld [vmem:[%s4 + $0x270] sm:$0xff]
  %v6198 = vld [vmem:[%s4 + $0x278] sm:$0xff]
  %v6199 = vld [vmem:[%s4 + $0x280] sm:$0xff]
  %v6200 = vld [vmem:[%s4 + $0x288] sm:$0xff]
  %v6201 = vld [vmem:[%s4 + $0x290] sm:$0xff]
  %v6202 = vld [vmem:[%s4 + $0x298] sm:$0xff]
  %v6203 = vld [vmem:[%s4 + $0x2a0] sm:$0xff]
  %v6204 = vld [vmem:[%s4 + $0x2a8] sm:$0xff]
  %v6205 = vld [vmem:[%s4 + $0x2b0] sm:$0xff]
  %v6206 = vld [vmem:[%s4 + $0x2b8] sm:$0xff]
  %v6207 = vld [vmem:[%s4 + $0x2c0] sm:$0xff]
  %v6208 = vld [vmem:[%s4 + $0x2c8] sm:$0xff]
  %v6209 = vld [vmem:[%s4 + $0x2d0] sm:$0xff]
  %v6210 = vld [vmem:[%s4 + $0x2d8] sm:$0xff]
  %v6211 = vld [vmem:[%s4 + $0x2e0] sm:$0xff]
  %v6212 = vld [vmem:[%s4 + $0x2e8] sm:$0xff]
  %v6213 = vld [vmem:[%s4 + $0x2f0] sm:$0xff]
  %v6214 = vld [vmem:[%s4 + $0x2f8] sm:$0xff]
  %v6215 = vld [vmem:[%s4 + $0x300] sm:$0xff]
  %v6216 = vld [vmem:[%s4 + $0x308] sm:$0xff]
  %v6217 = vld [vmem:[%s4 + $0x310] sm:$0xff]
  %v6218 = vld [vmem:[%s4 + $0x318] sm:$0xff]
  %v6219 = vld [vmem:[%s4 + $0x320] sm:$0xff]
  %v6220 = vld [vmem:[%s4 + $0x328] sm:$0xff]
  %v6221 = vld [vmem:[%s4 + $0x330] sm:$0xff]
  %v6222 = vld [vmem:[%s4 + $0x338] sm:$0xff]
  %v6223 = vld [vmem:[%s4 + $0x340] sm:$0xff]
  %v6224 = vld [vmem:[%s4 + $0x348] sm:$0xff]
  %v6225 = vld [vmem:[%s4 + $0x350] sm:$0xff]
  %v6226 = vld [vmem:[%s4 + $0x358] sm:$0xff]
  %v6227 = vld [vmem:[%s4 + $0x360] sm:$0xff]
  %v6228 = vld [vmem:[%s4 + $0x368] sm:$0xff]
  %v6229 = vld [vmem:[%s4 + $0x370] sm:$0xff]
  %v6230 = vld [vmem:[%s4 + $0x378] sm:$0xff]
  %v6231 = vld [vmem:[%s4 + $0x380] sm:$0xff]
  %v6232 = vld [vmem:[%s4 + $0x388] sm:$0xff]
  %v6233 = vld [vmem:[%s4 + $0x390] sm:$0xff]
  %v6234 = vld [vmem:[%s4 + $0x398] sm:$0xff]
  %v6235 = vld [vmem:[%s4 + $0x3a0] sm:$0xff]
  %v6236 = vld [vmem:[%s4 + $0x3a8] sm:$0xff]
  %v6237 = vld [vmem:[%s4 + $0x3b0] sm:$0xff]
  %v6238 = vld [vmem:[%s4 + $0x3b8] sm:$0xff]
  %v6239 = vld [vmem:[%s4 + $0x3c0] sm:$0xff]
  %v6240 = vld [vmem:[%s4 + $0x3c8] sm:$0xff]
  %v6241 = vld [vmem:[%s4 + $0x3d0] sm:$0xff]
  %v6242 = vld [vmem:[%s4 + $0x3d8] sm:$0xff]
  %v6243 = vld [vmem:[%s4 + $0x3e0] sm:$0xff]
  %v6244 = vld [vmem:[%s4 + $0x3e8] sm:$0xff]
  %v6245 = vld [vmem:[%s4 + $0x3f0] sm:$0xff]
  %v6246 = vld [vmem:[%s4 + $0x3f8] sm:$0xff]
  %v6247 = vld [vmem:[%s1] sm:$0x1]
  %v6248 = vld [vmem:[%s5] sm:$0xff]
  %v6249 = vld [vmem:[%s5 + $0x8] sm:$0xff]
  %v6250 = vld [vmem:[%s5 + $0x10] sm:$0xff]
  %v6251 = vld [vmem:[%s5 + $0x18] sm:$0xff]
  %v6252 = vld [vmem:[%s5 + $0x20] sm:$0xff]
  %v6253 = vld [vmem:[%s5 + $0x28] sm:$0xff]
  %v6254 = vld [vmem:[%s5 + $0x30] sm:$0xff]
  %v6255 = vld [vmem:[%s5 + $0x38] sm:$0xff]
  %v6256 = vld [vmem:[%s5 + $0x40] sm:$0xff]
  %v6257 = vld [vmem:[%s5 + $0x48] sm:$0xff]
  %v6258 = vld [vmem:[%s5 + $0x50] sm:$0xff]
  %v6259 = vld [vmem:[%s5 + $0x58] sm:$0xff]
  %v6260 = vld [vmem:[%s5 + $0x60] sm:$0xff]
  %v6261 = vld [vmem:[%s5 + $0x68] sm:$0xff]
  %v6262 = vld [vmem:[%s5 + $0x70] sm:$0xff]
  %v6263 = vld [vmem:[%s5 + $0x78] sm:$0xff]
  %v6264 = vld [vmem:[%s5 + $0x80] sm:$0xff]
  %v6265 = vld [vmem:[%s5 + $0x88] sm:$0xff]
  %v6266 = vld [vmem:[%s5 + $0x90] sm:$0xff]
  %v6267 = vld [vmem:[%s5 + $0x98] sm:$0xff]
  %v6268 = vld [vmem:[%s5 + $0xa0] sm:$0xff]
  %v6269 = vld [vmem:[%s5 + $0xa8] sm:$0xff]
  %v6270 = vld [vmem:[%s5 + $0xb0] sm:$0xff]
  %v6271 = vld [vmem:[%s5 + $0xb8] sm:$0xff]
  %v6272 = vld [vmem:[%s5 + $0xc0] sm:$0xff]
  %v6273 = vld [vmem:[%s5 + $0xc8] sm:$0xff]
  %v6274 = vld [vmem:[%s5 + $0xd0] sm:$0xff]
  %v6275 = vld [vmem:[%s5 + $0xd8] sm:$0xff]
  %v6276 = vld [vmem:[%s5 + $0xe0] sm:$0xff]
  %v6277 = vld [vmem:[%s5 + $0xe8] sm:$0xff]
  %v6278 = vld [vmem:[%s5 + $0xf0] sm:$0xff]
  %v6279 = vld [vmem:[%s5 + $0xf8] sm:$0xff]
  %v6312 = vunpack.c.l.b16 %v6248
  %v6313 = vunpack.c.h.b16 %v6248
  %v6314 = vunpack.c.l.b16 %v6249
  %v6315 = vunpack.c.h.b16 %v6249
  %v6316 = vunpack.c.l.b16 %v6250
  %v6317 = vunpack.c.h.b16 %v6250
  %v6318 = vunpack.c.l.b16 %v6251
  %v6319 = vunpack.c.h.b16 %v6251
  %v6320 = vunpack.c.l.b16 %v6252
  %v6321 = vunpack.c.h.b16 %v6252
  %v6322 = vunpack.c.l.b16 %v6253
  %v6323 = vunpack.c.h.b16 %v6253
  %v6324 = vunpack.c.l.b16 %v6254
  %v6325 = vunpack.c.h.b16 %v6254
  %v6326 = vunpack.c.l.b16 %v6255
  %v6327 = vunpack.c.h.b16 %v6255
  %v6328 = vunpack.c.l.b16 %v6256
  %v6329 = vunpack.c.h.b16 %v6256
  %v6330 = vunpack.c.l.b16 %v6257
  %v6331 = vunpack.c.h.b16 %v6257
  %v6332 = vunpack.c.l.b16 %v6258
  %v6333 = vunpack.c.h.b16 %v6258
  %v6334 = vunpack.c.l.b16 %v6259
  %v6335 = vunpack.c.h.b16 %v6259
  %v6336 = vunpack.c.l.b16 %v6260
  %v6337 = vunpack.c.h.b16 %v6260
  %v6338 = vunpack.c.l.b16 %v6261
  %v6339 = vunpack.c.h.b16 %v6261
  %v6340 = vunpack.c.l.b16 %v6262
  %v6341 = vunpack.c.h.b16 %v6262
  %v6342 = vunpack.c.l.b16 %v6263
  %v6343 = vunpack.c.h.b16 %v6263
  %v6344 = vunpack.c.l.b16 %v6264
  %v6345 = vunpack.c.h.b16 %v6264
  %v6346 = vunpack.c.l.b16 %v6265
  %v6347 = vunpack.c.h.b16 %v6265
  %v6348 = vunpack.c.l.b16 %v6266
  %v6349 = vunpack.c.h.b16 %v6266
  %v6350 = vunpack.c.l.b16 %v6267
  %v6351 = vunpack.c.h.b16 %v6267
  %v6352 = vunpack.c.l.b16 %v6268
  %v6353 = vunpack.c.h.b16 %v6268
  %v6354 = vunpack.c.l.b16 %v6269
  %v6355 = vunpack.c.h.b16 %v6269
  %v6356 = vunpack.c.l.b16 %v6270
  %v6357 = vunpack.c.h.b16 %v6270
  %v6358 = vunpack.c.l.b16 %v6271
  %v6359 = vunpack.c.h.b16 %v6271
  %v6360 = vunpack.c.l.b16 %v6272
  %v6361 = vunpack.c.h.b16 %v6272
  %v6362 = vunpack.c.l.b16 %v6273
  %v6363 = vunpack.c.h.b16 %v6273
  %v6364 = vunpack.c.l.b16 %v6274
  %v6365 = vunpack.c.h.b16 %v6274
  %v6366 = vunpack.c.l.b16 %v6275
  %v6367 = vunpack.c.h.b16 %v6275
  %v6368 = vunpack.c.l.b16 %v6276
  %v6369 = vunpack.c.h.b16 %v6276
  %v6370 = vunpack.c.l.b16 %v6277
  %v6371 = vunpack.c.h.b16 %v6277
  %v6372 = vunpack.c.l.b16 %v6278
  %v6373 = vunpack.c.h.b16 %v6278
  %v6374 = vunpack.c.l.b16 %v6279
  %v6375 = vunpack.c.h.b16 %v6279
  %v6376 = vpack.c.b16 %v6316, %v6312
  %v6377 = vpack.c.b16 %v6317, %v6313
  %v6378 = vpack.c.b16 %v6318, %v6314
  %v6379 = vpack.c.b16 %v6319, %v6315
  %v6380 = vpack.c.b16 %v6324, %v6320
  %v6381 = vpack.c.b16 %v6325, %v6321
  %v6382 = vpack.c.b16 %v6326, %v6322
  %v6383 = vpack.c.b16 %v6327, %v6323
  %v6384 = vpack.c.b16 %v6332, %v6328
  %v6385 = vpack.c.b16 %v6333, %v6329
  %v6386 = vpack.c.b16 %v6334, %v6330
  %v6387 = vpack.c.b16 %v6335, %v6331
  %v6388 = vpack.c.b16 %v6340, %v6336
  %v6389 = vpack.c.b16 %v6341, %v6337
  %v6390 = vpack.c.b16 %v6342, %v6338
  %v6391 = vpack.c.b16 %v6343, %v6339
  %v6392 = vpack.c.b16 %v6348, %v6344
  %v6393 = vpack.c.b16 %v6349, %v6345
  %v6394 = vpack.c.b16 %v6350, %v6346
  %v6395 = vpack.c.b16 %v6351, %v6347
  %v6396 = vpack.c.b16 %v6356, %v6352
  %v6397 = vpack.c.b16 %v6357, %v6353
  %v6398 = vpack.c.b16 %v6358, %v6354
  %v6399 = vpack.c.b16 %v6359, %v6355
  %v6400 = vpack.c.b16 %v6364, %v6360
  %v6401 = vpack.c.b16 %v6365, %v6361
  %v6402 = vpack.c.b16 %v6366, %v6362
  %v6403 = vpack.c.b16 %v6367, %v6363
  %v6404 = vpack.c.b16 %v6372, %v6368
  %v6405 = vpack.c.b16 %v6373, %v6369
  %v6406 = vpack.c.b16 %v6374, %v6370
  %v6407 = vpack.c.b16 %v6375, %v6371
  %6440 = vmatpush.bf16.msra.mxu0 %v6404
  %6441 = vmatpush.bf16.msra.mxu0 %v6400
  %6442 = vmatpush.bf16.msra.mxu0 %v6396
  %6443 = vmatpush.bf16.msra.mxu0 %v6392
  %6444 = vmatpush.bf16.msra.mxu0 %v6388
  %6445 = vmatpush.bf16.msra.mxu0 %v6384
  %6446 = vmatpush.bf16.msra.mxu0 %v6380
  %6447 = vmatpush.bf16.msra.mxu0 %v6376
  %6448 = vmatmul.bf16.gmra.mxu0 %v6247
  %v6449 = vpop.f32.mrf.mxu0
  %v6450 = vadd.f32 0.0, %v6449
  %v6451 = vpop.f32.mrf.mxu0
  %6452 = vdwg.mxu0
  %6453 = vmatpush.bf16.msra.mxu0 %v6405
  %6454 = vmatpush.bf16.msra.mxu0 %v6401
  %6455 = vmatpush.bf16.msra.mxu0 %v6397
  %6456 = vmatpush.bf16.msra.mxu0 %v6393
  %6457 = vmatpush.bf16.msra.mxu0 %v6389
  %6458 = vmatpush.bf16.msra.mxu0 %v6385
  %6459 = vmatpush.bf16.msra.mxu0 %v6381
  %6460 = vmatpush.bf16.msra.mxu0 %v6377
  %6461 = vmatmul.bf16.gmra.mxu0 %v6247
  %v6462 = vpop.f32.mrf.mxu0
  %v6463 = vadd.f32 0.0, %v6462
  %v6464 = vpop.f32.mrf.mxu0
  %6465 = vdwg.mxu0
  %6466 = vmatpush.bf16.msra.mxu0 %v6406
  %6467 = vmatpush.bf16.msra.mxu0 %v6402
  %6468 = vmatpush.bf16.msra.mxu0 %v6398
  %6469 = vmatpush.bf16.msra.mxu0 %v6394
  %6470 = vmatpush.bf16.msra.mxu0 %v6390
  %6471 = vmatpush.bf16.msra.mxu0 %v6386
  %6472 = vmatpush.bf16.msra.mxu0 %v6382
  %6473 = vmatpush.bf16.msra.mxu0 %v6378
  %6474 = vmatmul.bf16.gmra.mxu0 %v6247
  %v6475 = vpop.f32.mrf.mxu0
  %v6476 = vadd.f32 0.0, %v6475
  %v6477 = vpop.f32.mrf.mxu0
  %6478 = vdwg.mxu0
  %6479 = vmatpush.bf16.msra.mxu0 %v6407
  %6480 = vmatpush.bf16.msra.mxu0 %v6403
  %6481 = vmatpush.bf16.msra.mxu0 %v6399
  %6482 = vmatpush.bf16.msra.mxu0 %v6395
  %6483 = vmatpush.bf16.msra.mxu0 %v6391
  %6484 = vmatpush.bf16.msra.mxu0 %v6387
  %6485 = vmatpush.bf16.msra.mxu0 %v6383
  %6486 = vmatpush.bf16.msra.mxu0 %v6379
  %6487 = vmatmul.bf16.gmra.mxu0 %v6247
  %v6488 = vpop.f32.mrf.mxu0
  %v6489 = vadd.f32 0.0, %v6488
  %v6490 = vpop.f32.mrf.mxu0
  %6491 = vdwg.mxu0
  %v6620 = vunpack.c.l.b16 %v6119
  %v6621 = vunpack.c.h.b16 %v6119
  %v6622 = vunpack.c.l.b16 %v6120
  %v6623 = vunpack.c.h.b16 %v6120
  %v6624 = vunpack.c.l.b16 %v6121
  %v6625 = vunpack.c.h.b16 %v6121
  %v6626 = vunpack.c.l.b16 %v6122
  %v6627 = vunpack.c.h.b16 %v6122
  %v6628 = vunpack.c.l.b16 %v6123
  %v6629 = vunpack.c.h.b16 %v6123
  %v6630 = vunpack.c.l.b16 %v6124
  %v6631 = vunpack.c.h.b16 %v6124
  %v6632 = vunpack.c.l.b16 %v6125
  %v6633 = vunpack.c.h.b16 %v6125
  %v6634 = vunpack.c.l.b16 %v6126
  %v6635 = vunpack.c.h.b16 %v6126
  %v6636 = vunpack.c.l.b16 %v6127
  %v6637 = vunpack.c.h.b16 %v6127
  %v6638 = vunpack.c.l.b16 %v6128
  %v6639 = vunpack.c.h.b16 %v6128
  %v6640 = vunpack.c.l.b16 %v6129
  %v6641 = vunpack.c.h.b16 %v6129
  %v6642 = vunpack.c.l.b16 %v6130
  %v6643 = vunpack.c.h.b16 %v6130
  %v6644 = vunpack.c.l.b16 %v6131
  %v6645 = vunpack.c.h.b16 %v6131
  %v6646 = vunpack.c.l.b16 %v6132
  %v6647 = vunpack.c.h.b16 %v6132
  %v6648 = vunpack.c.l.b16 %v6133
  %v6649 = vunpack.c.h.b16 %v6133
  %v6650 = vunpack.c.l.b16 %v6134
  %v6651 = vunpack.c.h.b16 %v6134
  %v6652 = vunpack.c.l.b16 %v6135
  %v6653 = vunpack.c.h.b16 %v6135
  %v6654 = vunpack.c.l.b16 %v6136
  %v6655 = vunpack.c.h.b16 %v6136
  %v6656 = vunpack.c.l.b16 %v6137
  %v6657 = vunpack.c.h.b16 %v6137
  %v6658 = vunpack.c.l.b16 %v6138
  %v6659 = vunpack.c.h.b16 %v6138
  %v6660 = vunpack.c.l.b16 %v6139
  %v6661 = vunpack.c.h.b16 %v6139
  %v6662 = vunpack.c.l.b16 %v6140
  %v6663 = vunpack.c.h.b16 %v6140
  %v6664 = vunpack.c.l.b16 %v6141
  %v6665 = vunpack.c.h.b16 %v6141
  %v6666 = vunpack.c.l.b16 %v6142
  %v6667 = vunpack.c.h.b16 %v6142
  %v6668 = vunpack.c.l.b16 %v6143
  %v6669 = vunpack.c.h.b16 %v6143
  %v6670 = vunpack.c.l.b16 %v6144
  %v6671 = vunpack.c.h.b16 %v6144
  %v6672 = vunpack.c.l.b16 %v6145
  %v6673 = vunpack.c.h.b16 %v6145
  %v6674 = vunpack.c.l.b16 %v6146
  %v6675 = vunpack.c.h.b16 %v6146
  %v6676 = vunpack.c.l.b16 %v6147
  %v6677 = vunpack.c.h.b16 %v6147
  %v6678 = vunpack.c.l.b16 %v6148
  %v6679 = vunpack.c.h.b16 %v6148
  %v6680 = vunpack.c.l.b16 %v6149
  %v6681 = vunpack.c.h.b16 %v6149
  %v6682 = vunpack.c.l.b16 %v6150
  %v6683 = vunpack.c.h.b16 %v6150
  %v6684 = vunpack.c.l.b16 %v6151
  %v6685 = vunpack.c.h.b16 %v6151
  %v6686 = vunpack.c.l.b16 %v6152
  %v6687 = vunpack.c.h.b16 %v6152
  %v6688 = vunpack.c.l.b16 %v6153
  %v6689 = vunpack.c.h.b16 %v6153
  %v6690 = vunpack.c.l.b16 %v6154
  %v6691 = vunpack.c.h.b16 %v6154
  %v6692 = vunpack.c.l.b16 %v6155
  %v6693 = vunpack.c.h.b16 %v6155
  %v6694 = vunpack.c.l.b16 %v6156
  %v6695 = vunpack.c.h.b16 %v6156
  %v6696 = vunpack.c.l.b16 %v6157
  %v6697 = vunpack.c.h.b16 %v6157
  %v6698 = vunpack.c.l.b16 %v6158
  %v6699 = vunpack.c.h.b16 %v6158
  %v6700 = vunpack.c.l.b16 %v6159
  %v6701 = vunpack.c.h.b16 %v6159
  %v6702 = vunpack.c.l.b16 %v6160
  %v6703 = vunpack.c.h.b16 %v6160
  %v6704 = vunpack.c.l.b16 %v6161
  %v6705 = vunpack.c.h.b16 %v6161
  %v6706 = vunpack.c.l.b16 %v6162
  %v6707 = vunpack.c.h.b16 %v6162
  %v6708 = vunpack.c.l.b16 %v6163
  %v6709 = vunpack.c.h.b16 %v6163
  %v6710 = vunpack.c.l.b16 %v6164
  %v6711 = vunpack.c.h.b16 %v6164
  %v6712 = vunpack.c.l.b16 %v6165
  %v6713 = vunpack.c.h.b16 %v6165
  %v6714 = vunpack.c.l.b16 %v6166
  %v6715 = vunpack.c.h.b16 %v6166
  %v6716 = vunpack.c.l.b16 %v6167
  %v6717 = vunpack.c.h.b16 %v6167
  %v6718 = vunpack.c.l.b16 %v6168
  %v6719 = vunpack.c.h.b16 %v6168
  %v6720 = vunpack.c.l.b16 %v6169
  %v6721 = vunpack.c.h.b16 %v6169
  %v6722 = vunpack.c.l.b16 %v6170
  %v6723 = vunpack.c.h.b16 %v6170
  %v6724 = vunpack.c.l.b16 %v6171
  %v6725 = vunpack.c.h.b16 %v6171
  %v6726 = vunpack.c.l.b16 %v6172
  %v6727 = vunpack.c.h.b16 %v6172
  %v6728 = vunpack.c.l.b16 %v6173
  %v6729 = vunpack.c.h.b16 %v6173
  %v6730 = vunpack.c.l.b16 %v6174
  %v6731 = vunpack.c.h.b16 %v6174
  %v6732 = vunpack.c.l.b16 %v6175
  %v6733 = vunpack.c.h.b16 %v6175
  %v6734 = vunpack.c.l.b16 %v6176
  %v6735 = vunpack.c.h.b16 %v6176
  %v6736 = vunpack.c.l.b16 %v6177
  %v6737 = vunpack.c.h.b16 %v6177
  %v6738 = vunpack.c.l.b16 %v6178
  %v6739 = vunpack.c.h.b16 %v6178
  %v6740 = vunpack.c.l.b16 %v6179
  %v6741 = vunpack.c.h.b16 %v6179
  %v6742 = vunpack.c.l.b16 %v6180
  %v6743 = vunpack.c.h.b16 %v6180
  %v6744 = vunpack.c.l.b16 %v6181
  %v6745 = vunpack.c.h.b16 %v6181
  %v6746 = vunpack.c.l.b16 %v6182
  %v6747 = vunpack.c.h.b16 %v6182
  %v6748 = vunpack.c.l.b16 %v6183
  %v6749 = vunpack.c.h.b16 %v6183
  %v6750 = vunpack.c.l.b16 %v6184
  %v6751 = vunpack.c.h.b16 %v6184
  %v6752 = vunpack.c.l.b16 %v6185
  %v6753 = vunpack.c.h.b16 %v6185
  %v6754 = vunpack.c.l.b16 %v6186
  %v6755 = vunpack.c.h.b16 %v6186
  %v6756 = vunpack.c.l.b16 %v6187
  %v6757 = vunpack.c.h.b16 %v6187
  %v6758 = vunpack.c.l.b16 %v6188
  %v6759 = vunpack.c.h.b16 %v6188
  %v6760 = vunpack.c.l.b16 %v6189
  %v6761 = vunpack.c.h.b16 %v6189
  %v6762 = vunpack.c.l.b16 %v6190
  %v6763 = vunpack.c.h.b16 %v6190
  %v6764 = vunpack.c.l.b16 %v6191
  %v6765 = vunpack.c.h.b16 %v6191
  %v6766 = vunpack.c.l.b16 %v6192
  %v6767 = vunpack.c.h.b16 %v6192
  %v6768 = vunpack.c.l.b16 %v6193
  %v6769 = vunpack.c.h.b16 %v6193
  %v6770 = vunpack.c.l.b16 %v6194
  %v6771 = vunpack.c.h.b16 %v6194
  %v6772 = vunpack.c.l.b16 %v6195
  %v6773 = vunpack.c.h.b16 %v6195
  %v6774 = vunpack.c.l.b16 %v6196
  %v6775 = vunpack.c.h.b16 %v6196
  %v6776 = vunpack.c.l.b16 %v6197
  %v6777 = vunpack.c.h.b16 %v6197
  %v6778 = vunpack.c.l.b16 %v6198
  %v6779 = vunpack.c.h.b16 %v6198
  %v6780 = vunpack.c.l.b16 %v6199
  %v6781 = vunpack.c.h.b16 %v6199
  %v6782 = vunpack.c.l.b16 %v6200
  %v6783 = vunpack.c.h.b16 %v6200
  %v6784 = vunpack.c.l.b16 %v6201
  %v6785 = vunpack.c.h.b16 %v6201
  %v6786 = vunpack.c.l.b16 %v6202
  %v6787 = vunpack.c.h.b16 %v6202
  %v6788 = vunpack.c.l.b16 %v6203
  %v6789 = vunpack.c.h.b16 %v6203
  %v6790 = vunpack.c.l.b16 %v6204
  %v6791 = vunpack.c.h.b16 %v6204
  %v6792 = vunpack.c.l.b16 %v6205
  %v6793 = vunpack.c.h.b16 %v6205
  %v6794 = vunpack.c.l.b16 %v6206
  %v6795 = vunpack.c.h.b16 %v6206
  %v6796 = vunpack.c.l.b16 %v6207
  %v6797 = vunpack.c.h.b16 %v6207
  %v6798 = vunpack.c.l.b16 %v6208
  %v6799 = vunpack.c.h.b16 %v6208
  %v6800 = vunpack.c.l.b16 %v6209
  %v6801 = vunpack.c.h.b16 %v6209
  %v6802 = vunpack.c.l.b16 %v6210
  %v6803 = vunpack.c.h.b16 %v6210
  %v6804 = vunpack.c.l.b16 %v6211
  %v6805 = vunpack.c.h.b16 %v6211
  %v6806 = vunpack.c.l.b16 %v6212
  %v6807 = vunpack.c.h.b16 %v6212
  %v6808 = vunpack.c.l.b16 %v6213
  %v6809 = vunpack.c.h.b16 %v6213
  %v6810 = vunpack.c.l.b16 %v6214
  %v6811 = vunpack.c.h.b16 %v6214
  %v6812 = vunpack.c.l.b16 %v6215
  %v6813 = vunpack.c.h.b16 %v6215
  %v6814 = vunpack.c.l.b16 %v6216
  %v6815 = vunpack.c.h.b16 %v6216
  %v6816 = vunpack.c.l.b16 %v6217
  %v6817 = vunpack.c.h.b16 %v6217
  %v6818 = vunpack.c.l.b16 %v6218
  %v6819 = vunpack.c.h.b16 %v6218
  %v6820 = vunpack.c.l.b16 %v6219
  %v6821 = vunpack.c.h.b16 %v6219
  %v6822 = vunpack.c.l.b16 %v6220
  %v6823 = vunpack.c.h.b16 %v6220
  %v6824 = vunpack.c.l.b16 %v6221
  %v6825 = vunpack.c.h.b16 %v6221
  %v6826 = vunpack.c.l.b16 %v6222
  %v6827 = vunpack.c.h.b16 %v6222
  %v6828 = vunpack.c.l.b16 %v6223
  %v6829 = vunpack.c.h.b16 %v6223
  %v6830 = vunpack.c.l.b16 %v6224
  %v6831 = vunpack.c.h.b16 %v6224
  %v6832 = vunpack.c.l.b16 %v6225
  %v6833 = vunpack.c.h.b16 %v6225
  %v6834 = vunpack.c.l.b16 %v6226
  %v6835 = vunpack.c.h.b16 %v6226
  %v6836 = vunpack.c.l.b16 %v6227
  %v6837 = vunpack.c.h.b16 %v6227
  %v6838 = vunpack.c.l.b16 %v6228
  %v6839 = vunpack.c.h.b16 %v6228
  %v6840 = vunpack.c.l.b16 %v6229
  %v6841 = vunpack.c.h.b16 %v6229
  %v6842 = vunpack.c.l.b16 %v6230
  %v6843 = vunpack.c.h.b16 %v6230
  %v6844 = vunpack.c.l.b16 %v6231
  %v6845 = vunpack.c.h.b16 %v6231
  %v6846 = vunpack.c.l.b16 %v6232
  %v6847 = vunpack.c.h.b16 %v6232
  %v6848 = vunpack.c.l.b16 %v6233
  %v6849 = vunpack.c.h.b16 %v6233
  %v6850 = vunpack.c.l.b16 %v6234
  %v6851 = vunpack.c.h.b16 %v6234
  %v6852 = vunpack.c.l.b16 %v6235
  %v6853 = vunpack.c.h.b16 %v6235
  %v6854 = vunpack.c.l.b16 %v6236
  %v6855 = vunpack.c.h.b16 %v6236
  %v6856 = vunpack.c.l.b16 %v6237
  %v6857 = vunpack.c.h.b16 %v6237
  %v6858 = vunpack.c.l.b16 %v6238
  %v6859 = vunpack.c.h.b16 %v6238
  %v6860 = vunpack.c.l.b16 %v6239
  %v6861 = vunpack.c.h.b16 %v6239
  %v6862 = vunpack.c.l.b16 %v6240
  %v6863 = vunpack.c.h.b16 %v6240
  %v6864 = vunpack.c.l.b16 %v6241
  %v6865 = vunpack.c.h.b16 %v6241
  %v6866 = vunpack.c.l.b16 %v6242
  %v6867 = vunpack.c.h.b16 %v6242
  %v6868 = vunpack.c.l.b16 %v6243
  %v6869 = vunpack.c.h.b16 %v6243
  %v6870 = vunpack.c.l.b16 %v6244
  %v6871 = vunpack.c.h.b16 %v6244
  %v6872 = vunpack.c.l.b16 %v6245
  %v6873 = vunpack.c.h.b16 %v6245
  %v6874 = vunpack.c.l.b16 %v6246
  %v6875 = vunpack.c.h.b16 %v6246
  %v6876 = vpack.c.b16 %v6624, %v6620
  %v6877 = vpack.c.b16 %v6625, %v6621
  %v6878 = vpack.c.b16 %v6626, %v6622
  %v6879 = vpack.c.b16 %v6627, %v6623
  %v6880 = vpack.c.b16 %v6632, %v6628
  %v6881 = vpack.c.b16 %v6633, %v6629
  %v6882 = vpack.c.b16 %v6634, %v6630
  %v6883 = vpack.c.b16 %v6635, %v6631
  %v6884 = vpack.c.b16 %v6640, %v6636
  %v6885 = vpack.c.b16 %v6641, %v6637
  %v6886 = vpack.c.b16 %v6642, %v6638
  %v6887 = vpack.c.b16 %v6643, %v6639
  %v6888 = vpack.c.b16 %v6648, %v6644
  %v6889 = vpack.c.b16 %v6649, %v6645
  %v6890 = vpack.c.b16 %v6650, %v6646
  %v6891 = vpack.c.b16 %v6651, %v6647
  %v6892 = vpack.c.b16 %v6656, %v6652
  %v6893 = vpack.c.b16 %v6657, %v6653
  %v6894 = vpack.c.b16 %v6658, %v6654
  %v6895 = vpack.c.b16 %v6659, %v6655
  %v6896 = vpack.c.b16 %v6664, %v6660
  %v6897 = vpack.c.b16 %v6665, %v6661
  %v6898 = vpack.c.b16 %v6666, %v6662
  %v6899 = vpack.c.b16 %v6667, %v6663
  %v6900 = vpack.c.b16 %v6672, %v6668
  %v6901 = vpack.c.b16 %v6673, %v6669
  %v6902 = vpack.c.b16 %v6674, %v6670
  %v6903 = vpack.c.b16 %v6675, %v6671
  %v6904 = vpack.c.b16 %v6680, %v6676
  %v6905 = vpack.c.b16 %v6681, %v6677
  %v6906 = vpack.c.b16 %v6682, %v6678
  %v6907 = vpack.c.b16 %v6683, %v6679
  %v6908 = vpack.c.b16 %v6688, %v6684
  %v6909 = vpack.c.b16 %v6689, %v6685
  %v6910 = vpack.c.b16 %v6690, %v6686
  %v6911 = vpack.c.b16 %v6691, %v6687
  %v6912 = vpack.c.b16 %v6696, %v6692
  %v6913 = vpack.c.b16 %v6697, %v6693
  %v6914 = vpack.c.b16 %v6698, %v6694
  %v6915 = vpack.c.b16 %v6699, %v6695
  %v6916 = vpack.c.b16 %v6704, %v6700
  %v6917 = vpack.c.b16 %v6705, %v6701
  %v6918 = vpack.c.b16 %v6706, %v6702
  %v6919 = vpack.c.b16 %v6707, %v6703
  %v6920 = vpack.c.b16 %v6712, %v6708
  %v6921 = vpack.c.b16 %v6713, %v6709
  %v6922 = vpack.c.b16 %v6714, %v6710
  %v6923 = vpack.c.b16 %v6715, %v6711
  %v6924 = vpack.c.b16 %v6720, %v6716
  %v6925 = vpack.c.b16 %v6721, %v6717
  %v6926 = vpack.c.b16 %v6722, %v6718
  %v6927 = vpack.c.b16 %v6723, %v6719
  %v6928 = vpack.c.b16 %v6728, %v6724
  %v6929 = vpack.c.b16 %v6729, %v6725
  %v6930 = vpack.c.b16 %v6730, %v6726
  %v6931 = vpack.c.b16 %v6731, %v6727
  %v6932 = vpack.c.b16 %v6736, %v6732
  %v6933 = vpack.c.b16 %v6737, %v6733
  %v6934 = vpack.c.b16 %v6738, %v6734
  %v6935 = vpack.c.b16 %v6739, %v6735
  %v6936 = vpack.c.b16 %v6744, %v6740
  %v6937 = vpack.c.b16 %v6745, %v6741
  %v6938 = vpack.c.b16 %v6746, %v6742
  %v6939 = vpack.c.b16 %v6747, %v6743
  %v6940 = vpack.c.b16 %v6752, %v6748
  %v6941 = vpack.c.b16 %v6753, %v6749
  %v6942 = vpack.c.b16 %v6754, %v6750
  %v6943 = vpack.c.b16 %v6755, %v6751
  %v6944 = vpack.c.b16 %v6760, %v6756
  %v6945 = vpack.c.b16 %v6761, %v6757
  %v6946 = vpack.c.b16 %v6762, %v6758
  %v6947 = vpack.c.b16 %v6763, %v6759
  %v6948 = vpack.c.b16 %v6768, %v6764
  %v6949 = vpack.c.b16 %v6769, %v6765
  %v6950 = vpack.c.b16 %v6770, %v6766
  %v6951 = vpack.c.b16 %v6771, %v6767
  %v6952 = vpack.c.b16 %v6776, %v6772
  %v6953 = vpack.c.b16 %v6777, %v6773
  %v6954 = vpack.c.b16 %v6778, %v6774
  %v6955 = vpack.c.b16 %v6779, %v6775
  %v6956 = vpack.c.b16 %v6784, %v6780
  %v6957 = vpack.c.b16 %v6785, %v6781
  %v6958 = vpack.c.b16 %v6786, %v6782
  %v6959 = vpack.c.b16 %v6787, %v6783
  %v6960 = vpack.c.b16 %v6792, %v6788
  %v6961 = vpack.c.b16 %v6793, %v6789
  %v6962 = vpack.c.b16 %v6794, %v6790
  %v6963 = vpack.c.b16 %v6795, %v6791
  %v6964 = vpack.c.b16 %v6800, %v6796
  %v6965 = vpack.c.b16 %v6801, %v6797
  %v6966 = vpack.c.b16 %v6802, %v6798
  %v6967 = vpack.c.b16 %v6803, %v6799
  %v6968 = vpack.c.b16 %v6808, %v6804
  %v6969 = vpack.c.b16 %v6809, %v6805
  %v6970 = vpack.c.b16 %v6810, %v6806
  %v6971 = vpack.c.b16 %v6811, %v6807
  %v6972 = vpack.c.b16 %v6816, %v6812
  %v6973 = vpack.c.b16 %v6817, %v6813
  %v6974 = vpack.c.b16 %v6818, %v6814
  %v6975 = vpack.c.b16 %v6819, %v6815
  %v6976 = vpack.c.b16 %v6824, %v6820
  %v6977 = vpack.c.b16 %v6825, %v6821
  %v6978 = vpack.c.b16 %v6826, %v6822
  %v6979 = vpack.c.b16 %v6827, %v6823
  %v6980 = vpack.c.b16 %v6832, %v6828
  %v6981 = vpack.c.b16 %v6833, %v6829
  %v6982 = vpack.c.b16 %v6834, %v6830
  %v6983 = vpack.c.b16 %v6835, %v6831
  %v6984 = vpack.c.b16 %v6840, %v6836
  %v6985 = vpack.c.b16 %v6841, %v6837
  %v6986 = vpack.c.b16 %v6842, %v6838
  %v6987 = vpack.c.b16 %v6843, %v6839
  %v6988 = vpack.c.b16 %v6848, %v6844
  %v6989 = vpack.c.b16 %v6849, %v6845
  %v6990 = vpack.c.b16 %v6850, %v6846
  %v6991 = vpack.c.b16 %v6851, %v6847
  %v6992 = vpack.c.b16 %v6856, %v6852
  %v6993 = vpack.c.b16 %v6857, %v6853
  %v6994 = vpack.c.b16 %v6858, %v6854
  %v6995 = vpack.c.b16 %v6859, %v6855
  %v6996 = vpack.c.b16 %v6864, %v6860
  %v6997 = vpack.c.b16 %v6865, %v6861
  %v6998 = vpack.c.b16 %v6866, %v6862
  %v6999 = vpack.c.b16 %v6867, %v6863
  %v7000 = vpack.c.b16 %v6872, %v6868
  %v7001 = vpack.c.b16 %v6873, %v6869
  %v7002 = vpack.c.b16 %v6874, %v6870
  %v7003 = vpack.c.b16 %v6875, %v6871
  %7132 = vmatpush.bf16.msra.mxu0 %v6904
  %7133 = vmatpush.bf16.msra.mxu0 %v6900
  %7134 = vmatpush.bf16.msra.mxu0 %v6896
  %7135 = vmatpush.bf16.msra.mxu0 %v6892
  %7136 = vmatpush.bf16.msra.mxu0 %v6888
  %7137 = vmatpush.bf16.msra.mxu0 %v6884
  %7138 = vmatpush.bf16.msra.mxu0 %v6880
  %7139 = vmatpush.bf16.msra.mxu0 %v6876
  %7140 = vmatmul.bf16.gmra.mxu0 %v6115
  %v7141 = vpop.f32.mrf.mxu0
  %v7142 = vadd.f32 %v6450, %v7141
  %v7143 = vpop.f32.mrf.mxu0
  %7144 = vdwg.mxu0
  %7145 = vmatpush.bf16.msra.mxu0 %v6936
  %7146 = vmatpush.bf16.msra.mxu0 %v6932
  %7147 = vmatpush.bf16.msra.mxu0 %v6928
  %7148 = vmatpush.bf16.msra.mxu0 %v6924
  %7149 = vmatpush.bf16.msra.mxu0 %v6920
  %7150 = vmatpush.bf16.msra.mxu0 %v6916
  %7151 = vmatpush.bf16.msra.mxu0 %v6912
  %7152 = vmatpush.bf16.msra.mxu0 %v6908
  %7153 = vmatmul.bf16.gmra.mxu0 %v6116
  %v7154 = vpop.f32.mrf.mxu0
  %v7155 = vadd.f32 %v7142, %v7154
  %v7156 = vpop.f32.mrf.mxu0
  %7157 = vdwg.mxu0
  %7158 = vmatpush.bf16.msra.mxu0 %v6968
  %7159 = vmatpush.bf16.msra.mxu0 %v6964
  %7160 = vmatpush.bf16.msra.mxu0 %v6960
  %7161 = vmatpush.bf16.msra.mxu0 %v6956
  %7162 = vmatpush.bf16.msra.mxu0 %v6952
  %7163 = vmatpush.bf16.msra.mxu0 %v6948
  %7164 = vmatpush.bf16.msra.mxu0 %v6944
  %7165 = vmatpush.bf16.msra.mxu0 %v6940
  %7166 = vmatmul.bf16.gmra.mxu0 %v6117
  %v7167 = vpop.f32.mrf.mxu0
  %v7168 = vadd.f32 %v7155, %v7167
  %v7169 = vpop.f32.mrf.mxu0
  %7170 = vdwg.mxu0
  %7171 = vmatpush.bf16.msra.mxu0 %v7000
  %7172 = vmatpush.bf16.msra.mxu0 %v6996
  %7173 = vmatpush.bf16.msra.mxu0 %v6992
  %7174 = vmatpush.bf16.msra.mxu0 %v6988
  %7175 = vmatpush.bf16.msra.mxu0 %v6984
  %7176 = vmatpush.bf16.msra.mxu0 %v6980
  %7177 = vmatpush.bf16.msra.mxu0 %v6976
  %7178 = vmatpush.bf16.msra.mxu0 %v6972
  %7179 = vmatmul.bf16.gmra.mxu0 %v6118
  %v7180 = vpop.f32.mrf.mxu0
  %v7181 = vadd.f32 %v7168, %v7180
  %v7182 = vpop.f32.mrf.mxu0
  %7183 = vdwg.mxu0
  %7184 = vmatpush.bf16.msra.mxu0 %v6905
  %7185 = vmatpush.bf16.msra.mxu0 %v6901
  %7186 = vmatpush.bf16.msra.mxu0 %v6897
  %7187 = vmatpush.bf16.msra.mxu0 %v6893
  %7188 = vmatpush.bf16.msra.mxu0 %v6889
  %7189 = vmatpush.bf16.msra.mxu0 %v6885
  %7190 = vmatpush.bf16.msra.mxu0 %v6881
  %7191 = vmatpush.bf16.msra.mxu0 %v6877
  %7192 = vmatmul.bf16.gmra.mxu0 %v6115
  %v7193 = vpop.f32.mrf.mxu0
  %v7194 = vadd.f32 %v6463, %v7193
  %v7195 = vpop.f32.mrf.mxu0
  %7196 = vdwg.mxu0
  %7197 = vmatpush.bf16.msra.mxu0 %v6937
  %7198 = vmatpush.bf16.msra.mxu0 %v6933
  %7199 = vmatpush.bf16.msra.mxu0 %v6929
  %7200 = vmatpush.bf16.msra.mxu0 %v6925
  %7201 = vmatpush.bf16.msra.mxu0 %v6921
  %7202 = vmatpush.bf16.msra.mxu0 %v6917
  %7203 = vmatpush.bf16.msra.mxu0 %v6913
  %7204 = vmatpush.bf16.msra.mxu0 %v6909
  %7205 = vmatmul.bf16.gmra.mxu0 %v6116
  %v7206 = vpop.f32.mrf.mxu0
  %v7207 = vadd.f32 %v7194, %v7206
  %v7208 = vpop.f32.mrf.mxu0
  %7209 = vdwg.mxu0
  %7210 = vmatpush.bf16.msra.mxu0 %v6969
  %7211 = vmatpush.bf16.msra.mxu0 %v6965
  %7212 = vmatpush.bf16.msra.mxu0 %v6961
  %7213 = vmatpush.bf16.msra.mxu0 %v6957
  %7214 = vmatpush.bf16.msra.mxu0 %v6953
  %7215 = vmatpush.bf16.msra.mxu0 %v6949
  %7216 = vmatpush.bf16.msra.mxu0 %v6945
  %7217 = vmatpush.bf16.msra.mxu0 %v6941
  %7218 = vmatmul.bf16.gmra.mxu0 %v6117
  %v7219 = vpop.f32.mrf.mxu0
  %v7220 = vadd.f32 %v7207, %v7219
  %v7221 = vpop.f32.mrf.mxu0
  %7222 = vdwg.mxu0
  %7223 = vmatpush.bf16.msra.mxu0 %v7001
  %7224 = vmatpush.bf16.msra.mxu0 %v6997
  %7225 = vmatpush.bf16.msra.mxu0 %v6993
  %7226 = vmatpush.bf16.msra.mxu0 %v6989
  %7227 = vmatpush.bf16.msra.mxu0 %v6985
  %7228 = vmatpush.bf16.msra.mxu0 %v6981
  %7229 = vmatpush.bf16.msra.mxu0 %v6977
  %7230 = vmatpush.bf16.msra.mxu0 %v6973
  %7231 = vmatmul.bf16.gmra.mxu0 %v6118
  %v7232 = vpop.f32.mrf.mxu0
  %v7233 = vadd.f32 %v7220, %v7232
  %v7234 = vpop.f32.mrf.mxu0
  %7235 = vdwg.mxu0
  %7236 = vmatpush.bf16.msra.mxu0 %v6906
  %7237 = vmatpush.bf16.msra.mxu0 %v6902
  %7238 = vmatpush.bf16.msra.mxu0 %v6898
  %7239 = vmatpush.bf16.msra.mxu0 %v6894
  %7240 = vmatpush.bf16.msra.mxu0 %v6890
  %7241 = vmatpush.bf16.msra.mxu0 %v6886
  %7242 = vmatpush.bf16.msra.mxu0 %v6882
  %7243 = vmatpush.bf16.msra.mxu0 %v6878
  %7244 = vmatmul.bf16.gmra.mxu0 %v6115
  %v7245 = vpop.f32.mrf.mxu0
  %v7246 = vadd.f32 %v6476, %v7245
  %v7247 = vpop.f32.mrf.mxu0
  %7248 = vdwg.mxu0
  %7249 = vmatpush.bf16.msra.mxu0 %v6938
  %7250 = vmatpush.bf16.msra.mxu0 %v6934
  %7251 = vmatpush.bf16.msra.mxu0 %v6930
  %7252 = vmatpush.bf16.msra.mxu0 %v6926
  %7253 = vmatpush.bf16.msra.mxu0 %v6922
  %7254 = vmatpush.bf16.msra.mxu0 %v6918
  %7255 = vmatpush.bf16.msra.mxu0 %v6914
  %7256 = vmatpush.bf16.msra.mxu0 %v6910
  %7257 = vmatmul.bf16.gmra.mxu0 %v6116
  %v7258 = vpop.f32.mrf.mxu0
  %v7259 = vadd.f32 %v7246, %v7258
  %v7260 = vpop.f32.mrf.mxu0
  %7261 = vdwg.mxu0
  %7262 = vmatpush.bf16.msra.mxu0 %v6970
  %7263 = vmatpush.bf16.msra.mxu0 %v6966
  %7264 = vmatpush.bf16.msra.mxu0 %v6962
  %7265 = vmatpush.bf16.msra.mxu0 %v6958
  %7266 = vmatpush.bf16.msra.mxu0 %v6954
  %7267 = vmatpush.bf16.msra.mxu0 %v6950
  %7268 = vmatpush.bf16.msra.mxu0 %v6946
  %7269 = vmatpush.bf16.msra.mxu0 %v6942
  %7270 = vmatmul.bf16.gmra.mxu0 %v6117
  %v7271 = vpop.f32.mrf.mxu0
  %v7272 = vadd.f32 %v7259, %v7271
  %v7273 = vpop.f32.mrf.mxu0
  %7274 = vdwg.mxu0
  %7275 = vmatpush.bf16.msra.mxu0 %v7002
  %7276 = vmatpush.bf16.msra.mxu0 %v6998
  %7277 = vmatpush.bf16.msra.mxu0 %v6994
  %7278 = vmatpush.bf16.msra.mxu0 %v6990
  %7279 = vmatpush.bf16.msra.mxu0 %v6986
  %7280 = vmatpush.bf16.msra.mxu0 %v6982
  %7281 = vmatpush.bf16.msra.mxu0 %v6978
  %7282 = vmatpush.bf16.msra.mxu0 %v6974
  %7283 = vmatmul.bf16.gmra.mxu0 %v6118
  %v7284 = vpop.f32.mrf.mxu0
  %v7285 = vadd.f32 %v7272, %v7284
  %v7286 = vpop.f32.mrf.mxu0
  %7287 = vdwg.mxu0
  %7288 = vmatpush.bf16.msra.mxu0 %v6907
  %7289 = vmatpush.bf16.msra.mxu0 %v6903
  %7290 = vmatpush.bf16.msra.mxu0 %v6899
  %7291 = vmatpush.bf16.msra.mxu0 %v6895
  %7292 = vmatpush.bf16.msra.mxu0 %v6891
  %7293 = vmatpush.bf16.msra.mxu0 %v6887
  %7294 = vmatpush.bf16.msra.mxu0 %v6883
  %7295 = vmatpush.bf16.msra.mxu0 %v6879
  %7296 = vmatmul.bf16.gmra.mxu0 %v6115
  %v7297 = vpop.f32.mrf.mxu0
  %v7298 = vadd.f32 %v6489, %v7297
  %v7299 = vpop.f32.mrf.mxu0
  %7300 = vdwg.mxu0
  %7301 = vmatpush.bf16.msra.mxu0 %v6939
  %7302 = vmatpush.bf16.msra.mxu0 %v6935
  %7303 = vmatpush.bf16.msra.mxu0 %v6931
  %7304 = vmatpush.bf16.msra.mxu0 %v6927
  %7305 = vmatpush.bf16.msra.mxu0 %v6923
  %7306 = vmatpush.bf16.msra.mxu0 %v6919
  %7307 = vmatpush.bf16.msra.mxu0 %v6915
  %7308 = vmatpush.bf16.msra.mxu0 %v6911
  %7309 = vmatmul.bf16.gmra.mxu0 %v6116
  %v7310 = vpop.f32.mrf.mxu0
  %v7311 = vadd.f32 %v7298, %v7310
  %v7312 = vpop.f32.mrf.mxu0
  %7313 = vdwg.mxu0
  %7314 = vmatpush.bf16.msra.mxu0 %v6971
  %7315 = vmatpush.bf16.msra.mxu0 %v6967
  %7316 = vmatpush.bf16.msra.mxu0 %v6963
  %7317 = vmatpush.bf16.msra.mxu0 %v6959
  %7318 = vmatpush.bf16.msra.mxu0 %v6955
  %7319 = vmatpush.bf16.msra.mxu0 %v6951
  %7320 = vmatpush.bf16.msra.mxu0 %v6947
  %7321 = vmatpush.bf16.msra.mxu0 %v6943
  %7322 = vmatmul.bf16.gmra.mxu0 %v6117
  %v7323 = vpop.f32.mrf.mxu0
  %v7324 = vadd.f32 %v7311, %v7323
  %v7325 = vpop.f32.mrf.mxu0
  %7326 = vdwg.mxu0
  %7327 = vmatpush.bf16.msra.mxu0 %v7003
  %7328 = vmatpush.bf16.msra.mxu0 %v6999
  %7329 = vmatpush.bf16.msra.mxu0 %v6995
  %7330 = vmatpush.bf16.msra.mxu0 %v6991
  %7331 = vmatpush.bf16.msra.mxu0 %v6987
  %7332 = vmatpush.bf16.msra.mxu0 %v6983
  %7333 = vmatpush.bf16.msra.mxu0 %v6979
  %7334 = vmatpush.bf16.msra.mxu0 %v6975
  %7335 = vmatmul.bf16.gmra.mxu0 %v6118
  %v7336 = vpop.f32.mrf.mxu0
  %v7337 = vadd.f32 %v7324, %v7336
  %v7338 = vpop.f32.mrf.mxu0
  %7339 = vdwg.mxu0
  %v7340 = vld [vmem:[%s6] sm:$0xf]
  %v7342 = vperm.slane %v7340, 0
  %v7343 = vperm.slane %v7340, 1
  %v7344 = vperm.slane %v7340, 2
  %v7345 = vperm.slane %v7340, 3
  %v7350 = vadd.f32 %v7181, %v7342
  %v7351 = vadd.f32 %v7233, %v7343
  %v7352 = vadd.f32 %v7285, %v7344
  %v7353 = vadd.f32 %v7337, %v7345
  %v7354 = vtanh.pop %v7350
  %v7355 = vtanh.pop %v7351
  %v7356 = vtanh.pop %v7352
  %v7357 = vtanh.pop %v7353
  %v7358 = vpack.c.bf16 %v7354, %v7354
  %v7359 = vpack.c.bf16 %v7355, %v7355
  %v7360 = vpack.c.bf16 %v7356, %v7356
  %v7361 = vpack.c.bf16 %v7357, %v7357
  %v7362 = vld [vmem:[%s7] sm:$0xf]
  %v7363 = vld [vmem:[%s7 + $0x4] sm:$0xf]
  %v7364 = vld [vmem:[%s7 + $0x8] sm:$0xf]
  %v7365 = vld [vmem:[%s7 + $0xc] sm:$0xf]
  %v7366 = vld [vmem:[%s7 + $0x10] sm:$0xf]
  %v7367 = vld [vmem:[%s7 + $0x14] sm:$0xf]
  %v7368 = vld [vmem:[%s7 + $0x18] sm:$0xf]
  %v7369 = vld [vmem:[%s7 + $0x1c] sm:$0xf]
  %v7370 = vld [vmem:[%s7 + $0x20] sm:$0xf]
  %v7371 = vld [vmem:[%s7 + $0x24] sm:$0xf]
  %v7372 = vld [vmem:[%s7 + $0x28] sm:$0xf]
  %v7373 = vld [vmem:[%s7 + $0x2c] sm:$0xf]
  %v7374 = vld [vmem:[%s7 + $0x30] sm:$0xf]
  %v7375 = vld [vmem:[%s7 + $0x34] sm:$0xf]
  %v7376 = vld [vmem:[%s7 + $0x38] sm:$0xf]
  %v7377 = vld [vmem:[%s7 + $0x3c] sm:$0xf]
  %v7378 = vld [vmem:[%s7 + $0x40] sm:$0xf]
  %v7379 = vld [vmem:[%s7 + $0x44] sm:$0xf]
  %v7380 = vld [vmem:[%s7 + $0x48] sm:$0xf]
  %v7381 = vld [vmem:[%s7 + $0x4c] sm:$0xf]
  %v7382 = vld [vmem:[%s7 + $0x50] sm:$0xf]
  %v7383 = vld [vmem:[%s7 + $0x54] sm:$0xf]
  %v7384 = vld [vmem:[%s7 + $0x58] sm:$0xf]
  %v7385 = vld [vmem:[%s7 + $0x5c] sm:$0xf]
  %v7386 = vld [vmem:[%s7 + $0x60] sm:$0xf]
  %v7387 = vld [vmem:[%s7 + $0x64] sm:$0xf]
  %v7388 = vld [vmem:[%s7 + $0x68] sm:$0xf]
  %v7389 = vld [vmem:[%s7 + $0x6c] sm:$0xf]
  %v7390 = vld [vmem:[%s7 + $0x70] sm:$0xf]
  %v7391 = vld [vmem:[%s7 + $0x74] sm:$0xf]
  %v7392 = vld [vmem:[%s7 + $0x78] sm:$0xf]
  %v7393 = vld [vmem:[%s7 + $0x7c] sm:$0xf]
  %v7394 = vld [vmem:[%s7 + $0x80] sm:$0xf]
  %v7395 = vld [vmem:[%s7 + $0x84] sm:$0xf]
  %v7396 = vld [vmem:[%s7 + $0x88] sm:$0xf]
  %v7397 = vld [vmem:[%s7 + $0x8c] sm:$0xf]
  %v7398 = vld [vmem:[%s7 + $0x90] sm:$0xf]
  %v7399 = vld [vmem:[%s7 + $0x94] sm:$0xf]
  %v7400 = vld [vmem:[%s7 + $0x98] sm:$0xf]
  %v7401 = vld [vmem:[%s7 + $0x9c] sm:$0xf]
  %v7402 = vld [vmem:[%s7 + $0xa0] sm:$0xf]
  %v7403 = vld [vmem:[%s7 + $0xa4] sm:$0xf]
  %v7404 = vld [vmem:[%s7 + $0xa8] sm:$0xf]
  %v7405 = vld [vmem:[%s7 + $0xac] sm:$0xf]
  %v7406 = vld [vmem:[%s7 + $0xb0] sm:$0xf]
  %v7407 = vld [vmem:[%s7 + $0xb4] sm:$0xf]
  %v7408 = vld [vmem:[%s7 + $0xb8] sm:$0xf]
  %v7409 = vld [vmem:[%s7 + $0xbc] sm:$0xf]
  %v7410 = vld [vmem:[%s7 + $0xc0] sm:$0xf]
  %v7411 = vld [vmem:[%s7 + $0xc4] sm:$0xf]
  %v7412 = vld [vmem:[%s7 + $0xc8] sm:$0xf]
  %v7413 = vld [vmem:[%s7 + $0xcc] sm:$0xf]
  %v7414 = vld [vmem:[%s7 + $0xd0] sm:$0xf]
  %v7415 = vld [vmem:[%s7 + $0xd4] sm:$0xf]
  %v7416 = vld [vmem:[%s7 + $0xd8] sm:$0xf]
  %v7417 = vld [vmem:[%s7 + $0xdc] sm:$0xf]
  %v7418 = vld [vmem:[%s7 + $0xe0] sm:$0xf]
  %v7419 = vld [vmem:[%s7 + $0xe4] sm:$0xf]
  %v7420 = vld [vmem:[%s7 + $0xe8] sm:$0xf]
  %v7421 = vld [vmem:[%s7 + $0xec] sm:$0xf]
  %v7422 = vld [vmem:[%s7 + $0xf0] sm:$0xf]
  %v7423 = vld [vmem:[%s7 + $0xf4] sm:$0xf]
  %v7424 = vld [vmem:[%s7 + $0xf8] sm:$0xf]
  %v7425 = vld [vmem:[%s7 + $0xfc] sm:$0xf]
  %v7426 = vld [vmem:[%s8] sm:$0x1]
  %v7428 = vperm.slane %v7426, 0
  %v7494 = vunpack.c.l.b16 %v7362
  %v7495 = vunpack.c.l.b16 %v7363
  %v7496 = vunpack.c.l.b16 %v7364
  %v7497 = vunpack.c.l.b16 %v7365
  %v7498 = vunpack.c.l.b16 %v7366
  %v7499 = vunpack.c.l.b16 %v7367
  %v7500 = vunpack.c.l.b16 %v7368
  %v7501 = vunpack.c.l.b16 %v7369
  %v7502 = vunpack.c.l.b16 %v7370
  %v7503 = vunpack.c.l.b16 %v7371
  %v7504 = vunpack.c.l.b16 %v7372
  %v7505 = vunpack.c.l.b16 %v7373
  %v7506 = vunpack.c.l.b16 %v7374
  %v7507 = vunpack.c.l.b16 %v7375
  %v7508 = vunpack.c.l.b16 %v7376
  %v7509 = vunpack.c.l.b16 %v7377
  %v7510 = vunpack.c.l.b16 %v7378
  %v7511 = vunpack.c.l.b16 %v7379
  %v7512 = vunpack.c.l.b16 %v7380
  %v7513 = vunpack.c.l.b16 %v7381
  %v7514 = vunpack.c.l.b16 %v7382
  %v7515 = vunpack.c.l.b16 %v7383
  %v7516 = vunpack.c.l.b16 %v7384
  %v7517 = vunpack.c.l.b16 %v7385
  %v7518 = vunpack.c.l.b16 %v7386
  %v7519 = vunpack.c.l.b16 %v7387
  %v7520 = vunpack.c.l.b16 %v7388
  %v7521 = vunpack.c.l.b16 %v7389
  %v7522 = vunpack.c.l.b16 %v7390
  %v7523 = vunpack.c.l.b16 %v7391
  %v7524 = vunpack.c.l.b16 %v7392
  %v7525 = vunpack.c.l.b16 %v7393
  %v7526 = vunpack.c.l.b16 %v7394
  %v7527 = vunpack.c.l.b16 %v7395
  %v7528 = vunpack.c.l.b16 %v7396
  %v7529 = vunpack.c.l.b16 %v7397
  %v7530 = vunpack.c.l.b16 %v7398
  %v7531 = vunpack.c.l.b16 %v7399
  %v7532 = vunpack.c.l.b16 %v7400
  %v7533 = vunpack.c.l.b16 %v7401
  %v7534 = vunpack.c.l.b16 %v7402
  %v7535 = vunpack.c.l.b16 %v7403
  %v7536 = vunpack.c.l.b16 %v7404
  %v7537 = vunpack.c.l.b16 %v7405
  %v7538 = vunpack.c.l.b16 %v7406
  %v7539 = vunpack.c.l.b16 %v7407
  %v7540 = vunpack.c.l.b16 %v7408
  %v7541 = vunpack.c.l.b16 %v7409
  %v7542 = vunpack.c.l.b16 %v7410
  %v7543 = vunpack.c.l.b16 %v7411
  %v7544 = vunpack.c.l.b16 %v7412
  %v7545 = vunpack.c.l.b16 %v7413
  %v7546 = vunpack.c.l.b16 %v7414
  %v7547 = vunpack.c.l.b16 %v7415
  %v7548 = vunpack.c.l.b16 %v7416
  %v7549 = vunpack.c.l.b16 %v7417
  %v7550 = vunpack.c.l.b16 %v7418
  %v7551 = vunpack.c.l.b16 %v7419
  %v7552 = vunpack.c.l.b16 %v7420
  %v7553 = vunpack.c.l.b16 %v7421
  %v7554 = vunpack.c.l.b16 %v7422
  %v7555 = vunpack.c.l.b16 %v7423
  %v7556 = vunpack.c.l.b16 %v7424
  %v7557 = vunpack.c.l.b16 %v7425
  %v7558 = vpack.c.b16 %v7495, %v7494
  %v7559 = vpack.c.b16 %v7497, %v7496
  %v7560 = vpack.c.b16 %v7499, %v7498
  %v7561 = vpack.c.b16 %v7501, %v7500
  %v7562 = vpack.c.b16 %v7503, %v7502
  %v7563 = vpack.c.b16 %v7505, %v7504
  %v7564 = vpack.c.b16 %v7507, %v7506
  %v7565 = vpack.c.b16 %v7509, %v7508
  %v7566 = vpack.c.b16 %v7511, %v7510
  %v7567 = vpack.c.b16 %v7513, %v7512
  %v7568 = vpack.c.b16 %v7515, %v7514
  %v7569 = vpack.c.b16 %v7517, %v7516
  %v7570 = vpack.c.b16 %v7519, %v7518
  %v7571 = vpack.c.b16 %v7521, %v7520
  %v7572 = vpack.c.b16 %v7523, %v7522
  %v7573 = vpack.c.b16 %v7525, %v7524
  %v7574 = vpack.c.b16 %v7527, %v7526
  %v7575 = vpack.c.b16 %v7529, %v7528
  %v7576 = vpack.c.b16 %v7531, %v7530
  %v7577 = vpack.c.b16 %v7533, %v7532
  %v7578 = vpack.c.b16 %v7535, %v7534
  %v7579 = vpack.c.b16 %v7537, %v7536
  %v7580 = vpack.c.b16 %v7539, %v7538
  %v7581 = vpack.c.b16 %v7541, %v7540
  %v7582 = vpack.c.b16 %v7543, %v7542
  %v7583 = vpack.c.b16 %v7545, %v7544
  %v7584 = vpack.c.b16 %v7547, %v7546
  %v7585 = vpack.c.b16 %v7549, %v7548
  %v7586 = vpack.c.b16 %v7551, %v7550
  %v7587 = vpack.c.b16 %v7553, %v7552
  %v7588 = vpack.c.b16 %v7555, %v7554
  %v7589 = vpack.c.b16 %v7557, %v7556
  %7622 = vmatpush.bf16.msra.mxu0 %v7565
  %7623 = vmatpush.bf16.msra.mxu0 %v7564
  %7624 = vmatpush.bf16.msra.mxu0 %v7563
  %7625 = vmatpush.bf16.msra.mxu0 %v7562
  %7626 = vmatpush.bf16.msra.mxu0 %v7561
  %7627 = vmatpush.bf16.msra.mxu0 %v7560
  %7628 = vmatpush.bf16.msra.mxu0 %v7559
  %7629 = vmatpush.bf16.msra.mxu0 %v7558
  %7630 = vmatmul.bf16.gmra.mxu0 %v7358
  %v7631 = vpop.f32.mrf.mxu0
  %v7632 = vadd.f32 %v7428, %v7631
  %v7633 = vpop.f32.mrf.mxu0
  %7634 = vdwg.mxu0
  %7635 = vmatpush.bf16.msra.mxu0 %v7573
  %7636 = vmatpush.bf16.msra.mxu0 %v7572
  %7637 = vmatpush.bf16.msra.mxu0 %v7571
  %7638 = vmatpush.bf16.msra.mxu0 %v7570
  %7639 = vmatpush.bf16.msra.mxu0 %v7569
  %7640 = vmatpush.bf16.msra.mxu0 %v7568
  %7641 = vmatpush.bf16.msra.mxu0 %v7567
  %7642 = vmatpush.bf16.msra.mxu0 %v7566
  %7643 = vmatmul.bf16.gmra.mxu0 %v7359
  %v7644 = vpop.f32.mrf.mxu0
  %v7645 = vadd.f32 %v7632, %v7644
  %v7646 = vpop.f32.mrf.mxu0
  %7647 = vdwg.mxu0
  %7648 = vmatpush.bf16.msra.mxu0 %v7581
  %7649 = vmatpush.bf16.msra.mxu0 %v7580
  %7650 = vmatpush.bf16.msra.mxu0 %v7579
  %7651 = vmatpush.bf16.msra.mxu0 %v7578
  %7652 = vmatpush.bf16.msra.mxu0 %v7577
  %7653 = vmatpush.bf16.msra.mxu0 %v7576
  %7654 = vmatpush.bf16.msra.mxu0 %v7575
  %7655 = vmatpush.bf16.msra.mxu0 %v7574
  %7656 = vmatmul.bf16.gmra.mxu0 %v7360
  %v7657 = vpop.f32.mrf.mxu0
  %v7658 = vadd.f32 %v7645, %v7657
  %v7659 = vpop.f32.mrf.mxu0
  %7660 = vdwg.mxu0
  %7661 = vmatpush.bf16.msra.mxu0 %v7589
  %7662 = vmatpush.bf16.msra.mxu0 %v7588
  %7663 = vmatpush.bf16.msra.mxu0 %v7587
  %7664 = vmatpush.bf16.msra.mxu0 %v7586
  %7665 = vmatpush.bf16.msra.mxu0 %v7585
  %7666 = vmatpush.bf16.msra.mxu0 %v7584
  %7667 = vmatpush.bf16.msra.mxu0 %v7583
  %7668 = vmatpush.bf16.msra.mxu0 %v7582
  %7669 = vmatmul.bf16.gmra.mxu0 %v7361
  %v7670 = vpop.f32.mrf.mxu0
  %v7671 = vadd.f32 %v7658, %v7670
  %v7672 = vpop.f32.mrf.mxu0
  %7673 = vdwg.mxu0
  %7674 = vst [vmem:[%s9] sm:$0x3] %v7671
  // Predicated region
  $region38: #{critic_forward.7} parent=0 // pred_check
    _
  $region39: #{critic_forward.7} parent=0 // pred_check_branch
    %7676 = sbr.rel (0) target = $region41
  $region40: #{critic_forward.7} parent=0 // pred_region
    _
  $region41: #{critic_forward.7} parent=0 // pred_fallthru
    _
  // Predicated region
  $region42: #{critic_forward.7} parent=0 // pred_check
    _
  $region43: #{critic_forward.7} parent=0 // pred_check_branch
    %7678 = sbr.rel (0) target = $region45
  $region44: #{critic_forward.7} parent=0 // pred_region
    _
  $region45: #{critic_forward.7} parent=0 // pred_fallthru
    _

</llo_original>
